<compile_context>
chip_gen: v7x
topology: tpu7x:2x2x1
jax: 0.10.0
libtpu: 0.0.40
codegen_flags: <defaults>
</compile_context>

<pallas_src>
import functools

import jax
import jax.numpy as jnp
from jax import lax
from jax.experimental import pallas as pl
from jax.experimental.pallas import tpu as pltpu


# Toy working sets are ~1 MiB; raise toward 64-96 MiB on v5e/v6e for large
# volumes, keep well under 64 MiB total on v7x.
_VMEM_LIMIT_BYTES = 32 * 1024 * 1024
_MIN_PALLAS_LANES = 128  # below this the kernel's lane axis can never be dense


def _round_up(x, m):
    return ((x + m - 1) // m) * m


# ----------------------------------------------------------------------------
# Fused ResNet-block Pallas kernel
# ----------------------------------------------------------------------------
def fused_resnet_block(x_big, mask, w1cat, w2cat, *, dims):
    """One fused ResNet3d block as a single pallas_call.

    x_big : (B, Cin, lead+Np+lead) bf16 -- per-batch zero-padded volume,
            flattened, with `lead` extra zero lanes on each end so every tap
            slice stays in range.
    mask  : (1, Np) f32 -- 1 at interior (valid) positions, 0 at halo.
    w1cat : (Cmid, 27*cin_pad + 8) bf16 -- folded conv1 taps + bias column.
    w2cat : (Cout, 27*cmid_pad + 8 [+ cin_pad]) bf16 -- folded conv2 taps +
            (bias2 [+ bias_sc]) column [+ 1x1x1 shortcut weights].
    Returns (B, Cout, Np) bf16 in the same padded-flat layout (halo = 0).
    """
    B, cin, npad = x_big.shape
    D, H, W = dims
    Dp, Hp, Wp = D + 2, H + 2, W + 2
    np_flat = Dp * Hp * Wp
    M = Hp * Wp + Wp + 1                       # max |tap offset| in flat index
    lead = _round_up(M, 128)                   # lane-aligned halo pad
    assert npad == lead + np_flat + lead

    cmid, k1 = w1cat.shape
    cout, k2 = w2cat.shape
    cin_pad = _round_up(cin, 8)
    cmid_pad = _round_up(cmid, 8)
    assert k1 == 27 * cin_pad + 8
    has_proj = (k2 == 27 * cmid_pad + 8 + cin_pad)
    assert has_proj or (k2 == 27 * cmid_pad + 8 and cin == cout)

    # flat-index offsets of the 27 taps (kd-major, then kh, then kw) -- must
    # match the column order produced by _fold_conv_w.
    taps = [(kd - 1) * Hp * Wp + (kh - 1) * Wp + (kw - 1)
            for kd in range(3) for kh in range(3) for kw in range(3)]

    def kernel(x_ref, w1_ref, w2_ref, mask_ref, o_ref, p1_ref, hb_ref, p2_ref):
        # Re-init scratch every step (required: grid axis is "parallel", and
        # the zero-padded K rows / folded-bias "ones" rows must never contain
        # stale or uninitialised VMEM).
        p1_ref[...] = jnp.zeros(p1_ref.shape, p1_ref.dtype)
        p2_ref[...] = jnp.zeros(p2_ref.shape, p2_ref.dtype)
        hb_ref[...] = jnp.zeros(hb_ref.shape, hb_ref.dtype)
        p1_ref[pl.ds(27 * cin_pad, 1), :] = jnp.ones((1, np_flat), jnp.bfloat16)
        p2_ref[pl.ds(27 * cmid_pad, 1), :] = jnp.ones((1, np_flat), jnp.bfloat16)

        mask = mask_ref[...]                                   # (1, Np) f32

        # ---- conv1: build P1 in VMEM from 27 static lane-offset slices of
        #      the resident padded block, then ONE folded-K MXU matmul.
        for t, off in enumerate(taps):
            p1_ref[pl.ds(t * cin_pad, cin), :] = x_ref[:, pl.ds(lead + off, np_flat)]
        acc1 = jnp.dot(w1_ref[...], p1_ref[...],
                       preferred_element_type=jnp.float32)     # (Cmid, Np)
        h = jnp.maximum(acc1, 0.0) * mask                      # ReLU + zero halo (f32)
        hb_ref[:, pl.ds(lead, np_flat)] = h.astype(jnp.bfloat16)

        # ---- conv2 (+ fused 1x1x1 shortcut) on the VMEM-resident h.
        for t, off in enumerate(taps):
            p2_ref[pl.ds(t * cmid_pad, cmid), :] = hb_ref[:, pl.ds(lead + off, np_flat)]
        if has_proj:
            p2_ref[pl.ds(27 * cmid_pad + 8, cin), :] = x_ref[:, pl.ds(lead, np_flat)]
        acc2 = jnp.dot(w2_ref[...], p2_ref[...],
                       preferred_element_type=jnp.float32)     # (Cout, Np)
        if not has_proj:                                       # identity skip
            acc2 = acc2 + x_ref[:, pl.ds(lead, np_flat)].astype(jnp.float32)
        out = jnp.maximum(acc2, 0.0) * mask                    # f32 epilogue
        o_ref[...] = out.astype(o_ref.dtype)

    flops = 2.0 * B * np_flat * (cmid * k1 + cout * k2)
    bytes_accessed = (x_big.size * 2 + w1cat.size * 2 + w2cat.size * 2
                      + mask.size * 4 + B * cout * np_flat * 2)

    return pl.pallas_call(
        kernel,
        out_shape=jax.ShapeDtypeStruct((B, cout, np_flat), jnp.bfloat16),
        grid=(B,),
        in_specs=[
            pl.BlockSpec((None, cin, npad), lambda b: (b, 0, 0)),   # per-batch x
            pl.BlockSpec((cmid, k1), lambda b: (0, 0)),             # resident W1
            pl.BlockSpec((cout, k2), lambda b: (0, 0)),             # resident W2
            pl.BlockSpec((1, np_flat), lambda b: (0, 0)),           # resident mask
        ],
        out_specs=pl.BlockSpec((None, cout, np_flat), lambda b: (b, 0, 0)),
        scratch_shapes=[
            pltpu.VMEM((k1, np_flat), jnp.bfloat16),   # P1 patches
            pltpu.VMEM((cmid, npad), jnp.bfloat16),    # padded-flat h
            pltpu.VMEM((k2, np_flat), jnp.bfloat16),   # P2 patches (+bias, +x)
        ],
        compiler_params=pltpu.CompilerParams(
            dimension_semantics=("parallel",),
            vmem_limit_bytes=_VMEM_LIMIT_BYTES,
        ),
        cost_estimate=pl.CostEstimate(flops=int(flops), transcendentals=0,
                                      bytes_accessed=int(bytes_accessed)),
    )(x_big, w1cat, w2cat, mask)


# ----------------------------------------------------------------------------
# Wrapper glue (layout plumbing only; all conv compute is in the kernel)
# ----------------------------------------------------------------------------
def maxpool3d_2(x):
    """MaxPool3d(kernel_size=2, stride=2) on (B, C, D, H, W)."""
    B, C, D, H, W = x.shape
    xr = x.reshape(B, C, D // 2, 2, H // 2, 2, W // 2, 2)
    return jnp.max(xr, axis=(3, 5, 7))


def _pad_flatten(x, lead):
    """(B,C,D,H,W) -> (B, C, lead + (D+2)(H+2)(W+2) + lead) bf16 (zero pad=1)."""
    B, C, D, H, W = x.shape
    xp = jnp.pad(x, ((0, 0), (0, 0), (1, 1), (1, 1), (1, 1)))
    xf = xp.reshape(B, C, (D + 2) * (H + 2) * (W + 2))
    xf = jnp.pad(xf, ((0, 0), (0, 0), (lead, lead)))
    return xf.astype(jnp.bfloat16)


def _extract_interior(y_flat, dims):
    """(B, C, Np) padded-flat -> (B, C, D, H, W)."""
    D, H, W = dims
    B, C, _ = y_flat.shape
    y = y_flat.reshape(B, C, D + 2, H + 2, W + 2)
    return y[:, :, 1:-1, 1:-1, 1:-1]


def _interior_mask(D, H, W):
    m = jnp.pad(jnp.ones((D, H, W), jnp.float32), ((1, 1), (1, 1), (1, 1)))
    return m.reshape(1, (D + 2) * (H + 2) * (W + 2))


def _conv3d_xla(x, w, b, padding):
    y = lax.conv_general_dilated(
        x, w, window_strides=(1, 1, 1), padding=padding,
        dimension_numbers=("NCDHW", "OIDHW", "NCDHW"))
    return y + b.reshape(1, -1, 1, 1, 1)


def _resnet_block_xla(x, raw):
    """Plain-XLA ResNet block (used for tiny deep stages and as reference)."""
    h = jax.nn.relu(_conv3d_xla(x, raw["w1"], raw["b1"], "SAME"))
    y = _conv3d_xla(h, raw["w2"], raw["b2"], "SAME")
    if "wsc" in raw:
        y = y + _conv3d_xla(x, raw["wsc"], raw["bsc"], "VALID")
    else:
        y = y + x
    return jax.nn.relu(y)


def resnet_stage(x, blocks):
    """ResNet3dBlocks forward. x: (B, C, D, H, W)."""
    B, C, D, H, W = x.shape
    Dp, Hp, Wp = D + 2, H + 2, W + 2
    np_flat = Dp * Hp * Wp
    if np_flat < _MIN_PALLAS_LANES:
        # Deep tiny stages stay in plain XLA (lane-dense output impossible).
        y = x.astype(jnp.float32)
        for blk in blocks:
            y = _resnet_block_xla(y, blk["raw"])
        return y.astype(jnp.bfloat16)

    M = Hp * Wp + Wp + 1
    lead = _round_up(M, 128)
    mask = _interior_mask(D, H, W)
    x_big = _pad_flatten(x, lead)
    y_flat = None
    for i, blk in enumerate(blocks):
        if i > 0:
            # previous output is already the zero-halo padded-flat layout;
            # only the lead/trail lanes need re-appending.
            x_big = jnp.pad(y_flat, ((0, 0), (0, 0), (lead, lead)))
        y_flat = fused_resnet_block(x_big, mask, blk["w1cat"], blk["w2cat"],
                                    dims=(D, H, W))
    return _extract_interior(y_flat, (D, H, W))


def encoder_forward(x, params):
    """Matches Encoder.forward: (identity, enc1, enc2, enc3, bottleneck)."""
    identity = x
    e = x
    outs = []
    for name in ("enc1", "enc2", "enc3", "enc4"):
        e = maxpool3d_2(e)                 # TODO(synk): fold pool into kernel
        e = resnet_stage(e, params[name])
        outs.append(e)
    return (identity,) + tuple(o.astype(jnp.float32) for o in outs)


def encoder_reference(x, raw_params):
    """Pure-XLA f32 reference of the same reconstructed module."""
    identity = x
    e = x
    outs = []
    for name in ("enc1", "enc2", "enc3", "enc4"):
        e = maxpool3d_2(e)
        for raw in raw_params[name]:
            e = _resnet_block_xla(e, raw)
        outs.append(e)
    return (identity,) + tuple(outs)


# ----------------------------------------------------------------------------
# Parameters: torch-layout init + one-time folding (outside jit)
# ----------------------------------------------------------------------------
def init_conv3d_params(key, c_in, c_out, ksize, bias):
    """PyTorch layout: weight (Cout, Cin, kD, kH, kW), bias (Cout,)."""
    fan_in = c_in * ksize ** 3
    kw_, kb_ = jax.random.split(key)
    w = jax.random.normal(kw_, (c_out, c_in, ksize, ksize, ksize),
                          jnp.float32) / jnp.sqrt(fan_in)
    b = (jax.random.normal(kb_, (c_out,), jnp.float32) * 0.01 if bias
         else jnp.zeros((c_out,), jnp.float32))
    return w, b


def init_resblock_params(key, c_in, c_out, bias):
    k1, k2, k3 = jax.random.split(key, 3)
    w1, b1 = init_conv3d_params(k1, c_in, c_out, 3, bias)
    w2, b2 = init_conv3d_params(k2, c_out, c_out, 3, bias)
    raw = {"w1": w1, "b1": b1, "w2": w2, "b2": b2}
    if c_in != c_out:
        wsc, bsc = init_conv3d_params(k3, c_in, c_out, 1, bias)
        raw["wsc"], raw["bsc"] = wsc, bsc
    return raw


def init_encoder_params(key, *, feat_channels_0, feat_channels_1,
                        feat_channels_2, feat_channels_3, out_channels, bias,
                        num_resnet_block):
    keys = jax.random.split(key, 4)

    def stage(k, cin, cout):
        ks = jax.random.split(k, num_resnet_block)
        blocks = [init_resblock_params(ks[0], cin, cout, bias)]
        for i in range(1, num_resnet_block):
            blocks.append(init_resblock_params(ks[i], cout, cout, bias))
        return blocks

    return {"enc1": stage(keys[0], feat_channels_0, feat_channels_1),
            "enc2": stage(keys[1], feat_channels_1, feat_channels_2),
            "enc3": stage(keys[2], feat_channels_2, feat_channels_3),
            "enc4": stage(keys[3], feat_channels_3, out_channels)}


def _fold_conv_w(w, c_pad):
    """(Cout, Cin, 3,3,3) -> (Cout, 27*c_pad): tap-major (kd,kh,kw), channel
    minor, each channel block zero-padded to c_pad (keeps the in-kernel
    P-scratch stores sublane-aligned).  No kernel flip (cross-correlation)."""
    cout, cin = w.shape[:2]
    wt = w.reshape(cout, cin, 27).transpose(0, 2, 1)          # (Cout, 27, Cin)
    wt = jnp.pad(wt, ((0, 0), (0, 0), (0, c_pad - cin)))
    return wt.reshape(cout, 27 * c_pad)


def prepare_block(raw):
    """Fold / concat / cast weights once (outside jit)."""
    w1, b1, w2, b2 = raw["w1"], raw["b1"], raw["w2"], raw["b2"]
    cmid, cin = w1.shape[:2]
    cout = w2.shape[0]
    cin_pad, cmid_pad = _round_up(cin, 8), _round_up(cmid, 8)
    proj = "wsc" in raw

    bias1 = jnp.zeros((cmid, 8), jnp.float32).at[:, 0].set(b1)
    w1cat = jnp.concatenate([_fold_conv_w(w1, cin_pad), bias1], axis=1)

    b_total = b2 + (raw["bsc"] if proj else 0.0)
    bias2 = jnp.zeros((cout, 8), jnp.float32).at[:, 0].set(b_total)
    parts = [_fold_conv_w(w2, cmid_pad), bias2]
    if proj:
        wsc = raw["wsc"].reshape(cout, cin)
        parts.append(jnp.pad(wsc, ((0, 0), (0, cin_pad - cin))))
    w2cat = jnp.concatenate(parts, axis=1)

    return {"w1cat": w1cat.astype(jnp.bfloat16),
            "w2cat": w2cat.astype(jnp.bfloat16),
            "raw": raw}


def prepare_encoder_params(raw_params):
    return {name: [prepare_block(blk) for blk in blocks]
            for name, blocks in raw_params.items()}


# ----------------------------------------------------------------------------
if __name__ == "__main__":
    key = jax.random.PRNGKey(0)
    kx, kp = jax.random.split(key)

    # small shapes: NCDHW, like the PyTorch module input
    B, C0, D, H, W = 2, 2, 16, 16, 16
    x = jax.random.normal(kx, (B, C0, D, H, W), jnp.float32)

    raw_params = init_encoder_params(
        kp, feat_channels_0=2, feat_channels_1=4, feat_channels_2=8,
        feat_channels_3=8, out_channels=16, bias=True, num_resnet_block=1)
    params = prepare_encoder_params(raw_params)       # folded ONCE, outside jit

    fwd = jax.jit(encoder_forward)
    outs = fwd(x, params)
    jax.block_until_ready(outs)
    identity, enc1, enc2, enc3, bottleneck = outs

    assert identity.shape == (B, C0, D, H, W)
    assert enc1.shape == (B, 4, 8, 8, 8)
    assert enc2.shape == (B, 8, 4, 4, 4)
    assert enc3.shape == (B, 8, 2, 2, 2)
    assert bottleneck.shape == (B, 16, 1, 1, 1)

    # numerical check against a pure-XLA f32 reference (bf16 activations in
    # the Pallas path -> loose tolerance)
    ref = jax.jit(encoder_reference)(x, raw_params)
    jax.block_until_ready(ref)
    for got, want, name in zip(outs[1:], ref[1:],
                               ("enc1", "enc2", "enc3", "bottleneck")):
        err = float(jnp.max(jnp.abs(got.astype(jnp.float32) - want)))
        scale = float(jnp.max(jnp.abs(want))) + 1e-6
        assert err <= 0.1 * scale + 0.05, f"{name}: err={err:.4f} scale={scale:.4f}"

    print("KERNEL_OK")
</pallas_src>

<mosaic_0001>
module attributes {stable_mosaic.version = 11 : i64} {
  func.func @kernel(%arg0: i32, %arg1: memref<1x2x1256xbf16, #tpu.memory_space<vmem>>, %arg2: memref<4x224xbf16, #tpu.memory_space<vmem>>, %arg3: memref<4x232xbf16, #tpu.memory_space<vmem>>, %arg4: memref<1x1000xf32, #tpu.memory_space<vmem>>, %arg5: memref<1x4x1000xbf16, #tpu.memory_space<vmem>>, %arg6: memref<224x1000xbf16, #tpu.memory_space<vmem>>, %arg7: memref<4x1256xbf16, #tpu.memory_space<vmem>>, %arg8: memref<232x1000xbf16, #tpu.memory_space<vmem>>) attributes {dimension_semantics = [#tpu.dimension_semantics<parallel>], iteration_bounds = array<i64: 2>, scalar_prefetch = 0 : i64, scratch_operands = 3 : i64, tpu.core_type = #tpu.core_type<tc>, window_params = [{transform_indices = @transform_0, window_bounds = array<i64: 1, 2, 1256>}, {pipeline_mode = #tpu.pipeline_mode<synchronous>, transform_indices = @transform_1, window_bounds = array<i64: 4, 224>}, {pipeline_mode = #tpu.pipeline_mode<synchronous>, transform_indices = @transform_2, window_bounds = array<i64: 4, 232>}, {pipeline_mode = #tpu.pipeline_mode<synchronous>, transform_indices = @transform_3, window_bounds = array<i64: 1, 1000>}, {transform_indices = @transform_4, window_bounds = array<i64: 1, 4, 1000>}]} {
    %cst = arith.constant 0.000000e+00 : bf16
    %0 = vector.broadcast %cst : bf16 to vector<224x1000xbf16>
    %c0 = arith.constant 0 : index
    %c0_0 = arith.constant 0 : index
    %1 = vector.load %arg6[%c0, %c0_0] : memref<224x1000xbf16, #tpu.memory_space<vmem>>, vector<224x1000xbf16>
    tpu.vector_store %arg6[%c0, %c0_0], %0 {strides = array<i32>} : memref<224x1000xbf16, #tpu.memory_space<vmem>>, vector<224x1000xbf16>,
    %cst_1 = arith.constant 0.000000e+00 : bf16
    %2 = vector.broadcast %cst_1 : bf16 to vector<232x1000xbf16>
    %c0_2 = arith.constant 0 : index
    %c0_3 = arith.constant 0 : index
    %3 = vector.load %arg8[%c0_2, %c0_3] : memref<232x1000xbf16, #tpu.memory_space<vmem>>, vector<232x1000xbf16>
    tpu.vector_store %arg8[%c0_2, %c0_3], %2 {strides = array<i32>} : memref<232x1000xbf16, #tpu.memory_space<vmem>>, vector<232x1000xbf16>,
    %cst_4 = arith.constant 0.000000e+00 : bf16
    %4 = vector.broadcast %cst_4 : bf16 to vector<4x1256xbf16>
    %c0_5 = arith.constant 0 : index
    %c0_6 = arith.constant 0 : index
    %5 = vector.load %arg7[%c0_5, %c0_6] : memref<4x1256xbf16, #tpu.memory_space<vmem>>, vector<4x1256xbf16>
    tpu.vector_store %arg7[%c0_5, %c0_6], %4 {strides = array<i32>} : memref<4x1256xbf16, #tpu.memory_space<vmem>>, vector<4x1256xbf16>,
    %cst_7 = arith.constant 1.000000e+00 : bf16
    %6 = vector.broadcast %cst_7 : bf16 to vector<1x1000xbf16>
    %c216 = arith.constant 216 : index
    %c0_8 = arith.constant 0 : index
    %7 = vector.load %arg6[%c216, %c0_8] : memref<224x1000xbf16, #tpu.memory_space<vmem>>, vector<1x1000xbf16>
    tpu.vector_store %arg6[%c216, %c0_8], %6 {strides = array<i32>} : memref<224x1000xbf16, #tpu.memory_space<vmem>>, vector<1x1000xbf16>,
    %cst_9 = arith.constant 1.000000e+00 : bf16
    %8 = vector.broadcast %cst_9 : bf16 to vector<1x1000xbf16>
    %c216_10 = arith.constant 216 : index
    %c0_11 = arith.constant 0 : index
    %9 = vector.load %arg8[%c216_10, %c0_11] : memref<232x1000xbf16, #tpu.memory_space<vmem>>, vector<1x1000xbf16>
    tpu.vector_store %arg8[%c216_10, %c0_11], %8 {strides = array<i32>} : memref<232x1000xbf16, #tpu.memory_space<vmem>>, vector<1x1000xbf16>,
    %c0_12 = arith.constant 0 : index
    %c0_13 = arith.constant 0 : index
    %10 = vector.load %arg4[%c0_12, %c0_13] : memref<1x1000xf32, #tpu.memory_space<vmem>>, vector<1x1000xf32>
    %c0_14 = arith.constant 0 : index
    %c0_15 = arith.constant 0 : index
    %c17 = arith.constant 17 : index
    %11 = vector.load %arg1[%c0_14, %c0_15, %c17] : memref<1x2x1256xbf16, #tpu.memory_space<vmem>>, vector<1x2x1000xbf16>
    %12 = vector.shape_cast %11 : vector<1x2x1000xbf16> to vector<2x1000xbf16>
    %c0_16 = arith.constant 0 : index
    %c0_17 = arith.constant 0 : index
    %13 = vector.load %arg6[%c0_16, %c0_17] : memref<224x1000xbf16, #tpu.memory_space<vmem>>, vector<2x1000xbf16>
    tpu.vector_store %arg6[%c0_16, %c0_17], %12 {strides = array<i32>} : memref<224x1000xbf16, #tpu.memory_space<vmem>>, vector<2x1000xbf16>,
    %c0_18 = arith.constant 0 : index
    %c0_19 = arith.constant 0 : index
    %c18 = arith.constant 18 : index
    %14 = vector.load %arg1[%c0_18, %c0_19, %c18] : memref<1x2x1256xbf16, #tpu.memory_space<vmem>>, vector<1x2x1000xbf16>
    %15 = vector.shape_cast %14 : vector<1x2x1000xbf16> to vector<2x1000xbf16>
    %c8 = arith.constant 8 : index
    %c0_20 = arith.constant 0 : index
    %16 = vector.load %arg6[%c8, %c0_20] : memref<224x1000xbf16, #tpu.memory_space<vmem>>, vector<2x1000xbf16>
    tpu.vector_store %arg6[%c8, %c0_20], %15 {strides = array<i32>} : memref<224x1000xbf16, #tpu.memory_space<vmem>>, vector<2x1000xbf16>,
    %c0_21 = arith.constant 0 : index
    %c0_22 = arith.constant 0 : index
    %c19 = arith.constant 19 : index
    %17 = vector.load %arg1[%c0_21, %c0_22, %c19] : memref<1x2x1256xbf16, #tpu.memory_space<vmem>>, vector<1x2x1000xbf16>
    %18 = vector.shape_cast %17 : vector<1x2x1000xbf16> to vector<2x1000xbf16>
    %c16 = arith.constant 16 : index
    %c0_23 = arith.constant 0 : index
    %19 = vector.load %arg6[%c16, %c0_23] : memref<224x1000xbf16, #tpu.memory_space<vmem>>, vector<2x1000xbf16>
    tpu.vector_store %arg6[%c16, %c0_23], %18 {strides = array<i32>} : memref<224x1000xbf16, #tpu.memory_space<vmem>>, vector<2x1000xbf16>,
    %c0_24 = arith.constant 0 : index
    %c0_25 = arith.constant 0 : index
    %c27 = arith.constant 27 : index
    %20 = vector.load %arg1[%c0_24, %c0_25, %c27] : memref<1x2x1256xbf16, #tpu.memory_space<vmem>>, vector<1x2x1000xbf16>
    %21 = vector.shape_cast %20 : vector<1x2x1000xbf16> to vector<2x1000xbf16>
    %c24 = arith.constant 24 : index
    %c0_26 = arith.constant 0 : index
    %22 = vector.load %arg6[%c24, %c0_26] : memref<224x1000xbf16, #tpu.memory_space<vmem>>, vector<2x1000xbf16>
    tpu.vector_store %arg6[%c24, %c0_26], %21 {strides = array<i32>} : memref<224x1000xbf16, #tpu.memory_space<vmem>>, vector<2x1000xbf16>,
    %c0_27 = arith.constant 0 : index
    %c0_28 = arith.constant 0 : index
    %c28 = arith.constant 28 : index
    %23 = vector.load %arg1[%c0_27, %c0_28, %c28] : memref<1x2x1256xbf16, #tpu.memory_space<vmem>>, vector<1x2x1000xbf16>
    %24 = vector.shape_cast %23 : vector<1x2x1000xbf16> to vector<2x1000xbf16>
    %c32 = arith.constant 32 : index
    %c0_29 = arith.constant 0 : index
    %25 = vector.load %arg6[%c32, %c0_29] : memref<224x1000xbf16, #tpu.memory_space<vmem>>, vector<2x1000xbf16>
    tpu.vector_store %arg6[%c32, %c0_29], %24 {strides = array<i32>} : memref<224x1000xbf16, #tpu.memory_space<vmem>>, vector<2x1000xbf16>,
    %c0_30 = arith.constant 0 : index
    %c0_31 = arith.constant 0 : index
    %c29 = arith.constant 29 : index
    %26 = vector.load %arg1[%c0_30, %c0_31, %c29] : memref<1x2x1256xbf16, #tpu.memory_space<vmem>>, vector<1x2x1000xbf16>
    %27 = vector.shape_cast %26 : vector<1x2x1000xbf16> to vector<2x1000xbf16>
    %c40 = arith.constant 40 : index
    %c0_32 = arith.constant 0 : index
    %28 = vector.load %arg6[%c40, %c0_32] : memref<224x1000xbf16, #tpu.memory_space<vmem>>, vector<2x1000xbf16>
    tpu.vector_store %arg6[%c40, %c0_32], %27 {strides = array<i32>} : memref<224x1000xbf16, #tpu.memory_space<vmem>>, vector<2x1000xbf16>,
    %c0_33 = arith.constant 0 : index
    %c0_34 = arith.constant 0 : index
    %c37 = arith.constant 37 : index
    %29 = vector.load %arg1[%c0_33, %c0_34, %c37] : memref<1x2x1256xbf16, #tpu.memory_space<vmem>>, vector<1x2x1000xbf16>
    %30 = vector.shape_cast %29 : vector<1x2x1000xbf16> to vector<2x1000xbf16>
    %c48 = arith.constant 48 : index
    %c0_35 = arith.constant 0 : index
    %31 = vector.load %arg6[%c48, %c0_35] : memref<224x1000xbf16, #tpu.memory_space<vmem>>, vector<2x1000xbf16>
    tpu.vector_store %arg6[%c48, %c0_35], %30 {strides = array<i32>} : memref<224x1000xbf16, #tpu.memory_space<vmem>>, vector<2x1000xbf16>,
    %c0_36 = arith.constant 0 : index
    %c0_37 = arith.constant 0 : index
    %c38 = arith.constant 38 : index
    %32 = vector.load %arg1[%c0_36, %c0_37, %c38] : memref<1x2x1256xbf16, #tpu.memory_space<vmem>>, vector<1x2x1000xbf16>
    %33 = vector.shape_cast %32 : vector<1x2x1000xbf16> to vector<2x1000xbf16>
    %c56 = arith.constant 56 : index
    %c0_38 = arith.constant 0 : index
    %34 = vector.load %arg6[%c56, %c0_38] : memref<224x1000xbf16, #tpu.memory_space<vmem>>, vector<2x1000xbf16>
    tpu.vector_store %arg6[%c56, %c0_38], %33 {strides = array<i32>} : memref<224x1000xbf16, #tpu.memory_space<vmem>>, vector<2x1000xbf16>,
    %c0_39 = arith.constant 0 : index
    %c0_40 = arith.constant 0 : index
    %c39 = arith.constant 39 : index
    %35 = vector.load %arg1[%c0_39, %c0_40, %c39] : memref<1x2x1256xbf16, #tpu.memory_space<vmem>>, vector<1x2x1000xbf16>
    %36 = vector.shape_cast %35 : vector<1x2x1000xbf16> to vector<2x1000xbf16>
    %c64 = arith.constant 64 : index
    %c0_41 = arith.constant 0 : index
    %37 = vector.load %arg6[%c64, %c0_41] : memref<224x1000xbf16, #tpu.memory_space<vmem>>, vector<2x1000xbf16>
    tpu.vector_store %arg6[%c64, %c0_41], %36 {strides = array<i32>} : memref<224x1000xbf16, #tpu.memory_space<vmem>>, vector<2x1000xbf16>,
    %c0_42 = arith.constant 0 : index
    %c0_43 = arith.constant 0 : index
    %c117 = arith.constant 117 : index
    %38 = vector.load %arg1[%c0_42, %c0_43, %c117] : memref<1x2x1256xbf16, #tpu.memory_space<vmem>>, vector<1x2x1000xbf16>
    %39 = vector.shape_cast %38 : vector<1x2x1000xbf16> to vector<2x1000xbf16>
    %c72 = arith.constant 72 : index
    %c0_44 = arith.constant 0 : index
    %40 = vector.load %arg6[%c72, %c0_44] : memref<224x1000xbf16, #tpu.memory_space<vmem>>, vector<2x1000xbf16>
    tpu.vector_store %arg6[%c72, %c0_44], %39 {strides = array<i32>} : memref<224x1000xbf16, #tpu.memory_space<vmem>>, vector<2x1000xbf16>,
    %c0_45 = arith.constant 0 : index
    %c0_46 = arith.constant 0 : index
    %c118 = arith.constant 118 : index
    %41 = vector.load %arg1[%c0_45, %c0_46, %c118] : memref<1x2x1256xbf16, #tpu.memory_space<vmem>>, vector<1x2x1000xbf16>
    %42 = vector.shape_cast %41 : vector<1x2x1000xbf16> to vector<2x1000xbf16>
    %c80 = arith.constant 80 : index
    %c0_47 = arith.constant 0 : index
    %43 = vector.load %arg6[%c80, %c0_47] : memref<224x1000xbf16, #tpu.memory_space<vmem>>, vector<2x1000xbf16>
    tpu.vector_store %arg6[%c80, %c0_47], %42 {strides = array<i32>} : memref<224x1000xbf16, #tpu.memory_space<vmem>>, vector<2x1000xbf16>,
    %c0_48 = arith.constant 0 : index
    %c0_49 = arith.constant 0 : index
    %c119 = arith.constant 119 : index
    %44 = vector.load %arg1[%c0_48, %c0_49, %c119] : memref<1x2x1256xbf16, #tpu.memory_space<vmem>>, vector<1x2x1000xbf16>
    %45 = vector.shape_cast %44 : vector<1x2x1000xbf16> to vector<2x1000xbf16>
    %c88 = arith.constant 88 : index
    %c0_50 = arith.constant 0 : index
    %46 = vector.load %arg6[%c88, %c0_50] : memref<224x1000xbf16, #tpu.memory_space<vmem>>, vector<2x1000xbf16>
    tpu.vector_store %arg6[%c88, %c0_50], %45 {strides = array<i32>} : memref<224x1000xbf16, #tpu.memory_space<vmem>>, vector<2x1000xbf16>,
    %c0_51 = arith.constant 0 : index
    %c0_52 = arith.constant 0 : index
    %c127 = arith.constant 127 : index
    %47 = vector.load %arg1[%c0_51, %c0_52, %c127] : memref<1x2x1256xbf16, #tpu.memory_space<vmem>>, vector<1x2x1000xbf16>
    %48 = vector.shape_cast %47 : vector<1x2x1000xbf16> to vector<2x1000xbf16>
    %c96 = arith.constant 96 : index
    %c0_53 = arith.constant 0 : index
    %49 = vector.load %arg6[%c96, %c0_53] : memref<224x1000xbf16, #tpu.memory_space<vmem>>, vector<2x1000xbf16>
    tpu.vector_store %arg6[%c96, %c0_53], %48 {strides = array<i32>} : memref<224x1000xbf16, #tpu.memory_space<vmem>>, vector<2x1000xbf16>,
    %c0_54 = arith.constant 0 : index
    %c0_55 = arith.constant 0 : index
    %c128 = arith.constant 128 : index
    %50 = vector.load %arg1[%c0_54, %c0_55, %c128] : memref<1x2x1256xbf16, #tpu.memory_space<vmem>>, vector<1x2x1000xbf16>
    %51 = vector.shape_cast %50 : vector<1x2x1000xbf16> to vector<2x1000xbf16>
    %c104 = arith.constant 104 : index
    %c0_56 = arith.constant 0 : index
    %52 = vector.load %arg6[%c104, %c0_56] : memref<224x1000xbf16, #tpu.memory_space<vmem>>, vector<2x1000xbf16>
    tpu.vector_store %arg6[%c104, %c0_56], %51 {strides = array<i32>} : memref<224x1000xbf16, #tpu.memory_space<vmem>>, vector<2x1000xbf16>,
    %c0_57 = arith.constant 0 : index
    %c0_58 = arith.constant 0 : index
    %c129 = arith.constant 129 : index
    %53 = vector.load %arg1[%c0_57, %c0_58, %c129] : memref<1x2x1256xbf16, #tpu.memory_space<vmem>>, vector<1x2x1000xbf16>
    %54 = vector.shape_cast %53 : vector<1x2x1000xbf16> to vector<2x1000xbf16>
    %c112 = arith.constant 112 : index
    %c0_59 = arith.constant 0 : index
    %55 = vector.load %arg6[%c112, %c0_59] : memref<224x1000xbf16, #tpu.memory_space<vmem>>, vector<2x1000xbf16>
    tpu.vector_store %arg6[%c112, %c0_59], %54 {strides = array<i32>} : memref<224x1000xbf16, #tpu.memory_space<vmem>>, vector<2x1000xbf16>,
    %c0_60 = arith.constant 0 : index
    %c0_61 = arith.constant 0 : index
    %c137 = arith.constant 137 : index
    %56 = vector.load %arg1[%c0_60, %c0_61, %c137] : memref<1x2x1256xbf16, #tpu.memory_space<vmem>>, vector<1x2x1000xbf16>
    %57 = vector.shape_cast %56 : vector<1x2x1000xbf16> to vector<2x1000xbf16>
    %c120 = arith.constant 120 : index
    %c0_62 = arith.constant 0 : index
    %58 = vector.load %arg6[%c120, %c0_62] : memref<224x1000xbf16, #tpu.memory_space<vmem>>, vector<2x1000xbf16>
    tpu.vector_store %arg6[%c120, %c0_62], %57 {strides = array<i32>} : memref<224x1000xbf16, #tpu.memory_space<vmem>>, vector<2x1000xbf16>,
    %c0_63 = arith.constant 0 : index
    %c0_64 = arith.constant 0 : index
    %c138 = arith.constant 138 : index
    %59 = vector.load %arg1[%c0_63, %c0_64, %c138] : memref<1x2x1256xbf16, #tpu.memory_space<vmem>>, vector<1x2x1000xbf16>
    %60 = vector.shape_cast %59 : vector<1x2x1000xbf16> to vector<2x1000xbf16>
    %c128_65 = arith.constant 128 : index
    %c0_66 = arith.constant 0 : index
    %61 = vector.load %arg6[%c128_65, %c0_66] : memref<224x1000xbf16, #tpu.memory_space<vmem>>, vector<2x1000xbf16>
    tpu.vector_store %arg6[%c128_65, %c0_66], %60 {strides = array<i32>} : memref<224x1000xbf16, #tpu.memory_space<vmem>>, vector<2x1000xbf16>,
    %c0_67 = arith.constant 0 : index
    %c0_68 = arith.constant 0 : index
    %c139 = arith.constant 139 : index
    %62 = vector.load %arg1[%c0_67, %c0_68, %c139] : memref<1x2x1256xbf16, #tpu.memory_space<vmem>>, vector<1x2x1000xbf16>
    %63 = vector.shape_cast %62 : vector<1x2x1000xbf16> to vector<2x1000xbf16>
    %c136 = arith.constant 136 : index
    %c0_69 = arith.constant 0 : index
    %64 = vector.load %arg6[%c136, %c0_69] : memref<224x1000xbf16, #tpu.memory_space<vmem>>, vector<2x1000xbf16>
    tpu.vector_store %arg6[%c136, %c0_69], %63 {strides = array<i32>} : memref<224x1000xbf16, #tpu.memory_space<vmem>>, vector<2x1000xbf16>,
    %c0_70 = arith.constant 0 : index
    %c0_71 = arith.constant 0 : index
    %c217 = arith.constant 217 : index
    %65 = vector.load %arg1[%c0_70, %c0_71, %c217] : memref<1x2x1256xbf16, #tpu.memory_space<vmem>>, vector<1x2x1000xbf16>
    %66 = vector.shape_cast %65 : vector<1x2x1000xbf16> to vector<2x1000xbf16>
    %c144 = arith.constant 144 : index
    %c0_72 = arith.constant 0 : index
    %67 = vector.load %arg6[%c144, %c0_72] : memref<224x1000xbf16, #tpu.memory_space<vmem>>, vector<2x1000xbf16>
    tpu.vector_store %arg6[%c144, %c0_72], %66 {strides = array<i32>} : memref<224x1000xbf16, #tpu.memory_space<vmem>>, vector<2x1000xbf16>,
    %c0_73 = arith.constant 0 : index
    %c0_74 = arith.constant 0 : index
    %c218 = arith.constant 218 : index
    %68 = vector.load %arg1[%c0_73, %c0_74, %c218] : memref<1x2x1256xbf16, #tpu.memory_space<vmem>>, vector<1x2x1000xbf16>
    %69 = vector.shape_cast %68 : vector<1x2x1000xbf16> to vector<2x1000xbf16>
    %c152 = arith.constant 152 : index
    %c0_75 = arith.constant 0 : index
    %70 = vector.load %arg6[%c152, %c0_75] : memref<224x1000xbf16, #tpu.memory_space<vmem>>, vector<2x1000xbf16>
    tpu.vector_store %arg6[%c152, %c0_75], %69 {strides = array<i32>} : memref<224x1000xbf16, #tpu.memory_space<vmem>>, vector<2x1000xbf16>,
    %c0_76 = arith.constant 0 : index
    %c0_77 = arith.constant 0 : index
    %c219 = arith.constant 219 : index
    %71 = vector.load %arg1[%c0_76, %c0_77, %c219] : memref<1x2x1256xbf16, #tpu.memory_space<vmem>>, vector<1x2x1000xbf16>
    %72 = vector.shape_cast %71 : vector<1x2x1000xbf16> to vector<2x1000xbf16>
    %c160 = arith.constant 160 : index
    %c0_78 = arith.constant 0 : index
    %73 = vector.load %arg6[%c160, %c0_78] : memref<224x1000xbf16, #tpu.memory_space<vmem>>, vector<2x1000xbf16>
    tpu.vector_store %arg6[%c160, %c0_78], %72 {strides = array<i32>} : memref<224x1000xbf16, #tpu.memory_space<vmem>>, vector<2x1000xbf16>,
    %c0_79 = arith.constant 0 : index
    %c0_80 = arith.constant 0 : index
    %c227 = arith.constant 227 : index
    %74 = vector.load %arg1[%c0_79, %c0_80, %c227] : memref<1x2x1256xbf16, #tpu.memory_space<vmem>>, vector<1x2x1000xbf16>
    %75 = vector.shape_cast %74 : vector<1x2x1000xbf16> to vector<2x1000xbf16>
    %c168 = arith.constant 168 : index
    %c0_81 = arith.constant 0 : index
    %76 = vector.load %arg6[%c168, %c0_81] : memref<224x1000xbf16, #tpu.memory_space<vmem>>, vector<2x1000xbf16>
    tpu.vector_store %arg6[%c168, %c0_81], %75 {strides = array<i32>} : memref<224x1000xbf16, #tpu.memory_space<vmem>>, vector<2x1000xbf16>,
    %c0_82 = arith.constant 0 : index
    %c0_83 = arith.constant 0 : index
    %c228 = arith.constant 228 : index
    %77 = vector.load %arg1[%c0_82, %c0_83, %c228] : memref<1x2x1256xbf16, #tpu.memory_space<vmem>>, vector<1x2x1000xbf16>
    %78 = vector.shape_cast %77 : vector<1x2x1000xbf16> to vector<2x1000xbf16>
    %c176 = arith.constant 176 : index
    %c0_84 = arith.constant 0 : index
    %79 = vector.load %arg6[%c176, %c0_84] : memref<224x1000xbf16, #tpu.memory_space<vmem>>, vector<2x1000xbf16>
    tpu.vector_store %arg6[%c176, %c0_84], %78 {strides = array<i32>} : memref<224x1000xbf16, #tpu.memory_space<vmem>>, vector<2x1000xbf16>,
    %c0_85 = arith.constant 0 : index
    %c0_86 = arith.constant 0 : index
    %c229 = arith.constant 229 : index
    %80 = vector.load %arg1[%c0_85, %c0_86, %c229] : memref<1x2x1256xbf16, #tpu.memory_space<vmem>>, vector<1x2x1000xbf16>
    %81 = vector.shape_cast %80 : vector<1x2x1000xbf16> to vector<2x1000xbf16>
    %c184 = arith.constant 184 : index
    %c0_87 = arith.constant 0 : index
    %82 = vector.load %arg6[%c184, %c0_87] : memref<224x1000xbf16, #tpu.memory_space<vmem>>, vector<2x1000xbf16>
    tpu.vector_store %arg6[%c184, %c0_87], %81 {strides = array<i32>} : memref<224x1000xbf16, #tpu.memory_space<vmem>>, vector<2x1000xbf16>,
    %c0_88 = arith.constant 0 : index
    %c0_89 = arith.constant 0 : index
    %c237 = arith.constant 237 : index
    %83 = vector.load %arg1[%c0_88, %c0_89, %c237] : memref<1x2x1256xbf16, #tpu.memory_space<vmem>>, vector<1x2x1000xbf16>
    %84 = vector.shape_cast %83 : vector<1x2x1000xbf16> to vector<2x1000xbf16>
    %c192 = arith.constant 192 : index
    %c0_90 = arith.constant 0 : index
    %85 = vector.load %arg6[%c192, %c0_90] : memref<224x1000xbf16, #tpu.memory_space<vmem>>, vector<2x1000xbf16>
    tpu.vector_store %arg6[%c192, %c0_90], %84 {strides = array<i32>} : memref<224x1000xbf16, #tpu.memory_space<vmem>>, vector<2x1000xbf16>,
    %c0_91 = arith.constant 0 : index
    %c0_92 = arith.constant 0 : index
    %c238 = arith.constant 238 : index
    %86 = vector.load %arg1[%c0_91, %c0_92, %c238] : memref<1x2x1256xbf16, #tpu.memory_space<vmem>>, vector<1x2x1000xbf16>
    %87 = vector.shape_cast %86 : vector<1x2x1000xbf16> to vector<2x1000xbf16>
    %c200 = arith.constant 200 : index
    %c0_93 = arith.constant 0 : index
    %88 = vector.load %arg6[%c200, %c0_93] : memref<224x1000xbf16, #tpu.memory_space<vmem>>, vector<2x1000xbf16>
    tpu.vector_store %arg6[%c200, %c0_93], %87 {strides = array<i32>} : memref<224x1000xbf16, #tpu.memory_space<vmem>>, vector<2x1000xbf16>,
    %c0_94 = arith.constant 0 : index
    %c0_95 = arith.constant 0 : index
    %c239 = arith.constant 239 : index
    %89 = vector.load %arg1[%c0_94, %c0_95, %c239] : memref<1x2x1256xbf16, #tpu.memory_space<vmem>>, vector<1x2x1000xbf16>
    %90 = vector.shape_cast %89 : vector<1x2x1000xbf16> to vector<2x1000xbf16>
    %c208 = arith.constant 208 : index
    %c0_96 = arith.constant 0 : index
    %91 = vector.load %arg6[%c208, %c0_96] : memref<224x1000xbf16, #tpu.memory_space<vmem>>, vector<2x1000xbf16>
    tpu.vector_store %arg6[%c208, %c0_96], %90 {strides = array<i32>} : memref<224x1000xbf16, #tpu.memory_space<vmem>>, vector<2x1000xbf16>,
    %c0_97 = arith.constant 0 : index
    %c0_98 = arith.constant 0 : index
    %92 = vector.load %arg2[%c0_97, %c0_98] : memref<4x224xbf16, #tpu.memory_space<vmem>>, vector<4x224xbf16>
    %c0_99 = arith.constant 0 : index
    %c0_100 = arith.constant 0 : index
    %93 = vector.load %arg6[%c0_99, %c0_100] : memref<224x1000xbf16, #tpu.memory_space<vmem>>, vector<224x1000xbf16>
    %cst_101 = arith.constant dense<0.000000e+00> : vector<4x1000xf32>
    %94 = tpu.matmul %92, %93, %cst_101 {dimension_numbers = #tpu.dot_dimension_numbers<[1], [0], [0], [1], [0, 0, 1, 1], [], []>} : vector<4x224xbf16>, vector<224x1000xbf16>, vector<4x1000xf32> -> vector<4x1000xf32>
    %cst_102 = arith.constant 0.000000e+00 : f32
    %95 = vector.broadcast %cst_102 : f32 to vector<4x1000xf32>
    %96 = arith.maximumf %94, %95 : vector<4x1000xf32>
    %97 = vector.broadcast %10 : vector<1x1000xf32> to vector<4x1000xf32>
    %98 = arith.mulf %96, %97 : vector<4x1000xf32>
    %99 = arith.truncf %98 : vector<4x1000xf32> to vector<4x1000xbf16>
    %c0_103 = arith.constant 0 : index
    %c128_104 = arith.constant 128 : index
    %100 = vector.load %arg7[%c0_103, %c128_104] : memref<4x1256xbf16, #tpu.memory_space<vmem>>, vector<4x1000xbf16>
    tpu.vector_store %arg7[%c0_103, %c128_104], %99 {strides = array<i32>} : memref<4x1256xbf16, #tpu.memory_space<vmem>>, vector<4x1000xbf16>,
    %c0_105 = arith.constant 0 : index
    %c17_106 = arith.constant 17 : index
    %101 = vector.load %arg7[%c0_105, %c17_106] : memref<4x1256xbf16, #tpu.memory_space<vmem>>, vector<4x1000xbf16>
    %c0_107 = arith.constant 0 : index
    %c0_108 = arith.constant 0 : index
    %102 = vector.load %arg8[%c0_107, %c0_108] : memref<232x1000xbf16, #tpu.memory_space<vmem>>, vector<4x1000xbf16>
    tpu.vector_store %arg8[%c0_107, %c0_108], %101 {strides = array<i32>} : memref<232x1000xbf16, #tpu.memory_space<vmem>>, vector<4x1000xbf16>,
    %c0_109 = arith.constant 0 : index
    %c18_110 = arith.constant 18 : index
    %103 = vector.load %arg7[%c0_109, %c18_110] : memref<4x1256xbf16, #tpu.memory_space<vmem>>, vector<4x1000xbf16>
    %c8_111 = arith.constant 8 : index
    %c0_112 = arith.constant 0 : index
    %104 = vector.load %arg8[%c8_111, %c0_112] : memref<232x1000xbf16, #tpu.memory_space<vmem>>, vector<4x1000xbf16>
    tpu.vector_store %arg8[%c8_111, %c0_112], %103 {strides = array<i32>} : memref<232x1000xbf16, #tpu.memory_space<vmem>>, vector<4x1000xbf16>,
    %c0_113 = arith.constant 0 : index
    %c19_114 = arith.constant 19 : index
    %105 = vector.load %arg7[%c0_113, %c19_114] : memref<4x1256xbf16, #tpu.memory_space<vmem>>, vector<4x1000xbf16>
    %c16_115 = arith.constant 16 : index
    %c0_116 = arith.constant 0 : index
    %106 = vector.load %arg8[%c16_115, %c0_116] : memref<232x1000xbf16, #tpu.memory_space<vmem>>, vector<4x1000xbf16>
    tpu.vector_store %arg8[%c16_115, %c0_116], %105 {strides = array<i32>} : memref<232x1000xbf16, #tpu.memory_space<vmem>>, vector<4x1000xbf16>,
    %c0_117 = arith.constant 0 : index
    %c27_118 = arith.constant 27 : index
    %107 = vector.load %arg7[%c0_117, %c27_118] : memref<4x1256xbf16, #tpu.memory_space<vmem>>, vector<4x1000xbf16>
    %c24_119 = arith.constant 24 : index
    %c0_120 = arith.constant 0 : index
    %108 = vector.load %arg8[%c24_119, %c0_120] : memref<232x1000xbf16, #tpu.memory_space<vmem>>, vector<4x1000xbf16>
    tpu.vector_store %arg8[%c24_119, %c0_120], %107 {strides = array<i32>} : memref<232x1000xbf16, #tpu.memory_space<vmem>>, vector<4x1000xbf16>,
    %c0_121 = arith.constant 0 : index
    %c28_122 = arith.constant 28 : index
    %109 = vector.load %arg7[%c0_121, %c28_122] : memref<4x1256xbf16, #tpu.memory_space<vmem>>, vector<4x1000xbf16>
    %c32_123 = arith.constant 32 : index
    %c0_124 = arith.constant 0 : index
    %110 = vector.load %arg8[%c32_123, %c0_124] : memref<232x1000xbf16, #tpu.memory_space<vmem>>, vector<4x1000xbf16>
    tpu.vector_store %arg8[%c32_123, %c0_124], %109 {strides = array<i32>} : memref<232x1000xbf16, #tpu.memory_space<vmem>>, vector<4x1000xbf16>,
    %c0_125 = arith.constant 0 : index
    %c29_126 = arith.constant 29 : index
    %111 = vector.load %arg7[%c0_125, %c29_126] : memref<4x1256xbf16, #tpu.memory_space<vmem>>, vector<4x1000xbf16>
    %c40_127 = arith.constant 40 : index
    %c0_128 = arith.constant 0 : index
    %112 = vector.load %arg8[%c40_127, %c0_128] : memref<232x1000xbf16, #tpu.memory_space<vmem>>, vector<4x1000xbf16>
    tpu.vector_store %arg8[%c40_127, %c0_128], %111 {strides = array<i32>} : memref<232x1000xbf16, #tpu.memory_space<vmem>>, vector<4x1000xbf16>,
    %c0_129 = arith.constant 0 : index
    %c37_130 = arith.constant 37 : index
    %113 = vector.load %arg7[%c0_129, %c37_130] : memref<4x1256xbf16, #tpu.memory_space<vmem>>, vector<4x1000xbf16>
    %c48_131 = arith.constant 48 : index
    %c0_132 = arith.constant 0 : index
    %114 = vector.load %arg8[%c48_131, %c0_132] : memref<232x1000xbf16, #tpu.memory_space<vmem>>, vector<4x1000xbf16>
    tpu.vector_store %arg8[%c48_131, %c0_132], %113 {strides = array<i32>} : memref<232x1000xbf16, #tpu.memory_space<vmem>>, vector<4x1000xbf16>,
    %c0_133 = arith.constant 0 : index
    %c38_134 = arith.constant 38 : index
    %115 = vector.load %arg7[%c0_133, %c38_134] : memref<4x1256xbf16, #tpu.memory_space<vmem>>, vector<4x1000xbf16>
    %c56_135 = arith.constant 56 : index
    %c0_136 = arith.constant 0 : index
    %116 = vector.load %arg8[%c56_135, %c0_136] : memref<232x1000xbf16, #tpu.memory_space<vmem>>, vector<4x1000xbf16>
    tpu.vector_store %arg8[%c56_135, %c0_136], %115 {strides = array<i32>} : memref<232x1000xbf16, #tpu.memory_space<vmem>>, vector<4x1000xbf16>,
    %c0_137 = arith.constant 0 : index
    %c39_138 = arith.constant 39 : index
    %117 = vector.load %arg7[%c0_137, %c39_138] : memref<4x1256xbf16, #tpu.memory_space<vmem>>, vector<4x1000xbf16>
    %c64_139 = arith.constant 64 : index
    %c0_140 = arith.constant 0 : index
    %118 = vector.load %arg8[%c64_139, %c0_140] : memref<232x1000xbf16, #tpu.memory_space<vmem>>, vector<4x1000xbf16>
    tpu.vector_store %arg8[%c64_139, %c0_140], %117 {strides = array<i32>} : memref<232x1000xbf16, #tpu.memory_space<vmem>>, vector<4x1000xbf16>,
    %c0_141 = arith.constant 0 : index
    %c117_142 = arith.constant 117 : index
    %119 = vector.load %arg7[%c0_141, %c117_142] : memref<4x1256xbf16, #tpu.memory_space<vmem>>, vector<4x1000xbf16>
    %c72_143 = arith.constant 72 : index
    %c0_144 = arith.constant 0 : index
    %120 = vector.load %arg8[%c72_143, %c0_144] : memref<232x1000xbf16, #tpu.memory_space<vmem>>, vector<4x1000xbf16>
    tpu.vector_store %arg8[%c72_143, %c0_144], %119 {strides = array<i32>} : memref<232x1000xbf16, #tpu.memory_space<vmem>>, vector<4x1000xbf16>,
    %c0_145 = arith.constant 0 : index
    %c118_146 = arith.constant 118 : index
    %121 = vector.load %arg7[%c0_145, %c118_146] : memref<4x1256xbf16, #tpu.memory_space<vmem>>, vector<4x1000xbf16>
    %c80_147 = arith.constant 80 : index
    %c0_148 = arith.constant 0 : index
    %122 = vector.load %arg8[%c80_147, %c0_148] : memref<232x1000xbf16, #tpu.memory_space<vmem>>, vector<4x1000xbf16>
    tpu.vector_store %arg8[%c80_147, %c0_148], %121 {strides = array<i32>} : memref<232x1000xbf16, #tpu.memory_space<vmem>>, vector<4x1000xbf16>,
    %c0_149 = arith.constant 0 : index
    %c119_150 = arith.constant 119 : index
    %123 = vector.load %arg7[%c0_149, %c119_150] : memref<4x1256xbf16, #tpu.memory_space<vmem>>, vector<4x1000xbf16>
    %c88_151 = arith.constant 88 : index
    %c0_152 = arith.constant 0 : index
    %124 = vector.load %arg8[%c88_151, %c0_152] : memref<232x1000xbf16, #tpu.memory_space<vmem>>, vector<4x1000xbf16>
    tpu.vector_store %arg8[%c88_151, %c0_152], %123 {strides = array<i32>} : memref<232x1000xbf16, #tpu.memory_space<vmem>>, vector<4x1000xbf16>,
    %c0_153 = arith.constant 0 : index
    %c127_154 = arith.constant 127 : index
    %125 = vector.load %arg7[%c0_153, %c127_154] : memref<4x1256xbf16, #tpu.memory_space<vmem>>, vector<4x1000xbf16>
    %c96_155 = arith.constant 96 : index
    %c0_156 = arith.constant 0 : index
    %126 = vector.load %arg8[%c96_155, %c0_156] : memref<232x1000xbf16, #tpu.memory_space<vmem>>, vector<4x1000xbf16>
    tpu.vector_store %arg8[%c96_155, %c0_156], %125 {strides = array<i32>} : memref<232x1000xbf16, #tpu.memory_space<vmem>>, vector<4x1000xbf16>,
    %c0_157 = arith.constant 0 : index
    %c128_158 = arith.constant 128 : index
    %127 = vector.load %arg7[%c0_157, %c128_158] : memref<4x1256xbf16, #tpu.memory_space<vmem>>, vector<4x1000xbf16>
    %c104_159 = arith.constant 104 : index
    %c0_160 = arith.constant 0 : index
    %128 = vector.load %arg8[%c104_159, %c0_160] : memref<232x1000xbf16, #tpu.memory_space<vmem>>, vector<4x1000xbf16>
    tpu.vector_store %arg8[%c104_159, %c0_160], %127 {strides = array<i32>} : memref<232x1000xbf16, #tpu.memory_space<vmem>>, vector<4x1000xbf16>,
    %c0_161 = arith.constant 0 : index
    %c129_162 = arith.constant 129 : index
    %129 = vector.load %arg7[%c0_161, %c129_162] : memref<4x1256xbf16, #tpu.memory_space<vmem>>, vector<4x1000xbf16>
    %c112_163 = arith.constant 112 : index
    %c0_164 = arith.constant 0 : index
    %130 = vector.load %arg8[%c112_163, %c0_164] : memref<232x1000xbf16, #tpu.memory_space<vmem>>, vector<4x1000xbf16>
    tpu.vector_store %arg8[%c112_163, %c0_164], %129 {strides = array<i32>} : memref<232x1000xbf16, #tpu.memory_space<vmem>>, vector<4x1000xbf16>,
    %c0_165 = arith.constant 0 : index
    %c137_166 = arith.constant 137 : index
    %131 = vector.load %arg7[%c0_165, %c137_166] : memref<4x1256xbf16, #tpu.memory_space<vmem>>, vector<4x1000xbf16>
    %c120_167 = arith.constant 120 : index
    %c0_168 = arith.constant 0 : index
    %132 = vector.load %arg8[%c120_167, %c0_168] : memref<232x1000xbf16, #tpu.memory_space<vmem>>, vector<4x1000xbf16>
    tpu.vector_store %arg8[%c120_167, %c0_168], %131 {strides = array<i32>} : memref<232x1000xbf16, #tpu.memory_space<vmem>>, vector<4x1000xbf16>,
    %c0_169 = arith.constant 0 : index
    %c138_170 = arith.constant 138 : index
    %133 = vector.load %arg7[%c0_169, %c138_170] : memref<4x1256xbf16, #tpu.memory_space<vmem>>, vector<4x1000xbf16>
    %c128_171 = arith.constant 128 : index
    %c0_172 = arith.constant 0 : index
    %134 = vector.load %arg8[%c128_171, %c0_172] : memref<232x1000xbf16, #tpu.memory_space<vmem>>, vector<4x1000xbf16>
    tpu.vector_store %arg8[%c128_171, %c0_172], %133 {strides = array<i32>} : memref<232x1000xbf16, #tpu.memory_space<vmem>>, vector<4x1000xbf16>,
    %c0_173 = arith.constant 0 : index
    %c139_174 = arith.constant 139 : index
    %135 = vector.load %arg7[%c0_173, %c139_174] : memref<4x1256xbf16, #tpu.memory_space<vmem>>, vector<4x1000xbf16>
    %c136_175 = arith.constant 136 : index
    %c0_176 = arith.constant 0 : index
    %136 = vector.load %arg8[%c136_175, %c0_176] : memref<232x1000xbf16, #tpu.memory_space<vmem>>, vector<4x1000xbf16>
    tpu.vector_store %arg8[%c136_175, %c0_176], %135 {strides = array<i32>} : memref<232x1000xbf16, #tpu.memory_space<vmem>>, vector<4x1000xbf16>,
    %c0_177 = arith.constant 0 : index
    %c217_178 = arith.constant 217 : index
    %137 = vector.load %arg7[%c0_177, %c217_178] : memref<4x1256xbf16, #tpu.memory_space<vmem>>, vector<4x1000xbf16>
    %c144_179 = arith.constant 144 : index
    %c0_180 = arith.constant 0 : index
    %138 = vector.load %arg8[%c144_179, %c0_180] : memref<232x1000xbf16, #tpu.memory_space<vmem>>, vector<4x1000xbf16>
    tpu.vector_store %arg8[%c144_179, %c0_180], %137 {strides = array<i32>} : memref<232x1000xbf16, #tpu.memory_space<vmem>>, vector<4x1000xbf16>,
    %c0_181 = arith.constant 0 : index
    %c218_182 = arith.constant 218 : index
    %139 = vector.load %arg7[%c0_181, %c218_182] : memref<4x1256xbf16, #tpu.memory_space<vmem>>, vector<4x1000xbf16>
    %c152_183 = arith.constant 152 : index
    %c0_184 = arith.constant 0 : index
    %140 = vector.load %arg8[%c152_183, %c0_184] : memref<232x1000xbf16, #tpu.memory_space<vmem>>, vector<4x1000xbf16>
    tpu.vector_store %arg8[%c152_183, %c0_184], %139 {strides = array<i32>} : memref<232x1000xbf16, #tpu.memory_space<vmem>>, vector<4x1000xbf16>,
    %c0_185 = arith.constant 0 : index
    %c219_186 = arith.constant 219 : index
    %141 = vector.load %arg7[%c0_185, %c219_186] : memref<4x1256xbf16, #tpu.memory_space<vmem>>, vector<4x1000xbf16>
    %c160_187 = arith.constant 160 : index
    %c0_188 = arith.constant 0 : index
    %142 = vector.load %arg8[%c160_187, %c0_188] : memref<232x1000xbf16, #tpu.memory_space<vmem>>, vector<4x1000xbf16>
    tpu.vector_store %arg8[%c160_187, %c0_188], %141 {strides = array<i32>} : memref<232x1000xbf16, #tpu.memory_space<vmem>>, vector<4x1000xbf16>,
    %c0_189 = arith.constant 0 : index
    %c227_190 = arith.constant 227 : index
    %143 = vector.load %arg7[%c0_189, %c227_190] : memref<4x1256xbf16, #tpu.memory_space<vmem>>, vector<4x1000xbf16>
    %c168_191 = arith.constant 168 : index
    %c0_192 = arith.constant 0 : index
    %144 = vector.load %arg8[%c168_191, %c0_192] : memref<232x1000xbf16, #tpu.memory_space<vmem>>, vector<4x1000xbf16>
    tpu.vector_store %arg8[%c168_191, %c0_192], %143 {strides = array<i32>} : memref<232x1000xbf16, #tpu.memory_space<vmem>>, vector<4x1000xbf16>,
    %c0_193 = arith.constant 0 : index
    %c228_194 = arith.constant 228 : index
    %145 = vector.load %arg7[%c0_193, %c228_194] : memref<4x1256xbf16, #tpu.memory_space<vmem>>, vector<4x1000xbf16>
    %c176_195 = arith.constant 176 : index
    %c0_196 = arith.constant 0 : index
    %146 = vector.load %arg8[%c176_195, %c0_196] : memref<232x1000xbf16, #tpu.memory_space<vmem>>, vector<4x1000xbf16>
    tpu.vector_store %arg8[%c176_195, %c0_196], %145 {strides = array<i32>} : memref<232x1000xbf16, #tpu.memory_space<vmem>>, vector<4x1000xbf16>,
    %c0_197 = arith.constant 0 : index
    %c229_198 = arith.constant 229 : index
    %147 = vector.load %arg7[%c0_197, %c229_198] : memref<4x1256xbf16, #tpu.memory_space<vmem>>, vector<4x1000xbf16>
    %c184_199 = arith.constant 184 : index
    %c0_200 = arith.constant 0 : index
    %148 = vector.load %arg8[%c184_199, %c0_200] : memref<232x1000xbf16, #tpu.memory_space<vmem>>, vector<4x1000xbf16>
    tpu.vector_store %arg8[%c184_199, %c0_200], %147 {strides = array<i32>} : memref<232x1000xbf16, #tpu.memory_space<vmem>>, vector<4x1000xbf16>,
    %c0_201 = arith.constant 0 : index
    %c237_202 = arith.constant 237 : index
    %149 = vector.load %arg7[%c0_201, %c237_202] : memref<4x1256xbf16, #tpu.memory_space<vmem>>, vector<4x1000xbf16>
    %c192_203 = arith.constant 192 : index
    %c0_204 = arith.constant 0 : index
    %150 = vector.load %arg8[%c192_203, %c0_204] : memref<232x1000xbf16, #tpu.memory_space<vmem>>, vector<4x1000xbf16>
    tpu.vector_store %arg8[%c192_203, %c0_204], %149 {strides = array<i32>} : memref<232x1000xbf16, #tpu.memory_space<vmem>>, vector<4x1000xbf16>,
    %c0_205 = arith.constant 0 : index
    %c238_206 = arith.constant 238 : index
    %151 = vector.load %arg7[%c0_205, %c238_206] : memref<4x1256xbf16, #tpu.memory_space<vmem>>, vector<4x1000xbf16>
    %c200_207 = arith.constant 200 : index
    %c0_208 = arith.constant 0 : index
    %152 = vector.load %arg8[%c200_207, %c0_208] : memref<232x1000xbf16, #tpu.memory_space<vmem>>, vector<4x1000xbf16>
    tpu.vector_store %arg8[%c200_207, %c0_208], %151 {strides = array<i32>} : memref<232x1000xbf16, #tpu.memory_space<vmem>>, vector<4x1000xbf16>,
    %c0_209 = arith.constant 0 : index
    %c239_210 = arith.constant 239 : index
    %153 = vector.load %arg7[%c0_209, %c239_210] : memref<4x1256xbf16, #tpu.memory_space<vmem>>, vector<4x1000xbf16>
    %c208_211 = arith.constant 208 : index
    %c0_212 = arith.constant 0 : index
    %154 = vector.load %arg8[%c208_211, %c0_212] : memref<232x1000xbf16, #tpu.memory_space<vmem>>, vector<4x1000xbf16>
    tpu.vector_store %arg8[%c208_211, %c0_212], %153 {strides = array<i32>} : memref<232x1000xbf16, #tpu.memory_space<vmem>>, vector<4x1000xbf16>,
    %c0_213 = arith.constant 0 : index
    %c0_214 = arith.constant 0 : index
    %c128_215 = arith.constant 128 : index
    %155 = vector.load %arg1[%c0_213, %c0_214, %c128_215] : memref<1x2x1256xbf16, #tpu.memory_space<vmem>>, vector<1x2x1000xbf16>
    %156 = vector.shape_cast %155 : vector<1x2x1000xbf16> to vector<2x1000xbf16>
    %c224 = arith.constant 224 : index
    %c0_216 = arith.constant 0 : index
    %157 = vector.load %arg8[%c224, %c0_216] : memref<232x1000xbf16, #tpu.memory_space<vmem>>, vector<2x1000xbf16>
    tpu.vector_store %arg8[%c224, %c0_216], %156 {strides = array<i32>} : memref<232x1000xbf16, #tpu.memory_space<vmem>>, vector<2x1000xbf16>,
    %c0_217 = arith.constant 0 : index
    %c0_218 = arith.constant 0 : index
    %158 = vector.load %arg3[%c0_217, %c0_218] : memref<4x232xbf16, #tpu.memory_space<vmem>>, vector<4x232xbf16>
    %c0_219 = arith.constant 0 : index
    %c0_220 = arith.constant 0 : index
    %159 = vector.load %arg8[%c0_219, %c0_220] : memref<232x1000xbf16, #tpu.memory_space<vmem>>, vector<232x1000xbf16>
    %cst_221 = arith.constant dense<0.000000e+00> : vector<4x1000xf32>
    %160 = tpu.matmul %158, %159, %cst_221 {dimension_numbers = #tpu.dot_dimension_numbers<[1], [0], [0], [1], [0, 0, 1, 1], [], []>} : vector<4x232xbf16>, vector<232x1000xbf16>, vector<4x1000xf32> -> vector<4x1000xf32>
    %cst_222 = arith.constant 0.000000e+00 : f32
    %161 = vector.broadcast %cst_222 : f32 to vector<4x1000xf32>
    %162 = arith.maximumf %160, %161 : vector<4x1000xf32>
    %163 = vector.broadcast %10 : vector<1x1000xf32> to vector<4x1000xf32>
    %164 = arith.mulf %162, %163 : vector<4x1000xf32>
    %165 = arith.truncf %164 : vector<4x1000xf32> to vector<4x1000xbf16>
    %c0_223 = arith.constant 0 : index
    %c0_224 = arith.constant 0 : index
    %c0_225 = arith.constant 0 : index
    %166 = vector.load %arg5[%c0_223, %c0_224, %c0_225] : memref<1x4x1000xbf16, #tpu.memory_space<vmem>>, vector<1x4x1000xbf16>
    %167 = vector.shape_cast %166 : vector<1x4x1000xbf16> to vector<4x1000xbf16>
    %168 = vector.shape_cast %165 : vector<4x1000xbf16> to vector<1x4x1000xbf16>
    tpu.vector_store %arg5[%c0_223, %c0_224, %c0_225], %168 {strides = array<i32>} : memref<1x4x1000xbf16, #tpu.memory_space<vmem>>, vector<1x4x1000xbf16>,
    return
  }
  func.func @transform_0(%arg0: i32) -> (i32, i32, i32) {
    %c0_i32 = arith.constant 0 : i32
    %c0_i32_0 = arith.constant 0 : i32
    %c0_i32_1 = arith.constant 0 : i32
    return %arg0, %c0_i32, %c0_i32_0 : i32, i32, i32
  }
  func.func @transform_1(%arg0: i32) -> (i32, i32) {
    %c0_i32 = arith.constant 0 : i32
    %c0_i32_0 = arith.constant 0 : i32
    %c0_i32_1 = arith.constant 0 : i32
    return %c0_i32, %c0_i32_0 : i32, i32
  }
  func.func @transform_2(%arg0: i32) -> (i32, i32) {
    %c0_i32 = arith.constant 0 : i32
    %c0_i32_0 = arith.constant 0 : i32
    %c0_i32_1 = arith.constant 0 : i32
    return %c0_i32, %c0_i32_0 : i32, i32
  }
  func.func @transform_3(%arg0: i32) -> (i32, i32) {
    %c0_i32 = arith.constant 0 : i32
    %c0_i32_0 = arith.constant 0 : i32
    %c0_i32_1 = arith.constant 0 : i32
    return %c0_i32, %c0_i32_0 : i32, i32
  }
  func.func @transform_4(%arg0: i32) -> (i32, i32, i32) {
    %c0_i32 = arith.constant 0 : i32
    %c0_i32_0 = arith.constant 0 : i32
    %c0_i32_1 = arith.constant 0 : i32
    return %arg0, %c0_i32, %c0_i32_0 : i32, i32, i32
  }
}

module attributes {stable_mosaic.version = 11 : i64} {
  func.func @kernel(%arg0: i32, %arg1: memref<1x4x472xbf16, #tpu.memory_space<vmem>>, %arg2: memref<8x224xbf16, #tpu.memory_space<vmem>>, %arg3: memref<8x232xbf16, #tpu.memory_space<vmem>>, %arg4: memref<1x216xf32, #tpu.memory_space<vmem>>, %arg5: memref<1x8x216xbf16, #tpu.memory_space<vmem>>, %arg6: memref<224x216xbf16, #tpu.memory_space<vmem>>, %arg7: memref<8x472xbf16, #tpu.memory_space<vmem>>, %arg8: memref<232x216xbf16, #tpu.memory_space<vmem>>) attributes {dimension_semantics = [#tpu.dimension_semantics<parallel>], iteration_bounds = array<i64: 2>, scalar_prefetch = 0 : i64, scratch_operands = 3 : i64, tpu.core_type = #tpu.core_type<tc>, window_params = [{transform_indices = @transform_0, window_bounds = array<i64: 1, 4, 472>}, {pipeline_mode = #tpu.pipeline_mode<synchronous>, transform_indices = @transform_1, window_bounds = array<i64: 8, 224>}, {pipeline_mode = #tpu.pipeline_mode<synchronous>, transform_indices = @transform_2, window_bounds = array<i64: 8, 232>}, {pipeline_mode = #tpu.pipeline_mode<synchronous>, transform_indices = @transform_3, window_bounds = array<i64: 1, 216>}, {transform_indices = @transform_4, window_bounds = array<i64: 1, 8, 216>}]} {
    %cst = arith.constant 0.000000e+00 : bf16
    %0 = vector.broadcast %cst : bf16 to vector<224x216xbf16>
    %c0 = arith.constant 0 : index
    %c0_0 = arith.constant 0 : index
    %1 = vector.load %arg6[%c0, %c0_0] : memref<224x216xbf16, #tpu.memory_space<vmem>>, vector<224x216xbf16>
    tpu.vector_store %arg6[%c0, %c0_0], %0 {strides = array<i32>} : memref<224x216xbf16, #tpu.memory_space<vmem>>, vector<224x216xbf16>,
    %cst_1 = arith.constant 0.000000e+00 : bf16
    %2 = vector.broadcast %cst_1 : bf16 to vector<232x216xbf16>
    %c0_2 = arith.constant 0 : index
    %c0_3 = arith.constant 0 : index
    %3 = vector.load %arg8[%c0_2, %c0_3] : memref<232x216xbf16, #tpu.memory_space<vmem>>, vector<232x216xbf16>
    tpu.vector_store %arg8[%c0_2, %c0_3], %2 {strides = array<i32>} : memref<232x216xbf16, #tpu.memory_space<vmem>>, vector<232x216xbf16>,
    %cst_4 = arith.constant 0.000000e+00 : bf16
    %4 = vector.broadcast %cst_4 : bf16 to vector<8x472xbf16>
    %c0_5 = arith.constant 0 : index
    %c0_6 = arith.constant 0 : index
    %5 = vector.load %arg7[%c0_5, %c0_6] : memref<8x472xbf16, #tpu.memory_space<vmem>>, vector<8x472xbf16>
    tpu.vector_store %arg7[%c0_5, %c0_6], %4 {strides = array<i32>} : memref<8x472xbf16, #tpu.memory_space<vmem>>, vector<8x472xbf16>,
    %cst_7 = arith.constant 1.000000e+00 : bf16
    %6 = vector.broadcast %cst_7 : bf16 to vector<1x216xbf16>
    %c216 = arith.constant 216 : index
    %c0_8 = arith.constant 0 : index
    %7 = vector.load %arg6[%c216, %c0_8] : memref<224x216xbf16, #tpu.memory_space<vmem>>, vector<1x216xbf16>
    tpu.vector_store %arg6[%c216, %c0_8], %6 {strides = array<i32>} : memref<224x216xbf16, #tpu.memory_space<vmem>>, vector<1x216xbf16>,
    %cst_9 = arith.constant 1.000000e+00 : bf16
    %8 = vector.broadcast %cst_9 : bf16 to vector<1x216xbf16>
    %c216_10 = arith.constant 216 : index
    %c0_11 = arith.constant 0 : index
    %9 = vector.load %arg8[%c216_10, %c0_11] : memref<232x216xbf16, #tpu.memory_space<vmem>>, vector<1x216xbf16>
    tpu.vector_store %arg8[%c216_10, %c0_11], %8 {strides = array<i32>} : memref<232x216xbf16, #tpu.memory_space<vmem>>, vector<1x216xbf16>,
    %c0_12 = arith.constant 0 : index
    %c0_13 = arith.constant 0 : index
    %10 = vector.load %arg4[%c0_12, %c0_13] : memref<1x216xf32, #tpu.memory_space<vmem>>, vector<1x216xf32>
    %c0_14 = arith.constant 0 : index
    %c0_15 = arith.constant 0 : index
    %c85 = arith.constant 85 : index
    %11 = vector.load %arg1[%c0_14, %c0_15, %c85] : memref<1x4x472xbf16, #tpu.memory_space<vmem>>, vector<1x4x216xbf16>
    %12 = vector.shape_cast %11 : vector<1x4x216xbf16> to vector<4x216xbf16>
    %c0_16 = arith.constant 0 : index
    %c0_17 = arith.constant 0 : index
    %13 = vector.load %arg6[%c0_16, %c0_17] : memref<224x216xbf16, #tpu.memory_space<vmem>>, vector<4x216xbf16>
    tpu.vector_store %arg6[%c0_16, %c0_17], %12 {strides = array<i32>} : memref<224x216xbf16, #tpu.memory_space<vmem>>, vector<4x216xbf16>,
    %c0_18 = arith.constant 0 : index
    %c0_19 = arith.constant 0 : index
    %c86 = arith.constant 86 : index
    %14 = vector.load %arg1[%c0_18, %c0_19, %c86] : memref<1x4x472xbf16, #tpu.memory_space<vmem>>, vector<1x4x216xbf16>
    %15 = vector.shape_cast %14 : vector<1x4x216xbf16> to vector<4x216xbf16>
    %c8 = arith.constant 8 : index
    %c0_20 = arith.constant 0 : index
    %16 = vector.load %arg6[%c8, %c0_20] : memref<224x216xbf16, #tpu.memory_space<vmem>>, vector<4x216xbf16>
    tpu.vector_store %arg6[%c8, %c0_20], %15 {strides = array<i32>} : memref<224x216xbf16, #tpu.memory_space<vmem>>, vector<4x216xbf16>,
    %c0_21 = arith.constant 0 : index
    %c0_22 = arith.constant 0 : index
    %c87 = arith.constant 87 : index
    %17 = vector.load %arg1[%c0_21, %c0_22, %c87] : memref<1x4x472xbf16, #tpu.memory_space<vmem>>, vector<1x4x216xbf16>
    %18 = vector.shape_cast %17 : vector<1x4x216xbf16> to vector<4x216xbf16>
    %c16 = arith.constant 16 : index
    %c0_23 = arith.constant 0 : index
    %19 = vector.load %arg6[%c16, %c0_23] : memref<224x216xbf16, #tpu.memory_space<vmem>>, vector<4x216xbf16>
    tpu.vector_store %arg6[%c16, %c0_23], %18 {strides = array<i32>} : memref<224x216xbf16, #tpu.memory_space<vmem>>, vector<4x216xbf16>,
    %c0_24 = arith.constant 0 : index
    %c0_25 = arith.constant 0 : index
    %c91 = arith.constant 91 : index
    %20 = vector.load %arg1[%c0_24, %c0_25, %c91] : memref<1x4x472xbf16, #tpu.memory_space<vmem>>, vector<1x4x216xbf16>
    %21 = vector.shape_cast %20 : vector<1x4x216xbf16> to vector<4x216xbf16>
    %c24 = arith.constant 24 : index
    %c0_26 = arith.constant 0 : index
    %22 = vector.load %arg6[%c24, %c0_26] : memref<224x216xbf16, #tpu.memory_space<vmem>>, vector<4x216xbf16>
    tpu.vector_store %arg6[%c24, %c0_26], %21 {strides = array<i32>} : memref<224x216xbf16, #tpu.memory_space<vmem>>, vector<4x216xbf16>,
    %c0_27 = arith.constant 0 : index
    %c0_28 = arith.constant 0 : index
    %c92 = arith.constant 92 : index
    %23 = vector.load %arg1[%c0_27, %c0_28, %c92] : memref<1x4x472xbf16, #tpu.memory_space<vmem>>, vector<1x4x216xbf16>
    %24 = vector.shape_cast %23 : vector<1x4x216xbf16> to vector<4x216xbf16>
    %c32 = arith.constant 32 : index
    %c0_29 = arith.constant 0 : index
    %25 = vector.load %arg6[%c32, %c0_29] : memref<224x216xbf16, #tpu.memory_space<vmem>>, vector<4x216xbf16>
    tpu.vector_store %arg6[%c32, %c0_29], %24 {strides = array<i32>} : memref<224x216xbf16, #tpu.memory_space<vmem>>, vector<4x216xbf16>,
    %c0_30 = arith.constant 0 : index
    %c0_31 = arith.constant 0 : index
    %c93 = arith.constant 93 : index
    %26 = vector.load %arg1[%c0_30, %c0_31, %c93] : memref<1x4x472xbf16, #tpu.memory_space<vmem>>, vector<1x4x216xbf16>
    %27 = vector.shape_cast %26 : vector<1x4x216xbf16> to vector<4x216xbf16>
    %c40 = arith.constant 40 : index
    %c0_32 = arith.constant 0 : index
    %28 = vector.load %arg6[%c40, %c0_32] : memref<224x216xbf16, #tpu.memory_space<vmem>>, vector<4x216xbf16>
    tpu.vector_store %arg6[%c40, %c0_32], %27 {strides = array<i32>} : memref<224x216xbf16, #tpu.memory_space<vmem>>, vector<4x216xbf16>,
    %c0_33 = arith.constant 0 : index
    %c0_34 = arith.constant 0 : index
    %c97 = arith.constant 97 : index
    %29 = vector.load %arg1[%c0_33, %c0_34, %c97] : memref<1x4x472xbf16, #tpu.memory_space<vmem>>, vector<1x4x216xbf16>
    %30 = vector.shape_cast %29 : vector<1x4x216xbf16> to vector<4x216xbf16>
    %c48 = arith.constant 48 : index
    %c0_35 = arith.constant 0 : index
    %31 = vector.load %arg6[%c48, %c0_35] : memref<224x216xbf16, #tpu.memory_space<vmem>>, vector<4x216xbf16>
    tpu.vector_store %arg6[%c48, %c0_35], %30 {strides = array<i32>} : memref<224x216xbf16, #tpu.memory_space<vmem>>, vector<4x216xbf16>,
    %c0_36 = arith.constant 0 : index
    %c0_37 = arith.constant 0 : index
    %c98 = arith.constant 98 : index
    %32 = vector.load %arg1[%c0_36, %c0_37, %c98] : memref<1x4x472xbf16, #tpu.memory_space<vmem>>, vector<1x4x216xbf16>
    %33 = vector.shape_cast %32 : vector<1x4x216xbf16> to vector<4x216xbf16>
    %c56 = arith.constant 56 : index
    %c0_38 = arith.constant 0 : index
    %34 = vector.load %arg6[%c56, %c0_38] : memref<224x216xbf16, #tpu.memory_space<vmem>>, vector<4x216xbf16>
    tpu.vector_store %arg6[%c56, %c0_38], %33 {strides = array<i32>} : memref<224x216xbf16, #tpu.memory_space<vmem>>, vector<4x216xbf16>,
    %c0_39 = arith.constant 0 : index
    %c0_40 = arith.constant 0 : index
    %c99 = arith.constant 99 : index
    %35 = vector.load %arg1[%c0_39, %c0_40, %c99] : memref<1x4x472xbf16, #tpu.memory_space<vmem>>, vector<1x4x216xbf16>
    %36 = vector.shape_cast %35 : vector<1x4x216xbf16> to vector<4x216xbf16>
    %c64 = arith.constant 64 : index
    %c0_41 = arith.constant 0 : index
    %37 = vector.load %arg6[%c64, %c0_41] : memref<224x216xbf16, #tpu.memory_space<vmem>>, vector<4x216xbf16>
    tpu.vector_store %arg6[%c64, %c0_41], %36 {strides = array<i32>} : memref<224x216xbf16, #tpu.memory_space<vmem>>, vector<4x216xbf16>,
    %c0_42 = arith.constant 0 : index
    %c0_43 = arith.constant 0 : index
    %c121 = arith.constant 121 : index
    %38 = vector.load %arg1[%c0_42, %c0_43, %c121] : memref<1x4x472xbf16, #tpu.memory_space<vmem>>, vector<1x4x216xbf16>
    %39 = vector.shape_cast %38 : vector<1x4x216xbf16> to vector<4x216xbf16>
    %c72 = arith.constant 72 : index
    %c0_44 = arith.constant 0 : index
    %40 = vector.load %arg6[%c72, %c0_44] : memref<224x216xbf16, #tpu.memory_space<vmem>>, vector<4x216xbf16>
    tpu.vector_store %arg6[%c72, %c0_44], %39 {strides = array<i32>} : memref<224x216xbf16, #tpu.memory_space<vmem>>, vector<4x216xbf16>,
    %c0_45 = arith.constant 0 : index
    %c0_46 = arith.constant 0 : index
    %c122 = arith.constant 122 : index
    %41 = vector.load %arg1[%c0_45, %c0_46, %c122] : memref<1x4x472xbf16, #tpu.memory_space<vmem>>, vector<1x4x216xbf16>
    %42 = vector.shape_cast %41 : vector<1x4x216xbf16> to vector<4x216xbf16>
    %c80 = arith.constant 80 : index
    %c0_47 = arith.constant 0 : index
    %43 = vector.load %arg6[%c80, %c0_47] : memref<224x216xbf16, #tpu.memory_space<vmem>>, vector<4x216xbf16>
    tpu.vector_store %arg6[%c80, %c0_47], %42 {strides = array<i32>} : memref<224x216xbf16, #tpu.memory_space<vmem>>, vector<4x216xbf16>,
    %c0_48 = arith.constant 0 : index
    %c0_49 = arith.constant 0 : index
    %c123 = arith.constant 123 : index
    %44 = vector.load %arg1[%c0_48, %c0_49, %c123] : memref<1x4x472xbf16, #tpu.memory_space<vmem>>, vector<1x4x216xbf16>
    %45 = vector.shape_cast %44 : vector<1x4x216xbf16> to vector<4x216xbf16>
    %c88 = arith.constant 88 : index
    %c0_50 = arith.constant 0 : index
    %46 = vector.load %arg6[%c88, %c0_50] : memref<224x216xbf16, #tpu.memory_space<vmem>>, vector<4x216xbf16>
    tpu.vector_store %arg6[%c88, %c0_50], %45 {strides = array<i32>} : memref<224x216xbf16, #tpu.memory_space<vmem>>, vector<4x216xbf16>,
    %c0_51 = arith.constant 0 : index
    %c0_52 = arith.constant 0 : index
    %c127 = arith.constant 127 : index
    %47 = vector.load %arg1[%c0_51, %c0_52, %c127] : memref<1x4x472xbf16, #tpu.memory_space<vmem>>, vector<1x4x216xbf16>
    %48 = vector.shape_cast %47 : vector<1x4x216xbf16> to vector<4x216xbf16>
    %c96 = arith.constant 96 : index
    %c0_53 = arith.constant 0 : index
    %49 = vector.load %arg6[%c96, %c0_53] : memref<224x216xbf16, #tpu.memory_space<vmem>>, vector<4x216xbf16>
    tpu.vector_store %arg6[%c96, %c0_53], %48 {strides = array<i32>} : memref<224x216xbf16, #tpu.memory_space<vmem>>, vector<4x216xbf16>,
    %c0_54 = arith.constant 0 : index
    %c0_55 = arith.constant 0 : index
    %c128 = arith.constant 128 : index
    %50 = vector.load %arg1[%c0_54, %c0_55, %c128] : memref<1x4x472xbf16, #tpu.memory_space<vmem>>, vector<1x4x216xbf16>
    %51 = vector.shape_cast %50 : vector<1x4x216xbf16> to vector<4x216xbf16>
    %c104 = arith.constant 104 : index
    %c0_56 = arith.constant 0 : index
    %52 = vector.load %arg6[%c104, %c0_56] : memref<224x216xbf16, #tpu.memory_space<vmem>>, vector<4x216xbf16>
    tpu.vector_store %arg6[%c104, %c0_56], %51 {strides = array<i32>} : memref<224x216xbf16, #tpu.memory_space<vmem>>, vector<4x216xbf16>,
    %c0_57 = arith.constant 0 : index
    %c0_58 = arith.constant 0 : index
    %c129 = arith.constant 129 : index
    %53 = vector.load %arg1[%c0_57, %c0_58, %c129] : memref<1x4x472xbf16, #tpu.memory_space<vmem>>, vector<1x4x216xbf16>
    %54 = vector.shape_cast %53 : vector<1x4x216xbf16> to vector<4x216xbf16>
    %c112 = arith.constant 112 : index
    %c0_59 = arith.constant 0 : index
    %55 = vector.load %arg6[%c112, %c0_59] : memref<224x216xbf16, #tpu.memory_space<vmem>>, vector<4x216xbf16>
    tpu.vector_store %arg6[%c112, %c0_59], %54 {strides = array<i32>} : memref<224x216xbf16, #tpu.memory_space<vmem>>, vector<4x216xbf16>,
    %c0_60 = arith.constant 0 : index
    %c0_61 = arith.constant 0 : index
    %c133 = arith.constant 133 : index
    %56 = vector.load %arg1[%c0_60, %c0_61, %c133] : memref<1x4x472xbf16, #tpu.memory_space<vmem>>, vector<1x4x216xbf16>
    %57 = vector.shape_cast %56 : vector<1x4x216xbf16> to vector<4x216xbf16>
    %c120 = arith.constant 120 : index
    %c0_62 = arith.constant 0 : index
    %58 = vector.load %arg6[%c120, %c0_62] : memref<224x216xbf16, #tpu.memory_space<vmem>>, vector<4x216xbf16>
    tpu.vector_store %arg6[%c120, %c0_62], %57 {strides = array<i32>} : memref<224x216xbf16, #tpu.memory_space<vmem>>, vector<4x216xbf16>,
    %c0_63 = arith.constant 0 : index
    %c0_64 = arith.constant 0 : index
    %c134 = arith.constant 134 : index
    %59 = vector.load %arg1[%c0_63, %c0_64, %c134] : memref<1x4x472xbf16, #tpu.memory_space<vmem>>, vector<1x4x216xbf16>
    %60 = vector.shape_cast %59 : vector<1x4x216xbf16> to vector<4x216xbf16>
    %c128_65 = arith.constant 128 : index
    %c0_66 = arith.constant 0 : index
    %61 = vector.load %arg6[%c128_65, %c0_66] : memref<224x216xbf16, #tpu.memory_space<vmem>>, vector<4x216xbf16>
    tpu.vector_store %arg6[%c128_65, %c0_66], %60 {strides = array<i32>} : memref<224x216xbf16, #tpu.memory_space<vmem>>, vector<4x216xbf16>,
    %c0_67 = arith.constant 0 : index
    %c0_68 = arith.constant 0 : index
    %c135 = arith.constant 135 : index
    %62 = vector.load %arg1[%c0_67, %c0_68, %c135] : memref<1x4x472xbf16, #tpu.memory_space<vmem>>, vector<1x4x216xbf16>
    %63 = vector.shape_cast %62 : vector<1x4x216xbf16> to vector<4x216xbf16>
    %c136 = arith.constant 136 : index
    %c0_69 = arith.constant 0 : index
    %64 = vector.load %arg6[%c136, %c0_69] : memref<224x216xbf16, #tpu.memory_space<vmem>>, vector<4x216xbf16>
    tpu.vector_store %arg6[%c136, %c0_69], %63 {strides = array<i32>} : memref<224x216xbf16, #tpu.memory_space<vmem>>, vector<4x216xbf16>,
    %c0_70 = arith.constant 0 : index
    %c0_71 = arith.constant 0 : index
    %c157 = arith.constant 157 : index
    %65 = vector.load %arg1[%c0_70, %c0_71, %c157] : memref<1x4x472xbf16, #tpu.memory_space<vmem>>, vector<1x4x216xbf16>
    %66 = vector.shape_cast %65 : vector<1x4x216xbf16> to vector<4x216xbf16>
    %c144 = arith.constant 144 : index
    %c0_72 = arith.constant 0 : index
    %67 = vector.load %arg6[%c144, %c0_72] : memref<224x216xbf16, #tpu.memory_space<vmem>>, vector<4x216xbf16>
    tpu.vector_store %arg6[%c144, %c0_72], %66 {strides = array<i32>} : memref<224x216xbf16, #tpu.memory_space<vmem>>, vector<4x216xbf16>,
    %c0_73 = arith.constant 0 : index
    %c0_74 = arith.constant 0 : index
    %c158 = arith.constant 158 : index
    %68 = vector.load %arg1[%c0_73, %c0_74, %c158] : memref<1x4x472xbf16, #tpu.memory_space<vmem>>, vector<1x4x216xbf16>
    %69 = vector.shape_cast %68 : vector<1x4x216xbf16> to vector<4x216xbf16>
    %c152 = arith.constant 152 : index
    %c0_75 = arith.constant 0 : index
    %70 = vector.load %arg6[%c152, %c0_75] : memref<224x216xbf16, #tpu.memory_space<vmem>>, vector<4x216xbf16>
    tpu.vector_store %arg6[%c152, %c0_75], %69 {strides = array<i32>} : memref<224x216xbf16, #tpu.memory_space<vmem>>, vector<4x216xbf16>,
    %c0_76 = arith.constant 0 : index
    %c0_77 = arith.constant 0 : index
    %c159 = arith.constant 159 : index
    %71 = vector.load %arg1[%c0_76, %c0_77, %c159] : memref<1x4x472xbf16, #tpu.memory_space<vmem>>, vector<1x4x216xbf16>
    %72 = vector.shape_cast %71 : vector<1x4x216xbf16> to vector<4x216xbf16>
    %c160 = arith.constant 160 : index
    %c0_78 = arith.constant 0 : index
    %73 = vector.load %arg6[%c160, %c0_78] : memref<224x216xbf16, #tpu.memory_space<vmem>>, vector<4x216xbf16>
    tpu.vector_store %arg6[%c160, %c0_78], %72 {strides = array<i32>} : memref<224x216xbf16, #tpu.memory_space<vmem>>, vector<4x216xbf16>,
    %c0_79 = arith.constant 0 : index
    %c0_80 = arith.constant 0 : index
    %c163 = arith.constant 163 : index
    %74 = vector.load %arg1[%c0_79, %c0_80, %c163] : memref<1x4x472xbf16, #tpu.memory_space<vmem>>, vector<1x4x216xbf16>
    %75 = vector.shape_cast %74 : vector<1x4x216xbf16> to vector<4x216xbf16>
    %c168 = arith.constant 168 : index
    %c0_81 = arith.constant 0 : index
    %76 = vector.load %arg6[%c168, %c0_81] : memref<224x216xbf16, #tpu.memory_space<vmem>>, vector<4x216xbf16>
    tpu.vector_store %arg6[%c168, %c0_81], %75 {strides = array<i32>} : memref<224x216xbf16, #tpu.memory_space<vmem>>, vector<4x216xbf16>,
    %c0_82 = arith.constant 0 : index
    %c0_83 = arith.constant 0 : index
    %c164 = arith.constant 164 : index
    %77 = vector.load %arg1[%c0_82, %c0_83, %c164] : memref<1x4x472xbf16, #tpu.memory_space<vmem>>, vector<1x4x216xbf16>
    %78 = vector.shape_cast %77 : vector<1x4x216xbf16> to vector<4x216xbf16>
    %c176 = arith.constant 176 : index
    %c0_84 = arith.constant 0 : index
    %79 = vector.load %arg6[%c176, %c0_84] : memref<224x216xbf16, #tpu.memory_space<vmem>>, vector<4x216xbf16>
    tpu.vector_store %arg6[%c176, %c0_84], %78 {strides = array<i32>} : memref<224x216xbf16, #tpu.memory_space<vmem>>, vector<4x216xbf16>,
    %c0_85 = arith.constant 0 : index
    %c0_86 = arith.constant 0 : index
    %c165 = arith.constant 165 : index
    %80 = vector.load %arg1[%c0_85, %c0_86, %c165] : memref<1x4x472xbf16, #tpu.memory_space<vmem>>, vector<1x4x216xbf16>
    %81 = vector.shape_cast %80 : vector<1x4x216xbf16> to vector<4x216xbf16>
    %c184 = arith.constant 184 : index
    %c0_87 = arith.constant 0 : index
    %82 = vector.load %arg6[%c184, %c0_87] : memref<224x216xbf16, #tpu.memory_space<vmem>>, vector<4x216xbf16>
    tpu.vector_store %arg6[%c184, %c0_87], %81 {strides = array<i32>} : memref<224x216xbf16, #tpu.memory_space<vmem>>, vector<4x216xbf16>,
    %c0_88 = arith.constant 0 : index
    %c0_89 = arith.constant 0 : index
    %c169 = arith.constant 169 : index
    %83 = vector.load %arg1[%c0_88, %c0_89, %c169] : memref<1x4x472xbf16, #tpu.memory_space<vmem>>, vector<1x4x216xbf16>
    %84 = vector.shape_cast %83 : vector<1x4x216xbf16> to vector<4x216xbf16>
    %c192 = arith.constant 192 : index
    %c0_90 = arith.constant 0 : index
    %85 = vector.load %arg6[%c192, %c0_90] : memref<224x216xbf16, #tpu.memory_space<vmem>>, vector<4x216xbf16>
    tpu.vector_store %arg6[%c192, %c0_90], %84 {strides = array<i32>} : memref<224x216xbf16, #tpu.memory_space<vmem>>, vector<4x216xbf16>,
    %c0_91 = arith.constant 0 : index
    %c0_92 = arith.constant 0 : index
    %c170 = arith.constant 170 : index
    %86 = vector.load %arg1[%c0_91, %c0_92, %c170] : memref<1x4x472xbf16, #tpu.memory_space<vmem>>, vector<1x4x216xbf16>
    %87 = vector.shape_cast %86 : vector<1x4x216xbf16> to vector<4x216xbf16>
    %c200 = arith.constant 200 : index
    %c0_93 = arith.constant 0 : index
    %88 = vector.load %arg6[%c200, %c0_93] : memref<224x216xbf16, #tpu.memory_space<vmem>>, vector<4x216xbf16>
    tpu.vector_store %arg6[%c200, %c0_93], %87 {strides = array<i32>} : memref<224x216xbf16, #tpu.memory_space<vmem>>, vector<4x216xbf16>,
    %c0_94 = arith.constant 0 : index
    %c0_95 = arith.constant 0 : index
    %c171 = arith.constant 171 : index
    %89 = vector.load %arg1[%c0_94, %c0_95, %c171] : memref<1x4x472xbf16, #tpu.memory_space<vmem>>, vector<1x4x216xbf16>
    %90 = vector.shape_cast %89 : vector<1x4x216xbf16> to vector<4x216xbf16>
    %c208 = arith.constant 208 : index
    %c0_96 = arith.constant 0 : index
    %91 = vector.load %arg6[%c208, %c0_96] : memref<224x216xbf16, #tpu.memory_space<vmem>>, vector<4x216xbf16>
    tpu.vector_store %arg6[%c208, %c0_96], %90 {strides = array<i32>} : memref<224x216xbf16, #tpu.memory_space<vmem>>, vector<4x216xbf16>,
    %c0_97 = arith.constant 0 : index
    %c0_98 = arith.constant 0 : index
    %92 = vector.load %arg2[%c0_97, %c0_98] : memref<8x224xbf16, #tpu.memory_space<vmem>>, vector<8x224xbf16>
    %c0_99 = arith.constant 0 : index
    %c0_100 = arith.constant 0 : index
    %93 = vector.load %arg6[%c0_99, %c0_100] : memref<224x216xbf16, #tpu.memory_space<vmem>>, vector<224x216xbf16>
    %cst_101 = arith.constant dense<0.000000e+00> : vector<8x216xf32>
    %94 = tpu.matmul %92, %93, %cst_101 {dimension_numbers = #tpu.dot_dimension_numbers<[1], [0], [0], [1], [0, 0, 1, 1], [], []>} : vector<8x224xbf16>, vector<224x216xbf16>, vector<8x216xf32> -> vector<8x216xf32>
    %cst_102 = arith.constant 0.000000e+00 : f32
    %95 = vector.broadcast %cst_102 : f32 to vector<8x216xf32>
    %96 = arith.maximumf %94, %95 : vector<8x216xf32>
    %97 = vector.broadcast %10 : vector<1x216xf32> to vector<8x216xf32>
    %98 = arith.mulf %96, %97 : vector<8x216xf32>
    %99 = arith.truncf %98 : vector<8x216xf32> to vector<8x216xbf16>
    %c0_103 = arith.constant 0 : index
    %c128_104 = arith.constant 128 : index
    %100 = vector.load %arg7[%c0_103, %c128_104] : memref<8x472xbf16, #tpu.memory_space<vmem>>, vector<8x216xbf16>
    tpu.vector_store %arg7[%c0_103, %c128_104], %99 {strides = array<i32>} : memref<8x472xbf16, #tpu.memory_space<vmem>>, vector<8x216xbf16>,
    %c0_105 = arith.constant 0 : index
    %c85_106 = arith.constant 85 : index
    %101 = vector.load %arg7[%c0_105, %c85_106] : memref<8x472xbf16, #tpu.memory_space<vmem>>, vector<8x216xbf16>
    %c0_107 = arith.constant 0 : index
    %c0_108 = arith.constant 0 : index
    %102 = vector.load %arg8[%c0_107, %c0_108] : memref<232x216xbf16, #tpu.memory_space<vmem>>, vector<8x216xbf16>
    tpu.vector_store %arg8[%c0_107, %c0_108], %101 {strides = array<i32>} : memref<232x216xbf16, #tpu.memory_space<vmem>>, vector<8x216xbf16>,
    %c0_109 = arith.constant 0 : index
    %c86_110 = arith.constant 86 : index
    %103 = vector.load %arg7[%c0_109, %c86_110] : memref<8x472xbf16, #tpu.memory_space<vmem>>, vector<8x216xbf16>
    %c8_111 = arith.constant 8 : index
    %c0_112 = arith.constant 0 : index
    %104 = vector.load %arg8[%c8_111, %c0_112] : memref<232x216xbf16, #tpu.memory_space<vmem>>, vector<8x216xbf16>
    tpu.vector_store %arg8[%c8_111, %c0_112], %103 {strides = array<i32>} : memref<232x216xbf16, #tpu.memory_space<vmem>>, vector<8x216xbf16>,
    %c0_113 = arith.constant 0 : index
    %c87_114 = arith.constant 87 : index
    %105 = vector.load %arg7[%c0_113, %c87_114] : memref<8x472xbf16, #tpu.memory_space<vmem>>, vector<8x216xbf16>
    %c16_115 = arith.constant 16 : index
    %c0_116 = arith.constant 0 : index
    %106 = vector.load %arg8[%c16_115, %c0_116] : memref<232x216xbf16, #tpu.memory_space<vmem>>, vector<8x216xbf16>
    tpu.vector_store %arg8[%c16_115, %c0_116], %105 {strides = array<i32>} : memref<232x216xbf16, #tpu.memory_space<vmem>>, vector<8x216xbf16>,
    %c0_117 = arith.constant 0 : index
    %c91_118 = arith.constant 91 : index
    %107 = vector.load %arg7[%c0_117, %c91_118] : memref<8x472xbf16, #tpu.memory_space<vmem>>, vector<8x216xbf16>
    %c24_119 = arith.constant 24 : index
    %c0_120 = arith.constant 0 : index
    %108 = vector.load %arg8[%c24_119, %c0_120] : memref<232x216xbf16, #tpu.memory_space<vmem>>, vector<8x216xbf16>
    tpu.vector_store %arg8[%c24_119, %c0_120], %107 {strides = array<i32>} : memref<232x216xbf16, #tpu.memory_space<vmem>>, vector<8x216xbf16>,
    %c0_121 = arith.constant 0 : index
    %c92_122 = arith.constant 92 : index
    %109 = vector.load %arg7[%c0_121, %c92_122] : memref<8x472xbf16, #tpu.memory_space<vmem>>, vector<8x216xbf16>
    %c32_123 = arith.constant 32 : index
    %c0_124 = arith.constant 0 : index
    %110 = vector.load %arg8[%c32_123, %c0_124] : memref<232x216xbf16, #tpu.memory_space<vmem>>, vector<8x216xbf16>
    tpu.vector_store %arg8[%c32_123, %c0_124], %109 {strides = array<i32>} : memref<232x216xbf16, #tpu.memory_space<vmem>>, vector<8x216xbf16>,
    %c0_125 = arith.constant 0 : index
    %c93_126 = arith.constant 93 : index
    %111 = vector.load %arg7[%c0_125, %c93_126] : memref<8x472xbf16, #tpu.memory_space<vmem>>, vector<8x216xbf16>
    %c40_127 = arith.constant 40 : index
    %c0_128 = arith.constant 0 : index
    %112 = vector.load %arg8[%c40_127, %c0_128] : memref<232x216xbf16, #tpu.memory_space<vmem>>, vector<8x216xbf16>
    tpu.vector_store %arg8[%c40_127, %c0_128], %111 {strides = array<i32>} : memref<232x216xbf16, #tpu.memory_space<vmem>>, vector<8x216xbf16>,
    %c0_129 = arith.constant 0 : index
    %c97_130 = arith.constant 97 : index
    %113 = vector.load %arg7[%c0_129, %c97_130] : memref<8x472xbf16, #tpu.memory_space<vmem>>, vector<8x216xbf16>
    %c48_131 = arith.constant 48 : index
    %c0_132 = arith.constant 0 : index
    %114 = vector.load %arg8[%c48_131, %c0_132] : memref<232x216xbf16, #tpu.memory_space<vmem>>, vector<8x216xbf16>
    tpu.vector_store %arg8[%c48_131, %c0_132], %113 {strides = array<i32>} : memref<232x216xbf16, #tpu.memory_space<vmem>>, vector<8x216xbf16>,
    %c0_133 = arith.constant 0 : index
    %c98_134 = arith.constant 98 : index
    %115 = vector.load %arg7[%c0_133, %c98_134] : memref<8x472xbf16, #tpu.memory_space<vmem>>, vector<8x216xbf16>
    %c56_135 = arith.constant 56 : index
    %c0_136 = arith.constant 0 : index
    %116 = vector.load %arg8[%c56_135, %c0_136] : memref<232x216xbf16, #tpu.memory_space<vmem>>, vector<8x216xbf16>
    tpu.vector_store %arg8[%c56_135, %c0_136], %115 {strides = array<i32>} : memref<232x216xbf16, #tpu.memory_space<vmem>>, vector<8x216xbf16>,
    %c0_137 = arith.constant 0 : index
    %c99_138 = arith.constant 99 : index
    %117 = vector.load %arg7[%c0_137, %c99_138] : memref<8x472xbf16, #tpu.memory_space<vmem>>, vector<8x216xbf16>
    %c64_139 = arith.constant 64 : index
    %c0_140 = arith.constant 0 : index
    %118 = vector.load %arg8[%c64_139, %c0_140] : memref<232x216xbf16, #tpu.memory_space<vmem>>, vector<8x216xbf16>
    tpu.vector_store %arg8[%c64_139, %c0_140], %117 {strides = array<i32>} : memref<232x216xbf16, #tpu.memory_space<vmem>>, vector<8x216xbf16>,
    %c0_141 = arith.constant 0 : index
    %c121_142 = arith.constant 121 : index
    %119 = vector.load %arg7[%c0_141, %c121_142] : memref<8x472xbf16, #tpu.memory_space<vmem>>, vector<8x216xbf16>
    %c72_143 = arith.constant 72 : index
    %c0_144 = arith.constant 0 : index
    %120 = vector.load %arg8[%c72_143, %c0_144] : memref<232x216xbf16, #tpu.memory_space<vmem>>, vector<8x216xbf16>
    tpu.vector_store %arg8[%c72_143, %c0_144], %119 {strides = array<i32>} : memref<232x216xbf16, #tpu.memory_space<vmem>>, vector<8x216xbf16>,
    %c0_145 = arith.constant 0 : index
    %c122_146 = arith.constant 122 : index
    %121 = vector.load %arg7[%c0_145, %c122_146] : memref<8x472xbf16, #tpu.memory_space<vmem>>, vector<8x216xbf16>
    %c80_147 = arith.constant 80 : index
    %c0_148 = arith.constant 0 : index
    %122 = vector.load %arg8[%c80_147, %c0_148] : memref<232x216xbf16, #tpu.memory_space<vmem>>, vector<8x216xbf16>
    tpu.vector_store %arg8[%c80_147, %c0_148], %121 {strides = array<i32>} : memref<232x216xbf16, #tpu.memory_space<vmem>>, vector<8x216xbf16>,
    %c0_149 = arith.constant 0 : index
    %c123_150 = arith.constant 123 : index
    %123 = vector.load %arg7[%c0_149, %c123_150] : memref<8x472xbf16, #tpu.memory_space<vmem>>, vector<8x216xbf16>
    %c88_151 = arith.constant 88 : index
    %c0_152 = arith.constant 0 : index
    %124 = vector.load %arg8[%c88_151, %c0_152] : memref<232x216xbf16, #tpu.memory_space<vmem>>, vector<8x216xbf16>
    tpu.vector_store %arg8[%c88_151, %c0_152], %123 {strides = array<i32>} : memref<232x216xbf16, #tpu.memory_space<vmem>>, vector<8x216xbf16>,
    %c0_153 = arith.constant 0 : index
    %c127_154 = arith.constant 127 : index
    %125 = vector.load %arg7[%c0_153, %c127_154] : memref<8x472xbf16, #tpu.memory_space<vmem>>, vector<8x216xbf16>
    %c96_155 = arith.constant 96 : index
    %c0_156 = arith.constant 0 : index
    %126 = vector.load %arg8[%c96_155, %c0_156] : memref<232x216xbf16, #tpu.memory_space<vmem>>, vector<8x216xbf16>
    tpu.vector_store %arg8[%c96_155, %c0_156], %125 {strides = array<i32>} : memref<232x216xbf16, #tpu.memory_space<vmem>>, vector<8x216xbf16>,
    %c0_157 = arith.constant 0 : index
    %c128_158 = arith.constant 128 : index
    %127 = vector.load %arg7[%c0_157, %c128_158] : memref<8x472xbf16, #tpu.memory_space<vmem>>, vector<8x216xbf16>
    %c104_159 = arith.constant 104 : index
    %c0_160 = arith.constant 0 : index
    %128 = vector.load %arg8[%c104_159, %c0_160] : memref<232x216xbf16, #tpu.memory_space<vmem>>, vector<8x216xbf16>
    tpu.vector_store %arg8[%c104_159, %c0_160], %127 {strides = array<i32>} : memref<232x216xbf16, #tpu.memory_space<vmem>>, vector<8x216xbf16>,
    %c0_161 = arith.constant 0 : index
    %c129_162 = arith.constant 129 : index
    %129 = vector.load %arg7[%c0_161, %c129_162] : memref<8x472xbf16, #tpu.memory_space<vmem>>, vector<8x216xbf16>
    %c112_163 = arith.constant 112 : index
    %c0_164 = arith.constant 0 : index
    %130 = vector.load %arg8[%c112_163, %c0_164] : memref<232x216xbf16, #tpu.memory_space<vmem>>, vector<8x216xbf16>
    tpu.vector_store %arg8[%c112_163, %c0_164], %129 {strides = array<i32>} : memref<232x216xbf16, #tpu.memory_space<vmem>>, vector<8x216xbf16>,
    %c0_165 = arith.constant 0 : index
    %c133_166 = arith.constant 133 : index
    %131 = vector.load %arg7[%c0_165, %c133_166] : memref<8x472xbf16, #tpu.memory_space<vmem>>, vector<8x216xbf16>
    %c120_167 = arith.constant 120 : index
    %c0_168 = arith.constant 0 : index
    %132 = vector.load %arg8[%c120_167, %c0_168] : memref<232x216xbf16, #tpu.memory_space<vmem>>, vector<8x216xbf16>
    tpu.vector_store %arg8[%c120_167, %c0_168], %131 {strides = array<i32>} : memref<232x216xbf16, #tpu.memory_space<vmem>>, vector<8x216xbf16>,
    %c0_169 = arith.constant 0 : index
    %c134_170 = arith.constant 134 : index
    %133 = vector.load %arg7[%c0_169, %c134_170] : memref<8x472xbf16, #tpu.memory_space<vmem>>, vector<8x216xbf16>
    %c128_171 = arith.constant 128 : index
    %c0_172 = arith.constant 0 : index
    %134 = vector.load %arg8[%c128_171, %c0_172] : memref<232x216xbf16, #tpu.memory_space<vmem>>, vector<8x216xbf16>
    tpu.vector_store %arg8[%c128_171, %c0_172], %133 {strides = array<i32>} : memref<232x216xbf16, #tpu.memory_space<vmem>>, vector<8x216xbf16>,
    %c0_173 = arith.constant 0 : index
    %c135_174 = arith.constant 135 : index
    %135 = vector.load %arg7[%c0_173, %c135_174] : memref<8x472xbf16, #tpu.memory_space<vmem>>, vector<8x216xbf16>
    %c136_175 = arith.constant 136 : index
    %c0_176 = arith.constant 0 : index
    %136 = vector.load %arg8[%c136_175, %c0_176] : memref<232x216xbf16, #tpu.memory_space<vmem>>, vector<8x216xbf16>
    tpu.vector_store %arg8[%c136_175, %c0_176], %135 {strides = array<i32>} : memref<232x216xbf16, #tpu.memory_space<vmem>>, vector<8x216xbf16>,
    %c0_177 = arith.constant 0 : index
    %c157_178 = arith.constant 157 : index
    %137 = vector.load %arg7[%c0_177, %c157_178] : memref<8x472xbf16, #tpu.memory_space<vmem>>, vector<8x216xbf16>
    %c144_179 = arith.constant 144 : index
    %c0_180 = arith.constant 0 : index
    %138 = vector.load %arg8[%c144_179, %c0_180] : memref<232x216xbf16, #tpu.memory_space<vmem>>, vector<8x216xbf16>
    tpu.vector_store %arg8[%c144_179, %c0_180], %137 {strides = array<i32>} : memref<232x216xbf16, #tpu.memory_space<vmem>>, vector<8x216xbf16>,
    %c0_181 = arith.constant 0 : index
    %c158_182 = arith.constant 158 : index
    %139 = vector.load %arg7[%c0_181, %c158_182] : memref<8x472xbf16, #tpu.memory_space<vmem>>, vector<8x216xbf16>
    %c152_183 = arith.constant 152 : index
    %c0_184 = arith.constant 0 : index
    %140 = vector.load %arg8[%c152_183, %c0_184] : memref<232x216xbf16, #tpu.memory_space<vmem>>, vector<8x216xbf16>
    tpu.vector_store %arg8[%c152_183, %c0_184], %139 {strides = array<i32>} : memref<232x216xbf16, #tpu.memory_space<vmem>>, vector<8x216xbf16>,
    %c0_185 = arith.constant 0 : index
    %c159_186 = arith.constant 159 : index
    %141 = vector.load %arg7[%c0_185, %c159_186] : memref<8x472xbf16, #tpu.memory_space<vmem>>, vector<8x216xbf16>
    %c160_187 = arith.constant 160 : index
    %c0_188 = arith.constant 0 : index
    %142 = vector.load %arg8[%c160_187, %c0_188] : memref<232x216xbf16, #tpu.memory_space<vmem>>, vector<8x216xbf16>
    tpu.vector_store %arg8[%c160_187, %c0_188], %141 {strides = array<i32>} : memref<232x216xbf16, #tpu.memory_space<vmem>>, vector<8x216xbf16>,
    %c0_189 = arith.constant 0 : index
    %c163_190 = arith.constant 163 : index
    %143 = vector.load %arg7[%c0_189, %c163_190] : memref<8x472xbf16, #tpu.memory_space<vmem>>, vector<8x216xbf16>
    %c168_191 = arith.constant 168 : index
    %c0_192 = arith.constant 0 : index
    %144 = vector.load %arg8[%c168_191, %c0_192] : memref<232x216xbf16, #tpu.memory_space<vmem>>, vector<8x216xbf16>
    tpu.vector_store %arg8[%c168_191, %c0_192], %143 {strides = array<i32>} : memref<232x216xbf16, #tpu.memory_space<vmem>>, vector<8x216xbf16>,
    %c0_193 = arith.constant 0 : index
    %c164_194 = arith.constant 164 : index
    %145 = vector.load %arg7[%c0_193, %c164_194] : memref<8x472xbf16, #tpu.memory_space<vmem>>, vector<8x216xbf16>
    %c176_195 = arith.constant 176 : index
    %c0_196 = arith.constant 0 : index
    %146 = vector.load %arg8[%c176_195, %c0_196] : memref<232x216xbf16, #tpu.memory_space<vmem>>, vector<8x216xbf16>
    tpu.vector_store %arg8[%c176_195, %c0_196], %145 {strides = array<i32>} : memref<232x216xbf16, #tpu.memory_space<vmem>>, vector<8x216xbf16>,
    %c0_197 = arith.constant 0 : index
    %c165_198 = arith.constant 165 : index
    %147 = vector.load %arg7[%c0_197, %c165_198] : memref<8x472xbf16, #tpu.memory_space<vmem>>, vector<8x216xbf16>
    %c184_199 = arith.constant 184 : index
    %c0_200 = arith.constant 0 : index
    %148 = vector.load %arg8[%c184_199, %c0_200] : memref<232x216xbf16, #tpu.memory_space<vmem>>, vector<8x216xbf16>
    tpu.vector_store %arg8[%c184_199, %c0_200], %147 {strides = array<i32>} : memref<232x216xbf16, #tpu.memory_space<vmem>>, vector<8x216xbf16>,
    %c0_201 = arith.constant 0 : index
    %c169_202 = arith.constant 169 : index
    %149 = vector.load %arg7[%c0_201, %c169_202] : memref<8x472xbf16, #tpu.memory_space<vmem>>, vector<8x216xbf16>
    %c192_203 = arith.constant 192 : index
    %c0_204 = arith.constant 0 : index
    %150 = vector.load %arg8[%c192_203, %c0_204] : memref<232x216xbf16, #tpu.memory_space<vmem>>, vector<8x216xbf16>
    tpu.vector_store %arg8[%c192_203, %c0_204], %149 {strides = array<i32>} : memref<232x216xbf16, #tpu.memory_space<vmem>>, vector<8x216xbf16>,
    %c0_205 = arith.constant 0 : index
    %c170_206 = arith.constant 170 : index
    %151 = vector.load %arg7[%c0_205, %c170_206] : memref<8x472xbf16, #tpu.memory_space<vmem>>, vector<8x216xbf16>
    %c200_207 = arith.constant 200 : index
    %c0_208 = arith.constant 0 : index
    %152 = vector.load %arg8[%c200_207, %c0_208] : memref<232x216xbf16, #tpu.memory_space<vmem>>, vector<8x216xbf16>
    tpu.vector_store %arg8[%c200_207, %c0_208], %151 {strides = array<i32>} : memref<232x216xbf16, #tpu.memory_space<vmem>>, vector<8x216xbf16>,
    %c0_209 = arith.constant 0 : index
    %c171_210 = arith.constant 171 : index
    %153 = vector.load %arg7[%c0_209, %c171_210] : memref<8x472xbf16, #tpu.memory_space<vmem>>, vector<8x216xbf16>
    %c208_211 = arith.constant 208 : index
    %c0_212 = arith.constant 0 : index
    %154 = vector.load %arg8[%c208_211, %c0_212] : memref<232x216xbf16, #tpu.memory_space<vmem>>, vector<8x216xbf16>
    tpu.vector_store %arg8[%c208_211, %c0_212], %153 {strides = array<i32>} : memref<232x216xbf16, #tpu.memory_space<vmem>>, vector<8x216xbf16>,
    %c0_213 = arith.constant 0 : index
    %c0_214 = arith.constant 0 : index
    %c128_215 = arith.constant 128 : index
    %155 = vector.load %arg1[%c0_213, %c0_214, %c128_215] : memref<1x4x472xbf16, #tpu.memory_space<vmem>>, vector<1x4x216xbf16>
    %156 = vector.shape_cast %155 : vector<1x4x216xbf16> to vector<4x216xbf16>
    %c224 = arith.constant 224 : index
    %c0_216 = arith.constant 0 : index
    %157 = vector.load %arg8[%c224, %c0_216] : memref<232x216xbf16, #tpu.memory_space<vmem>>, vector<4x216xbf16>
    tpu.vector_store %arg8[%c224, %c0_216], %156 {strides = array<i32>} : memref<232x216xbf16, #tpu.memory_space<vmem>>, vector<4x216xbf16>,
    %c0_217 = arith.constant 0 : index
    %c0_218 = arith.constant 0 : index
    %158 = vector.load %arg3[%c0_217, %c0_218] : memref<8x232xbf16, #tpu.memory_space<vmem>>, vector<8x232xbf16>
    %c0_219 = arith.constant 0 : index
    %c0_220 = arith.constant 0 : index
    %159 = vector.load %arg8[%c0_219, %c0_220] : memref<232x216xbf16, #tpu.memory_space<vmem>>, vector<232x216xbf16>
    %cst_221 = arith.constant dense<0.000000e+00> : vector<8x216xf32>
    %160 = tpu.matmul %158, %159, %cst_221 {dimension_numbers = #tpu.dot_dimension_numbers<[1], [0], [0], [1], [0, 0, 1, 1], [], []>} : vector<8x232xbf16>, vector<232x216xbf16>, vector<8x216xf32> -> vector<8x216xf32>
    %cst_222 = arith.constant 0.000000e+00 : f32
    %161 = vector.broadcast %cst_222 : f32 to vector<8x216xf32>
    %162 = arith.maximumf %160, %161 : vector<8x216xf32>
    %163 = vector.broadcast %10 : vector<1x216xf32> to vector<8x216xf32>
    %164 = arith.mulf %162, %163 : vector<8x216xf32>
    %165 = arith.truncf %164 : vector<8x216xf32> to vector<8x216xbf16>
    %c0_223 = arith.constant 0 : index
    %c0_224 = arith.constant 0 : index
    %c0_225 = arith.constant 0 : index
    %166 = vector.load %arg5[%c0_223, %c0_224, %c0_225] : memref<1x8x216xbf16, #tpu.memory_space<vmem>>, vector<1x8x216xbf16>
    %167 = vector.shape_cast %166 : vector<1x8x216xbf16> to vector<8x216xbf16>
    %168 = vector.shape_cast %165 : vector<8x216xbf16> to vector<1x8x216xbf16>
    tpu.vector_store %arg5[%c0_223, %c0_224, %c0_225], %168 {strides = array<i32>} : memref<1x8x216xbf16, #tpu.memory_space<vmem>>, vector<1x8x216xbf16>,
    return
  }
  func.func @transform_0(%arg0: i32) -> (i32, i32, i32) {
    %c0_i32 = arith.constant 0 : i32
    %c0_i32_0 = arith.constant 0 : i32
    %c0_i32_1 = arith.constant 0 : i32
    return %arg0, %c0_i32, %c0_i32_0 : i32, i32, i32
  }
  func.func @transform_1(%arg0: i32) -> (i32, i32) {
    %c0_i32 = arith.constant 0 : i32
    %c0_i32_0 = arith.constant 0 : i32
    %c0_i32_1 = arith.constant 0 : i32
    return %c0_i32, %c0_i32_0 : i32, i32
  }
  func.func @transform_2(%arg0: i32) -> (i32, i32) {
    %c0_i32 = arith.constant 0 : i32
    %c0_i32_0 = arith.constant 0 : i32
    %c0_i32_1 = arith.constant 0 : i32
    return %c0_i32, %c0_i32_0 : i32, i32
  }
  func.func @transform_3(%arg0: i32) -> (i32, i32) {
    %c0_i32 = arith.constant 0 : i32
    %c0_i32_0 = arith.constant 0 : i32
    %c0_i32_1 = arith.constant 0 : i32
    return %c0_i32, %c0_i32_0 : i32, i32
  }
  func.func @transform_4(%arg0: i32) -> (i32, i32, i32) {
    %c0_i32 = arith.constant 0 : i32
    %c0_i32_0 = arith.constant 0 : i32
    %c0_i32_1 = arith.constant 0 : i32
    return %arg0, %c0_i32, %c0_i32_0 : i32, i32, i32
  }
}

</mosaic_0001>

<llo_original>
// kernel: encoder_forward.2
$region0: #{encoder_forward.2}
  #allocation0 [shape = 'u32[]', space=smem, size = 0x4, offset = 0x4, fixed_abs, tag = 'smem constant byte address 0x4 - core index']
  #allocation1 [shape = 'u32[144,128]{1,0:T(1,128)}', space=vmem, size = 0x12000, scoped, tag = 'internal scratch']
  #allocation2 [shape = 'bf16[224,1000]{1,0:T(16,128)(2,1)}', space=vmem, size = 0x70000, scoped, tag = 'scratch operand']
  #allocation3 [shape = 'bf16[4,1256]{1,0:T(4,128)(2,1)}', space=vmem, size = 0x2800, scoped, tag = 'scratch operand']
  #allocation4 [shape = 'bf16[232,1000]{1,0:T(8,128)(2,1)}', space=vmem, size = 0x74000, scoped, tag = 'scratch operand']
  %s0 = inlined_call_operand.vmem [shape: bf16[2,2,1256], index: 0, kind: input, shape index: {}]
  %s1 = inlined_call_operand.vmem [shape: bf16[4,224], index: 1, kind: input, shape index: {}]
  %s2 = inlined_call_operand.vmem [shape: bf16[4,232], index: 2, kind: input, shape index: {}]
  %s3 = inlined_call_operand.vmem [shape: f32[1,1000], index: 3, kind: input, shape index: {}]
  %s4 = inlined_call_operand.vmem [shape: bf16[2,4,1000], index: 4, kind: output, shape index: {}]
  %s5 = sld [smem:[#allocation0]]
  $region49: #{encoder_forward.2} parent=0
    _
  %s7 = ssub.s32 1, %s5
  %s8 = scalar_select 0, %s7, %s5
  loop: start=0, step=1, limit=4
  $region2: #{encoder_forward.2} parent=0 // loop_pre_header
    _
  $region3: #{encoder_forward.2} parent=0 // loop_header
    %s10 = sphi 0, %s14
    %p11 = scmp.ge.s32.totalorder %s10, 4
    %s20 = sphi 0, %s22
    %s23 = sphi 0, %s20
    %s24 = sphi 0, %s23
    %s40 = sphi 0, %s24
    %s44 = sphi 0, %s44
    %s46 = sphi 0, %s44
    %s47 = sphi 0, %s46
    %s61 = sphi 0, %s47
    %s65 = sphi 0, %s65
    %s67 = sphi 0, %s65
    %s68 = sphi 0, %s67
    %s82 = sphi 0, %s68
    %s86 = sphi 0, %s86
    %s88 = sphi 0, %s86
    %s89 = sphi 0, %s88
    %s103 = sphi 0, %s89
    %s109 = sphi 0, %s111
    %s112 = sphi 0, %s109
    %s113 = sphi 0, %s112
    %s129 = sphi 0, %s113
  $region4: #{encoder_forward.2} parent=0 // loop_header_branch
    %13 = sbr.rel (%p11) target = $region8
  $region5: #{encoder_forward.2} parent=0 // loop_body
    %s15 = ssub.s32 %s10, 1
    %s16 = ssub.s32 %s10, 2
    %s17 = sadd.s32 %s10, 1
    %s18 = ssub.s32 %s10, %s17
    %p19 = scmp.eq.s32.totalorder %s18, 0
    %s21 = sadd.s32 %s20, 1
    %s22 = scalar_select %p19, %s20, %s21
    %p25 = pneg %p19
    %p26 = scmp.eq.s32.totalorder %s10, 1
    %p27 = por %p25, %p26
    %p28 = scmp.ne.s32.totalorder %s20, %s23
    %p29 = scmp.eq.s32.totalorder %s10, 0
    %p30 = por %p28, %p29
    %p31 = scmp.ne.s32.totalorder %s20, %s23
    %p32 = scmp.eq.s32.totalorder %s15, 1
    %p33 = por %p31, %p32
    %p34 = scmp.ne.s32.totalorder %s23, %s24
    %p35 = scmp.eq.s32.totalorder %s15, 0
    %p36 = por %p34, %p35
    %p37 = scmp.ne.s32.totalorder %s23, %s24
    %p38 = scmp.eq.s32.totalorder %s16, 1
    %p39 = por %p37, %p38
    %p41 = scmp.ne.s32.totalorder %s24, %s40
    %p42 = scmp.eq.s32.totalorder %s16, 0
    %p43 = por %p41, %p42
    %s45 = sadd.s32 %s44, 1
    %p48 = scmp.eq.s32.totalorder %s10, 1
    %p49 = scmp.ne.s32.totalorder %s44, %s46
    %p50 = scmp.eq.s32.totalorder %s10, 0
    %p51 = por %p49, %p50
    %p52 = scmp.ne.s32.totalorder %s44, %s46
    %p53 = scmp.eq.s32.totalorder %s15, 1
    %p54 = por %p52, %p53
    %p55 = scmp.ne.s32.totalorder %s46, %s47
    %p56 = scmp.eq.s32.totalorder %s15, 0
    %p57 = por %p55, %p56
    %p58 = scmp.ne.s32.totalorder %s46, %s47
    %p59 = scmp.eq.s32.totalorder %s16, 1
    %p60 = por %p58, %p59
    %p62 = scmp.ne.s32.totalorder %s47, %s61
    %p63 = scmp.eq.s32.totalorder %s16, 0
    %p64 = por %p62, %p63
    %s66 = sadd.s32 %s65, 1
    %p69 = scmp.eq.s32.totalorder %s10, 1
    %p70 = scmp.ne.s32.totalorder %s65, %s67
    %p71 = scmp.eq.s32.totalorder %s10, 0
    %p72 = por %p70, %p71
    %p73 = scmp.ne.s32.totalorder %s65, %s67
    %p74 = scmp.eq.s32.totalorder %s15, 1
    %p75 = por %p73, %p74
    %p76 = scmp.ne.s32.totalorder %s67, %s68
    %p77 = scmp.eq.s32.totalorder %s15, 0
    %p78 = por %p76, %p77
    %p79 = scmp.ne.s32.totalorder %s67, %s68
    %p80 = scmp.eq.s32.totalorder %s16, 1
    %p81 = por %p79, %p80
    %p83 = scmp.ne.s32.totalorder %s68, %s82
    %p84 = scmp.eq.s32.totalorder %s16, 0
    %p85 = por %p83, %p84
    %s87 = sadd.s32 %s86, 1
    %p90 = scmp.eq.s32.totalorder %s10, 1
    %p91 = scmp.ne.s32.totalorder %s86, %s88
    %p92 = scmp.eq.s32.totalorder %s10, 0
    %p93 = por %p91, %p92
    %p94 = scmp.ne.s32.totalorder %s86, %s88
    %p95 = scmp.eq.s32.totalorder %s15, 1
    %p96 = por %p94, %p95
    %p97 = scmp.ne.s32.totalorder %s88, %s89
    %p98 = scmp.eq.s32.totalorder %s15, 0
    %p99 = por %p97, %p98
    %p100 = scmp.ne.s32.totalorder %s88, %s89
    %p101 = scmp.eq.s32.totalorder %s16, 1
    %p102 = por %p100, %p101
    %p104 = scmp.ne.s32.totalorder %s89, %s103
    %p105 = scmp.eq.s32.totalorder %s16, 0
    %p106 = por %p104, %p105
    %s107 = ssub.s32 %s10, %s17
    %p108 = scmp.eq.s32.totalorder %s107, 0
    %s110 = sadd.s32 %s109, 1
    %s111 = scalar_select %p108, %s109, %s110
    %p114 = pneg %p108
    %p115 = scmp.eq.s32.totalorder %s10, 1
    %p116 = por %p114, %p115
    %p117 = scmp.ne.s32.totalorder %s109, %s112
    %p118 = scmp.eq.s32.totalorder %s10, 0
    %p119 = por %p117, %p118
    %p120 = scmp.ne.s32.totalorder %s109, %s112
    %p121 = scmp.eq.s32.totalorder %s15, 1
    %p122 = por %p120, %p121
    %p123 = scmp.ne.s32.totalorder %s112, %s113
    %p124 = scmp.eq.s32.totalorder %s15, 0
    %p125 = por %p123, %p124
    %p126 = scmp.ne.s32.totalorder %s112, %s113
    %p127 = scmp.eq.s32.totalorder %s16, 1
    %p128 = por %p126, %p127
    %p130 = scmp.ne.s32.totalorder %s113, %s129
    %p131 = scmp.eq.s32.totalorder %s16, 0
    %p132 = por %p130, %p131
    %p133 = scmp.le.s32.totalorder 1, %s10
    %p134 = scmp.lt.s32.totalorder %s10, 3
    %p135 = pnand %p133, %p134
    %p136 = pneg %p135
    // Predicated region
    $region9: #{encoder_forward.2} parent=5 // pred_check
      _
    $region10: #{encoder_forward.2} parent=5 // pred_check_branch
      %138 = sbr.rel (%p135) target = $region12
    $region11: #{encoder_forward.2} parent=5 // pred_region
      %s139 = ssub.s32 %s10, 1
      // Predicated region
      $region13: #{encoder_forward.2} parent=11 // pred_check
        %p140 = pneg %p57
      $region14: #{encoder_forward.2} parent=11 // pred_check_branch
        %142 = sbr.rel (%p140) target = $region16
      $region15: #{encoder_forward.2} parent=11 // pred_region
        _
      $region16: #{encoder_forward.2} parent=11 // pred_fallthru
        _
      // Predicated region
      $region17: #{encoder_forward.2} parent=11 // pred_check
        %p143 = pneg %p78
      $region18: #{encoder_forward.2} parent=11 // pred_check_branch
        %145 = sbr.rel (%p143) target = $region20
      $region19: #{encoder_forward.2} parent=11 // pred_region
        _
      $region20: #{encoder_forward.2} parent=11 // pred_fallthru
        _
      // Predicated region
      $region21: #{encoder_forward.2} parent=11 // pred_check
        %p146 = pneg %p99
      $region22: #{encoder_forward.2} parent=11 // pred_check_branch
        %148 = sbr.rel (%p146) target = $region24
      $region23: #{encoder_forward.2} parent=11 // pred_region
        _
      $region24: #{encoder_forward.2} parent=11 // pred_fallthru
        _
    $region12: #{encoder_forward.2} parent=5 // pred_fallthru
      _
    %p149 = scmp.lt.s32.totalorder %s10, 2
    // Predicated region
    $region25: #{encoder_forward.2} parent=5 // pred_check
      %p150 = pneg %p149
    $region26: #{encoder_forward.2} parent=5 // pred_check_branch
      %152 = sbr.rel (%p150) target = $region28
    $region27: #{encoder_forward.2} parent=5 // pred_region
      // Predicated region
      $region29: #{encoder_forward.2} parent=27 // pred_check
        %p153 = pneg %p30
      $region30: #{encoder_forward.2} parent=27 // pred_check_branch
        %155 = sbr.rel (%p153) target = $region32
      $region31: #{encoder_forward.2} parent=27 // pred_region
        %p156 = scmp.lt.s32.totalorder %s10, 1
        %s157 = scalar_select %p156, %s10, 1
        %s158 = smul.addr %s157, 10
        %s159 = scalar_lea.vmem %s0, %s158
      $region32: #{encoder_forward.2} parent=27 // pred_fallthru
        _
    $region28: #{encoder_forward.2} parent=5 // pred_fallthru
      _
    %p160 = scmp.le.s32.totalorder 1, %s10
    %p161 = scmp.lt.s32.totalorder %s10, 3
    %p162 = pnand %p160, %p161
    %p163 = pneg %p162
    // Predicated region
    $region33: #{encoder_forward.2} parent=5 // pred_check
      _
    $region34: #{encoder_forward.2} parent=5 // pred_check_branch
      %165 = sbr.rel (%p162) target = $region36
    $region35: #{encoder_forward.2} parent=5 // pred_region
      %s166 = ssub.s32 %s10, 1
      %p167 = scmp.lt.s32.totalorder %s15, 1
      %s168 = scalar_select %p167, %s15, 1
      %s169 = smul.addr %s168, 10
      %s170 = scalar_lea.vmem %s0, %s169
      %p171 = pneg %p36
      %p172 = pneg %p33
      %p173 = pneg %p57
      %p174 = pneg %p54
      %p175 = pneg %p78
      %p176 = pneg %p75
      %p177 = pneg %p99
      %p178 = pneg %p96
      %p179 = pneg %p125
      %p180 = pneg %p122
      %p181 = scmp.lt.s32.totalorder %s15, 1
      %s182 = scalar_select %p181, %s15, 1
      %s183 = smul.addr %s182, 8
      %s184 = smul.addr %s183, 2
      %s185 = scalar_lea.vmem %s4, %s184
      %p186 = scmp.lt.s32.totalorder %s15, 1
      %s187 = scalar_select %p186, %s15, 1
      %s188 = smul.addr %s187, 10
      %s189 = scalar_lea.vmem %s0, %s188
      %p190 = scmp.lt.s32.totalorder %s15, 1
      %s191 = scalar_select %p190, %s15, 1
      %s192 = smul.addr %s191, 8
      %s193 = smul.addr %s192, 2
      %s194 = scalar_lea.vmem %s4, %s193
      %197 = vst [vmem:[#allocation2] sm:$0xff] 0
      %198 = vst [vmem:[#allocation2 + $0x8] sm:$0xff] 0
      %199 = vst [vmem:[#allocation2 + $0x10] sm:$0xff] 0
      %200 = vst [vmem:[#allocation2 + $0x18] sm:$0xff] 0
      %201 = vst [vmem:[#allocation2 + $0x20] sm:$0xff] 0
      %202 = vst [vmem:[#allocation2 + $0x28] sm:$0xff] 0
      %203 = vst [vmem:[#allocation2 + $0x30] sm:$0xff] 0
      %vm204 = vcmask 850944
      %205 = vst.msk [vmem:[#allocation2 + $0x38] sm:$0xff] %vm204, 0
      %206 = vst [vmem:[#allocation2 + $0x40] sm:$0xff] 0
      %207 = vst [vmem:[#allocation2 + $0x48] sm:$0xff] 0
      %208 = vst [vmem:[#allocation2 + $0x50] sm:$0xff] 0
      %209 = vst [vmem:[#allocation2 + $0x58] sm:$0xff] 0
      %210 = vst [vmem:[#allocation2 + $0x60] sm:$0xff] 0
      %211 = vst [vmem:[#allocation2 + $0x68] sm:$0xff] 0
      %212 = vst [vmem:[#allocation2 + $0x70] sm:$0xff] 0
      %213 = vst.msk [vmem:[#allocation2 + $0x78] sm:$0xff] %vm204, 0
      %214 = vst [vmem:[#allocation2 + $0x80] sm:$0xff] 0
      %215 = vst [vmem:[#allocation2 + $0x88] sm:$0xff] 0
      %216 = vst [vmem:[#allocation2 + $0x90] sm:$0xff] 0
      %217 = vst [vmem:[#allocation2 + $0x98] sm:$0xff] 0
      %218 = vst [vmem:[#allocation2 + $0xa0] sm:$0xff] 0
      %219 = vst [vmem:[#allocation2 + $0xa8] sm:$0xff] 0
      %220 = vst [vmem:[#allocation2 + $0xb0] sm:$0xff] 0
      %221 = vst.msk [vmem:[#allocation2 + $0xb8] sm:$0xff] %vm204, 0
      %222 = vst [vmem:[#allocation2 + $0xc0] sm:$0xff] 0
      %223 = vst [vmem:[#allocation2 + $0xc8] sm:$0xff] 0
      %224 = vst [vmem:[#allocation2 + $0xd0] sm:$0xff] 0
      %225 = vst [vmem:[#allocation2 + $0xd8] sm:$0xff] 0
      %226 = vst [vmem:[#allocation2 + $0xe0] sm:$0xff] 0
      %227 = vst [vmem:[#allocation2 + $0xe8] sm:$0xff] 0
      %228 = vst [vmem:[#allocation2 + $0xf0] sm:$0xff] 0
      %229 = vst.msk [vmem:[#allocation2 + $0xf8] sm:$0xff] %vm204, 0
      %230 = vst [vmem:[#allocation2 + $0x100] sm:$0xff] 0
      %231 = vst [vmem:[#allocation2 + $0x108] sm:$0xff] 0
      %232 = vst [vmem:[#allocation2 + $0x110] sm:$0xff] 0
      %233 = vst [vmem:[#allocation2 + $0x118] sm:$0xff] 0
      %234 = vst [vmem:[#allocation2 + $0x120] sm:$0xff] 0
      %235 = vst [vmem:[#allocation2 + $0x128] sm:$0xff] 0
      %236 = vst [vmem:[#allocation2 + $0x130] sm:$0xff] 0
      %237 = vst.msk [vmem:[#allocation2 + $0x138] sm:$0xff] %vm204, 0
      %238 = vst [vmem:[#allocation2 + $0x140] sm:$0xff] 0
      %239 = vst [vmem:[#allocation2 + $0x148] sm:$0xff] 0
      %240 = vst [vmem:[#allocation2 + $0x150] sm:$0xff] 0
      %241 = vst [vmem:[#allocation2 + $0x158] sm:$0xff] 0
      %242 = vst [vmem:[#allocation2 + $0x160] sm:$0xff] 0
      %243 = vst [vmem:[#allocation2 + $0x168] sm:$0xff] 0
      %244 = vst [vmem:[#allocation2 + $0x170] sm:$0xff] 0
      %245 = vst.msk [vmem:[#allocation2 + $0x178] sm:$0xff] %vm204, 0
      %246 = vst [vmem:[#allocation2 + $0x180] sm:$0xff] 0
      %247 = vst [vmem:[#allocation2 + $0x188] sm:$0xff] 0
      %248 = vst [vmem:[#allocation2 + $0x190] sm:$0xff] 0
      %249 = vst [vmem:[#allocation2 + $0x198] sm:$0xff] 0
      %250 = vst [vmem:[#allocation2 + $0x1a0] sm:$0xff] 0
      %251 = vst [vmem:[#allocation2 + $0x1a8] sm:$0xff] 0
      %252 = vst [vmem:[#allocation2 + $0x1b0] sm:$0xff] 0
      %253 = vst.msk [vmem:[#allocation2 + $0x1b8] sm:$0xff] %vm204, 0
      %254 = vst [vmem:[#allocation2 + $0x1c0] sm:$0xff] 0
      %255 = vst [vmem:[#allocation2 + $0x1c8] sm:$0xff] 0
      %256 = vst [vmem:[#allocation2 + $0x1d0] sm:$0xff] 0
      %257 = vst [vmem:[#allocation2 + $0x1d8] sm:$0xff] 0
      %258 = vst [vmem:[#allocation2 + $0x1e0] sm:$0xff] 0
      %259 = vst [vmem:[#allocation2 + $0x1e8] sm:$0xff] 0
      %260 = vst [vmem:[#allocation2 + $0x1f0] sm:$0xff] 0
      %261 = vst.msk [vmem:[#allocation2 + $0x1f8] sm:$0xff] %vm204, 0
      %262 = vst [vmem:[#allocation2 + $0x200] sm:$0xff] 0
      %263 = vst [vmem:[#allocation2 + $0x208] sm:$0xff] 0
      %264 = vst [vmem:[#allocation2 + $0x210] sm:$0xff] 0
      %265 = vst [vmem:[#allocation2 + $0x218] sm:$0xff] 0
      %266 = vst [vmem:[#allocation2 + $0x220] sm:$0xff] 0
      %267 = vst [vmem:[#allocation2 + $0x228] sm:$0xff] 0
      %268 = vst [vmem:[#allocation2 + $0x230] sm:$0xff] 0
      %269 = vst.msk [vmem:[#allocation2 + $0x238] sm:$0xff] %vm204, 0
      %270 = vst [vmem:[#allocation2 + $0x240] sm:$0xff] 0
      %271 = vst [vmem:[#allocation2 + $0x248] sm:$0xff] 0
      %272 = vst [vmem:[#allocation2 + $0x250] sm:$0xff] 0
      %273 = vst [vmem:[#allocation2 + $0x258] sm:$0xff] 0
      %274 = vst [vmem:[#allocation2 + $0x260] sm:$0xff] 0
      %275 = vst [vmem:[#allocation2 + $0x268] sm:$0xff] 0
      %276 = vst [vmem:[#allocation2 + $0x270] sm:$0xff] 0
      %277 = vst.msk [vmem:[#allocation2 + $0x278] sm:$0xff] %vm204, 0
      %278 = vst [vmem:[#allocation2 + $0x280] sm:$0xff] 0
      %279 = vst [vmem:[#allocation2 + $0x288] sm:$0xff] 0
      %280 = vst [vmem:[#allocation2 + $0x290] sm:$0xff] 0
      %281 = vst [vmem:[#allocation2 + $0x298] sm:$0xff] 0
      %282 = vst [vmem:[#allocation2 + $0x2a0] sm:$0xff] 0
      %283 = vst [vmem:[#allocation2 + $0x2a8] sm:$0xff] 0
      %284 = vst [vmem:[#allocation2 + $0x2b0] sm:$0xff] 0
      %285 = vst.msk [vmem:[#allocation2 + $0x2b8] sm:$0xff] %vm204, 0
      %286 = vst [vmem:[#allocation2 + $0x2c0] sm:$0xff] 0
      %287 = vst [vmem:[#allocation2 + $0x2c8] sm:$0xff] 0
      %288 = vst [vmem:[#allocation2 + $0x2d0] sm:$0xff] 0
      %289 = vst [vmem:[#allocation2 + $0x2d8] sm:$0xff] 0
      %290 = vst [vmem:[#allocation2 + $0x2e0] sm:$0xff] 0
      %291 = vst [vmem:[#allocation2 + $0x2e8] sm:$0xff] 0
      %292 = vst [vmem:[#allocation2 + $0x2f0] sm:$0xff] 0
      %293 = vst.msk [vmem:[#allocation2 + $0x2f8] sm:$0xff] %vm204, 0
      %294 = vst [vmem:[#allocation2 + $0x300] sm:$0xff] 0
      %295 = vst [vmem:[#allocation2 + $0x308] sm:$0xff] 0
      %296 = vst [vmem:[#allocation2 + $0x310] sm:$0xff] 0
      %297 = vst [vmem:[#allocation2 + $0x318] sm:$0xff] 0
      %298 = vst [vmem:[#allocation2 + $0x320] sm:$0xff] 0
      %299 = vst [vmem:[#allocation2 + $0x328] sm:$0xff] 0
      %300 = vst [vmem:[#allocation2 + $0x330] sm:$0xff] 0
      %301 = vst.msk [vmem:[#allocation2 + $0x338] sm:$0xff] %vm204, 0
      %302 = vst [vmem:[#allocation2 + $0x340] sm:$0xff] 0
      %303 = vst [vmem:[#allocation2 + $0x348] sm:$0xff] 0
      %304 = vst [vmem:[#allocation2 + $0x350] sm:$0xff] 0
      %305 = vst [vmem:[#allocation2 + $0x358] sm:$0xff] 0
      %306 = vst [vmem:[#allocation2 + $0x360] sm:$0xff] 0
      %307 = vst [vmem:[#allocation2 + $0x368] sm:$0xff] 0
      %308 = vst [vmem:[#allocation2 + $0x370] sm:$0xff] 0
      %309 = vst.msk [vmem:[#allocation2 + $0x378] sm:$0xff] %vm204, 0
      %310 = vst [vmem:[#allocation4] sm:$0xff] 0
      %311 = vst [vmem:[#allocation4 + $0x8] sm:$0xff] 0
      %312 = vst [vmem:[#allocation4 + $0x10] sm:$0xff] 0
      %vm313 = vcmask 1043456
      %vm314 = vcmask 850948
      %vm315 = vmor %vm314, %vm313
      %316 = vst.msk [vmem:[#allocation4 + $0x18] sm:$0xff] %vm315, 0
      %317 = vst [vmem:[#allocation4 + $0x20] sm:$0xff] 0
      %318 = vst [vmem:[#allocation4 + $0x28] sm:$0xff] 0
      %319 = vst [vmem:[#allocation4 + $0x30] sm:$0xff] 0
      %320 = vst.msk [vmem:[#allocation4 + $0x38] sm:$0xff] %vm315, 0
      %321 = vst [vmem:[#allocation4 + $0x40] sm:$0xff] 0
      %322 = vst [vmem:[#allocation4 + $0x48] sm:$0xff] 0
      %323 = vst [vmem:[#allocation4 + $0x50] sm:$0xff] 0
      %324 = vst.msk [vmem:[#allocation4 + $0x58] sm:$0xff] %vm315, 0
      %325 = vst [vmem:[#allocation4 + $0x60] sm:$0xff] 0
      %326 = vst [vmem:[#allocation4 + $0x68] sm:$0xff] 0
      %327 = vst [vmem:[#allocation4 + $0x70] sm:$0xff] 0
      %328 = vst.msk [vmem:[#allocation4 + $0x78] sm:$0xff] %vm315, 0
      %329 = vst [vmem:[#allocation4 + $0x80] sm:$0xff] 0
      %330 = vst [vmem:[#allocation4 + $0x88] sm:$0xff] 0
      %331 = vst [vmem:[#allocation4 + $0x90] sm:$0xff] 0
      %332 = vst.msk [vmem:[#allocation4 + $0x98] sm:$0xff] %vm315, 0
      %333 = vst [vmem:[#allocation4 + $0xa0] sm:$0xff] 0
      %334 = vst [vmem:[#allocation4 + $0xa8] sm:$0xff] 0
      %335 = vst [vmem:[#allocation4 + $0xb0] sm:$0xff] 0
      %336 = vst.msk [vmem:[#allocation4 + $0xb8] sm:$0xff] %vm315, 0
      %337 = vst [vmem:[#allocation4 + $0xc0] sm:$0xff] 0
      %338 = vst [vmem:[#allocation4 + $0xc8] sm:$0xff] 0
      %339 = vst [vmem:[#allocation4 + $0xd0] sm:$0xff] 0
      %340 = vst.msk [vmem:[#allocation4 + $0xd8] sm:$0xff] %vm315, 0
      %341 = vst [vmem:[#allocation4 + $0xe0] sm:$0xff] 0
      %342 = vst [vmem:[#allocation4 + $0xe8] sm:$0xff] 0
      %343 = vst [vmem:[#allocation4 + $0xf0] sm:$0xff] 0
      %344 = vst.msk [vmem:[#allocation4 + $0xf8] sm:$0xff] %vm315, 0
      %345 = vst [vmem:[#allocation4 + $0x100] sm:$0xff] 0
      %346 = vst [vmem:[#allocation4 + $0x108] sm:$0xff] 0
      %347 = vst [vmem:[#allocation4 + $0x110] sm:$0xff] 0
      %348 = vst.msk [vmem:[#allocation4 + $0x118] sm:$0xff] %vm315, 0
      %349 = vst [vmem:[#allocation4 + $0x120] sm:$0xff] 0
      %350 = vst [vmem:[#allocation4 + $0x128] sm:$0xff] 0
      %351 = vst [vmem:[#allocation4 + $0x130] sm:$0xff] 0
      %352 = vst.msk [vmem:[#allocation4 + $0x138] sm:$0xff] %vm315, 0
      %353 = vst [vmem:[#allocation4 + $0x140] sm:$0xff] 0
      %354 = vst [vmem:[#allocation4 + $0x148] sm:$0xff] 0
      %355 = vst [vmem:[#allocation4 + $0x150] sm:$0xff] 0
      %356 = vst.msk [vmem:[#allocation4 + $0x158] sm:$0xff] %vm315, 0
      %357 = vst [vmem:[#allocation4 + $0x160] sm:$0xff] 0
      %358 = vst [vmem:[#allocation4 + $0x168] sm:$0xff] 0
      %359 = vst [vmem:[#allocation4 + $0x170] sm:$0xff] 0
      %360 = vst.msk [vmem:[#allocation4 + $0x178] sm:$0xff] %vm315, 0
      %361 = vst [vmem:[#allocation4 + $0x180] sm:$0xff] 0
      %362 = vst [vmem:[#allocation4 + $0x188] sm:$0xff] 0
      %363 = vst [vmem:[#allocation4 + $0x190] sm:$0xff] 0
      %364 = vst.msk [vmem:[#allocation4 + $0x198] sm:$0xff] %vm315, 0
      %365 = vst [vmem:[#allocation4 + $0x1a0] sm:$0xff] 0
      %366 = vst [vmem:[#allocation4 + $0x1a8] sm:$0xff] 0
      %367 = vst [vmem:[#allocation4 + $0x1b0] sm:$0xff] 0
      %368 = vst.msk [vmem:[#allocation4 + $0x1b8] sm:$0xff] %vm315, 0
      %369 = vst [vmem:[#allocation4 + $0x1c0] sm:$0xff] 0
      %370 = vst [vmem:[#allocation4 + $0x1c8] sm:$0xff] 0
      %371 = vst [vmem:[#allocation4 + $0x1d0] sm:$0xff] 0
      %372 = vst.msk [vmem:[#allocation4 + $0x1d8] sm:$0xff] %vm315, 0
      %373 = vst [vmem:[#allocation4 + $0x1e0] sm:$0xff] 0
      %374 = vst [vmem:[#allocation4 + $0x1e8] sm:$0xff] 0
      %375 = vst [vmem:[#allocation4 + $0x1f0] sm:$0xff] 0
      %376 = vst.msk [vmem:[#allocation4 + $0x1f8] sm:$0xff] %vm315, 0
      %377 = vst [vmem:[#allocation4 + $0x200] sm:$0xff] 0
      %378 = vst [vmem:[#allocation4 + $0x208] sm:$0xff] 0
      %379 = vst [vmem:[#allocation4 + $0x210] sm:$0xff] 0
      %380 = vst.msk [vmem:[#allocation4 + $0x218] sm:$0xff] %vm315, 0
      %381 = vst [vmem:[#allocation4 + $0x220] sm:$0xff] 0
      %382 = vst [vmem:[#allocation4 + $0x228] sm:$0xff] 0
      %383 = vst [vmem:[#allocation4 + $0x230] sm:$0xff] 0
      %384 = vst.msk [vmem:[#allocation4 + $0x238] sm:$0xff] %vm315, 0
      %385 = vst [vmem:[#allocation4 + $0x240] sm:$0xff] 0
      %386 = vst [vmem:[#allocation4 + $0x248] sm:$0xff] 0
      %387 = vst [vmem:[#allocation4 + $0x250] sm:$0xff] 0
      %388 = vst.msk [vmem:[#allocation4 + $0x258] sm:$0xff] %vm315, 0
      %389 = vst [vmem:[#allocation4 + $0x260] sm:$0xff] 0
      %390 = vst [vmem:[#allocation4 + $0x268] sm:$0xff] 0
      %391 = vst [vmem:[#allocation4 + $0x270] sm:$0xff] 0
      %392 = vst.msk [vmem:[#allocation4 + $0x278] sm:$0xff] %vm315, 0
      %393 = vst [vmem:[#allocation4 + $0x280] sm:$0xff] 0
      %394 = vst [vmem:[#allocation4 + $0x288] sm:$0xff] 0
      %395 = vst [vmem:[#allocation4 + $0x290] sm:$0xff] 0
      %396 = vst.msk [vmem:[#allocation4 + $0x298] sm:$0xff] %vm315, 0
      %397 = vst [vmem:[#allocation4 + $0x2a0] sm:$0xff] 0
      %398 = vst [vmem:[#allocation4 + $0x2a8] sm:$0xff] 0
      %399 = vst [vmem:[#allocation4 + $0x2b0] sm:$0xff] 0
      %400 = vst.msk [vmem:[#allocation4 + $0x2b8] sm:$0xff] %vm315, 0
      %401 = vst [vmem:[#allocation4 + $0x2c0] sm:$0xff] 0
      %402 = vst [vmem:[#allocation4 + $0x2c8] sm:$0xff] 0
      %403 = vst [vmem:[#allocation4 + $0x2d0] sm:$0xff] 0
      %404 = vst.msk [vmem:[#allocation4 + $0x2d8] sm:$0xff] %vm315, 0
      %405 = vst [vmem:[#allocation4 + $0x2e0] sm:$0xff] 0
      %406 = vst [vmem:[#allocation4 + $0x2e8] sm:$0xff] 0
      %407 = vst [vmem:[#allocation4 + $0x2f0] sm:$0xff] 0
      %408 = vst.msk [vmem:[#allocation4 + $0x2f8] sm:$0xff] %vm315, 0
      %409 = vst [vmem:[#allocation4 + $0x300] sm:$0xff] 0
      %410 = vst [vmem:[#allocation4 + $0x308] sm:$0xff] 0
      %411 = vst [vmem:[#allocation4 + $0x310] sm:$0xff] 0
      %412 = vst.msk [vmem:[#allocation4 + $0x318] sm:$0xff] %vm315, 0
      %413 = vst [vmem:[#allocation4 + $0x320] sm:$0xff] 0
      %414 = vst [vmem:[#allocation4 + $0x328] sm:$0xff] 0
      %415 = vst [vmem:[#allocation4 + $0x330] sm:$0xff] 0
      %416 = vst.msk [vmem:[#allocation4 + $0x338] sm:$0xff] %vm315, 0
      %417 = vst [vmem:[#allocation4 + $0x340] sm:$0xff] 0
      %418 = vst [vmem:[#allocation4 + $0x348] sm:$0xff] 0
      %419 = vst [vmem:[#allocation4 + $0x350] sm:$0xff] 0
      %420 = vst.msk [vmem:[#allocation4 + $0x358] sm:$0xff] %vm315, 0
      %421 = vst [vmem:[#allocation4 + $0x360] sm:$0xff] 0
      %422 = vst [vmem:[#allocation4 + $0x368] sm:$0xff] 0
      %423 = vst [vmem:[#allocation4 + $0x370] sm:$0xff] 0
      %424 = vst.msk [vmem:[#allocation4 + $0x378] sm:$0xff] %vm315, 0
      %425 = vst [vmem:[#allocation4 + $0x380] sm:$0xff] 0
      %426 = vst [vmem:[#allocation4 + $0x388] sm:$0xff] 0
      %427 = vst [vmem:[#allocation4 + $0x390] sm:$0xff] 0
      %428 = vst.msk [vmem:[#allocation4 + $0x398] sm:$0xff] %vm315, 0
      %429 = vst [vmem:[#allocation3] sm:$0xff] 0
      %430 = vst [vmem:[#allocation3 + $0x8] sm:$0xff] 0
      %vm431 = vcmask 1041408
      %vm432 = vcmask 846850
      %vm433 = vmor %vm432, %vm431
      %434 = vst.msk [vmem:[#allocation3 + $0x10] sm:$0xf] %vm433, 0
      %vm435 = vcmask 1044484
      %vm436 = vsmask.f32 4352
      %vm437 = vmand %vm435, %vm436
      %v438 = vld [vmem:[#allocation2 + $0x340] sm:$0x10]
      %v439 = vsel %vm437, 1065369472, %v438
      %440 = vst [vmem:[#allocation2 + $0x340] sm:$0x10] %v439
      %v441 = vld [vmem:[#allocation2 + $0x348] sm:$0x10]
      %v442 = vsel %vm437, 1065369472, %v441
      %443 = vst [vmem:[#allocation2 + $0x348] sm:$0x10] %v442
      %v444 = vld [vmem:[#allocation2 + $0x350] sm:$0x10]
      %v445 = vsel %vm437, 1065369472, %v444
      %446 = vst [vmem:[#allocation2 + $0x350] sm:$0x10] %v445
      %v447 = vld [vmem:[#allocation2 + $0x358] sm:$0x10]
      %v448 = vsel %vm437, 1065369472, %v447
      %449 = vst [vmem:[#allocation2 + $0x358] sm:$0x10] %v448
      %v450 = vld [vmem:[#allocation2 + $0x360] sm:$0x10]
      %v451 = vsel %vm437, 1065369472, %v450
      %452 = vst [vmem:[#allocation2 + $0x360] sm:$0x10] %v451
      %v453 = vld [vmem:[#allocation2 + $0x368] sm:$0x10]
      %v454 = vsel %vm437, 1065369472, %v453
      %455 = vst [vmem:[#allocation2 + $0x368] sm:$0x10] %v454
      %v456 = vld [vmem:[#allocation2 + $0x370] sm:$0x10]
      %v457 = vsel %vm437, 1065369472, %v456
      %458 = vst [vmem:[#allocation2 + $0x370] sm:$0x10] %v457
      %vm459 = vcmask 847876
      %vm460 = vmand %vm459, %vm436
      %v461 = vld [vmem:[#allocation2 + $0x378] sm:$0x10]
      %v462 = vsel %vm460, 1065369472, %v461
      %463 = vst [vmem:[#allocation2 + $0x378] sm:$0x10] %v462
      %vm464 = vcmask 1040384
      %vm465 = vsmask.f32 256
      %vm466 = vmand %vm464, %vm465
      %vm467 = vmor %vm437, %vm466
      %v468 = vld [vmem:[#allocation4 + $0x360] sm:$0x11]
      %v469 = vsel %vm467, 1065369472, %v468
      %470 = vst [vmem:[#allocation4 + $0x360] sm:$0x11] %v469
      %v471 = vld [vmem:[#allocation4 + $0x368] sm:$0x11]
      %v472 = vsel %vm467, 1065369472, %v471
      %473 = vst [vmem:[#allocation4 + $0x368] sm:$0x11] %v472
      %v474 = vld [vmem:[#allocation4 + $0x370] sm:$0x11]
      %v475 = vsel %vm467, 1065369472, %v474
      %476 = vst [vmem:[#allocation4 + $0x370] sm:$0x11] %v475
      %vm477 = vmor %vm460, %vm466
      %v478 = vld [vmem:[#allocation4 + $0x378] sm:$0x11]
      %v479 = vsel %vm477, 1065369472, %v478
      %480 = vst [vmem:[#allocation4 + $0x378] sm:$0x11] %v479
      %v481 = vld [vmem:[%s3] sm:$0xff]
      %v482 = vld [vmem:[%s189] sm:$0xff]
      %v484 = vcombine.high %v482, %v482
      %v486 = vunpack.c.l.s4 1966171168
      %v487 = vunpack.c.0.s8 %v486
      %v488 = vlaneseq
      %v489 = vshrl.u32 %v488, 7
      %v490 = vsub.s32 %v487, %v489
      %v491 = vrot.slane %v482, %v490
      %v493 = vunpack.c.l.s4 1966171168
      %v494 = vunpack.c.0.s8 %v493
      %v495 = vlaneseq
      %v496 = vshrl.u32 %v495, 7
      %v497 = vsub.s32 %v494, %v496
      %v498 = vrot.slane %v484, %v497
      %v499 = vcombine.high %v491, %v491
      %v500 = vcombine.high %v498, %v498
      %v502 = vunpack.c.l.s4 1966171168
      %v503 = vunpack.c.0.s8 %v502
      %v504 = vlaneseq
      %v505 = vshrl.u32 %v504, 7
      %v506 = vsub.s32 %v503, %v505
      %v507 = vrot.slane %v491, %v506
      %v509 = vunpack.c.l.s4 1966171168
      %v510 = vunpack.c.0.s8 %v509
      %v511 = vlaneseq
      %v512 = vshrl.u32 %v511, 7
      %v513 = vsub.s32 %v510, %v512
      %v514 = vrot.slane %v498, %v513
      %v516 = vunpack.c.l.s4 1966171168
      %v517 = vunpack.c.0.s8 %v516
      %v518 = vlaneseq
      %v519 = vshrl.u32 %v518, 7
      %v520 = vsub.s32 %v517, %v519
      %v521 = vrot.slane %v499, %v520
      %v523 = vunpack.c.l.s4 1966171168
      %v524 = vunpack.c.0.s8 %v523
      %v525 = vlaneseq
      %v526 = vshrl.u32 %v525, 7
      %v527 = vsub.s32 %v524, %v526
      %v528 = vrot.slane %v500, %v527
      %v529 = vcombine.high %v507, %v507
      %v530 = vcombine.high %v514, %v514
      %v531 = vcombine.high %v521, %v521
      %v532 = vcombine.high %v528, %v528
      %533 = vrot.lane.b32.xlu0 %v507, 111
      %v534 = vpop.permute.xlu0 %533
      %535 = vrot.lane.b32.xlu0 %v521, 111
      %v536 = vpop.permute.xlu0 %535
      %537 = vrot.lane.b32.xlu0 %v529, 111
      %v538 = vpop.permute.xlu0 %537
      %539 = vrot.lane.b32.xlu0 %v531, 111
      %v540 = vpop.permute.xlu0 %539
      %541 = vrot.lane.b32.xlu0 %v514, 111
      %v542 = vpop.permute.xlu0 %541
      %543 = vrot.lane.b32.xlu0 %v528, 111
      %v544 = vpop.permute.xlu0 %543
      %545 = vrot.lane.b32.xlu0 %v530, 111
      %v546 = vpop.permute.xlu0 %545
      %547 = vrot.lane.b32.xlu0 %v532, 111
      %v548 = vpop.permute.xlu0 %547
      %vm549 = vcmask 908288
      %v550 = vsel %vm549, %v534, %v536
      %v551 = vsel %vm549, %v536, %v538
      %v552 = vsel %vm549, %v538, %v540
      %v553 = vsel %vm549, %v540, %v542
      %v554 = vsel %vm549, %v542, %v544
      %v555 = vsel %vm549, %v544, %v546
      %v556 = vsel %vm549, %v546, %v548
      %565 = vst [vmem:[#allocation2] sm:$0x1] %v550
      %566 = vst [vmem:[#allocation2 + $0x8] sm:$0x1] %v551
      %567 = vst [vmem:[#allocation2 + $0x10] sm:$0x1] %v552
      %568 = vst [vmem:[#allocation2 + $0x18] sm:$0x1] %v553
      %569 = vst [vmem:[#allocation2 + $0x20] sm:$0x1] %v554
      %570 = vst [vmem:[#allocation2 + $0x28] sm:$0x1] %v555
      %571 = vst [vmem:[#allocation2 + $0x30] sm:$0x1] %v556
      %vm572 = vcmask 843776
      %573 = vst.msk [vmem:[#allocation2 + $0x38] sm:$0x1] %vm572, %v548
      %v574 = vld [vmem:[%s189] sm:$0xff]
      %v576 = vcombine.high %v574, %v574
      %v578 = vunpack.c.l.s4 1966171168
      %v579 = vunpack.c.0.s8 %v578
      %v580 = vlaneseq
      %v581 = vshrl.u32 %v580, 7
      %v582 = vsub.s32 %v579, %v581
      %v583 = vrot.slane %v574, %v582
      %v585 = vunpack.c.l.s4 1966171168
      %v586 = vunpack.c.0.s8 %v585
      %v587 = vlaneseq
      %v588 = vshrl.u32 %v587, 7
      %v589 = vsub.s32 %v586, %v588
      %v590 = vrot.slane %v576, %v589
      %v591 = vcombine.high %v583, %v583
      %v592 = vcombine.high %v590, %v590
      %v594 = vunpack.c.l.s4 1966171168
      %v595 = vunpack.c.0.s8 %v594
      %v596 = vlaneseq
      %v597 = vshrl.u32 %v596, 7
      %v598 = vsub.s32 %v595, %v597
      %v599 = vrot.slane %v583, %v598
      %v601 = vunpack.c.l.s4 1966171168
      %v602 = vunpack.c.0.s8 %v601
      %v603 = vlaneseq
      %v604 = vshrl.u32 %v603, 7
      %v605 = vsub.s32 %v602, %v604
      %v606 = vrot.slane %v590, %v605
      %v608 = vunpack.c.l.s4 1966171168
      %v609 = vunpack.c.0.s8 %v608
      %v610 = vlaneseq
      %v611 = vshrl.u32 %v610, 7
      %v612 = vsub.s32 %v609, %v611
      %v613 = vrot.slane %v591, %v612
      %v615 = vunpack.c.l.s4 1966171168
      %v616 = vunpack.c.0.s8 %v615
      %v617 = vlaneseq
      %v618 = vshrl.u32 %v617, 7
      %v619 = vsub.s32 %v616, %v618
      %v620 = vrot.slane %v592, %v619
      %v621 = vcombine.low %v599, %v599
      %v622 = vcombine.low %v606, %v606
      %v623 = vcombine.low %v613, %v613
      %v624 = vcombine.low %v620, %v620
      %625 = vrot.lane.b32.xlu0 %v621, 110
      %v626 = vpop.permute.xlu0 %625
      %627 = vrot.lane.b32.xlu0 %v623, 110
      %v628 = vpop.permute.xlu0 %627
      %629 = vrot.lane.b32.xlu0 %v599, 110
      %v630 = vpop.permute.xlu0 %629
      %631 = vrot.lane.b32.xlu0 %v613, 110
      %v632 = vpop.permute.xlu0 %631
      %633 = vrot.lane.b32.xlu0 %v622, 110
      %v634 = vpop.permute.xlu0 %633
      %635 = vrot.lane.b32.xlu0 %v624, 110
      %v636 = vpop.permute.xlu0 %635
      %637 = vrot.lane.b32.xlu0 %v606, 110
      %v638 = vpop.permute.xlu0 %637
      %639 = vrot.lane.b32.xlu0 %v620, 110
      %v640 = vpop.permute.xlu0 %639
      %vm641 = vcmask 900096
      %v642 = vsel %vm641, %v626, %v628
      %v643 = vsel %vm641, %v628, %v630
      %v644 = vsel %vm641, %v630, %v632
      %v645 = vsel %vm641, %v632, %v634
      %v646 = vsel %vm641, %v634, %v636
      %v647 = vsel %vm641, %v636, %v638
      %v648 = vsel %vm641, %v638, %v640
      %657 = vst [vmem:[#allocation2] sm:$0x10] %v642
      %658 = vst [vmem:[#allocation2 + $0x8] sm:$0x10] %v643
      %659 = vst [vmem:[#allocation2 + $0x10] sm:$0x10] %v644
      %660 = vst [vmem:[#allocation2 + $0x18] sm:$0x10] %v645
      %661 = vst [vmem:[#allocation2 + $0x20] sm:$0x10] %v646
      %662 = vst [vmem:[#allocation2 + $0x28] sm:$0x10] %v647
      %663 = vst [vmem:[#allocation2 + $0x30] sm:$0x10] %v648
      %vm664 = vcmask 847876
      %665 = vst.msk [vmem:[#allocation2 + $0x38] sm:$0x10] %vm664, %v640
      %v666 = vld [vmem:[%s189] sm:$0xff]
      %v668 = vcombine.high %v666, %v666
      %v670 = vunpack.c.l.s4 1966171168
      %v671 = vunpack.c.0.s8 %v670
      %v672 = vlaneseq
      %v673 = vshrl.u32 %v672, 7
      %v674 = vsub.s32 %v671, %v673
      %v675 = vrot.slane %v666, %v674
      %v677 = vunpack.c.l.s4 1966171168
      %v678 = vunpack.c.0.s8 %v677
      %v679 = vlaneseq
      %v680 = vshrl.u32 %v679, 7
      %v681 = vsub.s32 %v678, %v680
      %v682 = vrot.slane %v668, %v681
      %v683 = vcombine.high %v675, %v675
      %v684 = vcombine.high %v682, %v682
      %v686 = vunpack.c.l.s4 1966171168
      %v687 = vunpack.c.0.s8 %v686
      %v688 = vlaneseq
      %v689 = vshrl.u32 %v688, 7
      %v690 = vsub.s32 %v687, %v689
      %v691 = vrot.slane %v675, %v690
      %v693 = vunpack.c.l.s4 1966171168
      %v694 = vunpack.c.0.s8 %v693
      %v695 = vlaneseq
      %v696 = vshrl.u32 %v695, 7
      %v697 = vsub.s32 %v694, %v696
      %v698 = vrot.slane %v682, %v697
      %v700 = vunpack.c.l.s4 1966171168
      %v701 = vunpack.c.0.s8 %v700
      %v702 = vlaneseq
      %v703 = vshrl.u32 %v702, 7
      %v704 = vsub.s32 %v701, %v703
      %v705 = vrot.slane %v683, %v704
      %v707 = vunpack.c.l.s4 1966171168
      %v708 = vunpack.c.0.s8 %v707
      %v709 = vlaneseq
      %v710 = vshrl.u32 %v709, 7
      %v711 = vsub.s32 %v708, %v710
      %v712 = vrot.slane %v684, %v711
      %v713 = vcombine.high %v691, %v691
      %v714 = vcombine.high %v698, %v698
      %v715 = vcombine.high %v705, %v705
      %v716 = vcombine.high %v712, %v712
      %717 = vrot.lane.b32.xlu0 %v691, 109
      %v718 = vpop.permute.xlu0 %717
      %719 = vrot.lane.b32.xlu0 %v705, 109
      %v720 = vpop.permute.xlu0 %719
      %721 = vrot.lane.b32.xlu0 %v713, 109
      %v722 = vpop.permute.xlu0 %721
      %723 = vrot.lane.b32.xlu0 %v715, 109
      %v724 = vpop.permute.xlu0 %723
      %725 = vrot.lane.b32.xlu0 %v698, 109
      %v726 = vpop.permute.xlu0 %725
      %727 = vrot.lane.b32.xlu0 %v712, 109
      %v728 = vpop.permute.xlu0 %727
      %729 = vrot.lane.b32.xlu0 %v714, 109
      %v730 = vpop.permute.xlu0 %729
      %731 = vrot.lane.b32.xlu0 %v716, 109
      %v732 = vpop.permute.xlu0 %731
      %vm733 = vcmask 891904
      %v734 = vsel %vm733, %v718, %v720
      %v735 = vsel %vm733, %v720, %v722
      %v736 = vsel %vm733, %v722, %v724
      %v737 = vsel %vm733, %v724, %v726
      %v738 = vsel %vm733, %v726, %v728
      %v739 = vsel %vm733, %v728, %v730
      %v740 = vsel %vm733, %v730, %v732
      %749 = vst [vmem:[#allocation2 + $0x40] sm:$0x1] %v734
      %750 = vst [vmem:[#allocation2 + $0x48] sm:$0x1] %v735
      %751 = vst [vmem:[#allocation2 + $0x50] sm:$0x1] %v736
      %752 = vst [vmem:[#allocation2 + $0x58] sm:$0x1] %v737
      %753 = vst [vmem:[#allocation2 + $0x60] sm:$0x1] %v738
      %754 = vst [vmem:[#allocation2 + $0x68] sm:$0x1] %v739
      %755 = vst [vmem:[#allocation2 + $0x70] sm:$0x1] %v740
      %756 = vst.msk [vmem:[#allocation2 + $0x78] sm:$0x1] %vm572, %v732
      %v757 = vld [vmem:[%s189] sm:$0xff]
      %v758 = vld [vmem:[%s189 + $0x8] sm:$0x1]
      %v761 = vcombine.high %v757, %v757
      %v763 = vunpack.c.l.s4 1966171168
      %v764 = vunpack.c.0.s8 %v763
      %v765 = vlaneseq
      %v766 = vshrl.u32 %v765, 7
      %v767 = vsub.s32 %v764, %v766
      %v768 = vrot.slane %v757, %v767
      %v770 = vunpack.c.l.s4 1966171168
      %v771 = vunpack.c.0.s8 %v770
      %v772 = vlaneseq
      %v773 = vshrl.u32 %v772, 7
      %v774 = vsub.s32 %v771, %v773
      %v775 = vrot.slane %v761, %v774
      %v776 = vcombine.high %v768, %v768
      %v777 = vcombine.high %v775, %v775
      %v779 = vunpack.c.l.s4 1966171168
      %v780 = vunpack.c.0.s8 %v779
      %v781 = vlaneseq
      %v782 = vshrl.u32 %v781, 7
      %v783 = vsub.s32 %v780, %v782
      %v784 = vrot.slane %v768, %v783
      %v786 = vunpack.c.l.s4 1966171168
      %v787 = vunpack.c.0.s8 %v786
      %v788 = vlaneseq
      %v789 = vshrl.u32 %v788, 7
      %v790 = vsub.s32 %v787, %v789
      %v791 = vrot.slane %v775, %v790
      %v793 = vunpack.c.l.s4 1966171168
      %v794 = vunpack.c.0.s8 %v793
      %v795 = vlaneseq
      %v796 = vshrl.u32 %v795, 7
      %v797 = vsub.s32 %v794, %v796
      %v798 = vrot.slane %v776, %v797
      %v800 = vunpack.c.l.s4 1966171168
      %v801 = vunpack.c.0.s8 %v800
      %v802 = vlaneseq
      %v803 = vshrl.u32 %v802, 7
      %v804 = vsub.s32 %v801, %v803
      %v805 = vrot.slane %v777, %v804
      %v806 = vcombine.low %v784, %v784
      %v807 = vcombine.low %v791, %v791
      %v808 = vcombine.low %v798, %v798
      %v809 = vcombine.low %v805, %v805
      %v811 = vunpack.c.l.s4 1966171168
      %v812 = vunpack.c.0.s8 %v811
      %v813 = vlaneseq
      %v814 = vshrl.u32 %v813, 7
      %v815 = vsub.s32 %v812, %v814
      %v816 = vrot.slane %v758, %v815
      %v818 = vunpack.c.l.s4 1966171168
      %v819 = vunpack.c.0.s8 %v818
      %v820 = vlaneseq
      %v821 = vshrl.u32 %v820, 7
      %v822 = vsub.s32 %v819, %v821
      %v823 = vrot.slane %v816, %v822
      %v824 = vcombine.low %v823, %v823
      %825 = vrot.lane.b32.xlu0 %v806, 101
      %v826 = vpop.permute.xlu0 %825
      %827 = vrot.lane.b32.xlu0 %v808, 101
      %v828 = vpop.permute.xlu0 %827
      %829 = vrot.lane.b32.xlu0 %v784, 101
      %v830 = vpop.permute.xlu0 %829
      %831 = vrot.lane.b32.xlu0 %v798, 101
      %v832 = vpop.permute.xlu0 %831
      %833 = vrot.lane.b32.xlu0 %v807, 101
      %v834 = vpop.permute.xlu0 %833
      %835 = vrot.lane.b32.xlu0 %v809, 101
      %v836 = vpop.permute.xlu0 %835
      %837 = vrot.lane.b32.xlu0 %v791, 101
      %v838 = vpop.permute.xlu0 %837
      %839 = vrot.lane.b32.xlu0 %v805, 101
      %v840 = vpop.permute.xlu0 %839
      %841 = vrot.lane.b32.xlu0 %v824, 101
      %v842 = vpop.permute.xlu0 %841
      %vm843 = vcmask 826368
      %v844 = vsel %vm843, %v826, %v828
      %v845 = vsel %vm843, %v828, %v830
      %v846 = vsel %vm843, %v830, %v832
      %v847 = vsel %vm843, %v832, %v834
      %v848 = vsel %vm843, %v834, %v836
      %v849 = vsel %vm843, %v836, %v838
      %v850 = vsel %vm843, %v838, %v840
      %v851 = vsel %vm843, %v840, %v842
      %860 = vst [vmem:[#allocation2 + $0x40] sm:$0x10] %v844
      %861 = vst [vmem:[#allocation2 + $0x48] sm:$0x10] %v845
      %862 = vst [vmem:[#allocation2 + $0x50] sm:$0x10] %v846
      %863 = vst [vmem:[#allocation2 + $0x58] sm:$0x10] %v847
      %864 = vst [vmem:[#allocation2 + $0x60] sm:$0x10] %v848
      %865 = vst [vmem:[#allocation2 + $0x68] sm:$0x10] %v849
      %866 = vst [vmem:[#allocation2 + $0x70] sm:$0x10] %v850
      %867 = vst.msk [vmem:[#allocation2 + $0x78] sm:$0x10] %vm664, %v851
      %v868 = vld [vmem:[%s189] sm:$0xff]
      %v869 = vld [vmem:[%s189 + $0x8] sm:$0x1]
      %v872 = vcombine.high %v868, %v868
      %v874 = vunpack.c.l.s4 1966171168
      %v875 = vunpack.c.0.s8 %v874
      %v876 = vlaneseq
      %v877 = vshrl.u32 %v876, 7
      %v878 = vsub.s32 %v875, %v877
      %v879 = vrot.slane %v868, %v878
      %v881 = vunpack.c.l.s4 1966171168
      %v882 = vunpack.c.0.s8 %v881
      %v883 = vlaneseq
      %v884 = vshrl.u32 %v883, 7
      %v885 = vsub.s32 %v882, %v884
      %v886 = vrot.slane %v872, %v885
      %v887 = vcombine.high %v879, %v879
      %v888 = vcombine.high %v886, %v886
      %v890 = vunpack.c.l.s4 1966171168
      %v891 = vunpack.c.0.s8 %v890
      %v892 = vlaneseq
      %v893 = vshrl.u32 %v892, 7
      %v894 = vsub.s32 %v891, %v893
      %v895 = vrot.slane %v879, %v894
      %v897 = vunpack.c.l.s4 1966171168
      %v898 = vunpack.c.0.s8 %v897
      %v899 = vlaneseq
      %v900 = vshrl.u32 %v899, 7
      %v901 = vsub.s32 %v898, %v900
      %v902 = vrot.slane %v886, %v901
      %v904 = vunpack.c.l.s4 1966171168
      %v905 = vunpack.c.0.s8 %v904
      %v906 = vlaneseq
      %v907 = vshrl.u32 %v906, 7
      %v908 = vsub.s32 %v905, %v907
      %v909 = vrot.slane %v887, %v908
      %v911 = vunpack.c.l.s4 1966171168
      %v912 = vunpack.c.0.s8 %v911
      %v913 = vlaneseq
      %v914 = vshrl.u32 %v913, 7
      %v915 = vsub.s32 %v912, %v914
      %v916 = vrot.slane %v888, %v915
      %v917 = vcombine.high %v895, %v895
      %v918 = vcombine.high %v902, %v902
      %v919 = vcombine.high %v909, %v909
      %v920 = vcombine.high %v916, %v916
      %v922 = vunpack.c.l.s4 1966171168
      %v923 = vunpack.c.0.s8 %v922
      %v924 = vlaneseq
      %v925 = vshrl.u32 %v924, 7
      %v926 = vsub.s32 %v923, %v925
      %v927 = vrot.slane %v869, %v926
      %v929 = vunpack.c.l.s4 1966171168
      %v930 = vunpack.c.0.s8 %v929
      %v931 = vlaneseq
      %v932 = vshrl.u32 %v931, 7
      %v933 = vsub.s32 %v930, %v932
      %v934 = vrot.slane %v927, %v933
      %935 = vrot.lane.b32.xlu0 %v895, 100
      %v936 = vpop.permute.xlu0 %935
      %937 = vrot.lane.b32.xlu0 %v909, 100
      %v938 = vpop.permute.xlu0 %937
      %939 = vrot.lane.b32.xlu0 %v917, 100
      %v940 = vpop.permute.xlu0 %939
      %941 = vrot.lane.b32.xlu0 %v919, 100
      %v942 = vpop.permute.xlu0 %941
      %943 = vrot.lane.b32.xlu0 %v902, 100
      %v944 = vpop.permute.xlu0 %943
      %945 = vrot.lane.b32.xlu0 %v916, 100
      %v946 = vpop.permute.xlu0 %945
      %947 = vrot.lane.b32.xlu0 %v918, 100
      %v948 = vpop.permute.xlu0 %947
      %949 = vrot.lane.b32.xlu0 %v920, 100
      %v950 = vpop.permute.xlu0 %949
      %951 = vrot.lane.b32.xlu0 %v934, 100
      %v952 = vpop.permute.xlu0 %951
      %vm953 = vcmask 818176
      %v954 = vsel %vm953, %v936, %v938
      %v955 = vsel %vm953, %v938, %v940
      %v956 = vsel %vm953, %v940, %v942
      %v957 = vsel %vm953, %v942, %v944
      %v958 = vsel %vm953, %v944, %v946
      %v959 = vsel %vm953, %v946, %v948
      %v960 = vsel %vm953, %v948, %v950
      %v961 = vsel %vm953, %v950, %v952
      %970 = vst [vmem:[#allocation2 + $0x80] sm:$0x1] %v954
      %971 = vst [vmem:[#allocation2 + $0x88] sm:$0x1] %v955
      %972 = vst [vmem:[#allocation2 + $0x90] sm:$0x1] %v956
      %973 = vst [vmem:[#allocation2 + $0x98] sm:$0x1] %v957
      %974 = vst [vmem:[#allocation2 + $0xa0] sm:$0x1] %v958
      %975 = vst [vmem:[#allocation2 + $0xa8] sm:$0x1] %v959
      %976 = vst [vmem:[#allocation2 + $0xb0] sm:$0x1] %v960
      %977 = vst.msk [vmem:[#allocation2 + $0xb8] sm:$0x1] %vm572, %v961
      %v978 = vld [vmem:[%s189] sm:$0xff]
      %v979 = vld [vmem:[%s189 + $0x8] sm:$0x1]
      %v982 = vcombine.high %v978, %v978
      %v984 = vunpack.c.l.s4 1966171168
      %v985 = vunpack.c.0.s8 %v984
      %v986 = vlaneseq
      %v987 = vshrl.u32 %v986, 7
      %v988 = vsub.s32 %v985, %v987
      %v989 = vrot.slane %v978, %v988
      %v991 = vunpack.c.l.s4 1966171168
      %v992 = vunpack.c.0.s8 %v991
      %v993 = vlaneseq
      %v994 = vshrl.u32 %v993, 7
      %v995 = vsub.s32 %v992, %v994
      %v996 = vrot.slane %v982, %v995
      %v997 = vcombine.high %v989, %v989
      %v998 = vcombine.high %v996, %v996
      %v1000 = vunpack.c.l.s4 1966171168
      %v1001 = vunpack.c.0.s8 %v1000
      %v1002 = vlaneseq
      %v1003 = vshrl.u32 %v1002, 7
      %v1004 = vsub.s32 %v1001, %v1003
      %v1005 = vrot.slane %v989, %v1004
      %v1007 = vunpack.c.l.s4 1966171168
      %v1008 = vunpack.c.0.s8 %v1007
      %v1009 = vlaneseq
      %v1010 = vshrl.u32 %v1009, 7
      %v1011 = vsub.s32 %v1008, %v1010
      %v1012 = vrot.slane %v996, %v1011
      %v1014 = vunpack.c.l.s4 1966171168
      %v1015 = vunpack.c.0.s8 %v1014
      %v1016 = vlaneseq
      %v1017 = vshrl.u32 %v1016, 7
      %v1018 = vsub.s32 %v1015, %v1017
      %v1019 = vrot.slane %v997, %v1018
      %v1021 = vunpack.c.l.s4 1966171168
      %v1022 = vunpack.c.0.s8 %v1021
      %v1023 = vlaneseq
      %v1024 = vshrl.u32 %v1023, 7
      %v1025 = vsub.s32 %v1022, %v1024
      %v1026 = vrot.slane %v998, %v1025
      %v1027 = vcombine.low %v1005, %v1005
      %v1028 = vcombine.low %v1012, %v1012
      %v1029 = vcombine.low %v1019, %v1019
      %v1030 = vcombine.low %v1026, %v1026
      %v1032 = vunpack.c.l.s4 1966171168
      %v1033 = vunpack.c.0.s8 %v1032
      %v1034 = vlaneseq
      %v1035 = vshrl.u32 %v1034, 7
      %v1036 = vsub.s32 %v1033, %v1035
      %v1037 = vrot.slane %v979, %v1036
      %v1039 = vunpack.c.l.s4 1966171168
      %v1040 = vunpack.c.0.s8 %v1039
      %v1041 = vlaneseq
      %v1042 = vshrl.u32 %v1041, 7
      %v1043 = vsub.s32 %v1040, %v1042
      %v1044 = vrot.slane %v1037, %v1043
      %v1045 = vcombine.low %v1044, %v1044
      %1046 = vrot.lane.b32.xlu0 %v1027, 99
      %v1047 = vpop.permute.xlu0 %1046
      %1048 = vrot.lane.b32.xlu0 %v1029, 99
      %v1049 = vpop.permute.xlu0 %1048
      %1050 = vrot.lane.b32.xlu0 %v1005, 99
      %v1051 = vpop.permute.xlu0 %1050
      %1052 = vrot.lane.b32.xlu0 %v1019, 99
      %v1053 = vpop.permute.xlu0 %1052
      %1054 = vrot.lane.b32.xlu0 %v1028, 99
      %v1055 = vpop.permute.xlu0 %1054
      %1056 = vrot.lane.b32.xlu0 %v1030, 99
      %v1057 = vpop.permute.xlu0 %1056
      %1058 = vrot.lane.b32.xlu0 %v1012, 99
      %v1059 = vpop.permute.xlu0 %1058
      %1060 = vrot.lane.b32.xlu0 %v1026, 99
      %v1061 = vpop.permute.xlu0 %1060
      %1062 = vrot.lane.b32.xlu0 %v1045, 99
      %v1063 = vpop.permute.xlu0 %1062
      %vm1064 = vcmask 809984
      %v1065 = vsel %vm1064, %v1047, %v1049
      %v1066 = vsel %vm1064, %v1049, %v1051
      %v1067 = vsel %vm1064, %v1051, %v1053
      %v1068 = vsel %vm1064, %v1053, %v1055
      %v1069 = vsel %vm1064, %v1055, %v1057
      %v1070 = vsel %vm1064, %v1057, %v1059
      %v1071 = vsel %vm1064, %v1059, %v1061
      %v1072 = vsel %vm1064, %v1061, %v1063
      %1081 = vst [vmem:[#allocation2 + $0x80] sm:$0x10] %v1065
      %1082 = vst [vmem:[#allocation2 + $0x88] sm:$0x10] %v1066
      %1083 = vst [vmem:[#allocation2 + $0x90] sm:$0x10] %v1067
      %1084 = vst [vmem:[#allocation2 + $0x98] sm:$0x10] %v1068
      %1085 = vst [vmem:[#allocation2 + $0xa0] sm:$0x10] %v1069
      %1086 = vst [vmem:[#allocation2 + $0xa8] sm:$0x10] %v1070
      %1087 = vst [vmem:[#allocation2 + $0xb0] sm:$0x10] %v1071
      %1088 = vst.msk [vmem:[#allocation2 + $0xb8] sm:$0x10] %vm664, %v1072
      %v1089 = vld [vmem:[%s189] sm:$0xff]
      %v1090 = vld [vmem:[%s189 + $0x8] sm:$0x1]
      %v1093 = vcombine.high %v1089, %v1089
      %v1095 = vunpack.c.l.s4 1966171168
      %v1096 = vunpack.c.0.s8 %v1095
      %v1097 = vlaneseq
      %v1098 = vshrl.u32 %v1097, 7
      %v1099 = vsub.s32 %v1096, %v1098
      %v1100 = vrot.slane %v1089, %v1099
      %v1102 = vunpack.c.l.s4 1966171168
      %v1103 = vunpack.c.0.s8 %v1102
      %v1104 = vlaneseq
      %v1105 = vshrl.u32 %v1104, 7
      %v1106 = vsub.s32 %v1103, %v1105
      %v1107 = vrot.slane %v1093, %v1106
      %v1108 = vcombine.high %v1100, %v1100
      %v1109 = vcombine.high %v1107, %v1107
      %v1111 = vunpack.c.l.s4 1966171168
      %v1112 = vunpack.c.0.s8 %v1111
      %v1113 = vlaneseq
      %v1114 = vshrl.u32 %v1113, 7
      %v1115 = vsub.s32 %v1112, %v1114
      %v1116 = vrot.slane %v1100, %v1115
      %v1118 = vunpack.c.l.s4 1966171168
      %v1119 = vunpack.c.0.s8 %v1118
      %v1120 = vlaneseq
      %v1121 = vshrl.u32 %v1120, 7
      %v1122 = vsub.s32 %v1119, %v1121
      %v1123 = vrot.slane %v1107, %v1122
      %v1125 = vunpack.c.l.s4 1966171168
      %v1126 = vunpack.c.0.s8 %v1125
      %v1127 = vlaneseq
      %v1128 = vshrl.u32 %v1127, 7
      %v1129 = vsub.s32 %v1126, %v1128
      %v1130 = vrot.slane %v1108, %v1129
      %v1132 = vunpack.c.l.s4 1966171168
      %v1133 = vunpack.c.0.s8 %v1132
      %v1134 = vlaneseq
      %v1135 = vshrl.u32 %v1134, 7
      %v1136 = vsub.s32 %v1133, %v1135
      %v1137 = vrot.slane %v1109, %v1136
      %v1138 = vcombine.high %v1116, %v1116
      %v1139 = vcombine.high %v1123, %v1123
      %v1140 = vcombine.high %v1130, %v1130
      %v1141 = vcombine.high %v1137, %v1137
      %v1143 = vunpack.c.l.s4 1966171168
      %v1144 = vunpack.c.0.s8 %v1143
      %v1145 = vlaneseq
      %v1146 = vshrl.u32 %v1145, 7
      %v1147 = vsub.s32 %v1144, %v1146
      %v1148 = vrot.slane %v1090, %v1147
      %v1150 = vunpack.c.l.s4 1966171168
      %v1151 = vunpack.c.0.s8 %v1150
      %v1152 = vlaneseq
      %v1153 = vshrl.u32 %v1152, 7
      %v1154 = vsub.s32 %v1151, %v1153
      %v1155 = vrot.slane %v1148, %v1154
      %1156 = vrot.lane.b32.xlu0 %v1116, 91
      %v1157 = vpop.permute.xlu0 %1156
      %1158 = vrot.lane.b32.xlu0 %v1130, 91
      %v1159 = vpop.permute.xlu0 %1158
      %1160 = vrot.lane.b32.xlu0 %v1138, 91
      %v1161 = vpop.permute.xlu0 %1160
      %1162 = vrot.lane.b32.xlu0 %v1140, 91
      %v1163 = vpop.permute.xlu0 %1162
      %1164 = vrot.lane.b32.xlu0 %v1123, 91
      %v1165 = vpop.permute.xlu0 %1164
      %1166 = vrot.lane.b32.xlu0 %v1137, 91
      %v1167 = vpop.permute.xlu0 %1166
      %1168 = vrot.lane.b32.xlu0 %v1139, 91
      %v1169 = vpop.permute.xlu0 %1168
      %1170 = vrot.lane.b32.xlu0 %v1141, 91
      %v1171 = vpop.permute.xlu0 %1170
      %1172 = vrot.lane.b32.xlu0 %v1155, 91
      %v1173 = vpop.permute.xlu0 %1172
      %vm1174 = vcmask 744448
      %v1175 = vsel %vm1174, %v1157, %v1159
      %v1176 = vsel %vm1174, %v1159, %v1161
      %v1177 = vsel %vm1174, %v1161, %v1163
      %v1178 = vsel %vm1174, %v1163, %v1165
      %v1179 = vsel %vm1174, %v1165, %v1167
      %v1180 = vsel %vm1174, %v1167, %v1169
      %v1181 = vsel %vm1174, %v1169, %v1171
      %v1182 = vsel %vm1174, %v1171, %v1173
      %1191 = vst [vmem:[#allocation2 + $0xc0] sm:$0x1] %v1175
      %1192 = vst [vmem:[#allocation2 + $0xc8] sm:$0x1] %v1176
      %1193 = vst [vmem:[#allocation2 + $0xd0] sm:$0x1] %v1177
      %1194 = vst [vmem:[#allocation2 + $0xd8] sm:$0x1] %v1178
      %1195 = vst [vmem:[#allocation2 + $0xe0] sm:$0x1] %v1179
      %1196 = vst [vmem:[#allocation2 + $0xe8] sm:$0x1] %v1180
      %1197 = vst [vmem:[#allocation2 + $0xf0] sm:$0x1] %v1181
      %1198 = vst.msk [vmem:[#allocation2 + $0xf8] sm:$0x1] %vm572, %v1182
      %v1199 = vld [vmem:[%s189] sm:$0xff]
      %v1200 = vld [vmem:[%s189 + $0x8] sm:$0x1]
      %v1203 = vcombine.high %v1199, %v1199
      %v1205 = vunpack.c.l.s4 1966171168
      %v1206 = vunpack.c.0.s8 %v1205
      %v1207 = vlaneseq
      %v1208 = vshrl.u32 %v1207, 7
      %v1209 = vsub.s32 %v1206, %v1208
      %v1210 = vrot.slane %v1199, %v1209
      %v1212 = vunpack.c.l.s4 1966171168
      %v1213 = vunpack.c.0.s8 %v1212
      %v1214 = vlaneseq
      %v1215 = vshrl.u32 %v1214, 7
      %v1216 = vsub.s32 %v1213, %v1215
      %v1217 = vrot.slane %v1203, %v1216
      %v1218 = vcombine.high %v1210, %v1210
      %v1219 = vcombine.high %v1217, %v1217
      %v1221 = vunpack.c.l.s4 1966171168
      %v1222 = vunpack.c.0.s8 %v1221
      %v1223 = vlaneseq
      %v1224 = vshrl.u32 %v1223, 7
      %v1225 = vsub.s32 %v1222, %v1224
      %v1226 = vrot.slane %v1210, %v1225
      %v1228 = vunpack.c.l.s4 1966171168
      %v1229 = vunpack.c.0.s8 %v1228
      %v1230 = vlaneseq
      %v1231 = vshrl.u32 %v1230, 7
      %v1232 = vsub.s32 %v1229, %v1231
      %v1233 = vrot.slane %v1217, %v1232
      %v1235 = vunpack.c.l.s4 1966171168
      %v1236 = vunpack.c.0.s8 %v1235
      %v1237 = vlaneseq
      %v1238 = vshrl.u32 %v1237, 7
      %v1239 = vsub.s32 %v1236, %v1238
      %v1240 = vrot.slane %v1218, %v1239
      %v1242 = vunpack.c.l.s4 1966171168
      %v1243 = vunpack.c.0.s8 %v1242
      %v1244 = vlaneseq
      %v1245 = vshrl.u32 %v1244, 7
      %v1246 = vsub.s32 %v1243, %v1245
      %v1247 = vrot.slane %v1219, %v1246
      %v1248 = vcombine.low %v1226, %v1226
      %v1249 = vcombine.low %v1233, %v1233
      %v1250 = vcombine.low %v1240, %v1240
      %v1251 = vcombine.low %v1247, %v1247
      %v1253 = vunpack.c.l.s4 1966171168
      %v1254 = vunpack.c.0.s8 %v1253
      %v1255 = vlaneseq
      %v1256 = vshrl.u32 %v1255, 7
      %v1257 = vsub.s32 %v1254, %v1256
      %v1258 = vrot.slane %v1200, %v1257
      %v1260 = vunpack.c.l.s4 1966171168
      %v1261 = vunpack.c.0.s8 %v1260
      %v1262 = vlaneseq
      %v1263 = vshrl.u32 %v1262, 7
      %v1264 = vsub.s32 %v1261, %v1263
      %v1265 = vrot.slane %v1258, %v1264
      %v1266 = vcombine.low %v1265, %v1265
      %1267 = vrot.lane.b32.xlu0 %v1248, 90
      %v1268 = vpop.permute.xlu0 %1267
      %1269 = vrot.lane.b32.xlu0 %v1250, 90
      %v1270 = vpop.permute.xlu0 %1269
      %1271 = vrot.lane.b32.xlu0 %v1226, 90
      %v1272 = vpop.permute.xlu0 %1271
      %1273 = vrot.lane.b32.xlu0 %v1240, 90
      %v1274 = vpop.permute.xlu0 %1273
      %1275 = vrot.lane.b32.xlu0 %v1249, 90
      %v1276 = vpop.permute.xlu0 %1275
      %1277 = vrot.lane.b32.xlu0 %v1251, 90
      %v1278 = vpop.permute.xlu0 %1277
      %1279 = vrot.lane.b32.xlu0 %v1233, 90
      %v1280 = vpop.permute.xlu0 %1279
      %1281 = vrot.lane.b32.xlu0 %v1247, 90
      %v1282 = vpop.permute.xlu0 %1281
      %1283 = vrot.lane.b32.xlu0 %v1266, 90
      %v1284 = vpop.permute.xlu0 %1283
      %vm1285 = vcmask 736256
      %v1286 = vsel %vm1285, %v1268, %v1270
      %v1287 = vsel %vm1285, %v1270, %v1272
      %v1288 = vsel %vm1285, %v1272, %v1274
      %v1289 = vsel %vm1285, %v1274, %v1276
      %v1290 = vsel %vm1285, %v1276, %v1278
      %v1291 = vsel %vm1285, %v1278, %v1280
      %v1292 = vsel %vm1285, %v1280, %v1282
      %v1293 = vsel %vm1285, %v1282, %v1284
      %1302 = vst [vmem:[#allocation2 + $0xc0] sm:$0x10] %v1286
      %1303 = vst [vmem:[#allocation2 + $0xc8] sm:$0x10] %v1287
      %1304 = vst [vmem:[#allocation2 + $0xd0] sm:$0x10] %v1288
      %1305 = vst [vmem:[#allocation2 + $0xd8] sm:$0x10] %v1289
      %1306 = vst [vmem:[#allocation2 + $0xe0] sm:$0x10] %v1290
      %1307 = vst [vmem:[#allocation2 + $0xe8] sm:$0x10] %v1291
      %1308 = vst [vmem:[#allocation2 + $0xf0] sm:$0x10] %v1292
      %1309 = vst.msk [vmem:[#allocation2 + $0xf8] sm:$0x10] %vm664, %v1293
      %v1310 = vld [vmem:[%s189] sm:$0xff]
      %v1311 = vld [vmem:[%s189 + $0x8] sm:$0x1]
      %v1314 = vcombine.high %v1310, %v1310
      %v1316 = vunpack.c.l.s4 1966171168
      %v1317 = vunpack.c.0.s8 %v1316
      %v1318 = vlaneseq
      %v1319 = vshrl.u32 %v1318, 7
      %v1320 = vsub.s32 %v1317, %v1319
      %v1321 = vrot.slane %v1310, %v1320
      %v1323 = vunpack.c.l.s4 1966171168
      %v1324 = vunpack.c.0.s8 %v1323
      %v1325 = vlaneseq
      %v1326 = vshrl.u32 %v1325, 7
      %v1327 = vsub.s32 %v1324, %v1326
      %v1328 = vrot.slane %v1314, %v1327
      %v1329 = vcombine.high %v1321, %v1321
      %v1330 = vcombine.high %v1328, %v1328
      %v1332 = vunpack.c.l.s4 1966171168
      %v1333 = vunpack.c.0.s8 %v1332
      %v1334 = vlaneseq
      %v1335 = vshrl.u32 %v1334, 7
      %v1336 = vsub.s32 %v1333, %v1335
      %v1337 = vrot.slane %v1321, %v1336
      %v1339 = vunpack.c.l.s4 1966171168
      %v1340 = vunpack.c.0.s8 %v1339
      %v1341 = vlaneseq
      %v1342 = vshrl.u32 %v1341, 7
      %v1343 = vsub.s32 %v1340, %v1342
      %v1344 = vrot.slane %v1328, %v1343
      %v1346 = vunpack.c.l.s4 1966171168
      %v1347 = vunpack.c.0.s8 %v1346
      %v1348 = vlaneseq
      %v1349 = vshrl.u32 %v1348, 7
      %v1350 = vsub.s32 %v1347, %v1349
      %v1351 = vrot.slane %v1329, %v1350
      %v1353 = vunpack.c.l.s4 1966171168
      %v1354 = vunpack.c.0.s8 %v1353
      %v1355 = vlaneseq
      %v1356 = vshrl.u32 %v1355, 7
      %v1357 = vsub.s32 %v1354, %v1356
      %v1358 = vrot.slane %v1330, %v1357
      %v1359 = vcombine.high %v1337, %v1337
      %v1360 = vcombine.high %v1344, %v1344
      %v1361 = vcombine.high %v1351, %v1351
      %v1362 = vcombine.high %v1358, %v1358
      %v1364 = vunpack.c.l.s4 1966171168
      %v1365 = vunpack.c.0.s8 %v1364
      %v1366 = vlaneseq
      %v1367 = vshrl.u32 %v1366, 7
      %v1368 = vsub.s32 %v1365, %v1367
      %v1369 = vrot.slane %v1311, %v1368
      %v1371 = vunpack.c.l.s4 1966171168
      %v1372 = vunpack.c.0.s8 %v1371
      %v1373 = vlaneseq
      %v1374 = vshrl.u32 %v1373, 7
      %v1375 = vsub.s32 %v1372, %v1374
      %v1376 = vrot.slane %v1369, %v1375
      %1377 = vrot.lane.b32.xlu0 %v1337, 89
      %v1378 = vpop.permute.xlu0 %1377
      %1379 = vrot.lane.b32.xlu0 %v1351, 89
      %v1380 = vpop.permute.xlu0 %1379
      %1381 = vrot.lane.b32.xlu0 %v1359, 89
      %v1382 = vpop.permute.xlu0 %1381
      %1383 = vrot.lane.b32.xlu0 %v1361, 89
      %v1384 = vpop.permute.xlu0 %1383
      %1385 = vrot.lane.b32.xlu0 %v1344, 89
      %v1386 = vpop.permute.xlu0 %1385
      %1387 = vrot.lane.b32.xlu0 %v1358, 89
      %v1388 = vpop.permute.xlu0 %1387
      %1389 = vrot.lane.b32.xlu0 %v1360, 89
      %v1390 = vpop.permute.xlu0 %1389
      %1391 = vrot.lane.b32.xlu0 %v1362, 89
      %v1392 = vpop.permute.xlu0 %1391
      %1393 = vrot.lane.b32.xlu0 %v1376, 89
      %v1394 = vpop.permute.xlu0 %1393
      %vm1395 = vcmask 728064
      %v1396 = vsel %vm1395, %v1378, %v1380
      %v1397 = vsel %vm1395, %v1380, %v1382
      %v1398 = vsel %vm1395, %v1382, %v1384
      %v1399 = vsel %vm1395, %v1384, %v1386
      %v1400 = vsel %vm1395, %v1386, %v1388
      %v1401 = vsel %vm1395, %v1388, %v1390
      %v1402 = vsel %vm1395, %v1390, %v1392
      %v1403 = vsel %vm1395, %v1392, %v1394
      %1412 = vst [vmem:[#allocation2 + $0x100] sm:$0x1] %v1396
      %1413 = vst [vmem:[#allocation2 + $0x108] sm:$0x1] %v1397
      %1414 = vst [vmem:[#allocation2 + $0x110] sm:$0x1] %v1398
      %1415 = vst [vmem:[#allocation2 + $0x118] sm:$0x1] %v1399
      %1416 = vst [vmem:[#allocation2 + $0x120] sm:$0x1] %v1400
      %1417 = vst [vmem:[#allocation2 + $0x128] sm:$0x1] %v1401
      %1418 = vst [vmem:[#allocation2 + $0x130] sm:$0x1] %v1402
      %1419 = vst.msk [vmem:[#allocation2 + $0x138] sm:$0x1] %vm572, %v1403
      %v1420 = vld [vmem:[%s189] sm:$0xff]
      %v1421 = vld [vmem:[%s189 + $0x8] sm:$0x1]
      %v1424 = vcombine.high %v1420, %v1420
      %v1426 = vunpack.c.l.s4 1966171168
      %v1427 = vunpack.c.0.s8 %v1426
      %v1428 = vlaneseq
      %v1429 = vshrl.u32 %v1428, 7
      %v1430 = vsub.s32 %v1427, %v1429
      %v1431 = vrot.slane %v1420, %v1430
      %v1433 = vunpack.c.l.s4 1966171168
      %v1434 = vunpack.c.0.s8 %v1433
      %v1435 = vlaneseq
      %v1436 = vshrl.u32 %v1435, 7
      %v1437 = vsub.s32 %v1434, %v1436
      %v1438 = vrot.slane %v1424, %v1437
      %v1439 = vcombine.high %v1431, %v1431
      %v1440 = vcombine.high %v1438, %v1438
      %v1442 = vunpack.c.l.s4 1966171168
      %v1443 = vunpack.c.0.s8 %v1442
      %v1444 = vlaneseq
      %v1445 = vshrl.u32 %v1444, 7
      %v1446 = vsub.s32 %v1443, %v1445
      %v1447 = vrot.slane %v1431, %v1446
      %v1449 = vunpack.c.l.s4 1966171168
      %v1450 = vunpack.c.0.s8 %v1449
      %v1451 = vlaneseq
      %v1452 = vshrl.u32 %v1451, 7
      %v1453 = vsub.s32 %v1450, %v1452
      %v1454 = vrot.slane %v1438, %v1453
      %v1456 = vunpack.c.l.s4 1966171168
      %v1457 = vunpack.c.0.s8 %v1456
      %v1458 = vlaneseq
      %v1459 = vshrl.u32 %v1458, 7
      %v1460 = vsub.s32 %v1457, %v1459
      %v1461 = vrot.slane %v1439, %v1460
      %v1463 = vunpack.c.l.s4 1966171168
      %v1464 = vunpack.c.0.s8 %v1463
      %v1465 = vlaneseq
      %v1466 = vshrl.u32 %v1465, 7
      %v1467 = vsub.s32 %v1464, %v1466
      %v1468 = vrot.slane %v1440, %v1467
      %v1469 = vcombine.low %v1447, %v1447
      %v1470 = vcombine.low %v1454, %v1454
      %v1471 = vcombine.low %v1461, %v1461
      %v1472 = vcombine.low %v1468, %v1468
      %v1474 = vunpack.c.l.s4 1966171168
      %v1475 = vunpack.c.0.s8 %v1474
      %v1476 = vlaneseq
      %v1477 = vshrl.u32 %v1476, 7
      %v1478 = vsub.s32 %v1475, %v1477
      %v1479 = vrot.slane %v1421, %v1478
      %v1481 = vunpack.c.l.s4 1966171168
      %v1482 = vunpack.c.0.s8 %v1481
      %v1483 = vlaneseq
      %v1484 = vshrl.u32 %v1483, 7
      %v1485 = vsub.s32 %v1482, %v1484
      %v1486 = vrot.slane %v1479, %v1485
      %v1487 = vcombine.low %v1486, %v1486
      %1488 = vrot.lane.b32.xlu0 %v1469, 11
      %v1489 = vpop.permute.xlu0 %1488
      %1490 = vrot.lane.b32.xlu0 %v1471, 11
      %v1491 = vpop.permute.xlu0 %1490
      %1492 = vrot.lane.b32.xlu0 %v1447, 11
      %v1493 = vpop.permute.xlu0 %1492
      %1494 = vrot.lane.b32.xlu0 %v1461, 11
      %v1495 = vpop.permute.xlu0 %1494
      %1496 = vrot.lane.b32.xlu0 %v1470, 11
      %v1497 = vpop.permute.xlu0 %1496
      %1498 = vrot.lane.b32.xlu0 %v1472, 11
      %v1499 = vpop.permute.xlu0 %1498
      %1500 = vrot.lane.b32.xlu0 %v1454, 11
      %v1501 = vpop.permute.xlu0 %1500
      %1502 = vrot.lane.b32.xlu0 %v1468, 11
      %v1503 = vpop.permute.xlu0 %1502
      %1504 = vrot.lane.b32.xlu0 %v1487, 11
      %v1505 = vpop.permute.xlu0 %1504
      %vm1506 = vcmask 89088
      %v1507 = vsel %vm1506, %v1489, %v1491
      %v1508 = vsel %vm1506, %v1491, %v1493
      %v1509 = vsel %vm1506, %v1493, %v1495
      %v1510 = vsel %vm1506, %v1495, %v1497
      %v1511 = vsel %vm1506, %v1497, %v1499
      %v1512 = vsel %vm1506, %v1499, %v1501
      %v1513 = vsel %vm1506, %v1501, %v1503
      %v1514 = vsel %vm1506, %v1503, %v1505
      %1523 = vst [vmem:[#allocation2 + $0x100] sm:$0x10] %v1507
      %1524 = vst [vmem:[#allocation2 + $0x108] sm:$0x10] %v1508
      %1525 = vst [vmem:[#allocation2 + $0x110] sm:$0x10] %v1509
      %1526 = vst [vmem:[#allocation2 + $0x118] sm:$0x10] %v1510
      %1527 = vst [vmem:[#allocation2 + $0x120] sm:$0x10] %v1511
      %1528 = vst [vmem:[#allocation2 + $0x128] sm:$0x10] %v1512
      %1529 = vst [vmem:[#allocation2 + $0x130] sm:$0x10] %v1513
      %1530 = vst.msk [vmem:[#allocation2 + $0x138] sm:$0x10] %vm664, %v1514
      %v1531 = vld [vmem:[%s189] sm:$0xff]
      %v1532 = vld [vmem:[%s189 + $0x8] sm:$0x1]
      %v1535 = vcombine.high %v1531, %v1531
      %v1537 = vunpack.c.l.s4 1966171168
      %v1538 = vunpack.c.0.s8 %v1537
      %v1539 = vlaneseq
      %v1540 = vshrl.u32 %v1539, 7
      %v1541 = vsub.s32 %v1538, %v1540
      %v1542 = vrot.slane %v1531, %v1541
      %v1544 = vunpack.c.l.s4 1966171168
      %v1545 = vunpack.c.0.s8 %v1544
      %v1546 = vlaneseq
      %v1547 = vshrl.u32 %v1546, 7
      %v1548 = vsub.s32 %v1545, %v1547
      %v1549 = vrot.slane %v1535, %v1548
      %v1550 = vcombine.high %v1542, %v1542
      %v1551 = vcombine.high %v1549, %v1549
      %v1553 = vunpack.c.l.s4 1966171168
      %v1554 = vunpack.c.0.s8 %v1553
      %v1555 = vlaneseq
      %v1556 = vshrl.u32 %v1555, 7
      %v1557 = vsub.s32 %v1554, %v1556
      %v1558 = vrot.slane %v1542, %v1557
      %v1560 = vunpack.c.l.s4 1966171168
      %v1561 = vunpack.c.0.s8 %v1560
      %v1562 = vlaneseq
      %v1563 = vshrl.u32 %v1562, 7
      %v1564 = vsub.s32 %v1561, %v1563
      %v1565 = vrot.slane %v1549, %v1564
      %v1567 = vunpack.c.l.s4 1966171168
      %v1568 = vunpack.c.0.s8 %v1567
      %v1569 = vlaneseq
      %v1570 = vshrl.u32 %v1569, 7
      %v1571 = vsub.s32 %v1568, %v1570
      %v1572 = vrot.slane %v1550, %v1571
      %v1574 = vunpack.c.l.s4 1966171168
      %v1575 = vunpack.c.0.s8 %v1574
      %v1576 = vlaneseq
      %v1577 = vshrl.u32 %v1576, 7
      %v1578 = vsub.s32 %v1575, %v1577
      %v1579 = vrot.slane %v1551, %v1578
      %v1580 = vcombine.high %v1558, %v1558
      %v1581 = vcombine.high %v1565, %v1565
      %v1582 = vcombine.high %v1572, %v1572
      %v1583 = vcombine.high %v1579, %v1579
      %v1585 = vunpack.c.l.s4 1966171168
      %v1586 = vunpack.c.0.s8 %v1585
      %v1587 = vlaneseq
      %v1588 = vshrl.u32 %v1587, 7
      %v1589 = vsub.s32 %v1586, %v1588
      %v1590 = vrot.slane %v1532, %v1589
      %v1592 = vunpack.c.l.s4 1966171168
      %v1593 = vunpack.c.0.s8 %v1592
      %v1594 = vlaneseq
      %v1595 = vshrl.u32 %v1594, 7
      %v1596 = vsub.s32 %v1593, %v1595
      %v1597 = vrot.slane %v1590, %v1596
      %1598 = vrot.lane.b32.xlu0 %v1558, 10
      %v1599 = vpop.permute.xlu0 %1598
      %1600 = vrot.lane.b32.xlu0 %v1572, 10
      %v1601 = vpop.permute.xlu0 %1600
      %1602 = vrot.lane.b32.xlu0 %v1580, 10
      %v1603 = vpop.permute.xlu0 %1602
      %1604 = vrot.lane.b32.xlu0 %v1582, 10
      %v1605 = vpop.permute.xlu0 %1604
      %1606 = vrot.lane.b32.xlu0 %v1565, 10
      %v1607 = vpop.permute.xlu0 %1606
      %1608 = vrot.lane.b32.xlu0 %v1579, 10
      %v1609 = vpop.permute.xlu0 %1608
      %1610 = vrot.lane.b32.xlu0 %v1581, 10
      %v1611 = vpop.permute.xlu0 %1610
      %1612 = vrot.lane.b32.xlu0 %v1583, 10
      %v1613 = vpop.permute.xlu0 %1612
      %1614 = vrot.lane.b32.xlu0 %v1597, 10
      %v1615 = vpop.permute.xlu0 %1614
      %vm1616 = vcmask 80896
      %v1617 = vsel %vm1616, %v1599, %v1601
      %v1618 = vsel %vm1616, %v1601, %v1603
      %v1619 = vsel %vm1616, %v1603, %v1605
      %v1620 = vsel %vm1616, %v1605, %v1607
      %v1621 = vsel %vm1616, %v1607, %v1609
      %v1622 = vsel %vm1616, %v1609, %v1611
      %v1623 = vsel %vm1616, %v1611, %v1613
      %v1624 = vsel %vm1616, %v1613, %v1615
      %1633 = vst [vmem:[#allocation2 + $0x140] sm:$0x1] %v1617
      %1634 = vst [vmem:[#allocation2 + $0x148] sm:$0x1] %v1618
      %1635 = vst [vmem:[#allocation2 + $0x150] sm:$0x1] %v1619
      %1636 = vst [vmem:[#allocation2 + $0x158] sm:$0x1] %v1620
      %1637 = vst [vmem:[#allocation2 + $0x160] sm:$0x1] %v1621
      %1638 = vst [vmem:[#allocation2 + $0x168] sm:$0x1] %v1622
      %1639 = vst [vmem:[#allocation2 + $0x170] sm:$0x1] %v1623
      %1640 = vst.msk [vmem:[#allocation2 + $0x178] sm:$0x1] %vm572, %v1624
      %v1641 = vld [vmem:[%s189] sm:$0xff]
      %v1642 = vld [vmem:[%s189 + $0x8] sm:$0x1]
      %v1645 = vcombine.high %v1641, %v1641
      %v1647 = vunpack.c.l.s4 1966171168
      %v1648 = vunpack.c.0.s8 %v1647
      %v1649 = vlaneseq
      %v1650 = vshrl.u32 %v1649, 7
      %v1651 = vsub.s32 %v1648, %v1650
      %v1652 = vrot.slane %v1641, %v1651
      %v1654 = vunpack.c.l.s4 1966171168
      %v1655 = vunpack.c.0.s8 %v1654
      %v1656 = vlaneseq
      %v1657 = vshrl.u32 %v1656, 7
      %v1658 = vsub.s32 %v1655, %v1657
      %v1659 = vrot.slane %v1645, %v1658
      %v1660 = vcombine.high %v1652, %v1652
      %v1661 = vcombine.high %v1659, %v1659
      %v1663 = vunpack.c.l.s4 1966171168
      %v1664 = vunpack.c.0.s8 %v1663
      %v1665 = vlaneseq
      %v1666 = vshrl.u32 %v1665, 7
      %v1667 = vsub.s32 %v1664, %v1666
      %v1668 = vrot.slane %v1652, %v1667
      %v1670 = vunpack.c.l.s4 1966171168
      %v1671 = vunpack.c.0.s8 %v1670
      %v1672 = vlaneseq
      %v1673 = vshrl.u32 %v1672, 7
      %v1674 = vsub.s32 %v1671, %v1673
      %v1675 = vrot.slane %v1659, %v1674
      %v1677 = vunpack.c.l.s4 1966171168
      %v1678 = vunpack.c.0.s8 %v1677
      %v1679 = vlaneseq
      %v1680 = vshrl.u32 %v1679, 7
      %v1681 = vsub.s32 %v1678, %v1680
      %v1682 = vrot.slane %v1660, %v1681
      %v1684 = vunpack.c.l.s4 1966171168
      %v1685 = vunpack.c.0.s8 %v1684
      %v1686 = vlaneseq
      %v1687 = vshrl.u32 %v1686, 7
      %v1688 = vsub.s32 %v1685, %v1687
      %v1689 = vrot.slane %v1661, %v1688
      %v1690 = vcombine.low %v1668, %v1668
      %v1691 = vcombine.low %v1675, %v1675
      %v1692 = vcombine.low %v1682, %v1682
      %v1693 = vcombine.low %v1689, %v1689
      %v1695 = vunpack.c.l.s4 1966171168
      %v1696 = vunpack.c.0.s8 %v1695
      %v1697 = vlaneseq
      %v1698 = vshrl.u32 %v1697, 7
      %v1699 = vsub.s32 %v1696, %v1698
      %v1700 = vrot.slane %v1642, %v1699
      %v1702 = vunpack.c.l.s4 1966171168
      %v1703 = vunpack.c.0.s8 %v1702
      %v1704 = vlaneseq
      %v1705 = vshrl.u32 %v1704, 7
      %v1706 = vsub.s32 %v1703, %v1705
      %v1707 = vrot.slane %v1700, %v1706
      %v1708 = vcombine.low %v1707, %v1707
      %1709 = vrot.lane.b32.xlu0 %v1690, 9
      %v1710 = vpop.permute.xlu0 %1709
      %1711 = vrot.lane.b32.xlu0 %v1692, 9
      %v1712 = vpop.permute.xlu0 %1711
      %1713 = vrot.lane.b32.xlu0 %v1668, 9
      %v1714 = vpop.permute.xlu0 %1713
      %1715 = vrot.lane.b32.xlu0 %v1682, 9
      %v1716 = vpop.permute.xlu0 %1715
      %1717 = vrot.lane.b32.xlu0 %v1691, 9
      %v1718 = vpop.permute.xlu0 %1717
      %1719 = vrot.lane.b32.xlu0 %v1693, 9
      %v1720 = vpop.permute.xlu0 %1719
      %1721 = vrot.lane.b32.xlu0 %v1675, 9
      %v1722 = vpop.permute.xlu0 %1721
      %1723 = vrot.lane.b32.xlu0 %v1689, 9
      %v1724 = vpop.permute.xlu0 %1723
      %1725 = vrot.lane.b32.xlu0 %v1708, 9
      %v1726 = vpop.permute.xlu0 %1725
      %vm1727 = vcmask 72704
      %v1728 = vsel %vm1727, %v1710, %v1712
      %v1729 = vsel %vm1727, %v1712, %v1714
      %v1730 = vsel %vm1727, %v1714, %v1716
      %v1731 = vsel %vm1727, %v1716, %v1718
      %v1732 = vsel %vm1727, %v1718, %v1720
      %v1733 = vsel %vm1727, %v1720, %v1722
      %v1734 = vsel %vm1727, %v1722, %v1724
      %v1735 = vsel %vm1727, %v1724, %v1726
      %1744 = vst [vmem:[#allocation2 + $0x140] sm:$0x10] %v1728
      %1745 = vst [vmem:[#allocation2 + $0x148] sm:$0x10] %v1729
      %1746 = vst [vmem:[#allocation2 + $0x150] sm:$0x10] %v1730
      %1747 = vst [vmem:[#allocation2 + $0x158] sm:$0x10] %v1731
      %1748 = vst [vmem:[#allocation2 + $0x160] sm:$0x10] %v1732
      %1749 = vst [vmem:[#allocation2 + $0x168] sm:$0x10] %v1733
      %1750 = vst [vmem:[#allocation2 + $0x170] sm:$0x10] %v1734
      %1751 = vst.msk [vmem:[#allocation2 + $0x178] sm:$0x10] %vm664, %v1735
      %v1752 = vld [vmem:[%s189] sm:$0xff]
      %v1753 = vld [vmem:[%s189 + $0x8] sm:$0x1]
      %v1756 = vcombine.high %v1752, %v1752
      %v1758 = vunpack.c.l.s4 1966171168
      %v1759 = vunpack.c.0.s8 %v1758
      %v1760 = vlaneseq
      %v1761 = vshrl.u32 %v1760, 7
      %v1762 = vsub.s32 %v1759, %v1761
      %v1763 = vrot.slane %v1752, %v1762
      %v1765 = vunpack.c.l.s4 1966171168
      %v1766 = vunpack.c.0.s8 %v1765
      %v1767 = vlaneseq
      %v1768 = vshrl.u32 %v1767, 7
      %v1769 = vsub.s32 %v1766, %v1768
      %v1770 = vrot.slane %v1756, %v1769
      %v1771 = vcombine.high %v1763, %v1763
      %v1772 = vcombine.high %v1770, %v1770
      %v1774 = vunpack.c.l.s4 1966171168
      %v1775 = vunpack.c.0.s8 %v1774
      %v1776 = vlaneseq
      %v1777 = vshrl.u32 %v1776, 7
      %v1778 = vsub.s32 %v1775, %v1777
      %v1779 = vrot.slane %v1763, %v1778
      %v1781 = vunpack.c.l.s4 1966171168
      %v1782 = vunpack.c.0.s8 %v1781
      %v1783 = vlaneseq
      %v1784 = vshrl.u32 %v1783, 7
      %v1785 = vsub.s32 %v1782, %v1784
      %v1786 = vrot.slane %v1770, %v1785
      %v1788 = vunpack.c.l.s4 1966171168
      %v1789 = vunpack.c.0.s8 %v1788
      %v1790 = vlaneseq
      %v1791 = vshrl.u32 %v1790, 7
      %v1792 = vsub.s32 %v1789, %v1791
      %v1793 = vrot.slane %v1771, %v1792
      %v1795 = vunpack.c.l.s4 1966171168
      %v1796 = vunpack.c.0.s8 %v1795
      %v1797 = vlaneseq
      %v1798 = vshrl.u32 %v1797, 7
      %v1799 = vsub.s32 %v1796, %v1798
      %v1800 = vrot.slane %v1772, %v1799
      %v1801 = vcombine.high %v1779, %v1779
      %v1802 = vcombine.high %v1786, %v1786
      %v1803 = vcombine.high %v1793, %v1793
      %v1804 = vcombine.high %v1800, %v1800
      %v1806 = vunpack.c.l.s4 1966171168
      %v1807 = vunpack.c.0.s8 %v1806
      %v1808 = vlaneseq
      %v1809 = vshrl.u32 %v1808, 7
      %v1810 = vsub.s32 %v1807, %v1809
      %v1811 = vrot.slane %v1753, %v1810
      %v1813 = vunpack.c.l.s4 1966171168
      %v1814 = vunpack.c.0.s8 %v1813
      %v1815 = vlaneseq
      %v1816 = vshrl.u32 %v1815, 7
      %v1817 = vsub.s32 %v1814, %v1816
      %v1818 = vrot.slane %v1811, %v1817
      %1819 = vrot.lane.b32.xlu0 %v1779, 1
      %v1820 = vpop.permute.xlu0 %1819
      %1821 = vrot.lane.b32.xlu0 %v1793, 1
      %v1822 = vpop.permute.xlu0 %1821
      %1823 = vrot.lane.b32.xlu0 %v1801, 1
      %v1824 = vpop.permute.xlu0 %1823
      %1825 = vrot.lane.b32.xlu0 %v1803, 1
      %v1826 = vpop.permute.xlu0 %1825
      %1827 = vrot.lane.b32.xlu0 %v1786, 1
      %v1828 = vpop.permute.xlu0 %1827
      %1829 = vrot.lane.b32.xlu0 %v1800, 1
      %v1830 = vpop.permute.xlu0 %1829
      %1831 = vrot.lane.b32.xlu0 %v1802, 1
      %v1832 = vpop.permute.xlu0 %1831
      %1833 = vrot.lane.b32.xlu0 %v1804, 1
      %v1834 = vpop.permute.xlu0 %1833
      %1835 = vrot.lane.b32.xlu0 %v1818, 1
      %v1836 = vpop.permute.xlu0 %1835
      %vm1837 = vcmask 7168
      %v1838 = vsel %vm1837, %v1820, %v1822
      %v1839 = vsel %vm1837, %v1822, %v1824
      %v1840 = vsel %vm1837, %v1824, %v1826
      %v1841 = vsel %vm1837, %v1826, %v1828
      %v1842 = vsel %vm1837, %v1828, %v1830
      %v1843 = vsel %vm1837, %v1830, %v1832
      %v1844 = vsel %vm1837, %v1832, %v1834
      %v1845 = vsel %vm1837, %v1834, %v1836
      %1854 = vst [vmem:[#allocation2 + $0x180] sm:$0x1] %v1838
      %1855 = vst [vmem:[#allocation2 + $0x188] sm:$0x1] %v1839
      %1856 = vst [vmem:[#allocation2 + $0x190] sm:$0x1] %v1840
      %1857 = vst [vmem:[#allocation2 + $0x198] sm:$0x1] %v1841
      %1858 = vst [vmem:[#allocation2 + $0x1a0] sm:$0x1] %v1842
      %1859 = vst [vmem:[#allocation2 + $0x1a8] sm:$0x1] %v1843
      %1860 = vst [vmem:[#allocation2 + $0x1b0] sm:$0x1] %v1844
      %1861 = vst.msk [vmem:[#allocation2 + $0x1b8] sm:$0x1] %vm572, %v1845
      %v1862 = vld [vmem:[%s189 + $0x1] sm:$0xff]
      %v1864 = vcombine.high %v1862, %v1862
      %v1866 = vunpack.c.l.s4 1966171168
      %v1867 = vunpack.c.0.s8 %v1866
      %v1868 = vlaneseq
      %v1869 = vshrl.u32 %v1868, 7
      %v1870 = vsub.s32 %v1867, %v1869
      %v1871 = vrot.slane %v1862, %v1870
      %v1873 = vunpack.c.l.s4 1966171168
      %v1874 = vunpack.c.0.s8 %v1873
      %v1875 = vlaneseq
      %v1876 = vshrl.u32 %v1875, 7
      %v1877 = vsub.s32 %v1874, %v1876
      %v1878 = vrot.slane %v1864, %v1877
      %v1879 = vcombine.high %v1871, %v1871
      %v1880 = vcombine.high %v1878, %v1878
      %v1882 = vunpack.c.l.s4 1966171168
      %v1883 = vunpack.c.0.s8 %v1882
      %v1884 = vlaneseq
      %v1885 = vshrl.u32 %v1884, 7
      %v1886 = vsub.s32 %v1883, %v1885
      %v1887 = vrot.slane %v1871, %v1886
      %v1889 = vunpack.c.l.s4 1966171168
      %v1890 = vunpack.c.0.s8 %v1889
      %v1891 = vlaneseq
      %v1892 = vshrl.u32 %v1891, 7
      %v1893 = vsub.s32 %v1890, %v1892
      %v1894 = vrot.slane %v1878, %v1893
      %v1896 = vunpack.c.l.s4 1966171168
      %v1897 = vunpack.c.0.s8 %v1896
      %v1898 = vlaneseq
      %v1899 = vshrl.u32 %v1898, 7
      %v1900 = vsub.s32 %v1897, %v1899
      %v1901 = vrot.slane %v1879, %v1900
      %v1903 = vunpack.c.l.s4 1966171168
      %v1904 = vunpack.c.0.s8 %v1903
      %v1905 = vlaneseq
      %v1906 = vshrl.u32 %v1905, 7
      %v1907 = vsub.s32 %v1904, %v1906
      %v1908 = vrot.slane %v1880, %v1907
      %v1909 = vcombine.low %v1887, %v1887
      %v1910 = vcombine.low %v1894, %v1894
      %v1911 = vcombine.low %v1901, %v1901
      %v1912 = vcombine.low %v1908, %v1908
      %1921 = vst [vmem:[#allocation2 + $0x180] sm:$0x10] %v1909
      %1922 = vst [vmem:[#allocation2 + $0x188] sm:$0x10] %v1911
      %1923 = vst [vmem:[#allocation2 + $0x190] sm:$0x10] %v1887
      %1924 = vst [vmem:[#allocation2 + $0x198] sm:$0x10] %v1901
      %1925 = vst [vmem:[#allocation2 + $0x1a0] sm:$0x10] %v1910
      %1926 = vst [vmem:[#allocation2 + $0x1a8] sm:$0x10] %v1912
      %1927 = vst [vmem:[#allocation2 + $0x1b0] sm:$0x10] %v1894
      %1928 = vst.msk [vmem:[#allocation2 + $0x1b8] sm:$0x10] %vm664, %v1908
      %v1929 = vld [vmem:[%s189 + $0x1] sm:$0xff]
      %v1931 = vcombine.high %v1929, %v1929
      %v1933 = vunpack.c.l.s4 1966171168
      %v1934 = vunpack.c.0.s8 %v1933
      %v1935 = vlaneseq
      %v1936 = vshrl.u32 %v1935, 7
      %v1937 = vsub.s32 %v1934, %v1936
      %v1938 = vrot.slane %v1929, %v1937
      %v1940 = vunpack.c.l.s4 1966171168
      %v1941 = vunpack.c.0.s8 %v1940
      %v1942 = vlaneseq
      %v1943 = vshrl.u32 %v1942, 7
      %v1944 = vsub.s32 %v1941, %v1943
      %v1945 = vrot.slane %v1931, %v1944
      %v1946 = vcombine.high %v1938, %v1938
      %v1947 = vcombine.high %v1945, %v1945
      %v1949 = vunpack.c.l.s4 1966171168
      %v1950 = vunpack.c.0.s8 %v1949
      %v1951 = vlaneseq
      %v1952 = vshrl.u32 %v1951, 7
      %v1953 = vsub.s32 %v1950, %v1952
      %v1954 = vrot.slane %v1938, %v1953
      %v1956 = vunpack.c.l.s4 1966171168
      %v1957 = vunpack.c.0.s8 %v1956
      %v1958 = vlaneseq
      %v1959 = vshrl.u32 %v1958, 7
      %v1960 = vsub.s32 %v1957, %v1959
      %v1961 = vrot.slane %v1945, %v1960
      %v1963 = vunpack.c.l.s4 1966171168
      %v1964 = vunpack.c.0.s8 %v1963
      %v1965 = vlaneseq
      %v1966 = vshrl.u32 %v1965, 7
      %v1967 = vsub.s32 %v1964, %v1966
      %v1968 = vrot.slane %v1946, %v1967
      %v1970 = vunpack.c.l.s4 1966171168
      %v1971 = vunpack.c.0.s8 %v1970
      %v1972 = vlaneseq
      %v1973 = vshrl.u32 %v1972, 7
      %v1974 = vsub.s32 %v1971, %v1973
      %v1975 = vrot.slane %v1947, %v1974
      %v1976 = vcombine.high %v1954, %v1954
      %v1977 = vcombine.high %v1961, %v1961
      %v1978 = vcombine.high %v1968, %v1968
      %v1979 = vcombine.high %v1975, %v1975
      %1980 = vrot.lane.b32.xlu0 %v1954, 127
      %v1981 = vpop.permute.xlu0 %1980
      %1982 = vrot.lane.b32.xlu0 %v1968, 127
      %v1983 = vpop.permute.xlu0 %1982
      %1984 = vrot.lane.b32.xlu0 %v1976, 127
      %v1985 = vpop.permute.xlu0 %1984
      %1986 = vrot.lane.b32.xlu0 %v1978, 127
      %v1987 = vpop.permute.xlu0 %1986
      %1988 = vrot.lane.b32.xlu0 %v1961, 127
      %v1989 = vpop.permute.xlu0 %1988
      %1990 = vrot.lane.b32.xlu0 %v1975, 127
      %v1991 = vpop.permute.xlu0 %1990
      %1992 = vrot.lane.b32.xlu0 %v1977, 127
      %v1993 = vpop.permute.xlu0 %1992
      %1994 = vrot.lane.b32.xlu0 %v1979, 127
      %v1995 = vpop.permute.xlu0 %1994
      %vm1996 = vcmask 1039360
      %v1997 = vsel %vm1996, %v1981, %v1983
      %v1998 = vsel %vm1996, %v1983, %v1985
      %v1999 = vsel %vm1996, %v1985, %v1987
      %v2000 = vsel %vm1996, %v1987, %v1989
      %v2001 = vsel %vm1996, %v1989, %v1991
      %v2002 = vsel %vm1996, %v1991, %v1993
      %v2003 = vsel %vm1996, %v1993, %v1995
      %2012 = vst [vmem:[#allocation2 + $0x1c0] sm:$0x1] %v1997
      %2013 = vst [vmem:[#allocation2 + $0x1c8] sm:$0x1] %v1998
      %2014 = vst [vmem:[#allocation2 + $0x1d0] sm:$0x1] %v1999
      %2015 = vst [vmem:[#allocation2 + $0x1d8] sm:$0x1] %v2000
      %2016 = vst [vmem:[#allocation2 + $0x1e0] sm:$0x1] %v2001
      %2017 = vst [vmem:[#allocation2 + $0x1e8] sm:$0x1] %v2002
      %2018 = vst [vmem:[#allocation2 + $0x1f0] sm:$0x1] %v2003
      %2019 = vst.msk [vmem:[#allocation2 + $0x1f8] sm:$0x1] %vm572, %v1995
      %v2020 = vld [vmem:[%s189 + $0x1] sm:$0xff]
      %v2022 = vcombine.high %v2020, %v2020
      %v2024 = vunpack.c.l.s4 1966171168
      %v2025 = vunpack.c.0.s8 %v2024
      %v2026 = vlaneseq
      %v2027 = vshrl.u32 %v2026, 7
      %v2028 = vsub.s32 %v2025, %v2027
      %v2029 = vrot.slane %v2020, %v2028
      %v2031 = vunpack.c.l.s4 1966171168
      %v2032 = vunpack.c.0.s8 %v2031
      %v2033 = vlaneseq
      %v2034 = vshrl.u32 %v2033, 7
      %v2035 = vsub.s32 %v2032, %v2034
      %v2036 = vrot.slane %v2022, %v2035
      %v2037 = vcombine.high %v2029, %v2029
      %v2038 = vcombine.high %v2036, %v2036
      %v2040 = vunpack.c.l.s4 1966171168
      %v2041 = vunpack.c.0.s8 %v2040
      %v2042 = vlaneseq
      %v2043 = vshrl.u32 %v2042, 7
      %v2044 = vsub.s32 %v2041, %v2043
      %v2045 = vrot.slane %v2029, %v2044
      %v2047 = vunpack.c.l.s4 1966171168
      %v2048 = vunpack.c.0.s8 %v2047
      %v2049 = vlaneseq
      %v2050 = vshrl.u32 %v2049, 7
      %v2051 = vsub.s32 %v2048, %v2050
      %v2052 = vrot.slane %v2036, %v2051
      %v2054 = vunpack.c.l.s4 1966171168
      %v2055 = vunpack.c.0.s8 %v2054
      %v2056 = vlaneseq
      %v2057 = vshrl.u32 %v2056, 7
      %v2058 = vsub.s32 %v2055, %v2057
      %v2059 = vrot.slane %v2037, %v2058
      %v2061 = vunpack.c.l.s4 1966171168
      %v2062 = vunpack.c.0.s8 %v2061
      %v2063 = vlaneseq
      %v2064 = vshrl.u32 %v2063, 7
      %v2065 = vsub.s32 %v2062, %v2064
      %v2066 = vrot.slane %v2038, %v2065
      %v2067 = vcombine.low %v2045, %v2045
      %v2068 = vcombine.low %v2052, %v2052
      %v2069 = vcombine.low %v2059, %v2059
      %v2070 = vcombine.low %v2066, %v2066
      %2071 = vrot.lane.b32.xlu0 %v2067, 119
      %v2072 = vpop.permute.xlu0 %2071
      %2073 = vrot.lane.b32.xlu0 %v2069, 119
      %v2074 = vpop.permute.xlu0 %2073
      %2075 = vrot.lane.b32.xlu0 %v2045, 119
      %v2076 = vpop.permute.xlu0 %2075
      %2077 = vrot.lane.b32.xlu0 %v2059, 119
      %v2078 = vpop.permute.xlu0 %2077
      %2079 = vrot.lane.b32.xlu0 %v2068, 119
      %v2080 = vpop.permute.xlu0 %2079
      %2081 = vrot.lane.b32.xlu0 %v2070, 119
      %v2082 = vpop.permute.xlu0 %2081
      %2083 = vrot.lane.b32.xlu0 %v2052, 119
      %v2084 = vpop.permute.xlu0 %2083
      %2085 = vrot.lane.b32.xlu0 %v2066, 119
      %v2086 = vpop.permute.xlu0 %2085
      %vm2087 = vcmask 973824
      %v2088 = vsel %vm2087, %v2072, %v2074
      %v2089 = vsel %vm2087, %v2074, %v2076
      %v2090 = vsel %vm2087, %v2076, %v2078
      %v2091 = vsel %vm2087, %v2078, %v2080
      %v2092 = vsel %vm2087, %v2080, %v2082
      %v2093 = vsel %vm2087, %v2082, %v2084
      %v2094 = vsel %vm2087, %v2084, %v2086
      %2103 = vst [vmem:[#allocation2 + $0x1c0] sm:$0x10] %v2088
      %2104 = vst [vmem:[#allocation2 + $0x1c8] sm:$0x10] %v2089
      %2105 = vst [vmem:[#allocation2 + $0x1d0] sm:$0x10] %v2090
      %2106 = vst [vmem:[#allocation2 + $0x1d8] sm:$0x10] %v2091
      %2107 = vst [vmem:[#allocation2 + $0x1e0] sm:$0x10] %v2092
      %2108 = vst [vmem:[#allocation2 + $0x1e8] sm:$0x10] %v2093
      %2109 = vst [vmem:[#allocation2 + $0x1f0] sm:$0x10] %v2094
      %2110 = vst.msk [vmem:[#allocation2 + $0x1f8] sm:$0x10] %vm664, %v2086
      %v2111 = vld [vmem:[%s189 + $0x1] sm:$0xff]
      %v2113 = vcombine.high %v2111, %v2111
      %v2115 = vunpack.c.l.s4 1966171168
      %v2116 = vunpack.c.0.s8 %v2115
      %v2117 = vlaneseq
      %v2118 = vshrl.u32 %v2117, 7
      %v2119 = vsub.s32 %v2116, %v2118
      %v2120 = vrot.slane %v2111, %v2119
      %v2122 = vunpack.c.l.s4 1966171168
      %v2123 = vunpack.c.0.s8 %v2122
      %v2124 = vlaneseq
      %v2125 = vshrl.u32 %v2124, 7
      %v2126 = vsub.s32 %v2123, %v2125
      %v2127 = vrot.slane %v2113, %v2126
      %v2128 = vcombine.high %v2120, %v2120
      %v2129 = vcombine.high %v2127, %v2127
      %v2131 = vunpack.c.l.s4 1966171168
      %v2132 = vunpack.c.0.s8 %v2131
      %v2133 = vlaneseq
      %v2134 = vshrl.u32 %v2133, 7
      %v2135 = vsub.s32 %v2132, %v2134
      %v2136 = vrot.slane %v2120, %v2135
      %v2138 = vunpack.c.l.s4 1966171168
      %v2139 = vunpack.c.0.s8 %v2138
      %v2140 = vlaneseq
      %v2141 = vshrl.u32 %v2140, 7
      %v2142 = vsub.s32 %v2139, %v2141
      %v2143 = vrot.slane %v2127, %v2142
      %v2145 = vunpack.c.l.s4 1966171168
      %v2146 = vunpack.c.0.s8 %v2145
      %v2147 = vlaneseq
      %v2148 = vshrl.u32 %v2147, 7
      %v2149 = vsub.s32 %v2146, %v2148
      %v2150 = vrot.slane %v2128, %v2149
      %v2152 = vunpack.c.l.s4 1966171168
      %v2153 = vunpack.c.0.s8 %v2152
      %v2154 = vlaneseq
      %v2155 = vshrl.u32 %v2154, 7
      %v2156 = vsub.s32 %v2153, %v2155
      %v2157 = vrot.slane %v2129, %v2156
      %v2158 = vcombine.high %v2136, %v2136
      %v2159 = vcombine.high %v2143, %v2143
      %v2160 = vcombine.high %v2150, %v2150
      %v2161 = vcombine.high %v2157, %v2157
      %2162 = vrot.lane.b32.xlu0 %v2136, 118
      %v2163 = vpop.permute.xlu0 %2162
      %2164 = vrot.lane.b32.xlu0 %v2150, 118
      %v2165 = vpop.permute.xlu0 %2164
      %2166 = vrot.lane.b32.xlu0 %v2158, 118
      %v2167 = vpop.permute.xlu0 %2166
      %2168 = vrot.lane.b32.xlu0 %v2160, 118
      %v2169 = vpop.permute.xlu0 %2168
      %2170 = vrot.lane.b32.xlu0 %v2143, 118
      %v2171 = vpop.permute.xlu0 %2170
      %2172 = vrot.lane.b32.xlu0 %v2157, 118
      %v2173 = vpop.permute.xlu0 %2172
      %2174 = vrot.lane.b32.xlu0 %v2159, 118
      %v2175 = vpop.permute.xlu0 %2174
      %2176 = vrot.lane.b32.xlu0 %v2161, 118
      %v2177 = vpop.permute.xlu0 %2176
      %vm2178 = vcmask 965632
      %v2179 = vsel %vm2178, %v2163, %v2165
      %v2180 = vsel %vm2178, %v2165, %v2167
      %v2181 = vsel %vm2178, %v2167, %v2169
      %v2182 = vsel %vm2178, %v2169, %v2171
      %v2183 = vsel %vm2178, %v2171, %v2173
      %v2184 = vsel %vm2178, %v2173, %v2175
      %v2185 = vsel %vm2178, %v2175, %v2177
      %2194 = vst [vmem:[#allocation2 + $0x200] sm:$0x1] %v2179
      %2195 = vst [vmem:[#allocation2 + $0x208] sm:$0x1] %v2180
      %2196 = vst [vmem:[#allocation2 + $0x210] sm:$0x1] %v2181
      %2197 = vst [vmem:[#allocation2 + $0x218] sm:$0x1] %v2182
      %2198 = vst [vmem:[#allocation2 + $0x220] sm:$0x1] %v2183
      %2199 = vst [vmem:[#allocation2 + $0x228] sm:$0x1] %v2184
      %2200 = vst [vmem:[#allocation2 + $0x230] sm:$0x1] %v2185
      %2201 = vst.msk [vmem:[#allocation2 + $0x238] sm:$0x1] %vm572, %v2177
      %v2202 = vld [vmem:[%s189 + $0x1] sm:$0xff]
      %v2204 = vcombine.high %v2202, %v2202
      %v2206 = vunpack.c.l.s4 1966171168
      %v2207 = vunpack.c.0.s8 %v2206
      %v2208 = vlaneseq
      %v2209 = vshrl.u32 %v2208, 7
      %v2210 = vsub.s32 %v2207, %v2209
      %v2211 = vrot.slane %v2202, %v2210
      %v2213 = vunpack.c.l.s4 1966171168
      %v2214 = vunpack.c.0.s8 %v2213
      %v2215 = vlaneseq
      %v2216 = vshrl.u32 %v2215, 7
      %v2217 = vsub.s32 %v2214, %v2216
      %v2218 = vrot.slane %v2204, %v2217
      %v2219 = vcombine.high %v2211, %v2211
      %v2220 = vcombine.high %v2218, %v2218
      %v2222 = vunpack.c.l.s4 1966171168
      %v2223 = vunpack.c.0.s8 %v2222
      %v2224 = vlaneseq
      %v2225 = vshrl.u32 %v2224, 7
      %v2226 = vsub.s32 %v2223, %v2225
      %v2227 = vrot.slane %v2211, %v2226
      %v2229 = vunpack.c.l.s4 1966171168
      %v2230 = vunpack.c.0.s8 %v2229
      %v2231 = vlaneseq
      %v2232 = vshrl.u32 %v2231, 7
      %v2233 = vsub.s32 %v2230, %v2232
      %v2234 = vrot.slane %v2218, %v2233
      %v2236 = vunpack.c.l.s4 1966171168
      %v2237 = vunpack.c.0.s8 %v2236
      %v2238 = vlaneseq
      %v2239 = vshrl.u32 %v2238, 7
      %v2240 = vsub.s32 %v2237, %v2239
      %v2241 = vrot.slane %v2219, %v2240
      %v2243 = vunpack.c.l.s4 1966171168
      %v2244 = vunpack.c.0.s8 %v2243
      %v2245 = vlaneseq
      %v2246 = vshrl.u32 %v2245, 7
      %v2247 = vsub.s32 %v2244, %v2246
      %v2248 = vrot.slane %v2220, %v2247
      %v2249 = vcombine.low %v2227, %v2227
      %v2250 = vcombine.low %v2234, %v2234
      %v2251 = vcombine.low %v2241, %v2241
      %v2252 = vcombine.low %v2248, %v2248
      %2253 = vrot.lane.b32.xlu0 %v2249, 117
      %v2254 = vpop.permute.xlu0 %2253
      %2255 = vrot.lane.b32.xlu0 %v2251, 117
      %v2256 = vpop.permute.xlu0 %2255
      %2257 = vrot.lane.b32.xlu0 %v2227, 117
      %v2258 = vpop.permute.xlu0 %2257
      %2259 = vrot.lane.b32.xlu0 %v2241, 117
      %v2260 = vpop.permute.xlu0 %2259
      %2261 = vrot.lane.b32.xlu0 %v2250, 117
      %v2262 = vpop.permute.xlu0 %2261
      %2263 = vrot.lane.b32.xlu0 %v2252, 117
      %v2264 = vpop.permute.xlu0 %2263
      %2265 = vrot.lane.b32.xlu0 %v2234, 117
      %v2266 = vpop.permute.xlu0 %2265
      %2267 = vrot.lane.b32.xlu0 %v2248, 117
      %v2268 = vpop.permute.xlu0 %2267
      %vm2269 = vcmask 957440
      %v2270 = vsel %vm2269, %v2254, %v2256
      %v2271 = vsel %vm2269, %v2256, %v2258
      %v2272 = vsel %vm2269, %v2258, %v2260
      %v2273 = vsel %vm2269, %v2260, %v2262
      %v2274 = vsel %vm2269, %v2262, %v2264
      %v2275 = vsel %vm2269, %v2264, %v2266
      %v2276 = vsel %vm2269, %v2266, %v2268
      %2285 = vst [vmem:[#allocation2 + $0x200] sm:$0x10] %v2270
      %2286 = vst [vmem:[#allocation2 + $0x208] sm:$0x10] %v2271
      %2287 = vst [vmem:[#allocation2 + $0x210] sm:$0x10] %v2272
      %2288 = vst [vmem:[#allocation2 + $0x218] sm:$0x10] %v2273
      %2289 = vst [vmem:[#allocation2 + $0x220] sm:$0x10] %v2274
      %2290 = vst [vmem:[#allocation2 + $0x228] sm:$0x10] %v2275
      %2291 = vst [vmem:[#allocation2 + $0x230] sm:$0x10] %v2276
      %2292 = vst.msk [vmem:[#allocation2 + $0x238] sm:$0x10] %vm664, %v2268
      %v2293 = vld [vmem:[%s189 + $0x1] sm:$0xff]
      %v2294 = vld [vmem:[%s189 + $0x9] sm:$0x1]
      %v2297 = vcombine.high %v2293, %v2293
      %v2299 = vunpack.c.l.s4 1966171168
      %v2300 = vunpack.c.0.s8 %v2299
      %v2301 = vlaneseq
      %v2302 = vshrl.u32 %v2301, 7
      %v2303 = vsub.s32 %v2300, %v2302
      %v2304 = vrot.slane %v2293, %v2303
      %v2306 = vunpack.c.l.s4 1966171168
      %v2307 = vunpack.c.0.s8 %v2306
      %v2308 = vlaneseq
      %v2309 = vshrl.u32 %v2308, 7
      %v2310 = vsub.s32 %v2307, %v2309
      %v2311 = vrot.slane %v2297, %v2310
      %v2312 = vcombine.high %v2304, %v2304
      %v2313 = vcombine.high %v2311, %v2311
      %v2315 = vunpack.c.l.s4 1966171168
      %v2316 = vunpack.c.0.s8 %v2315
      %v2317 = vlaneseq
      %v2318 = vshrl.u32 %v2317, 7
      %v2319 = vsub.s32 %v2316, %v2318
      %v2320 = vrot.slane %v2304, %v2319
      %v2322 = vunpack.c.l.s4 1966171168
      %v2323 = vunpack.c.0.s8 %v2322
      %v2324 = vlaneseq
      %v2325 = vshrl.u32 %v2324, 7
      %v2326 = vsub.s32 %v2323, %v2325
      %v2327 = vrot.slane %v2311, %v2326
      %v2329 = vunpack.c.l.s4 1966171168
      %v2330 = vunpack.c.0.s8 %v2329
      %v2331 = vlaneseq
      %v2332 = vshrl.u32 %v2331, 7
      %v2333 = vsub.s32 %v2330, %v2332
      %v2334 = vrot.slane %v2312, %v2333
      %v2336 = vunpack.c.l.s4 1966171168
      %v2337 = vunpack.c.0.s8 %v2336
      %v2338 = vlaneseq
      %v2339 = vshrl.u32 %v2338, 7
      %v2340 = vsub.s32 %v2337, %v2339
      %v2341 = vrot.slane %v2313, %v2340
      %v2342 = vcombine.high %v2320, %v2320
      %v2343 = vcombine.high %v2327, %v2327
      %v2344 = vcombine.high %v2334, %v2334
      %v2345 = vcombine.high %v2341, %v2341
      %v2347 = vunpack.c.l.s4 1966171168
      %v2348 = vunpack.c.0.s8 %v2347
      %v2349 = vlaneseq
      %v2350 = vshrl.u32 %v2349, 7
      %v2351 = vsub.s32 %v2348, %v2350
      %v2352 = vrot.slane %v2294, %v2351
      %v2354 = vunpack.c.l.s4 1966171168
      %v2355 = vunpack.c.0.s8 %v2354
      %v2356 = vlaneseq
      %v2357 = vshrl.u32 %v2356, 7
      %v2358 = vsub.s32 %v2355, %v2357
      %v2359 = vrot.slane %v2352, %v2358
      %2360 = vrot.lane.b32.xlu0 %v2320, 39
      %v2361 = vpop.permute.xlu0 %2360
      %2362 = vrot.lane.b32.xlu0 %v2334, 39
      %v2363 = vpop.permute.xlu0 %2362
      %2364 = vrot.lane.b32.xlu0 %v2342, 39
      %v2365 = vpop.permute.xlu0 %2364
      %2366 = vrot.lane.b32.xlu0 %v2344, 39
      %v2367 = vpop.permute.xlu0 %2366
      %2368 = vrot.lane.b32.xlu0 %v2327, 39
      %v2369 = vpop.permute.xlu0 %2368
      %2370 = vrot.lane.b32.xlu0 %v2341, 39
      %v2371 = vpop.permute.xlu0 %2370
      %2372 = vrot.lane.b32.xlu0 %v2343, 39
      %v2373 = vpop.permute.xlu0 %2372
      %2374 = vrot.lane.b32.xlu0 %v2345, 39
      %v2375 = vpop.permute.xlu0 %2374
      %2376 = vrot.lane.b32.xlu0 %v2359, 39
      %v2377 = vpop.permute.xlu0 %2376
      %vm2378 = vcmask 318464
      %v2379 = vsel %vm2378, %v2361, %v2363
      %v2380 = vsel %vm2378, %v2363, %v2365
      %v2381 = vsel %vm2378, %v2365, %v2367
      %v2382 = vsel %vm2378, %v2367, %v2369
      %v2383 = vsel %vm2378, %v2369, %v2371
      %v2384 = vsel %vm2378, %v2371, %v2373
      %v2385 = vsel %vm2378, %v2373, %v2375
      %v2386 = vsel %vm2378, %v2375, %v2377
      %2395 = vst [vmem:[#allocation2 + $0x240] sm:$0x1] %v2379
      %2396 = vst [vmem:[#allocation2 + $0x248] sm:$0x1] %v2380
      %2397 = vst [vmem:[#allocation2 + $0x250] sm:$0x1] %v2381
      %2398 = vst [vmem:[#allocation2 + $0x258] sm:$0x1] %v2382
      %2399 = vst [vmem:[#allocation2 + $0x260] sm:$0x1] %v2383
      %2400 = vst [vmem:[#allocation2 + $0x268] sm:$0x1] %v2384
      %2401 = vst [vmem:[#allocation2 + $0x270] sm:$0x1] %v2385
      %2402 = vst.msk [vmem:[#allocation2 + $0x278] sm:$0x1] %vm572, %v2386
      %v2403 = vld [vmem:[%s189 + $0x1] sm:$0xff]
      %v2404 = vld [vmem:[%s189 + $0x9] sm:$0x1]
      %v2407 = vcombine.high %v2403, %v2403
      %v2409 = vunpack.c.l.s4 1966171168
      %v2410 = vunpack.c.0.s8 %v2409
      %v2411 = vlaneseq
      %v2412 = vshrl.u32 %v2411, 7
      %v2413 = vsub.s32 %v2410, %v2412
      %v2414 = vrot.slane %v2403, %v2413
      %v2416 = vunpack.c.l.s4 1966171168
      %v2417 = vunpack.c.0.s8 %v2416
      %v2418 = vlaneseq
      %v2419 = vshrl.u32 %v2418, 7
      %v2420 = vsub.s32 %v2417, %v2419
      %v2421 = vrot.slane %v2407, %v2420
      %v2422 = vcombine.high %v2414, %v2414
      %v2423 = vcombine.high %v2421, %v2421
      %v2425 = vunpack.c.l.s4 1966171168
      %v2426 = vunpack.c.0.s8 %v2425
      %v2427 = vlaneseq
      %v2428 = vshrl.u32 %v2427, 7
      %v2429 = vsub.s32 %v2426, %v2428
      %v2430 = vrot.slane %v2414, %v2429
      %v2432 = vunpack.c.l.s4 1966171168
      %v2433 = vunpack.c.0.s8 %v2432
      %v2434 = vlaneseq
      %v2435 = vshrl.u32 %v2434, 7
      %v2436 = vsub.s32 %v2433, %v2435
      %v2437 = vrot.slane %v2421, %v2436
      %v2439 = vunpack.c.l.s4 1966171168
      %v2440 = vunpack.c.0.s8 %v2439
      %v2441 = vlaneseq
      %v2442 = vshrl.u32 %v2441, 7
      %v2443 = vsub.s32 %v2440, %v2442
      %v2444 = vrot.slane %v2422, %v2443
      %v2446 = vunpack.c.l.s4 1966171168
      %v2447 = vunpack.c.0.s8 %v2446
      %v2448 = vlaneseq
      %v2449 = vshrl.u32 %v2448, 7
      %v2450 = vsub.s32 %v2447, %v2449
      %v2451 = vrot.slane %v2423, %v2450
      %v2452 = vcombine.low %v2430, %v2430
      %v2453 = vcombine.low %v2437, %v2437
      %v2454 = vcombine.low %v2444, %v2444
      %v2455 = vcombine.low %v2451, %v2451
      %v2457 = vunpack.c.l.s4 1966171168
      %v2458 = vunpack.c.0.s8 %v2457
      %v2459 = vlaneseq
      %v2460 = vshrl.u32 %v2459, 7
      %v2461 = vsub.s32 %v2458, %v2460
      %v2462 = vrot.slane %v2404, %v2461
      %v2464 = vunpack.c.l.s4 1966171168
      %v2465 = vunpack.c.0.s8 %v2464
      %v2466 = vlaneseq
      %v2467 = vshrl.u32 %v2466, 7
      %v2468 = vsub.s32 %v2465, %v2467
      %v2469 = vrot.slane %v2462, %v2468
      %v2470 = vcombine.low %v2469, %v2469
      %2471 = vrot.lane.b32.xlu0 %v2452, 38
      %v2472 = vpop.permute.xlu0 %2471
      %2473 = vrot.lane.b32.xlu0 %v2454, 38
      %v2474 = vpop.permute.xlu0 %2473
      %2475 = vrot.lane.b32.xlu0 %v2430, 38
      %v2476 = vpop.permute.xlu0 %2475
      %2477 = vrot.lane.b32.xlu0 %v2444, 38
      %v2478 = vpop.permute.xlu0 %2477
      %2479 = vrot.lane.b32.xlu0 %v2453, 38
      %v2480 = vpop.permute.xlu0 %2479
      %2481 = vrot.lane.b32.xlu0 %v2455, 38
      %v2482 = vpop.permute.xlu0 %2481
      %2483 = vrot.lane.b32.xlu0 %v2437, 38
      %v2484 = vpop.permute.xlu0 %2483
      %2485 = vrot.lane.b32.xlu0 %v2451, 38
      %v2486 = vpop.permute.xlu0 %2485
      %2487 = vrot.lane.b32.xlu0 %v2470, 38
      %v2488 = vpop.permute.xlu0 %2487
      %vm2489 = vcmask 310272
      %v2490 = vsel %vm2489, %v2472, %v2474
      %v2491 = vsel %vm2489, %v2474, %v2476
      %v2492 = vsel %vm2489, %v2476, %v2478
      %v2493 = vsel %vm2489, %v2478, %v2480
      %v2494 = vsel %vm2489, %v2480, %v2482
      %v2495 = vsel %vm2489, %v2482, %v2484
      %v2496 = vsel %vm2489, %v2484, %v2486
      %v2497 = vsel %vm2489, %v2486, %v2488
      %2506 = vst [vmem:[#allocation2 + $0x240] sm:$0x10] %v2490
      %2507 = vst [vmem:[#allocation2 + $0x248] sm:$0x10] %v2491
      %2508 = vst [vmem:[#allocation2 + $0x250] sm:$0x10] %v2492
      %2509 = vst [vmem:[#allocation2 + $0x258] sm:$0x10] %v2493
      %2510 = vst [vmem:[#allocation2 + $0x260] sm:$0x10] %v2494
      %2511 = vst [vmem:[#allocation2 + $0x268] sm:$0x10] %v2495
      %2512 = vst [vmem:[#allocation2 + $0x270] sm:$0x10] %v2496
      %2513 = vst.msk [vmem:[#allocation2 + $0x278] sm:$0x10] %vm664, %v2497
      %v2514 = vld [vmem:[%s189 + $0x1] sm:$0xff]
      %v2515 = vld [vmem:[%s189 + $0x9] sm:$0x1]
      %v2518 = vcombine.high %v2514, %v2514
      %v2520 = vunpack.c.l.s4 1966171168
      %v2521 = vunpack.c.0.s8 %v2520
      %v2522 = vlaneseq
      %v2523 = vshrl.u32 %v2522, 7
      %v2524 = vsub.s32 %v2521, %v2523
      %v2525 = vrot.slane %v2514, %v2524
      %v2527 = vunpack.c.l.s4 1966171168
      %v2528 = vunpack.c.0.s8 %v2527
      %v2529 = vlaneseq
      %v2530 = vshrl.u32 %v2529, 7
      %v2531 = vsub.s32 %v2528, %v2530
      %v2532 = vrot.slane %v2518, %v2531
      %v2533 = vcombine.high %v2525, %v2525
      %v2534 = vcombine.high %v2532, %v2532
      %v2536 = vunpack.c.l.s4 1966171168
      %v2537 = vunpack.c.0.s8 %v2536
      %v2538 = vlaneseq
      %v2539 = vshrl.u32 %v2538, 7
      %v2540 = vsub.s32 %v2537, %v2539
      %v2541 = vrot.slane %v2525, %v2540
      %v2543 = vunpack.c.l.s4 1966171168
      %v2544 = vunpack.c.0.s8 %v2543
      %v2545 = vlaneseq
      %v2546 = vshrl.u32 %v2545, 7
      %v2547 = vsub.s32 %v2544, %v2546
      %v2548 = vrot.slane %v2532, %v2547
      %v2550 = vunpack.c.l.s4 1966171168
      %v2551 = vunpack.c.0.s8 %v2550
      %v2552 = vlaneseq
      %v2553 = vshrl.u32 %v2552, 7
      %v2554 = vsub.s32 %v2551, %v2553
      %v2555 = vrot.slane %v2533, %v2554
      %v2557 = vunpack.c.l.s4 1966171168
      %v2558 = vunpack.c.0.s8 %v2557
      %v2559 = vlaneseq
      %v2560 = vshrl.u32 %v2559, 7
      %v2561 = vsub.s32 %v2558, %v2560
      %v2562 = vrot.slane %v2534, %v2561
      %v2563 = vcombine.high %v2541, %v2541
      %v2564 = vcombine.high %v2548, %v2548
      %v2565 = vcombine.high %v2555, %v2555
      %v2566 = vcombine.high %v2562, %v2562
      %v2568 = vunpack.c.l.s4 1966171168
      %v2569 = vunpack.c.0.s8 %v2568
      %v2570 = vlaneseq
      %v2571 = vshrl.u32 %v2570, 7
      %v2572 = vsub.s32 %v2569, %v2571
      %v2573 = vrot.slane %v2515, %v2572
      %v2575 = vunpack.c.l.s4 1966171168
      %v2576 = vunpack.c.0.s8 %v2575
      %v2577 = vlaneseq
      %v2578 = vshrl.u32 %v2577, 7
      %v2579 = vsub.s32 %v2576, %v2578
      %v2580 = vrot.slane %v2573, %v2579
      %2581 = vrot.lane.b32.xlu0 %v2541, 37
      %v2582 = vpop.permute.xlu0 %2581
      %2583 = vrot.lane.b32.xlu0 %v2555, 37
      %v2584 = vpop.permute.xlu0 %2583
      %2585 = vrot.lane.b32.xlu0 %v2563, 37
      %v2586 = vpop.permute.xlu0 %2585
      %2587 = vrot.lane.b32.xlu0 %v2565, 37
      %v2588 = vpop.permute.xlu0 %2587
      %2589 = vrot.lane.b32.xlu0 %v2548, 37
      %v2590 = vpop.permute.xlu0 %2589
      %2591 = vrot.lane.b32.xlu0 %v2562, 37
      %v2592 = vpop.permute.xlu0 %2591
      %2593 = vrot.lane.b32.xlu0 %v2564, 37
      %v2594 = vpop.permute.xlu0 %2593
      %2595 = vrot.lane.b32.xlu0 %v2566, 37
      %v2596 = vpop.permute.xlu0 %2595
      %2597 = vrot.lane.b32.xlu0 %v2580, 37
      %v2598 = vpop.permute.xlu0 %2597
      %vm2599 = vcmask 302080
      %v2600 = vsel %vm2599, %v2582, %v2584
      %v2601 = vsel %vm2599, %v2584, %v2586
      %v2602 = vsel %vm2599, %v2586, %v2588
      %v2603 = vsel %vm2599, %v2588, %v2590
      %v2604 = vsel %vm2599, %v2590, %v2592
      %v2605 = vsel %vm2599, %v2592, %v2594
      %v2606 = vsel %vm2599, %v2594, %v2596
      %v2607 = vsel %vm2599, %v2596, %v2598
      %2616 = vst [vmem:[#allocation2 + $0x280] sm:$0x1] %v2600
      %2617 = vst [vmem:[#allocation2 + $0x288] sm:$0x1] %v2601
      %2618 = vst [vmem:[#allocation2 + $0x290] sm:$0x1] %v2602
      %2619 = vst [vmem:[#allocation2 + $0x298] sm:$0x1] %v2603
      %2620 = vst [vmem:[#allocation2 + $0x2a0] sm:$0x1] %v2604
      %2621 = vst [vmem:[#allocation2 + $0x2a8] sm:$0x1] %v2605
      %2622 = vst [vmem:[#allocation2 + $0x2b0] sm:$0x1] %v2606
      %2623 = vst.msk [vmem:[#allocation2 + $0x2b8] sm:$0x1] %vm572, %v2607
      %v2624 = vld [vmem:[%s189 + $0x1] sm:$0xff]
      %v2625 = vld [vmem:[%s189 + $0x9] sm:$0x1]
      %v2628 = vcombine.high %v2624, %v2624
      %v2630 = vunpack.c.l.s4 1966171168
      %v2631 = vunpack.c.0.s8 %v2630
      %v2632 = vlaneseq
      %v2633 = vshrl.u32 %v2632, 7
      %v2634 = vsub.s32 %v2631, %v2633
      %v2635 = vrot.slane %v2624, %v2634
      %v2637 = vunpack.c.l.s4 1966171168
      %v2638 = vunpack.c.0.s8 %v2637
      %v2639 = vlaneseq
      %v2640 = vshrl.u32 %v2639, 7
      %v2641 = vsub.s32 %v2638, %v2640
      %v2642 = vrot.slane %v2628, %v2641
      %v2643 = vcombine.high %v2635, %v2635
      %v2644 = vcombine.high %v2642, %v2642
      %v2646 = vunpack.c.l.s4 1966171168
      %v2647 = vunpack.c.0.s8 %v2646
      %v2648 = vlaneseq
      %v2649 = vshrl.u32 %v2648, 7
      %v2650 = vsub.s32 %v2647, %v2649
      %v2651 = vrot.slane %v2635, %v2650
      %v2653 = vunpack.c.l.s4 1966171168
      %v2654 = vunpack.c.0.s8 %v2653
      %v2655 = vlaneseq
      %v2656 = vshrl.u32 %v2655, 7
      %v2657 = vsub.s32 %v2654, %v2656
      %v2658 = vrot.slane %v2642, %v2657
      %v2660 = vunpack.c.l.s4 1966171168
      %v2661 = vunpack.c.0.s8 %v2660
      %v2662 = vlaneseq
      %v2663 = vshrl.u32 %v2662, 7
      %v2664 = vsub.s32 %v2661, %v2663
      %v2665 = vrot.slane %v2643, %v2664
      %v2667 = vunpack.c.l.s4 1966171168
      %v2668 = vunpack.c.0.s8 %v2667
      %v2669 = vlaneseq
      %v2670 = vshrl.u32 %v2669, 7
      %v2671 = vsub.s32 %v2668, %v2670
      %v2672 = vrot.slane %v2644, %v2671
      %v2673 = vcombine.low %v2651, %v2651
      %v2674 = vcombine.low %v2658, %v2658
      %v2675 = vcombine.low %v2665, %v2665
      %v2676 = vcombine.low %v2672, %v2672
      %v2678 = vunpack.c.l.s4 1966171168
      %v2679 = vunpack.c.0.s8 %v2678
      %v2680 = vlaneseq
      %v2681 = vshrl.u32 %v2680, 7
      %v2682 = vsub.s32 %v2679, %v2681
      %v2683 = vrot.slane %v2625, %v2682
      %v2685 = vunpack.c.l.s4 1966171168
      %v2686 = vunpack.c.0.s8 %v2685
      %v2687 = vlaneseq
      %v2688 = vshrl.u32 %v2687, 7
      %v2689 = vsub.s32 %v2686, %v2688
      %v2690 = vrot.slane %v2683, %v2689
      %v2691 = vcombine.low %v2690, %v2690
      %2692 = vrot.lane.b32.xlu0 %v2673, 29
      %v2693 = vpop.permute.xlu0 %2692
      %2694 = vrot.lane.b32.xlu0 %v2675, 29
      %v2695 = vpop.permute.xlu0 %2694
      %2696 = vrot.lane.b32.xlu0 %v2651, 29
      %v2697 = vpop.permute.xlu0 %2696
      %2698 = vrot.lane.b32.xlu0 %v2665, 29
      %v2699 = vpop.permute.xlu0 %2698
      %2700 = vrot.lane.b32.xlu0 %v2674, 29
      %v2701 = vpop.permute.xlu0 %2700
      %2702 = vrot.lane.b32.xlu0 %v2676, 29
      %v2703 = vpop.permute.xlu0 %2702
      %2704 = vrot.lane.b32.xlu0 %v2658, 29
      %v2705 = vpop.permute.xlu0 %2704
      %2706 = vrot.lane.b32.xlu0 %v2672, 29
      %v2707 = vpop.permute.xlu0 %2706
      %2708 = vrot.lane.b32.xlu0 %v2691, 29
      %v2709 = vpop.permute.xlu0 %2708
      %vm2710 = vcmask 236544
      %v2711 = vsel %vm2710, %v2693, %v2695
      %v2712 = vsel %vm2710, %v2695, %v2697
      %v2713 = vsel %vm2710, %v2697, %v2699
      %v2714 = vsel %vm2710, %v2699, %v2701
      %v2715 = vsel %vm2710, %v2701, %v2703
      %v2716 = vsel %vm2710, %v2703, %v2705
      %v2717 = vsel %vm2710, %v2705, %v2707
      %v2718 = vsel %vm2710, %v2707, %v2709
      %2727 = vst [vmem:[#allocation2 + $0x280] sm:$0x10] %v2711
      %2728 = vst [vmem:[#allocation2 + $0x288] sm:$0x10] %v2712
      %2729 = vst [vmem:[#allocation2 + $0x290] sm:$0x10] %v2713
      %2730 = vst [vmem:[#allocation2 + $0x298] sm:$0x10] %v2714
      %2731 = vst [vmem:[#allocation2 + $0x2a0] sm:$0x10] %v2715
      %2732 = vst [vmem:[#allocation2 + $0x2a8] sm:$0x10] %v2716
      %2733 = vst [vmem:[#allocation2 + $0x2b0] sm:$0x10] %v2717
      %2734 = vst.msk [vmem:[#allocation2 + $0x2b8] sm:$0x10] %vm664, %v2718
      %v2735 = vld [vmem:[%s189 + $0x1] sm:$0xff]
      %v2736 = vld [vmem:[%s189 + $0x9] sm:$0x1]
      %v2739 = vcombine.high %v2735, %v2735
      %v2741 = vunpack.c.l.s4 1966171168
      %v2742 = vunpack.c.0.s8 %v2741
      %v2743 = vlaneseq
      %v2744 = vshrl.u32 %v2743, 7
      %v2745 = vsub.s32 %v2742, %v2744
      %v2746 = vrot.slane %v2735, %v2745
      %v2748 = vunpack.c.l.s4 1966171168
      %v2749 = vunpack.c.0.s8 %v2748
      %v2750 = vlaneseq
      %v2751 = vshrl.u32 %v2750, 7
      %v2752 = vsub.s32 %v2749, %v2751
      %v2753 = vrot.slane %v2739, %v2752
      %v2754 = vcombine.high %v2746, %v2746
      %v2755 = vcombine.high %v2753, %v2753
      %v2757 = vunpack.c.l.s4 1966171168
      %v2758 = vunpack.c.0.s8 %v2757
      %v2759 = vlaneseq
      %v2760 = vshrl.u32 %v2759, 7
      %v2761 = vsub.s32 %v2758, %v2760
      %v2762 = vrot.slane %v2746, %v2761
      %v2764 = vunpack.c.l.s4 1966171168
      %v2765 = vunpack.c.0.s8 %v2764
      %v2766 = vlaneseq
      %v2767 = vshrl.u32 %v2766, 7
      %v2768 = vsub.s32 %v2765, %v2767
      %v2769 = vrot.slane %v2753, %v2768
      %v2771 = vunpack.c.l.s4 1966171168
      %v2772 = vunpack.c.0.s8 %v2771
      %v2773 = vlaneseq
      %v2774 = vshrl.u32 %v2773, 7
      %v2775 = vsub.s32 %v2772, %v2774
      %v2776 = vrot.slane %v2754, %v2775
      %v2778 = vunpack.c.l.s4 1966171168
      %v2779 = vunpack.c.0.s8 %v2778
      %v2780 = vlaneseq
      %v2781 = vshrl.u32 %v2780, 7
      %v2782 = vsub.s32 %v2779, %v2781
      %v2783 = vrot.slane %v2755, %v2782
      %v2784 = vcombine.high %v2762, %v2762
      %v2785 = vcombine.high %v2769, %v2769
      %v2786 = vcombine.high %v2776, %v2776
      %v2787 = vcombine.high %v2783, %v2783
      %v2789 = vunpack.c.l.s4 1966171168
      %v2790 = vunpack.c.0.s8 %v2789
      %v2791 = vlaneseq
      %v2792 = vshrl.u32 %v2791, 7
      %v2793 = vsub.s32 %v2790, %v2792
      %v2794 = vrot.slane %v2736, %v2793
      %v2796 = vunpack.c.l.s4 1966171168
      %v2797 = vunpack.c.0.s8 %v2796
      %v2798 = vlaneseq
      %v2799 = vshrl.u32 %v2798, 7
      %v2800 = vsub.s32 %v2797, %v2799
      %v2801 = vrot.slane %v2794, %v2800
      %2802 = vrot.lane.b32.xlu0 %v2762, 28
      %v2803 = vpop.permute.xlu0 %2802
      %2804 = vrot.lane.b32.xlu0 %v2776, 28
      %v2805 = vpop.permute.xlu0 %2804
      %2806 = vrot.lane.b32.xlu0 %v2784, 28
      %v2807 = vpop.permute.xlu0 %2806
      %2808 = vrot.lane.b32.xlu0 %v2786, 28
      %v2809 = vpop.permute.xlu0 %2808
      %2810 = vrot.lane.b32.xlu0 %v2769, 28
      %v2811 = vpop.permute.xlu0 %2810
      %2812 = vrot.lane.b32.xlu0 %v2783, 28
      %v2813 = vpop.permute.xlu0 %2812
      %2814 = vrot.lane.b32.xlu0 %v2785, 28
      %v2815 = vpop.permute.xlu0 %2814
      %2816 = vrot.lane.b32.xlu0 %v2787, 28
      %v2817 = vpop.permute.xlu0 %2816
      %2818 = vrot.lane.b32.xlu0 %v2801, 28
      %v2819 = vpop.permute.xlu0 %2818
      %vm2820 = vcmask 228352
      %v2821 = vsel %vm2820, %v2803, %v2805
      %v2822 = vsel %vm2820, %v2805, %v2807
      %v2823 = vsel %vm2820, %v2807, %v2809
      %v2824 = vsel %vm2820, %v2809, %v2811
      %v2825 = vsel %vm2820, %v2811, %v2813
      %v2826 = vsel %vm2820, %v2813, %v2815
      %v2827 = vsel %vm2820, %v2815, %v2817
      %v2828 = vsel %vm2820, %v2817, %v2819
      %2837 = vst [vmem:[#allocation2 + $0x2c0] sm:$0x1] %v2821
      %2838 = vst [vmem:[#allocation2 + $0x2c8] sm:$0x1] %v2822
      %2839 = vst [vmem:[#allocation2 + $0x2d0] sm:$0x1] %v2823
      %2840 = vst [vmem:[#allocation2 + $0x2d8] sm:$0x1] %v2824
      %2841 = vst [vmem:[#allocation2 + $0x2e0] sm:$0x1] %v2825
      %2842 = vst [vmem:[#allocation2 + $0x2e8] sm:$0x1] %v2826
      %2843 = vst [vmem:[#allocation2 + $0x2f0] sm:$0x1] %v2827
      %2844 = vst.msk [vmem:[#allocation2 + $0x2f8] sm:$0x1] %vm572, %v2828
      %v2845 = vld [vmem:[%s189 + $0x1] sm:$0xff]
      %v2846 = vld [vmem:[%s189 + $0x9] sm:$0x1]
      %v2849 = vcombine.high %v2845, %v2845
      %v2851 = vunpack.c.l.s4 1966171168
      %v2852 = vunpack.c.0.s8 %v2851
      %v2853 = vlaneseq
      %v2854 = vshrl.u32 %v2853, 7
      %v2855 = vsub.s32 %v2852, %v2854
      %v2856 = vrot.slane %v2845, %v2855
      %v2858 = vunpack.c.l.s4 1966171168
      %v2859 = vunpack.c.0.s8 %v2858
      %v2860 = vlaneseq
      %v2861 = vshrl.u32 %v2860, 7
      %v2862 = vsub.s32 %v2859, %v2861
      %v2863 = vrot.slane %v2849, %v2862
      %v2864 = vcombine.high %v2856, %v2856
      %v2865 = vcombine.high %v2863, %v2863
      %v2867 = vunpack.c.l.s4 1966171168
      %v2868 = vunpack.c.0.s8 %v2867
      %v2869 = vlaneseq
      %v2870 = vshrl.u32 %v2869, 7
      %v2871 = vsub.s32 %v2868, %v2870
      %v2872 = vrot.slane %v2856, %v2871
      %v2874 = vunpack.c.l.s4 1966171168
      %v2875 = vunpack.c.0.s8 %v2874
      %v2876 = vlaneseq
      %v2877 = vshrl.u32 %v2876, 7
      %v2878 = vsub.s32 %v2875, %v2877
      %v2879 = vrot.slane %v2863, %v2878
      %v2881 = vunpack.c.l.s4 1966171168
      %v2882 = vunpack.c.0.s8 %v2881
      %v2883 = vlaneseq
      %v2884 = vshrl.u32 %v2883, 7
      %v2885 = vsub.s32 %v2882, %v2884
      %v2886 = vrot.slane %v2864, %v2885
      %v2888 = vunpack.c.l.s4 1966171168
      %v2889 = vunpack.c.0.s8 %v2888
      %v2890 = vlaneseq
      %v2891 = vshrl.u32 %v2890, 7
      %v2892 = vsub.s32 %v2889, %v2891
      %v2893 = vrot.slane %v2865, %v2892
      %v2894 = vcombine.low %v2872, %v2872
      %v2895 = vcombine.low %v2879, %v2879
      %v2896 = vcombine.low %v2886, %v2886
      %v2897 = vcombine.low %v2893, %v2893
      %v2899 = vunpack.c.l.s4 1966171168
      %v2900 = vunpack.c.0.s8 %v2899
      %v2901 = vlaneseq
      %v2902 = vshrl.u32 %v2901, 7
      %v2903 = vsub.s32 %v2900, %v2902
      %v2904 = vrot.slane %v2846, %v2903
      %v2906 = vunpack.c.l.s4 1966171168
      %v2907 = vunpack.c.0.s8 %v2906
      %v2908 = vlaneseq
      %v2909 = vshrl.u32 %v2908, 7
      %v2910 = vsub.s32 %v2907, %v2909
      %v2911 = vrot.slane %v2904, %v2910
      %v2912 = vcombine.low %v2911, %v2911
      %2913 = vrot.lane.b32.xlu0 %v2894, 27
      %v2914 = vpop.permute.xlu0 %2913
      %2915 = vrot.lane.b32.xlu0 %v2896, 27
      %v2916 = vpop.permute.xlu0 %2915
      %2917 = vrot.lane.b32.xlu0 %v2872, 27
      %v2918 = vpop.permute.xlu0 %2917
      %2919 = vrot.lane.b32.xlu0 %v2886, 27
      %v2920 = vpop.permute.xlu0 %2919
      %2921 = vrot.lane.b32.xlu0 %v2895, 27
      %v2922 = vpop.permute.xlu0 %2921
      %2923 = vrot.lane.b32.xlu0 %v2897, 27
      %v2924 = vpop.permute.xlu0 %2923
      %2925 = vrot.lane.b32.xlu0 %v2879, 27
      %v2926 = vpop.permute.xlu0 %2925
      %2927 = vrot.lane.b32.xlu0 %v2893, 27
      %v2928 = vpop.permute.xlu0 %2927
      %2929 = vrot.lane.b32.xlu0 %v2912, 27
      %v2930 = vpop.permute.xlu0 %2929
      %vm2931 = vcmask 220160
      %v2932 = vsel %vm2931, %v2914, %v2916
      %v2933 = vsel %vm2931, %v2916, %v2918
      %v2934 = vsel %vm2931, %v2918, %v2920
      %v2935 = vsel %vm2931, %v2920, %v2922
      %v2936 = vsel %vm2931, %v2922, %v2924
      %v2937 = vsel %vm2931, %v2924, %v2926
      %v2938 = vsel %vm2931, %v2926, %v2928
      %v2939 = vsel %vm2931, %v2928, %v2930
      %2948 = vst [vmem:[#allocation2 + $0x2c0] sm:$0x10] %v2932
      %2949 = vst [vmem:[#allocation2 + $0x2c8] sm:$0x10] %v2933
      %2950 = vst [vmem:[#allocation2 + $0x2d0] sm:$0x10] %v2934
      %2951 = vst [vmem:[#allocation2 + $0x2d8] sm:$0x10] %v2935
      %2952 = vst [vmem:[#allocation2 + $0x2e0] sm:$0x10] %v2936
      %2953 = vst [vmem:[#allocation2 + $0x2e8] sm:$0x10] %v2937
      %2954 = vst [vmem:[#allocation2 + $0x2f0] sm:$0x10] %v2938
      %2955 = vst.msk [vmem:[#allocation2 + $0x2f8] sm:$0x10] %vm664, %v2939
      %v2956 = vld [vmem:[%s189 + $0x1] sm:$0xff]
      %v2957 = vld [vmem:[%s189 + $0x9] sm:$0x1]
      %v2960 = vcombine.high %v2956, %v2956
      %v2962 = vunpack.c.l.s4 1966171168
      %v2963 = vunpack.c.0.s8 %v2962
      %v2964 = vlaneseq
      %v2965 = vshrl.u32 %v2964, 7
      %v2966 = vsub.s32 %v2963, %v2965
      %v2967 = vrot.slane %v2956, %v2966
      %v2969 = vunpack.c.l.s4 1966171168
      %v2970 = vunpack.c.0.s8 %v2969
      %v2971 = vlaneseq
      %v2972 = vshrl.u32 %v2971, 7
      %v2973 = vsub.s32 %v2970, %v2972
      %v2974 = vrot.slane %v2960, %v2973
      %v2975 = vcombine.high %v2967, %v2967
      %v2976 = vcombine.high %v2974, %v2974
      %v2978 = vunpack.c.l.s4 1966171168
      %v2979 = vunpack.c.0.s8 %v2978
      %v2980 = vlaneseq
      %v2981 = vshrl.u32 %v2980, 7
      %v2982 = vsub.s32 %v2979, %v2981
      %v2983 = vrot.slane %v2967, %v2982
      %v2985 = vunpack.c.l.s4 1966171168
      %v2986 = vunpack.c.0.s8 %v2985
      %v2987 = vlaneseq
      %v2988 = vshrl.u32 %v2987, 7
      %v2989 = vsub.s32 %v2986, %v2988
      %v2990 = vrot.slane %v2974, %v2989
      %v2992 = vunpack.c.l.s4 1966171168
      %v2993 = vunpack.c.0.s8 %v2992
      %v2994 = vlaneseq
      %v2995 = vshrl.u32 %v2994, 7
      %v2996 = vsub.s32 %v2993, %v2995
      %v2997 = vrot.slane %v2975, %v2996
      %v2999 = vunpack.c.l.s4 1966171168
      %v3000 = vunpack.c.0.s8 %v2999
      %v3001 = vlaneseq
      %v3002 = vshrl.u32 %v3001, 7
      %v3003 = vsub.s32 %v3000, %v3002
      %v3004 = vrot.slane %v2976, %v3003
      %v3005 = vcombine.high %v2983, %v2983
      %v3006 = vcombine.high %v2990, %v2990
      %v3007 = vcombine.high %v2997, %v2997
      %v3008 = vcombine.high %v3004, %v3004
      %v3010 = vunpack.c.l.s4 1966171168
      %v3011 = vunpack.c.0.s8 %v3010
      %v3012 = vlaneseq
      %v3013 = vshrl.u32 %v3012, 7
      %v3014 = vsub.s32 %v3011, %v3013
      %v3015 = vrot.slane %v2957, %v3014
      %v3017 = vunpack.c.l.s4 1966171168
      %v3018 = vunpack.c.0.s8 %v3017
      %v3019 = vlaneseq
      %v3020 = vshrl.u32 %v3019, 7
      %v3021 = vsub.s32 %v3018, %v3020
      %v3022 = vrot.slane %v3015, %v3021
      %3023 = vrot.lane.b32.xlu0 %v2983, 19
      %v3024 = vpop.permute.xlu0 %3023
      %3025 = vrot.lane.b32.xlu0 %v2997, 19
      %v3026 = vpop.permute.xlu0 %3025
      %3027 = vrot.lane.b32.xlu0 %v3005, 19
      %v3028 = vpop.permute.xlu0 %3027
      %3029 = vrot.lane.b32.xlu0 %v3007, 19
      %v3030 = vpop.permute.xlu0 %3029
      %3031 = vrot.lane.b32.xlu0 %v2990, 19
      %v3032 = vpop.permute.xlu0 %3031
      %3033 = vrot.lane.b32.xlu0 %v3004, 19
      %v3034 = vpop.permute.xlu0 %3033
      %3035 = vrot.lane.b32.xlu0 %v3006, 19
      %v3036 = vpop.permute.xlu0 %3035
      %3037 = vrot.lane.b32.xlu0 %v3008, 19
      %v3038 = vpop.permute.xlu0 %3037
      %3039 = vrot.lane.b32.xlu0 %v3022, 19
      %v3040 = vpop.permute.xlu0 %3039
      %vm3041 = vcmask 154624
      %v3042 = vsel %vm3041, %v3024, %v3026
      %v3043 = vsel %vm3041, %v3026, %v3028
      %v3044 = vsel %vm3041, %v3028, %v3030
      %v3045 = vsel %vm3041, %v3030, %v3032
      %v3046 = vsel %vm3041, %v3032, %v3034
      %v3047 = vsel %vm3041, %v3034, %v3036
      %v3048 = vsel %vm3041, %v3036, %v3038
      %v3049 = vsel %vm3041, %v3038, %v3040
      %3058 = vst [vmem:[#allocation2 + $0x300] sm:$0x1] %v3042
      %3059 = vst [vmem:[#allocation2 + $0x308] sm:$0x1] %v3043
      %3060 = vst [vmem:[#allocation2 + $0x310] sm:$0x1] %v3044
      %3061 = vst [vmem:[#allocation2 + $0x318] sm:$0x1] %v3045
      %3062 = vst [vmem:[#allocation2 + $0x320] sm:$0x1] %v3046
      %3063 = vst [vmem:[#allocation2 + $0x328] sm:$0x1] %v3047
      %3064 = vst [vmem:[#allocation2 + $0x330] sm:$0x1] %v3048
      %3065 = vst.msk [vmem:[#allocation2 + $0x338] sm:$0x1] %vm572, %v3049
      %v3066 = vld [vmem:[%s189 + $0x1] sm:$0xff]
      %v3067 = vld [vmem:[%s189 + $0x9] sm:$0x1]
      %v3070 = vcombine.high %v3066, %v3066
      %v3072 = vunpack.c.l.s4 1966171168
      %v3073 = vunpack.c.0.s8 %v3072
      %v3074 = vlaneseq
      %v3075 = vshrl.u32 %v3074, 7
      %v3076 = vsub.s32 %v3073, %v3075
      %v3077 = vrot.slane %v3066, %v3076
      %v3079 = vunpack.c.l.s4 1966171168
      %v3080 = vunpack.c.0.s8 %v3079
      %v3081 = vlaneseq
      %v3082 = vshrl.u32 %v3081, 7
      %v3083 = vsub.s32 %v3080, %v3082
      %v3084 = vrot.slane %v3070, %v3083
      %v3085 = vcombine.high %v3077, %v3077
      %v3086 = vcombine.high %v3084, %v3084
      %v3088 = vunpack.c.l.s4 1966171168
      %v3089 = vunpack.c.0.s8 %v3088
      %v3090 = vlaneseq
      %v3091 = vshrl.u32 %v3090, 7
      %v3092 = vsub.s32 %v3089, %v3091
      %v3093 = vrot.slane %v3077, %v3092
      %v3095 = vunpack.c.l.s4 1966171168
      %v3096 = vunpack.c.0.s8 %v3095
      %v3097 = vlaneseq
      %v3098 = vshrl.u32 %v3097, 7
      %v3099 = vsub.s32 %v3096, %v3098
      %v3100 = vrot.slane %v3084, %v3099
      %v3102 = vunpack.c.l.s4 1966171168
      %v3103 = vunpack.c.0.s8 %v3102
      %v3104 = vlaneseq
      %v3105 = vshrl.u32 %v3104, 7
      %v3106 = vsub.s32 %v3103, %v3105
      %v3107 = vrot.slane %v3085, %v3106
      %v3109 = vunpack.c.l.s4 1966171168
      %v3110 = vunpack.c.0.s8 %v3109
      %v3111 = vlaneseq
      %v3112 = vshrl.u32 %v3111, 7
      %v3113 = vsub.s32 %v3110, %v3112
      %v3114 = vrot.slane %v3086, %v3113
      %v3115 = vcombine.low %v3093, %v3093
      %v3116 = vcombine.low %v3100, %v3100
      %v3117 = vcombine.low %v3107, %v3107
      %v3118 = vcombine.low %v3114, %v3114
      %v3120 = vunpack.c.l.s4 1966171168
      %v3121 = vunpack.c.0.s8 %v3120
      %v3122 = vlaneseq
      %v3123 = vshrl.u32 %v3122, 7
      %v3124 = vsub.s32 %v3121, %v3123
      %v3125 = vrot.slane %v3067, %v3124
      %v3127 = vunpack.c.l.s4 1966171168
      %v3128 = vunpack.c.0.s8 %v3127
      %v3129 = vlaneseq
      %v3130 = vshrl.u32 %v3129, 7
      %v3131 = vsub.s32 %v3128, %v3130
      %v3132 = vrot.slane %v3125, %v3131
      %v3133 = vcombine.low %v3132, %v3132
      %3134 = vrot.lane.b32.xlu0 %v3115, 18
      %v3135 = vpop.permute.xlu0 %3134
      %3136 = vrot.lane.b32.xlu0 %v3117, 18
      %v3137 = vpop.permute.xlu0 %3136
      %3138 = vrot.lane.b32.xlu0 %v3093, 18
      %v3139 = vpop.permute.xlu0 %3138
      %3140 = vrot.lane.b32.xlu0 %v3107, 18
      %v3141 = vpop.permute.xlu0 %3140
      %3142 = vrot.lane.b32.xlu0 %v3116, 18
      %v3143 = vpop.permute.xlu0 %3142
      %3144 = vrot.lane.b32.xlu0 %v3118, 18
      %v3145 = vpop.permute.xlu0 %3144
      %3146 = vrot.lane.b32.xlu0 %v3100, 18
      %v3147 = vpop.permute.xlu0 %3146
      %3148 = vrot.lane.b32.xlu0 %v3114, 18
      %v3149 = vpop.permute.xlu0 %3148
      %3150 = vrot.lane.b32.xlu0 %v3133, 18
      %v3151 = vpop.permute.xlu0 %3150
      %vm3152 = vcmask 146432
      %v3153 = vsel %vm3152, %v3135, %v3137
      %v3154 = vsel %vm3152, %v3137, %v3139
      %v3155 = vsel %vm3152, %v3139, %v3141
      %v3156 = vsel %vm3152, %v3141, %v3143
      %v3157 = vsel %vm3152, %v3143, %v3145
      %v3158 = vsel %vm3152, %v3145, %v3147
      %v3159 = vsel %vm3152, %v3147, %v3149
      %v3160 = vsel %vm3152, %v3149, %v3151
      %3169 = vst [vmem:[#allocation2 + $0x300] sm:$0x10] %v3153
      %3170 = vst [vmem:[#allocation2 + $0x308] sm:$0x10] %v3154
      %3171 = vst [vmem:[#allocation2 + $0x310] sm:$0x10] %v3155
      %3172 = vst [vmem:[#allocation2 + $0x318] sm:$0x10] %v3156
      %3173 = vst [vmem:[#allocation2 + $0x320] sm:$0x10] %v3157
      %3174 = vst [vmem:[#allocation2 + $0x328] sm:$0x10] %v3158
      %3175 = vst [vmem:[#allocation2 + $0x330] sm:$0x10] %v3159
      %3176 = vst.msk [vmem:[#allocation2 + $0x338] sm:$0x10] %vm664, %v3160
      %v3177 = vld [vmem:[%s189 + $0x1] sm:$0xff]
      %v3178 = vld [vmem:[%s189 + $0x9] sm:$0x1]
      %v3181 = vcombine.high %v3177, %v3177
      %v3183 = vunpack.c.l.s4 1966171168
      %v3184 = vunpack.c.0.s8 %v3183
      %v3185 = vlaneseq
      %v3186 = vshrl.u32 %v3185, 7
      %v3187 = vsub.s32 %v3184, %v3186
      %v3188 = vrot.slane %v3177, %v3187
      %v3190 = vunpack.c.l.s4 1966171168
      %v3191 = vunpack.c.0.s8 %v3190
      %v3192 = vlaneseq
      %v3193 = vshrl.u32 %v3192, 7
      %v3194 = vsub.s32 %v3191, %v3193
      %v3195 = vrot.slane %v3181, %v3194
      %v3196 = vcombine.high %v3188, %v3188
      %v3197 = vcombine.high %v3195, %v3195
      %v3199 = vunpack.c.l.s4 1966171168
      %v3200 = vunpack.c.0.s8 %v3199
      %v3201 = vlaneseq
      %v3202 = vshrl.u32 %v3201, 7
      %v3203 = vsub.s32 %v3200, %v3202
      %v3204 = vrot.slane %v3188, %v3203
      %v3206 = vunpack.c.l.s4 1966171168
      %v3207 = vunpack.c.0.s8 %v3206
      %v3208 = vlaneseq
      %v3209 = vshrl.u32 %v3208, 7
      %v3210 = vsub.s32 %v3207, %v3209
      %v3211 = vrot.slane %v3195, %v3210
      %v3213 = vunpack.c.l.s4 1966171168
      %v3214 = vunpack.c.0.s8 %v3213
      %v3215 = vlaneseq
      %v3216 = vshrl.u32 %v3215, 7
      %v3217 = vsub.s32 %v3214, %v3216
      %v3218 = vrot.slane %v3196, %v3217
      %v3220 = vunpack.c.l.s4 1966171168
      %v3221 = vunpack.c.0.s8 %v3220
      %v3222 = vlaneseq
      %v3223 = vshrl.u32 %v3222, 7
      %v3224 = vsub.s32 %v3221, %v3223
      %v3225 = vrot.slane %v3197, %v3224
      %v3226 = vcombine.high %v3204, %v3204
      %v3227 = vcombine.high %v3211, %v3211
      %v3228 = vcombine.high %v3218, %v3218
      %v3229 = vcombine.high %v3225, %v3225
      %v3231 = vunpack.c.l.s4 1966171168
      %v3232 = vunpack.c.0.s8 %v3231
      %v3233 = vlaneseq
      %v3234 = vshrl.u32 %v3233, 7
      %v3235 = vsub.s32 %v3232, %v3234
      %v3236 = vrot.slane %v3178, %v3235
      %v3238 = vunpack.c.l.s4 1966171168
      %v3239 = vunpack.c.0.s8 %v3238
      %v3240 = vlaneseq
      %v3241 = vshrl.u32 %v3240, 7
      %v3242 = vsub.s32 %v3239, %v3241
      %v3243 = vrot.slane %v3236, %v3242
      %3244 = vrot.lane.b32.xlu0 %v3204, 17
      %v3245 = vpop.permute.xlu0 %3244
      %3246 = vrot.lane.b32.xlu0 %v3218, 17
      %v3247 = vpop.permute.xlu0 %3246
      %3248 = vrot.lane.b32.xlu0 %v3226, 17
      %v3249 = vpop.permute.xlu0 %3248
      %3250 = vrot.lane.b32.xlu0 %v3228, 17
      %v3251 = vpop.permute.xlu0 %3250
      %3252 = vrot.lane.b32.xlu0 %v3211, 17
      %v3253 = vpop.permute.xlu0 %3252
      %3254 = vrot.lane.b32.xlu0 %v3225, 17
      %v3255 = vpop.permute.xlu0 %3254
      %3256 = vrot.lane.b32.xlu0 %v3227, 17
      %v3257 = vpop.permute.xlu0 %3256
      %3258 = vrot.lane.b32.xlu0 %v3229, 17
      %v3259 = vpop.permute.xlu0 %3258
      %3260 = vrot.lane.b32.xlu0 %v3243, 17
      %v3261 = vpop.permute.xlu0 %3260
      %vm3262 = vcmask 138240
      %v3263 = vsel %vm3262, %v3245, %v3247
      %v3264 = vsel %vm3262, %v3247, %v3249
      %v3265 = vsel %vm3262, %v3249, %v3251
      %v3266 = vsel %vm3262, %v3251, %v3253
      %v3267 = vsel %vm3262, %v3253, %v3255
      %v3268 = vsel %vm3262, %v3255, %v3257
      %v3269 = vsel %vm3262, %v3257, %v3259
      %v3270 = vsel %vm3262, %v3259, %v3261
      %3279 = vst [vmem:[#allocation2 + $0x340] sm:$0x1] %v3263
      %3280 = vst [vmem:[#allocation2 + $0x348] sm:$0x1] %v3264
      %3281 = vst [vmem:[#allocation2 + $0x350] sm:$0x1] %v3265
      %3282 = vst [vmem:[#allocation2 + $0x358] sm:$0x1] %v3266
      %3283 = vst [vmem:[#allocation2 + $0x360] sm:$0x1] %v3267
      %3284 = vst [vmem:[#allocation2 + $0x368] sm:$0x1] %v3268
      %3285 = vst [vmem:[#allocation2 + $0x370] sm:$0x1] %v3269
      %3286 = vst.msk [vmem:[#allocation2 + $0x378] sm:$0x1] %vm572, %v3270
      %v3287 = vld [vmem:[%s1] sm:$0xf]
      %v3288 = vld [vmem:[#allocation2] sm:$0xff]
      %v3289 = vld [vmem:[#allocation2 + $0x8] sm:$0xff]
      %v3290 = vld [vmem:[#allocation2 + $0x10] sm:$0xff]
      %v3291 = vld [vmem:[#allocation2 + $0x18] sm:$0xff]
      %v3292 = vld [vmem:[#allocation2 + $0x20] sm:$0xff]
      %v3293 = vld [vmem:[#allocation2 + $0x28] sm:$0xff]
      %v3294 = vld [vmem:[#allocation2 + $0x30] sm:$0xff]
      %v3295 = vld [vmem:[#allocation2 + $0x38] sm:$0xff]
      %v3296 = vld [vmem:[#allocation2 + $0x40] sm:$0xff]
      %v3297 = vld [vmem:[#allocation2 + $0x48] sm:$0xff]
      %v3298 = vld [vmem:[#allocation2 + $0x50] sm:$0xff]
      %v3299 = vld [vmem:[#allocation2 + $0x58] sm:$0xff]
      %v3300 = vld [vmem:[#allocation2 + $0x60] sm:$0xff]
      %v3301 = vld [vmem:[#allocation2 + $0x68] sm:$0xff]
      %v3302 = vld [vmem:[#allocation2 + $0x70] sm:$0xff]
      %v3303 = vld [vmem:[#allocation2 + $0x78] sm:$0xff]
      %v3304 = vld [vmem:[#allocation2 + $0x80] sm:$0xff]
      %v3305 = vld [vmem:[#allocation2 + $0x88] sm:$0xff]
      %v3306 = vld [vmem:[#allocation2 + $0x90] sm:$0xff]
      %v3307 = vld [vmem:[#allocation2 + $0x98] sm:$0xff]
      %v3308 = vld [vmem:[#allocation2 + $0xa0] sm:$0xff]
      %v3309 = vld [vmem:[#allocation2 + $0xa8] sm:$0xff]
      %v3310 = vld [vmem:[#allocation2 + $0xb0] sm:$0xff]
      %v3311 = vld [vmem:[#allocation2 + $0xb8] sm:$0xff]
      %v3312 = vld [vmem:[#allocation2 + $0xc0] sm:$0xff]
      %v3313 = vld [vmem:[#allocation2 + $0xc8] sm:$0xff]
      %v3314 = vld [vmem:[#allocation2 + $0xd0] sm:$0xff]
      %v3315 = vld [vmem:[#allocation2 + $0xd8] sm:$0xff]
      %v3316 = vld [vmem:[#allocation2 + $0xe0] sm:$0xff]
      %v3317 = vld [vmem:[#allocation2 + $0xe8] sm:$0xff]
      %v3318 = vld [vmem:[#allocation2 + $0xf0] sm:$0xff]
      %v3319 = vld [vmem:[#allocation2 + $0xf8] sm:$0xff]
      %v3320 = vld [vmem:[#allocation2 + $0x100] sm:$0xff]
      %v3321 = vld [vmem:[#allocation2 + $0x108] sm:$0xff]
      %v3322 = vld [vmem:[#allocation2 + $0x110] sm:$0xff]
      %v3323 = vld [vmem:[#allocation2 + $0x118] sm:$0xff]
      %v3324 = vld [vmem:[#allocation2 + $0x120] sm:$0xff]
      %v3325 = vld [vmem:[#allocation2 + $0x128] sm:$0xff]
      %v3326 = vld [vmem:[#allocation2 + $0x130] sm:$0xff]
      %v3327 = vld [vmem:[#allocation2 + $0x138] sm:$0xff]
      %v3328 = vld [vmem:[#allocation2 + $0x140] sm:$0xff]
      %v3329 = vld [vmem:[#allocation2 + $0x148] sm:$0xff]
      %v3330 = vld [vmem:[#allocation2 + $0x150] sm:$0xff]
      %v3331 = vld [vmem:[#allocation2 + $0x158] sm:$0xff]
      %v3332 = vld [vmem:[#allocation2 + $0x160] sm:$0xff]
      %v3333 = vld [vmem:[#allocation2 + $0x168] sm:$0xff]
      %v3334 = vld [vmem:[#allocation2 + $0x170] sm:$0xff]
      %v3335 = vld [vmem:[#allocation2 + $0x178] sm:$0xff]
      %v3336 = vld [vmem:[#allocation2 + $0x180] sm:$0xff]
      %v3337 = vld [vmem:[#allocation2 + $0x188] sm:$0xff]
      %v3338 = vld [vmem:[#allocation2 + $0x190] sm:$0xff]
      %v3339 = vld [vmem:[#allocation2 + $0x198] sm:$0xff]
      %v3340 = vld [vmem:[#allocation2 + $0x1a0] sm:$0xff]
      %v3341 = vld [vmem:[#allocation2 + $0x1a8] sm:$0xff]
      %v3342 = vld [vmem:[#allocation2 + $0x1b0] sm:$0xff]
      %v3343 = vld [vmem:[#allocation2 + $0x1b8] sm:$0xff]
      %v3344 = vld [vmem:[#allocation2 + $0x1c0] sm:$0xff]
      %v3345 = vld [vmem:[#allocation2 + $0x1c8] sm:$0xff]
      %v3346 = vld [vmem:[#allocation2 + $0x1d0] sm:$0xff]
      %v3347 = vld [vmem:[#allocation2 + $0x1d8] sm:$0xff]
      %v3348 = vld [vmem:[#allocation2 + $0x1e0] sm:$0xff]
      %v3349 = vld [vmem:[#allocation2 + $0x1e8] sm:$0xff]
      %v3350 = vld [vmem:[#allocation2 + $0x1f0] sm:$0xff]
      %v3351 = vld [vmem:[#allocation2 + $0x1f8] sm:$0xff]
      %v3352 = vld [vmem:[#allocation2 + $0x200] sm:$0xff]
      %v3353 = vld [vmem:[#allocation2 + $0x208] sm:$0xff]
      %v3354 = vld [vmem:[#allocation2 + $0x210] sm:$0xff]
      %v3355 = vld [vmem:[#allocation2 + $0x218] sm:$0xff]
      %v3356 = vld [vmem:[#allocation2 + $0x220] sm:$0xff]
      %v3357 = vld [vmem:[#allocation2 + $0x228] sm:$0xff]
      %v3358 = vld [vmem:[#allocation2 + $0x230] sm:$0xff]
      %v3359 = vld [vmem:[#allocation2 + $0x238] sm:$0xff]
      %v3360 = vld [vmem:[#allocation2 + $0x240] sm:$0xff]
      %v3361 = vld [vmem:[#allocation2 + $0x248] sm:$0xff]
      %v3362 = vld [vmem:[#allocation2 + $0x250] sm:$0xff]
      %v3363 = vld [vmem:[#allocation2 + $0x258] sm:$0xff]
      %v3364 = vld [vmem:[#allocation2 + $0x260] sm:$0xff]
      %v3365 = vld [vmem:[#allocation2 + $0x268] sm:$0xff]
      %v3366 = vld [vmem:[#allocation2 + $0x270] sm:$0xff]
      %v3367 = vld [vmem:[#allocation2 + $0x278] sm:$0xff]
      %v3368 = vld [vmem:[#allocation2 + $0x280] sm:$0xff]
      %v3369 = vld [vmem:[#allocation2 + $0x288] sm:$0xff]
      %v3370 = vld [vmem:[#allocation2 + $0x290] sm:$0xff]
      %v3371 = vld [vmem:[#allocation2 + $0x298] sm:$0xff]
      %v3372 = vld [vmem:[#allocation2 + $0x2a0] sm:$0xff]
      %v3373 = vld [vmem:[#allocation2 + $0x2a8] sm:$0xff]
      %v3374 = vld [vmem:[#allocation2 + $0x2b0] sm:$0xff]
      %v3375 = vld [vmem:[#allocation2 + $0x2b8] sm:$0xff]
      %v3376 = vld [vmem:[#allocation2 + $0x2c0] sm:$0xff]
      %v3377 = vld [vmem:[#allocation2 + $0x2c8] sm:$0xff]
      %v3378 = vld [vmem:[#allocation2 + $0x2d0] sm:$0xff]
      %v3379 = vld [vmem:[#allocation2 + $0x2d8] sm:$0xff]
      %v3380 = vld [vmem:[#allocation2 + $0x2e0] sm:$0xff]
      %v3381 = vld [vmem:[#allocation2 + $0x2e8] sm:$0xff]
      %v3382 = vld [vmem:[#allocation2 + $0x2f0] sm:$0xff]
      %v3383 = vld [vmem:[#allocation2 + $0x2f8] sm:$0xff]
      %v3384 = vld [vmem:[#allocation2 + $0x300] sm:$0xff]
      %v3385 = vld [vmem:[#allocation2 + $0x308] sm:$0xff]
      %v3386 = vld [vmem:[#allocation2 + $0x310] sm:$0xff]
      %v3387 = vld [vmem:[#allocation2 + $0x318] sm:$0xff]
      %v3388 = vld [vmem:[#allocation2 + $0x320] sm:$0xff]
      %v3389 = vld [vmem:[#allocation2 + $0x328] sm:$0xff]
      %v3390 = vld [vmem:[#allocation2 + $0x330] sm:$0xff]
      %v3391 = vld [vmem:[#allocation2 + $0x338] sm:$0xff]
      %v3392 = vld [vmem:[#allocation2 + $0x340] sm:$0xff]
      %v3393 = vld [vmem:[#allocation2 + $0x348] sm:$0xff]
      %v3394 = vld [vmem:[#allocation2 + $0x350] sm:$0xff]
      %v3395 = vld [vmem:[#allocation2 + $0x358] sm:$0xff]
      %v3396 = vld [vmem:[#allocation2 + $0x360] sm:$0xff]
      %v3397 = vld [vmem:[#allocation2 + $0x368] sm:$0xff]
      %v3398 = vld [vmem:[#allocation2 + $0x370] sm:$0xff]
      %v3399 = vld [vmem:[#allocation2 + $0x378] sm:$0xff]
      %v3402 = vunpack.c.l.s4 1983009808
      %v3403 = vunpack.c.0.s8 %v3402
      %v3404 = vlaneseq
      %v3405 = vshrl.u32 %v3404, 7
      %v3406 = vsub.s32 %v3403, %v3405
      %v3407 = vrot.slane %v3287, %v3406
      %v3408 = vcombine.high %v3407, %v3407
      %vm3410 = vcmask 785408
      %v3412 = vsel %vm3410, %v3408, 0
      %3414 = vmatprep.subr.bf16.mxu0 %v3289
      %3415 = vmatpush1.bf16.msra.mxu0 %v3288
      %3416 = vmatprep.subr.bf16.mxu0 %v3297
      %3417 = vmatpush1.bf16.msra.mxu0 %v3296
      %3418 = vmatprep.subr.bf16.mxu0 %v3305
      %3419 = vmatpush1.bf16.msra.mxu0 %v3304
      %3420 = vmatprep.subr.bf16.mxu0 %v3313
      %3421 = vmatpush1.bf16.msra.mxu0 %v3312
      %3422 = vmatprep.subr.bf16.mxu0 %v3321
      %3423 = vmatpush1.bf16.msra.mxu0 %v3320
      %3424 = vmatprep.subr.bf16.mxu0 %v3329
      %3425 = vmatpush1.bf16.msra.mxu0 %v3328
      %3426 = vmatprep.subr.bf16.mxu0 %v3337
      %3427 = vmatpush1.bf16.msra.mxu0 %v3336
      %3428 = vmatprep.subr.bf16.mxu0 %v3345
      %3429 = vmatpush1.bf16.msra.mxu0 %v3344
      %3430 = vmatprep.subr.bf16.mxu0 %v3353
      %3431 = vmatpush1.bf16.msra.mxu0 %v3352
      %3432 = vmatprep.subr.bf16.mxu0 %v3361
      %3433 = vmatpush1.bf16.msra.mxu0 %v3360
      %3434 = vmatprep.subr.bf16.mxu0 %v3369
      %3435 = vmatpush1.bf16.msra.mxu0 %v3368
      %3436 = vmatprep.subr.bf16.mxu0 %v3377
      %3437 = vmatpush1.bf16.msra.mxu0 %v3376
      %3438 = vmatprep.subr.bf16.mxu0 %v3385
      %3439 = vmatpush1.bf16.msra.mxu0 %v3384
      %3440 = vmatprep.subr.bf16.mxu0 %v3393
      %3441 = vmatpush1.bf16.msra.mxu0 %v3392
      %3442 = vmatprep.subr.bf16.mxu0 0
      %3443 = vmatpush1.bf16.msra.mxu0 0
      %3444 = vmatprep.subr.bf16.mxu0 0
      %3445 = vmatpush1.bf16.msra.mxu0 0
      %3446 = vmatprep.mubr.bf16.mxu0 %v3412
      %3447 = vmatmul.mubr.bf16.gmra.mrb[0].mxu0 %v3407
      %v3448 = vpop.f32.mrb[0].mxu0
      %v3449 = vadd.f32 0.0, %v3448
      %v3450 = vpop.f32.mrb[0].mxu0
      %v3451 = vadd.f32 0.0, %v3450
      %v3452 = vpop.f32.mrb[0].mxu0
      %v3453 = vpop.f32.mrb[0].mxu0
      %3454 = vdwg.mxu0
      %3455 = vmatprep.subr.bf16.mxu0 %v3291
      %3456 = vmatpush1.bf16.msra.mxu0 %v3290
      %3457 = vmatprep.subr.bf16.mxu0 %v3299
      %3458 = vmatpush1.bf16.msra.mxu0 %v3298
      %3459 = vmatprep.subr.bf16.mxu0 %v3307
      %3460 = vmatpush1.bf16.msra.mxu0 %v3306
      %3461 = vmatprep.subr.bf16.mxu0 %v3315
      %3462 = vmatpush1.bf16.msra.mxu0 %v3314
      %3463 = vmatprep.subr.bf16.mxu0 %v3323
      %3464 = vmatpush1.bf16.msra.mxu0 %v3322
      %3465 = vmatprep.subr.bf16.mxu0 %v3331
      %3466 = vmatpush1.bf16.msra.mxu0 %v3330
      %3467 = vmatprep.subr.bf16.mxu0 %v3339
      %3468 = vmatpush1.bf16.msra.mxu0 %v3338
      %3469 = vmatprep.subr.bf16.mxu0 %v3347
      %3470 = vmatpush1.bf16.msra.mxu0 %v3346
      %3471 = vmatprep.subr.bf16.mxu0 %v3355
      %3472 = vmatpush1.bf16.msra.mxu0 %v3354
      %3473 = vmatprep.subr.bf16.mxu0 %v3363
      %3474 = vmatpush1.bf16.msra.mxu0 %v3362
      %3475 = vmatprep.subr.bf16.mxu0 %v3371
      %3476 = vmatpush1.bf16.msra.mxu0 %v3370
      %3477 = vmatprep.subr.bf16.mxu0 %v3379
      %3478 = vmatpush1.bf16.msra.mxu0 %v3378
      %3479 = vmatprep.subr.bf16.mxu0 %v3387
      %3480 = vmatpush1.bf16.msra.mxu0 %v3386
      %3481 = vmatprep.subr.bf16.mxu0 %v3395
      %3482 = vmatpush1.bf16.msra.mxu0 %v3394
      %3483 = vmatprep.subr.bf16.mxu0 0
      %3484 = vmatpush1.bf16.msra.mxu0 0
      %3485 = vmatprep.subr.bf16.mxu0 0
      %3486 = vmatpush1.bf16.msra.mxu0 0
      %3487 = vmatprep.mubr.bf16.mxu0 %v3412
      %3488 = vmatmul.mubr.bf16.gmra.mrb[0].mxu0 %v3407
      %v3489 = vpop.f32.mrb[0].mxu0
      %v3490 = vadd.f32 0.0, %v3489
      %v3491 = vpop.f32.mrb[0].mxu0
      %v3492 = vadd.f32 0.0, %v3491
      %v3493 = vpop.f32.mrb[0].mxu0
      %v3494 = vpop.f32.mrb[0].mxu0
      %3495 = vdwg.mxu0
      %3496 = vmatprep.subr.bf16.mxu0 %v3293
      %3497 = vmatpush1.bf16.msra.mxu0 %v3292
      %3498 = vmatprep.subr.bf16.mxu0 %v3301
      %3499 = vmatpush1.bf16.msra.mxu0 %v3300
      %3500 = vmatprep.subr.bf16.mxu0 %v3309
      %3501 = vmatpush1.bf16.msra.mxu0 %v3308
      %3502 = vmatprep.subr.bf16.mxu0 %v3317
      %3503 = vmatpush1.bf16.msra.mxu0 %v3316
      %3504 = vmatprep.subr.bf16.mxu0 %v3325
      %3505 = vmatpush1.bf16.msra.mxu0 %v3324
      %3506 = vmatprep.subr.bf16.mxu0 %v3333
      %3507 = vmatpush1.bf16.msra.mxu0 %v3332
      %3508 = vmatprep.subr.bf16.mxu0 %v3341
      %3509 = vmatpush1.bf16.msra.mxu0 %v3340
      %3510 = vmatprep.subr.bf16.mxu0 %v3349
      %3511 = vmatpush1.bf16.msra.mxu0 %v3348
      %3512 = vmatprep.subr.bf16.mxu0 %v3357
      %3513 = vmatpush1.bf16.msra.mxu0 %v3356
      %3514 = vmatprep.subr.bf16.mxu0 %v3365
      %3515 = vmatpush1.bf16.msra.mxu0 %v3364
      %3516 = vmatprep.subr.bf16.mxu0 %v3373
      %3517 = vmatpush1.bf16.msra.mxu0 %v3372
      %3518 = vmatprep.subr.bf16.mxu0 %v3381
      %3519 = vmatpush1.bf16.msra.mxu0 %v3380
      %3520 = vmatprep.subr.bf16.mxu0 %v3389
      %3521 = vmatpush1.bf16.msra.mxu0 %v3388
      %3522 = vmatprep.subr.bf16.mxu0 %v3397
      %3523 = vmatpush1.bf16.msra.mxu0 %v3396
      %3524 = vmatprep.subr.bf16.mxu0 0
      %3525 = vmatpush1.bf16.msra.mxu0 0
      %3526 = vmatprep.subr.bf16.mxu0 0
      %3527 = vmatpush1.bf16.msra.mxu0 0
      %3528 = vmatprep.mubr.bf16.mxu0 %v3412
      %3529 = vmatmul.mubr.bf16.gmra.mrb[0].mxu0 %v3407
      %v3530 = vpop.f32.mrb[0].mxu0
      %v3531 = vadd.f32 0.0, %v3530
      %v3532 = vpop.f32.mrb[0].mxu0
      %v3533 = vadd.f32 0.0, %v3532
      %v3534 = vpop.f32.mrb[0].mxu0
      %v3535 = vpop.f32.mrb[0].mxu0
      %3536 = vdwg.mxu0
      %3537 = vmatprep.subr.bf16.mxu0 %v3295
      %3538 = vmatpush1.bf16.msra.mxu0 %v3294
      %3539 = vmatprep.subr.bf16.mxu0 %v3303
      %3540 = vmatpush1.bf16.msra.mxu0 %v3302
      %3541 = vmatprep.subr.bf16.mxu0 %v3311
      %3542 = vmatpush1.bf16.msra.mxu0 %v3310
      %3543 = vmatprep.subr.bf16.mxu0 %v3319
      %3544 = vmatpush1.bf16.msra.mxu0 %v3318
      %3545 = vmatprep.subr.bf16.mxu0 %v3327
      %3546 = vmatpush1.bf16.msra.mxu0 %v3326
      %3547 = vmatprep.subr.bf16.mxu0 %v3335
      %3548 = vmatpush1.bf16.msra.mxu0 %v3334
      %3549 = vmatprep.subr.bf16.mxu0 %v3343
      %3550 = vmatpush1.bf16.msra.mxu0 %v3342
      %3551 = vmatprep.subr.bf16.mxu0 %v3351
      %3552 = vmatpush1.bf16.msra.mxu0 %v3350
      %3553 = vmatprep.subr.bf16.mxu0 %v3359
      %3554 = vmatpush1.bf16.msra.mxu0 %v3358
      %3555 = vmatprep.subr.bf16.mxu0 %v3367
      %3556 = vmatpush1.bf16.msra.mxu0 %v3366
      %3557 = vmatprep.subr.bf16.mxu0 %v3375
      %3558 = vmatpush1.bf16.msra.mxu0 %v3374
      %3559 = vmatprep.subr.bf16.mxu0 %v3383
      %3560 = vmatpush1.bf16.msra.mxu0 %v3382
      %3561 = vmatprep.subr.bf16.mxu0 %v3391
      %3562 = vmatpush1.bf16.msra.mxu0 %v3390
      %3563 = vmatprep.subr.bf16.mxu0 %v3399
      %3564 = vmatpush1.bf16.msra.mxu0 %v3398
      %3565 = vmatprep.subr.bf16.mxu0 0
      %3566 = vmatpush1.bf16.msra.mxu0 0
      %3567 = vmatprep.subr.bf16.mxu0 0
      %3568 = vmatpush1.bf16.msra.mxu0 0
      %3569 = vmatprep.mubr.bf16.mxu0 %v3412
      %3570 = vmatmul.mubr.bf16.gmra.mrb[0].mxu0 %v3407
      %v3571 = vpop.f32.mrb[0].mxu0
      %v3572 = vadd.f32 0.0, %v3571
      %v3573 = vpop.f32.mrb[0].mxu0
      %v3574 = vadd.f32 0.0, %v3573
      %v3575 = vpop.f32.mrb[0].mxu0
      %v3576 = vpop.f32.mrb[0].mxu0
      %3577 = vdwg.mxu0
      %v3578 = vmax.f32 %v3449, 0.0
      %v3579 = vmax.f32 %v3451, 0.0
      %v3580 = vmax.f32 %v3490, 0.0
      %v3581 = vmax.f32 %v3492, 0.0
      %v3582 = vmax.f32 %v3531, 0.0
      %v3583 = vmax.f32 %v3533, 0.0
      %v3584 = vmax.f32 %v3572, 0.0
      %v3585 = vmax.f32 %v3574, 0.0
      %v3587 = vlaneseq
      %v3588 = vshrl.u32 %v3587, 7
      %v3589 = vsub.s32 0, %v3588
      %v3590 = vrot.slane %v481, %v3589
      %v3591 = vlaneseq
      %v3592 = vshrl.u32 %v3591, 7
      %v3593 = vsub.s32 1, %v3592
      %v3594 = vrot.slane %v481, %v3593
      %v3595 = vlaneseq
      %v3596 = vshrl.u32 %v3595, 7
      %v3597 = vsub.s32 2, %v3596
      %v3598 = vrot.slane %v481, %v3597
      %v3599 = vlaneseq
      %v3600 = vshrl.u32 %v3599, 7
      %v3601 = vsub.s32 3, %v3600
      %v3602 = vrot.slane %v481, %v3601
      %v3603 = vlaneseq
      %v3604 = vshrl.u32 %v3603, 7
      %v3605 = vsub.s32 4, %v3604
      %v3606 = vrot.slane %v481, %v3605
      %v3607 = vlaneseq
      %v3608 = vshrl.u32 %v3607, 7
      %v3609 = vsub.s32 5, %v3608
      %v3610 = vrot.slane %v481, %v3609
      %v3611 = vlaneseq
      %v3612 = vshrl.u32 %v3611, 7
      %v3613 = vsub.s32 6, %v3612
      %v3614 = vrot.slane %v481, %v3613
      %v3615 = vlaneseq
      %v3616 = vshrl.u32 %v3615, 7
      %v3617 = vsub.s32 7, %v3616
      %v3618 = vrot.slane %v481, %v3617
      %v3627 = vmul.f32 %v3578, %v3590
      %v3628 = vmul.f32 %v3579, %v3594
      %v3629 = vmul.f32 %v3580, %v3598
      %v3630 = vmul.f32 %v3581, %v3602
      %v3631 = vmul.f32 %v3582, %v3606
      %v3632 = vmul.f32 %v3583, %v3610
      %v3633 = vmul.f32 %v3584, %v3614
      %v3634 = vmul.f32 %v3585, %v3618
      %v3635 = vpack.c.bf16 %v3627, %v3627
      %v3636 = vpack.c.bf16 %v3628, %v3628
      %v3637 = vpack.c.bf16 %v3629, %v3629
      %v3638 = vpack.c.bf16 %v3630, %v3630
      %v3639 = vpack.c.bf16 %v3631, %v3631
      %v3640 = vpack.c.bf16 %v3632, %v3632
      %v3641 = vpack.c.bf16 %v3633, %v3633
      %v3642 = vpack.c.bf16 %v3634, %v3634
      %v3651 = vcombine.low %v3635, %v3636
      %v3652 = vcombine.low %v3637, %v3638
      %v3654 = vunpack.c.l.s4 1983009808
      %v3655 = vunpack.c.0.s8 %v3654
      %v3656 = vlaneseq
      %v3657 = vshrl.u32 %v3656, 7
      %v3658 = vsub.s32 %v3655, %v3657
      %v3659 = vrot.slane %v3651, %v3658
      %v3661 = vunpack.c.l.s4 1983009808
      %v3662 = vunpack.c.0.s8 %v3661
      %v3663 = vlaneseq
      %v3664 = vshrl.u32 %v3663, 7
      %v3665 = vsub.s32 %v3662, %v3664
      %v3666 = vrot.slane %v3652, %v3665
      %v3667 = vcombine.low %v3659, %v3666
      %v3668 = vcombine.low %v3639, %v3640
      %v3669 = vcombine.low %v3641, %v3642
      %v3671 = vunpack.c.l.s4 1983009808
      %v3672 = vunpack.c.0.s8 %v3671
      %v3673 = vlaneseq
      %v3674 = vshrl.u32 %v3673, 7
      %v3675 = vsub.s32 %v3672, %v3674
      %v3676 = vrot.slane %v3668, %v3675
      %v3678 = vunpack.c.l.s4 1983009808
      %v3679 = vunpack.c.0.s8 %v3678
      %v3680 = vlaneseq
      %v3681 = vshrl.u32 %v3680, 7
      %v3682 = vsub.s32 %v3679, %v3681
      %v3683 = vrot.slane %v3669, %v3682
      %v3684 = vcombine.low %v3676, %v3683
      %3687 = vst [vmem:[#allocation3 + $0x2] sm:$0xff] %v3667
      %vm3688 = vcmask 1043458
      %vm3689 = vmor %vm3688, %vm431
      %vm3690 = vcmask 1045508
      %vm3691 = vmor %vm3690, %vm3689
      %vm3692 = vcmask 850950
      %vm3693 = vmor %vm3692, %vm3691
      %3694 = vst.msk [vmem:[#allocation3 + $0xa] sm:$0xff] %vm3693, %v3684
      %v3695 = vld [vmem:[#allocation3] sm:$0xff]
      %v3696 = vld [vmem:[#allocation3 + $0x8] sm:$0xff]
      %v3699 = vcombine.high %v3695, %v3695
      %v3701 = vunpack.c.l.s4 1983009808
      %v3702 = vunpack.c.0.s8 %v3701
      %v3703 = vlaneseq
      %v3704 = vshrl.u32 %v3703, 7
      %v3705 = vsub.s32 %v3702, %v3704
      %v3706 = vrot.slane %v3695, %v3705
      %v3708 = vunpack.c.l.s4 1983009808
      %v3709 = vunpack.c.0.s8 %v3708
      %v3710 = vlaneseq
      %v3711 = vshrl.u32 %v3710, 7
      %v3712 = vsub.s32 %v3709, %v3711
      %v3713 = vrot.slane %v3699, %v3712
      %v3714 = vcombine.high %v3696, %v3696
      %v3716 = vunpack.c.l.s4 1983009808
      %v3717 = vunpack.c.0.s8 %v3716
      %v3718 = vlaneseq
      %v3719 = vshrl.u32 %v3718, 7
      %v3720 = vsub.s32 %v3717, %v3719
      %v3721 = vrot.slane %v3696, %v3720
      %v3723 = vunpack.c.l.s4 1983009808
      %v3724 = vunpack.c.0.s8 %v3723
      %v3725 = vlaneseq
      %v3726 = vshrl.u32 %v3725, 7
      %v3727 = vsub.s32 %v3724, %v3726
      %v3728 = vrot.slane %v3714, %v3727
      %3729 = vrot.lane.b32.xlu0 %v3706, 111
      %v3730 = vpop.permute.xlu0 %3729
      %3731 = vrot.lane.b32.xlu0 %v3713, 111
      %v3732 = vpop.permute.xlu0 %3731
      %3733 = vrot.lane.b32.xlu0 %v3721, 111
      %v3734 = vpop.permute.xlu0 %3733
      %3735 = vrot.lane.b32.xlu0 %v3728, 111
      %v3736 = vpop.permute.xlu0 %3735
      %v3737 = vrot.slane %v3730, 4
      %v3738 = vrot.slane %v3732, 4
      %v3739 = vrot.slane %v3734, 4
      %v3740 = vrot.slane %v3736, 4
      %vm3741 = vcmask 1043456
      %v3742 = vsel %vm3741, %v3737, %v3738
      %v3743 = vsel %vm549, %v3730, %v3742
      %v3744 = vsel %vm3741, %v3738, %v3739
      %v3745 = vsel %vm549, %v3732, %v3744
      %v3746 = vsel %vm3741, %v3739, %v3740
      %v3747 = vsel %vm549, %v3734, %v3746
      %v3748 = vsel %vm549, %v3736, %v3740
      %3753 = vst [vmem:[#allocation4] sm:$0x33] %v3743
      %3754 = vst [vmem:[#allocation4 + $0x8] sm:$0x33] %v3745
      %3755 = vst [vmem:[#allocation4 + $0x10] sm:$0x33] %v3747
      %vm3756 = vcmask 848900
      %vm3757 = vmor %vm3756, %vm431
      %3758 = vst.msk [vmem:[#allocation4 + $0x18] sm:$0x33] %vm3757, %v3748
      %v3759 = vld [vmem:[#allocation3] sm:$0xff]
      %v3760 = vld [vmem:[#allocation3 + $0x8] sm:$0xff]
      %v3763 = vcombine.high %v3759, %v3759
      %v3765 = vunpack.c.l.s4 1983009808
      %v3766 = vunpack.c.0.s8 %v3765
      %v3767 = vlaneseq
      %v3768 = vshrl.u32 %v3767, 7
      %v3769 = vsub.s32 %v3766, %v3768
      %v3770 = vrot.slane %v3759, %v3769
      %v3772 = vunpack.c.l.s4 1983009808
      %v3773 = vunpack.c.0.s8 %v3772
      %v3774 = vlaneseq
      %v3775 = vshrl.u32 %v3774, 7
      %v3776 = vsub.s32 %v3773, %v3775
      %v3777 = vrot.slane %v3763, %v3776
      %v3778 = vcombine.high %v3760, %v3760
      %v3780 = vunpack.c.l.s4 1983009808
      %v3781 = vunpack.c.0.s8 %v3780
      %v3782 = vlaneseq
      %v3783 = vshrl.u32 %v3782, 7
      %v3784 = vsub.s32 %v3781, %v3783
      %v3785 = vrot.slane %v3760, %v3784
      %v3787 = vunpack.c.l.s4 1983009808
      %v3788 = vunpack.c.0.s8 %v3787
      %v3789 = vlaneseq
      %v3790 = vshrl.u32 %v3789, 7
      %v3791 = vsub.s32 %v3788, %v3790
      %v3792 = vrot.slane %v3778, %v3791
      %3793 = vrot.lane.b32.xlu0 %v3770, 110
      %v3794 = vpop.permute.xlu0 %3793
      %3795 = vrot.lane.b32.xlu0 %v3777, 110
      %v3796 = vpop.permute.xlu0 %3795
      %3797 = vrot.lane.b32.xlu0 %v3785, 110
      %v3798 = vpop.permute.xlu0 %3797
      %3799 = vrot.lane.b32.xlu0 %v3792, 110
      %v3800 = vpop.permute.xlu0 %3799
      %v3801 = vrot.slane %v3794, 4
      %v3802 = vrot.slane %v3796, 4
      %v3803 = vrot.slane %v3798, 4
      %v3804 = vrot.slane %v3800, 4
      %v3805 = vsel %vm3741, %v3801, %v3802
      %v3806 = vsel %vm641, %v3794, %v3805
      %v3807 = vsel %vm3741, %v3802, %v3803
      %v3808 = vsel %vm641, %v3796, %v3807
      %v3809 = vsel %vm3741, %v3803, %v3804
      %v3810 = vsel %vm641, %v3798, %v3809
      %v3811 = vsel %vm641, %v3800, %v3804
      %3816 = vst [vmem:[#allocation4 + $0x20] sm:$0x33] %v3806
      %3817 = vst [vmem:[#allocation4 + $0x28] sm:$0x33] %v3808
      %3818 = vst [vmem:[#allocation4 + $0x30] sm:$0x33] %v3810
      %3819 = vst.msk [vmem:[#allocation4 + $0x38] sm:$0x33] %vm3757, %v3811
      %v3820 = vld [vmem:[#allocation3] sm:$0xff]
      %v3821 = vld [vmem:[#allocation3 + $0x8] sm:$0xff]
      %v3824 = vcombine.high %v3820, %v3820
      %v3826 = vunpack.c.l.s4 1983009808
      %v3827 = vunpack.c.0.s8 %v3826
      %v3828 = vlaneseq
      %v3829 = vshrl.u32 %v3828, 7
      %v3830 = vsub.s32 %v3827, %v3829
      %v3831 = vrot.slane %v3820, %v3830
      %v3833 = vunpack.c.l.s4 1983009808
      %v3834 = vunpack.c.0.s8 %v3833
      %v3835 = vlaneseq
      %v3836 = vshrl.u32 %v3835, 7
      %v3837 = vsub.s32 %v3834, %v3836
      %v3838 = vrot.slane %v3824, %v3837
      %v3839 = vcombine.high %v3821, %v3821
      %v3841 = vunpack.c.l.s4 1983009808
      %v3842 = vunpack.c.0.s8 %v3841
      %v3843 = vlaneseq
      %v3844 = vshrl.u32 %v3843, 7
      %v3845 = vsub.s32 %v3842, %v3844
      %v3846 = vrot.slane %v3821, %v3845
      %v3848 = vunpack.c.l.s4 1983009808
      %v3849 = vunpack.c.0.s8 %v3848
      %v3850 = vlaneseq
      %v3851 = vshrl.u32 %v3850, 7
      %v3852 = vsub.s32 %v3849, %v3851
      %v3853 = vrot.slane %v3839, %v3852
      %3854 = vrot.lane.b32.xlu0 %v3831, 109
      %v3855 = vpop.permute.xlu0 %3854
      %3856 = vrot.lane.b32.xlu0 %v3838, 109
      %v3857 = vpop.permute.xlu0 %3856
      %3858 = vrot.lane.b32.xlu0 %v3846, 109
      %v3859 = vpop.permute.xlu0 %3858
      %3860 = vrot.lane.b32.xlu0 %v3853, 109
      %v3861 = vpop.permute.xlu0 %3860
      %v3862 = vrot.slane %v3855, 4
      %v3863 = vrot.slane %v3857, 4
      %v3864 = vrot.slane %v3859, 4
      %v3865 = vrot.slane %v3861, 4
      %v3866 = vsel %vm3741, %v3862, %v3863
      %v3867 = vsel %vm733, %v3855, %v3866
      %v3868 = vsel %vm3741, %v3863, %v3864
      %v3869 = vsel %vm733, %v3857, %v3868
      %v3870 = vsel %vm3741, %v3864, %v3865
      %v3871 = vsel %vm733, %v3859, %v3870
      %v3872 = vsel %vm733, %v3861, %v3865
      %3877 = vst [vmem:[#allocation4 + $0x40] sm:$0x33] %v3867
      %3878 = vst [vmem:[#allocation4 + $0x48] sm:$0x33] %v3869
      %3879 = vst [vmem:[#allocation4 + $0x50] sm:$0x33] %v3871
      %3880 = vst.msk [vmem:[#allocation4 + $0x58] sm:$0x33] %vm3757, %v3872
      %v3881 = vld [vmem:[#allocation3] sm:$0xff]
      %v3882 = vld [vmem:[#allocation3 + $0x8] sm:$0xff]
      %v3883 = vld [vmem:[#allocation3 + $0x10] sm:$0x3]
      %v3887 = vcombine.high %v3881, %v3881
      %v3889 = vunpack.c.l.s4 1983009808
      %v3890 = vunpack.c.0.s8 %v3889
      %v3891 = vlaneseq
      %v3892 = vshrl.u32 %v3891, 7
      %v3893 = vsub.s32 %v3890, %v3892
      %v3894 = vrot.slane %v3881, %v3893
      %v3896 = vunpack.c.l.s4 1983009808
      %v3897 = vunpack.c.0.s8 %v3896
      %v3898 = vlaneseq
      %v3899 = vshrl.u32 %v3898, 7
      %v3900 = vsub.s32 %v3897, %v3899
      %v3901 = vrot.slane %v3887, %v3900
      %v3902 = vcombine.high %v3882, %v3882
      %v3904 = vunpack.c.l.s4 1983009808
      %v3905 = vunpack.c.0.s8 %v3904
      %v3906 = vlaneseq
      %v3907 = vshrl.u32 %v3906, 7
      %v3908 = vsub.s32 %v3905, %v3907
      %v3909 = vrot.slane %v3882, %v3908
      %v3911 = vunpack.c.l.s4 1983009808
      %v3912 = vunpack.c.0.s8 %v3911
      %v3913 = vlaneseq
      %v3914 = vshrl.u32 %v3913, 7
      %v3915 = vsub.s32 %v3912, %v3914
      %v3916 = vrot.slane %v3902, %v3915
      %v3918 = vunpack.c.l.s4 1983009808
      %v3919 = vunpack.c.0.s8 %v3918
      %v3920 = vlaneseq
      %v3921 = vshrl.u32 %v3920, 7
      %v3922 = vsub.s32 %v3919, %v3921
      %v3923 = vrot.slane %v3883, %v3922
      %3924 = vrot.lane.b32.xlu0 %v3894, 101
      %v3925 = vpop.permute.xlu0 %3924
      %3926 = vrot.lane.b32.xlu0 %v3901, 101
      %v3927 = vpop.permute.xlu0 %3926
      %3928 = vrot.lane.b32.xlu0 %v3909, 101
      %v3929 = vpop.permute.xlu0 %3928
      %3930 = vrot.lane.b32.xlu0 %v3916, 101
      %v3931 = vpop.permute.xlu0 %3930
      %3932 = vrot.lane.b32.xlu0 %v3923, 101
      %v3933 = vpop.permute.xlu0 %3932
      %v3934 = vrot.slane %v3925, 4
      %v3935 = vrot.slane %v3927, 4
      %v3936 = vrot.slane %v3929, 4
      %v3937 = vrot.slane %v3931, 4
      %v3938 = vrot.slane %v3933, 4
      %v3939 = vsel %vm3741, %v3934, %v3935
      %v3940 = vsel %vm843, %v3925, %v3939
      %v3941 = vsel %vm3741, %v3935, %v3936
      %v3942 = vsel %vm843, %v3927, %v3941
      %v3943 = vsel %vm3741, %v3936, %v3937
      %v3944 = vsel %vm843, %v3929, %v3943
      %v3945 = vsel %vm3741, %v3937, %v3938
      %v3946 = vsel %vm843, %v3931, %v3945
      %3951 = vst [vmem:[#allocation4 + $0x60] sm:$0x33] %v3940
      %3952 = vst [vmem:[#allocation4 + $0x68] sm:$0x33] %v3942
      %3953 = vst [vmem:[#allocation4 + $0x70] sm:$0x33] %v3944
      %3954 = vst.msk [vmem:[#allocation4 + $0x78] sm:$0x33] %vm3757, %v3946
      %v3955 = vld [vmem:[#allocation3] sm:$0xff]
      %v3956 = vld [vmem:[#allocation3 + $0x8] sm:$0xff]
      %v3957 = vld [vmem:[#allocation3 + $0x10] sm:$0x3]
      %v3961 = vcombine.high %v3955, %v3955
      %v3963 = vunpack.c.l.s4 1983009808
      %v3964 = vunpack.c.0.s8 %v3963
      %v3965 = vlaneseq
      %v3966 = vshrl.u32 %v3965, 7
      %v3967 = vsub.s32 %v3964, %v3966
      %v3968 = vrot.slane %v3955, %v3967
      %v3970 = vunpack.c.l.s4 1983009808
      %v3971 = vunpack.c.0.s8 %v3970
      %v3972 = vlaneseq
      %v3973 = vshrl.u32 %v3972, 7
      %v3974 = vsub.s32 %v3971, %v3973
      %v3975 = vrot.slane %v3961, %v3974
      %v3976 = vcombine.high %v3956, %v3956
      %v3978 = vunpack.c.l.s4 1983009808
      %v3979 = vunpack.c.0.s8 %v3978
      %v3980 = vlaneseq
      %v3981 = vshrl.u32 %v3980, 7
      %v3982 = vsub.s32 %v3979, %v3981
      %v3983 = vrot.slane %v3956, %v3982
      %v3985 = vunpack.c.l.s4 1983009808
      %v3986 = vunpack.c.0.s8 %v3985
      %v3987 = vlaneseq
      %v3988 = vshrl.u32 %v3987, 7
      %v3989 = vsub.s32 %v3986, %v3988
      %v3990 = vrot.slane %v3976, %v3989
      %v3992 = vunpack.c.l.s4 1983009808
      %v3993 = vunpack.c.0.s8 %v3992
      %v3994 = vlaneseq
      %v3995 = vshrl.u32 %v3994, 7
      %v3996 = vsub.s32 %v3993, %v3995
      %v3997 = vrot.slane %v3957, %v3996
      %3998 = vrot.lane.b32.xlu0 %v3968, 100
      %v3999 = vpop.permute.xlu0 %3998
      %4000 = vrot.lane.b32.xlu0 %v3975, 100
      %v4001 = vpop.permute.xlu0 %4000
      %4002 = vrot.lane.b32.xlu0 %v3983, 100
      %v4003 = vpop.permute.xlu0 %4002
      %4004 = vrot.lane.b32.xlu0 %v3990, 100
      %v4005 = vpop.permute.xlu0 %4004
      %4006 = vrot.lane.b32.xlu0 %v3997, 100
      %v4007 = vpop.permute.xlu0 %4006
      %v4008 = vrot.slane %v3999, 4
      %v4009 = vrot.slane %v4001, 4
      %v4010 = vrot.slane %v4003, 4
      %v4011 = vrot.slane %v4005, 4
      %v4012 = vrot.slane %v4007, 4
      %v4013 = vsel %vm3741, %v4008, %v4009
      %v4014 = vsel %vm953, %v3999, %v4013
      %v4015 = vsel %vm3741, %v4009, %v4010
      %v4016 = vsel %vm953, %v4001, %v4015
      %v4017 = vsel %vm3741, %v4010, %v4011
      %v4018 = vsel %vm953, %v4003, %v4017
      %v4019 = vsel %vm3741, %v4011, %v4012
      %v4020 = vsel %vm953, %v4005, %v4019
      %4025 = vst [vmem:[#allocation4 + $0x80] sm:$0x33] %v4014
      %4026 = vst [vmem:[#allocation4 + $0x88] sm:$0x33] %v4016
      %4027 = vst [vmem:[#allocation4 + $0x90] sm:$0x33] %v4018
      %4028 = vst.msk [vmem:[#allocation4 + $0x98] sm:$0x33] %vm3757, %v4020
      %v4029 = vld [vmem:[#allocation3] sm:$0xff]
      %v4030 = vld [vmem:[#allocation3 + $0x8] sm:$0xff]
      %v4031 = vld [vmem:[#allocation3 + $0x10] sm:$0x3]
      %v4035 = vcombine.high %v4029, %v4029
      %v4037 = vunpack.c.l.s4 1983009808
      %v4038 = vunpack.c.0.s8 %v4037
      %v4039 = vlaneseq
      %v4040 = vshrl.u32 %v4039, 7
      %v4041 = vsub.s32 %v4038, %v4040
      %v4042 = vrot.slane %v4029, %v4041
      %v4044 = vunpack.c.l.s4 1983009808
      %v4045 = vunpack.c.0.s8 %v4044
      %v4046 = vlaneseq
      %v4047 = vshrl.u32 %v4046, 7
      %v4048 = vsub.s32 %v4045, %v4047
      %v4049 = vrot.slane %v4035, %v4048
      %v4050 = vcombine.high %v4030, %v4030
      %v4052 = vunpack.c.l.s4 1983009808
      %v4053 = vunpack.c.0.s8 %v4052
      %v4054 = vlaneseq
      %v4055 = vshrl.u32 %v4054, 7
      %v4056 = vsub.s32 %v4053, %v4055
      %v4057 = vrot.slane %v4030, %v4056
      %v4059 = vunpack.c.l.s4 1983009808
      %v4060 = vunpack.c.0.s8 %v4059
      %v4061 = vlaneseq
      %v4062 = vshrl.u32 %v4061, 7
      %v4063 = vsub.s32 %v4060, %v4062
      %v4064 = vrot.slane %v4050, %v4063
      %v4066 = vunpack.c.l.s4 1983009808
      %v4067 = vunpack.c.0.s8 %v4066
      %v4068 = vlaneseq
      %v4069 = vshrl.u32 %v4068, 7
      %v4070 = vsub.s32 %v4067, %v4069
      %v4071 = vrot.slane %v4031, %v4070
      %4072 = vrot.lane.b32.xlu0 %v4042, 99
      %v4073 = vpop.permute.xlu0 %4072
      %4074 = vrot.lane.b32.xlu0 %v4049, 99
      %v4075 = vpop.permute.xlu0 %4074
      %4076 = vrot.lane.b32.xlu0 %v4057, 99
      %v4077 = vpop.permute.xlu0 %4076
      %4078 = vrot.lane.b32.xlu0 %v4064, 99
      %v4079 = vpop.permute.xlu0 %4078
      %4080 = vrot.lane.b32.xlu0 %v4071, 99
      %v4081 = vpop.permute.xlu0 %4080
      %v4082 = vrot.slane %v4073, 4
      %v4083 = vrot.slane %v4075, 4
      %v4084 = vrot.slane %v4077, 4
      %v4085 = vrot.slane %v4079, 4
      %v4086 = vrot.slane %v4081, 4
      %v4087 = vsel %vm3741, %v4082, %v4083
      %v4088 = vsel %vm1064, %v4073, %v4087
      %v4089 = vsel %vm3741, %v4083, %v4084
      %v4090 = vsel %vm1064, %v4075, %v4089
      %v4091 = vsel %vm3741, %v4084, %v4085
      %v4092 = vsel %vm1064, %v4077, %v4091
      %v4093 = vsel %vm3741, %v4085, %v4086
      %v4094 = vsel %vm1064, %v4079, %v4093
      %4099 = vst [vmem:[#allocation4 + $0xa0] sm:$0x33] %v4088
      %4100 = vst [vmem:[#allocation4 + $0xa8] sm:$0x33] %v4090
      %4101 = vst [vmem:[#allocation4 + $0xb0] sm:$0x33] %v4092
      %4102 = vst.msk [vmem:[#allocation4 + $0xb8] sm:$0x33] %vm3757, %v4094
      %v4103 = vld [vmem:[#allocation3] sm:$0xff]
      %v4104 = vld [vmem:[#allocation3 + $0x8] sm:$0xff]
      %v4105 = vld [vmem:[#allocation3 + $0x10] sm:$0x3]
      %v4109 = vcombine.high %v4103, %v4103
      %v4111 = vunpack.c.l.s4 1983009808
      %v4112 = vunpack.c.0.s8 %v4111
      %v4113 = vlaneseq
      %v4114 = vshrl.u32 %v4113, 7
      %v4115 = vsub.s32 %v4112, %v4114
      %v4116 = vrot.slane %v4103, %v4115
      %v4118 = vunpack.c.l.s4 1983009808
      %v4119 = vunpack.c.0.s8 %v4118
      %v4120 = vlaneseq
      %v4121 = vshrl.u32 %v4120, 7
      %v4122 = vsub.s32 %v4119, %v4121
      %v4123 = vrot.slane %v4109, %v4122
      %v4124 = vcombine.high %v4104, %v4104
      %v4126 = vunpack.c.l.s4 1983009808
      %v4127 = vunpack.c.0.s8 %v4126
      %v4128 = vlaneseq
      %v4129 = vshrl.u32 %v4128, 7
      %v4130 = vsub.s32 %v4127, %v4129
      %v4131 = vrot.slane %v4104, %v4130
      %v4133 = vunpack.c.l.s4 1983009808
      %v4134 = vunpack.c.0.s8 %v4133
      %v4135 = vlaneseq
      %v4136 = vshrl.u32 %v4135, 7
      %v4137 = vsub.s32 %v4134, %v4136
      %v4138 = vrot.slane %v4124, %v4137
      %v4140 = vunpack.c.l.s4 1983009808
      %v4141 = vunpack.c.0.s8 %v4140
      %v4142 = vlaneseq
      %v4143 = vshrl.u32 %v4142, 7
      %v4144 = vsub.s32 %v4141, %v4143
      %v4145 = vrot.slane %v4105, %v4144
      %4146 = vrot.lane.b32.xlu0 %v4116, 91
      %v4147 = vpop.permute.xlu0 %4146
      %4148 = vrot.lane.b32.xlu0 %v4123, 91
      %v4149 = vpop.permute.xlu0 %4148
      %4150 = vrot.lane.b32.xlu0 %v4131, 91
      %v4151 = vpop.permute.xlu0 %4150
      %4152 = vrot.lane.b32.xlu0 %v4138, 91
      %v4153 = vpop.permute.xlu0 %4152
      %4154 = vrot.lane.b32.xlu0 %v4145, 91
      %v4155 = vpop.permute.xlu0 %4154
      %v4156 = vrot.slane %v4147, 4
      %v4157 = vrot.slane %v4149, 4
      %v4158 = vrot.slane %v4151, 4
      %v4159 = vrot.slane %v4153, 4
      %v4160 = vrot.slane %v4155, 4
      %v4161 = vsel %vm3741, %v4156, %v4157
      %v4162 = vsel %vm1174, %v4147, %v4161
      %v4163 = vsel %vm3741, %v4157, %v4158
      %v4164 = vsel %vm1174, %v4149, %v4163
      %v4165 = vsel %vm3741, %v4158, %v4159
      %v4166 = vsel %vm1174, %v4151, %v4165
      %v4167 = vsel %vm3741, %v4159, %v4160
      %v4168 = vsel %vm1174, %v4153, %v4167
      %4173 = vst [vmem:[#allocation4 + $0xc0] sm:$0x33] %v4162
      %4174 = vst [vmem:[#allocation4 + $0xc8] sm:$0x33] %v4164
      %4175 = vst [vmem:[#allocation4 + $0xd0] sm:$0x33] %v4166
      %4176 = vst.msk [vmem:[#allocation4 + $0xd8] sm:$0x33] %vm3757, %v4168
      %v4177 = vld [vmem:[#allocation3] sm:$0xff]
      %v4178 = vld [vmem:[#allocation3 + $0x8] sm:$0xff]
      %v4179 = vld [vmem:[#allocation3 + $0x10] sm:$0x3]
      %v4183 = vcombine.high %v4177, %v4177
      %v4185 = vunpack.c.l.s4 1983009808
      %v4186 = vunpack.c.0.s8 %v4185
      %v4187 = vlaneseq
      %v4188 = vshrl.u32 %v4187, 7
      %v4189 = vsub.s32 %v4186, %v4188
      %v4190 = vrot.slane %v4177, %v4189
      %v4192 = vunpack.c.l.s4 1983009808
      %v4193 = vunpack.c.0.s8 %v4192
      %v4194 = vlaneseq
      %v4195 = vshrl.u32 %v4194, 7
      %v4196 = vsub.s32 %v4193, %v4195
      %v4197 = vrot.slane %v4183, %v4196
      %v4198 = vcombine.high %v4178, %v4178
      %v4200 = vunpack.c.l.s4 1983009808
      %v4201 = vunpack.c.0.s8 %v4200
      %v4202 = vlaneseq
      %v4203 = vshrl.u32 %v4202, 7
      %v4204 = vsub.s32 %v4201, %v4203
      %v4205 = vrot.slane %v4178, %v4204
      %v4207 = vunpack.c.l.s4 1983009808
      %v4208 = vunpack.c.0.s8 %v4207
      %v4209 = vlaneseq
      %v4210 = vshrl.u32 %v4209, 7
      %v4211 = vsub.s32 %v4208, %v4210
      %v4212 = vrot.slane %v4198, %v4211
      %v4214 = vunpack.c.l.s4 1983009808
      %v4215 = vunpack.c.0.s8 %v4214
      %v4216 = vlaneseq
      %v4217 = vshrl.u32 %v4216, 7
      %v4218 = vsub.s32 %v4215, %v4217
      %v4219 = vrot.slane %v4179, %v4218
      %4220 = vrot.lane.b32.xlu0 %v4190, 90
      %v4221 = vpop.permute.xlu0 %4220
      %4222 = vrot.lane.b32.xlu0 %v4197, 90
      %v4223 = vpop.permute.xlu0 %4222
      %4224 = vrot.lane.b32.xlu0 %v4205, 90
      %v4225 = vpop.permute.xlu0 %4224
      %4226 = vrot.lane.b32.xlu0 %v4212, 90
      %v4227 = vpop.permute.xlu0 %4226
      %4228 = vrot.lane.b32.xlu0 %v4219, 90
      %v4229 = vpop.permute.xlu0 %4228
      %v4230 = vrot.slane %v4221, 4
      %v4231 = vrot.slane %v4223, 4
      %v4232 = vrot.slane %v4225, 4
      %v4233 = vrot.slane %v4227, 4
      %v4234 = vrot.slane %v4229, 4
      %v4235 = vsel %vm3741, %v4230, %v4231
      %v4236 = vsel %vm1285, %v4221, %v4235
      %v4237 = vsel %vm3741, %v4231, %v4232
      %v4238 = vsel %vm1285, %v4223, %v4237
      %v4239 = vsel %vm3741, %v4232, %v4233
      %v4240 = vsel %vm1285, %v4225, %v4239
      %v4241 = vsel %vm3741, %v4233, %v4234
      %v4242 = vsel %vm1285, %v4227, %v4241
      %4247 = vst [vmem:[#allocation4 + $0xe0] sm:$0x33] %v4236
      %4248 = vst [vmem:[#allocation4 + $0xe8] sm:$0x33] %v4238
      %4249 = vst [vmem:[#allocation4 + $0xf0] sm:$0x33] %v4240
      %4250 = vst.msk [vmem:[#allocation4 + $0xf8] sm:$0x33] %vm3757, %v4242
      %v4251 = vld [vmem:[#allocation3] sm:$0xff]
      %v4252 = vld [vmem:[#allocation3 + $0x8] sm:$0xff]
      %v4253 = vld [vmem:[#allocation3 + $0x10] sm:$0x3]
      %v4257 = vcombine.high %v4251, %v4251
      %v4259 = vunpack.c.l.s4 1983009808
      %v4260 = vunpack.c.0.s8 %v4259
      %v4261 = vlaneseq
      %v4262 = vshrl.u32 %v4261, 7
      %v4263 = vsub.s32 %v4260, %v4262
      %v4264 = vrot.slane %v4251, %v4263
      %v4266 = vunpack.c.l.s4 1983009808
      %v4267 = vunpack.c.0.s8 %v4266
      %v4268 = vlaneseq
      %v4269 = vshrl.u32 %v4268, 7
      %v4270 = vsub.s32 %v4267, %v4269
      %v4271 = vrot.slane %v4257, %v4270
      %v4272 = vcombine.high %v4252, %v4252
      %v4274 = vunpack.c.l.s4 1983009808
      %v4275 = vunpack.c.0.s8 %v4274
      %v4276 = vlaneseq
      %v4277 = vshrl.u32 %v4276, 7
      %v4278 = vsub.s32 %v4275, %v4277
      %v4279 = vrot.slane %v4252, %v4278
      %v4281 = vunpack.c.l.s4 1983009808
      %v4282 = vunpack.c.0.s8 %v4281
      %v4283 = vlaneseq
      %v4284 = vshrl.u32 %v4283, 7
      %v4285 = vsub.s32 %v4282, %v4284
      %v4286 = vrot.slane %v4272, %v4285
      %v4288 = vunpack.c.l.s4 1983009808
      %v4289 = vunpack.c.0.s8 %v4288
      %v4290 = vlaneseq
      %v4291 = vshrl.u32 %v4290, 7
      %v4292 = vsub.s32 %v4289, %v4291
      %v4293 = vrot.slane %v4253, %v4292
      %4294 = vrot.lane.b32.xlu0 %v4264, 89
      %v4295 = vpop.permute.xlu0 %4294
      %4296 = vrot.lane.b32.xlu0 %v4271, 89
      %v4297 = vpop.permute.xlu0 %4296
      %4298 = vrot.lane.b32.xlu0 %v4279, 89
      %v4299 = vpop.permute.xlu0 %4298
      %4300 = vrot.lane.b32.xlu0 %v4286, 89
      %v4301 = vpop.permute.xlu0 %4300
      %4302 = vrot.lane.b32.xlu0 %v4293, 89
      %v4303 = vpop.permute.xlu0 %4302
      %v4304 = vrot.slane %v4295, 4
      %v4305 = vrot.slane %v4297, 4
      %v4306 = vrot.slane %v4299, 4
      %v4307 = vrot.slane %v4301, 4
      %v4308 = vrot.slane %v4303, 4
      %v4309 = vsel %vm3741, %v4304, %v4305
      %v4310 = vsel %vm1395, %v4295, %v4309
      %v4311 = vsel %vm3741, %v4305, %v4306
      %v4312 = vsel %vm1395, %v4297, %v4311
      %v4313 = vsel %vm3741, %v4306, %v4307
      %v4314 = vsel %vm1395, %v4299, %v4313
      %v4315 = vsel %vm3741, %v4307, %v4308
      %v4316 = vsel %vm1395, %v4301, %v4315
      %4321 = vst [vmem:[#allocation4 + $0x100] sm:$0x33] %v4310
      %4322 = vst [vmem:[#allocation4 + $0x108] sm:$0x33] %v4312
      %4323 = vst [vmem:[#allocation4 + $0x110] sm:$0x33] %v4314
      %4324 = vst.msk [vmem:[#allocation4 + $0x118] sm:$0x33] %vm3757, %v4316
      %v4325 = vld [vmem:[#allocation3] sm:$0xff]
      %v4326 = vld [vmem:[#allocation3 + $0x8] sm:$0xff]
      %v4327 = vld [vmem:[#allocation3 + $0x10] sm:$0x3]
      %v4331 = vcombine.high %v4325, %v4325
      %v4333 = vunpack.c.l.s4 1983009808
      %v4334 = vunpack.c.0.s8 %v4333
      %v4335 = vlaneseq
      %v4336 = vshrl.u32 %v4335, 7
      %v4337 = vsub.s32 %v4334, %v4336
      %v4338 = vrot.slane %v4325, %v4337
      %v4340 = vunpack.c.l.s4 1983009808
      %v4341 = vunpack.c.0.s8 %v4340
      %v4342 = vlaneseq
      %v4343 = vshrl.u32 %v4342, 7
      %v4344 = vsub.s32 %v4341, %v4343
      %v4345 = vrot.slane %v4331, %v4344
      %v4346 = vcombine.high %v4326, %v4326
      %v4348 = vunpack.c.l.s4 1983009808
      %v4349 = vunpack.c.0.s8 %v4348
      %v4350 = vlaneseq
      %v4351 = vshrl.u32 %v4350, 7
      %v4352 = vsub.s32 %v4349, %v4351
      %v4353 = vrot.slane %v4326, %v4352
      %v4355 = vunpack.c.l.s4 1983009808
      %v4356 = vunpack.c.0.s8 %v4355
      %v4357 = vlaneseq
      %v4358 = vshrl.u32 %v4357, 7
      %v4359 = vsub.s32 %v4356, %v4358
      %v4360 = vrot.slane %v4346, %v4359
      %v4362 = vunpack.c.l.s4 1983009808
      %v4363 = vunpack.c.0.s8 %v4362
      %v4364 = vlaneseq
      %v4365 = vshrl.u32 %v4364, 7
      %v4366 = vsub.s32 %v4363, %v4365
      %v4367 = vrot.slane %v4327, %v4366
      %4368 = vrot.lane.b32.xlu0 %v4338, 11
      %v4369 = vpop.permute.xlu0 %4368
      %4370 = vrot.lane.b32.xlu0 %v4345, 11
      %v4371 = vpop.permute.xlu0 %4370
      %4372 = vrot.lane.b32.xlu0 %v4353, 11
      %v4373 = vpop.permute.xlu0 %4372
      %4374 = vrot.lane.b32.xlu0 %v4360, 11
      %v4375 = vpop.permute.xlu0 %4374
      %4376 = vrot.lane.b32.xlu0 %v4367, 11
      %v4377 = vpop.permute.xlu0 %4376
      %v4378 = vrot.slane %v4369, 4
      %v4379 = vrot.slane %v4371, 4
      %v4380 = vrot.slane %v4373, 4
      %v4381 = vrot.slane %v4375, 4
      %v4382 = vrot.slane %v4377, 4
      %v4383 = vsel %vm3741, %v4378, %v4379
      %v4384 = vsel %vm1506, %v4369, %v4383
      %v4385 = vsel %vm3741, %v4379, %v4380
      %v4386 = vsel %vm1506, %v4371, %v4385
      %v4387 = vsel %vm3741, %v4380, %v4381
      %v4388 = vsel %vm1506, %v4373, %v4387
      %v4389 = vsel %vm3741, %v4381, %v4382
      %v4390 = vsel %vm1506, %v4375, %v4389
      %4395 = vst [vmem:[#allocation4 + $0x120] sm:$0x33] %v4384
      %4396 = vst [vmem:[#allocation4 + $0x128] sm:$0x33] %v4386
      %4397 = vst [vmem:[#allocation4 + $0x130] sm:$0x33] %v4388
      %4398 = vst.msk [vmem:[#allocation4 + $0x138] sm:$0x33] %vm3757, %v4390
      %v4399 = vld [vmem:[#allocation3] sm:$0xff]
      %v4400 = vld [vmem:[#allocation3 + $0x8] sm:$0xff]
      %v4401 = vld [vmem:[#allocation3 + $0x10] sm:$0x3]
      %v4405 = vcombine.high %v4399, %v4399
      %v4407 = vunpack.c.l.s4 1983009808
      %v4408 = vunpack.c.0.s8 %v4407
      %v4409 = vlaneseq
      %v4410 = vshrl.u32 %v4409, 7
      %v4411 = vsub.s32 %v4408, %v4410
      %v4412 = vrot.slane %v4399, %v4411
      %v4414 = vunpack.c.l.s4 1983009808
      %v4415 = vunpack.c.0.s8 %v4414
      %v4416 = vlaneseq
      %v4417 = vshrl.u32 %v4416, 7
      %v4418 = vsub.s32 %v4415, %v4417
      %v4419 = vrot.slane %v4405, %v4418
      %v4420 = vcombine.high %v4400, %v4400
      %v4422 = vunpack.c.l.s4 1983009808
      %v4423 = vunpack.c.0.s8 %v4422
      %v4424 = vlaneseq
      %v4425 = vshrl.u32 %v4424, 7
      %v4426 = vsub.s32 %v4423, %v4425
      %v4427 = vrot.slane %v4400, %v4426
      %v4429 = vunpack.c.l.s4 1983009808
      %v4430 = vunpack.c.0.s8 %v4429
      %v4431 = vlaneseq
      %v4432 = vshrl.u32 %v4431, 7
      %v4433 = vsub.s32 %v4430, %v4432
      %v4434 = vrot.slane %v4420, %v4433
      %v4436 = vunpack.c.l.s4 1983009808
      %v4437 = vunpack.c.0.s8 %v4436
      %v4438 = vlaneseq
      %v4439 = vshrl.u32 %v4438, 7
      %v4440 = vsub.s32 %v4437, %v4439
      %v4441 = vrot.slane %v4401, %v4440
      %4442 = vrot.lane.b32.xlu0 %v4412, 10
      %v4443 = vpop.permute.xlu0 %4442
      %4444 = vrot.lane.b32.xlu0 %v4419, 10
      %v4445 = vpop.permute.xlu0 %4444
      %4446 = vrot.lane.b32.xlu0 %v4427, 10
      %v4447 = vpop.permute.xlu0 %4446
      %4448 = vrot.lane.b32.xlu0 %v4434, 10
      %v4449 = vpop.permute.xlu0 %4448
      %4450 = vrot.lane.b32.xlu0 %v4441, 10
      %v4451 = vpop.permute.xlu0 %4450
      %v4452 = vrot.slane %v4443, 4
      %v4453 = vrot.slane %v4445, 4
      %v4454 = vrot.slane %v4447, 4
      %v4455 = vrot.slane %v4449, 4
      %v4456 = vrot.slane %v4451, 4
      %v4457 = vsel %vm3741, %v4452, %v4453
      %v4458 = vsel %vm1616, %v4443, %v4457
      %v4459 = vsel %vm3741, %v4453, %v4454
      %v4460 = vsel %vm1616, %v4445, %v4459
      %v4461 = vsel %vm3741, %v4454, %v4455
      %v4462 = vsel %vm1616, %v4447, %v4461
      %v4463 = vsel %vm3741, %v4455, %v4456
      %v4464 = vsel %vm1616, %v4449, %v4463
      %4469 = vst [vmem:[#allocation4 + $0x140] sm:$0x33] %v4458
      %4470 = vst [vmem:[#allocation4 + $0x148] sm:$0x33] %v4460
      %4471 = vst [vmem:[#allocation4 + $0x150] sm:$0x33] %v4462
      %4472 = vst.msk [vmem:[#allocation4 + $0x158] sm:$0x33] %vm3757, %v4464
      %v4473 = vld [vmem:[#allocation3] sm:$0xff]
      %v4474 = vld [vmem:[#allocation3 + $0x8] sm:$0xff]
      %v4475 = vld [vmem:[#allocation3 + $0x10] sm:$0x3]
      %v4479 = vcombine.high %v4473, %v4473
      %v4481 = vunpack.c.l.s4 1983009808
      %v4482 = vunpack.c.0.s8 %v4481
      %v4483 = vlaneseq
      %v4484 = vshrl.u32 %v4483, 7
      %v4485 = vsub.s32 %v4482, %v4484
      %v4486 = vrot.slane %v4473, %v4485
      %v4488 = vunpack.c.l.s4 1983009808
      %v4489 = vunpack.c.0.s8 %v4488
      %v4490 = vlaneseq
      %v4491 = vshrl.u32 %v4490, 7
      %v4492 = vsub.s32 %v4489, %v4491
      %v4493 = vrot.slane %v4479, %v4492
      %v4494 = vcombine.high %v4474, %v4474
      %v4496 = vunpack.c.l.s4 1983009808
      %v4497 = vunpack.c.0.s8 %v4496
      %v4498 = vlaneseq
      %v4499 = vshrl.u32 %v4498, 7
      %v4500 = vsub.s32 %v4497, %v4499
      %v4501 = vrot.slane %v4474, %v4500
      %v4503 = vunpack.c.l.s4 1983009808
      %v4504 = vunpack.c.0.s8 %v4503
      %v4505 = vlaneseq
      %v4506 = vshrl.u32 %v4505, 7
      %v4507 = vsub.s32 %v4504, %v4506
      %v4508 = vrot.slane %v4494, %v4507
      %v4510 = vunpack.c.l.s4 1983009808
      %v4511 = vunpack.c.0.s8 %v4510
      %v4512 = vlaneseq
      %v4513 = vshrl.u32 %v4512, 7
      %v4514 = vsub.s32 %v4511, %v4513
      %v4515 = vrot.slane %v4475, %v4514
      %4516 = vrot.lane.b32.xlu0 %v4486, 9
      %v4517 = vpop.permute.xlu0 %4516
      %4518 = vrot.lane.b32.xlu0 %v4493, 9
      %v4519 = vpop.permute.xlu0 %4518
      %4520 = vrot.lane.b32.xlu0 %v4501, 9
      %v4521 = vpop.permute.xlu0 %4520
      %4522 = vrot.lane.b32.xlu0 %v4508, 9
      %v4523 = vpop.permute.xlu0 %4522
      %4524 = vrot.lane.b32.xlu0 %v4515, 9
      %v4525 = vpop.permute.xlu0 %4524
      %v4526 = vrot.slane %v4517, 4
      %v4527 = vrot.slane %v4519, 4
      %v4528 = vrot.slane %v4521, 4
      %v4529 = vrot.slane %v4523, 4
      %v4530 = vrot.slane %v4525, 4
      %v4531 = vsel %vm3741, %v4526, %v4527
      %v4532 = vsel %vm1727, %v4517, %v4531
      %v4533 = vsel %vm3741, %v4527, %v4528
      %v4534 = vsel %vm1727, %v4519, %v4533
      %v4535 = vsel %vm3741, %v4528, %v4529
      %v4536 = vsel %vm1727, %v4521, %v4535
      %v4537 = vsel %vm3741, %v4529, %v4530
      %v4538 = vsel %vm1727, %v4523, %v4537
      %4543 = vst [vmem:[#allocation4 + $0x160] sm:$0x33] %v4532
      %4544 = vst [vmem:[#allocation4 + $0x168] sm:$0x33] %v4534
      %4545 = vst [vmem:[#allocation4 + $0x170] sm:$0x33] %v4536
      %4546 = vst.msk [vmem:[#allocation4 + $0x178] sm:$0x33] %vm3757, %v4538
      %v4547 = vld [vmem:[#allocation3] sm:$0xff]
      %v4548 = vld [vmem:[#allocation3 + $0x8] sm:$0xff]
      %v4549 = vld [vmem:[#allocation3 + $0x10] sm:$0x3]
      %v4553 = vcombine.high %v4547, %v4547
      %v4555 = vunpack.c.l.s4 1983009808
      %v4556 = vunpack.c.0.s8 %v4555
      %v4557 = vlaneseq
      %v4558 = vshrl.u32 %v4557, 7
      %v4559 = vsub.s32 %v4556, %v4558
      %v4560 = vrot.slane %v4547, %v4559
      %v4562 = vunpack.c.l.s4 1983009808
      %v4563 = vunpack.c.0.s8 %v4562
      %v4564 = vlaneseq
      %v4565 = vshrl.u32 %v4564, 7
      %v4566 = vsub.s32 %v4563, %v4565
      %v4567 = vrot.slane %v4553, %v4566
      %v4568 = vcombine.high %v4548, %v4548
      %v4570 = vunpack.c.l.s4 1983009808
      %v4571 = vunpack.c.0.s8 %v4570
      %v4572 = vlaneseq
      %v4573 = vshrl.u32 %v4572, 7
      %v4574 = vsub.s32 %v4571, %v4573
      %v4575 = vrot.slane %v4548, %v4574
      %v4577 = vunpack.c.l.s4 1983009808
      %v4578 = vunpack.c.0.s8 %v4577
      %v4579 = vlaneseq
      %v4580 = vshrl.u32 %v4579, 7
      %v4581 = vsub.s32 %v4578, %v4580
      %v4582 = vrot.slane %v4568, %v4581
      %v4584 = vunpack.c.l.s4 1983009808
      %v4585 = vunpack.c.0.s8 %v4584
      %v4586 = vlaneseq
      %v4587 = vshrl.u32 %v4586, 7
      %v4588 = vsub.s32 %v4585, %v4587
      %v4589 = vrot.slane %v4549, %v4588
      %4590 = vrot.lane.b32.xlu0 %v4560, 1
      %v4591 = vpop.permute.xlu0 %4590
      %4592 = vrot.lane.b32.xlu0 %v4567, 1
      %v4593 = vpop.permute.xlu0 %4592
      %4594 = vrot.lane.b32.xlu0 %v4575, 1
      %v4595 = vpop.permute.xlu0 %4594
      %4596 = vrot.lane.b32.xlu0 %v4582, 1
      %v4597 = vpop.permute.xlu0 %4596
      %4598 = vrot.lane.b32.xlu0 %v4589, 1
      %v4599 = vpop.permute.xlu0 %4598
      %v4600 = vrot.slane %v4591, 4
      %v4601 = vrot.slane %v4593, 4
      %v4602 = vrot.slane %v4595, 4
      %v4603 = vrot.slane %v4597, 4
      %v4604 = vrot.slane %v4599, 4
      %v4605 = vsel %vm3741, %v4600, %v4601
      %v4606 = vsel %vm1837, %v4591, %v4605
      %v4607 = vsel %vm3741, %v4601, %v4602
      %v4608 = vsel %vm1837, %v4593, %v4607
      %v4609 = vsel %vm3741, %v4602, %v4603
      %v4610 = vsel %vm1837, %v4595, %v4609
      %v4611 = vsel %vm3741, %v4603, %v4604
      %v4612 = vsel %vm1837, %v4597, %v4611
      %4617 = vst [vmem:[#allocation4 + $0x180] sm:$0x33] %v4606
      %4618 = vst [vmem:[#allocation4 + $0x188] sm:$0x33] %v4608
      %4619 = vst [vmem:[#allocation4 + $0x190] sm:$0x33] %v4610
      %4620 = vst.msk [vmem:[#allocation4 + $0x198] sm:$0x33] %vm3757, %v4612
      %v4621 = vld [vmem:[#allocation3 + $0x2] sm:$0xff]
      %v4622 = vld [vmem:[#allocation3 + $0xa] sm:$0xff]
      %v4625 = vcombine.high %v4621, %v4621
      %v4627 = vunpack.c.l.s4 1983009808
      %v4628 = vunpack.c.0.s8 %v4627
      %v4629 = vlaneseq
      %v4630 = vshrl.u32 %v4629, 7
      %v4631 = vsub.s32 %v4628, %v4630
      %v4632 = vrot.slane %v4621, %v4631
      %v4634 = vunpack.c.l.s4 1983009808
      %v4635 = vunpack.c.0.s8 %v4634
      %v4636 = vlaneseq
      %v4637 = vshrl.u32 %v4636, 7
      %v4638 = vsub.s32 %v4635, %v4637
      %v4639 = vrot.slane %v4625, %v4638
      %v4640 = vcombine.high %v4622, %v4622
      %v4642 = vunpack.c.l.s4 1983009808
      %v4643 = vunpack.c.0.s8 %v4642
      %v4644 = vlaneseq
      %v4645 = vshrl.u32 %v4644, 7
      %v4646 = vsub.s32 %v4643, %v4645
      %v4647 = vrot.slane %v4622, %v4646
      %v4649 = vunpack.c.l.s4 1983009808
      %v4650 = vunpack.c.0.s8 %v4649
      %v4651 = vlaneseq
      %v4652 = vshrl.u32 %v4651, 7
      %v4653 = vsub.s32 %v4650, %v4652
      %v4654 = vrot.slane %v4640, %v4653
      %4659 = vst [vmem:[#allocation4 + $0x1a0] sm:$0x33] %v4632
      %4660 = vst [vmem:[#allocation4 + $0x1a8] sm:$0x33] %v4639
      %4661 = vst [vmem:[#allocation4 + $0x1b0] sm:$0x33] %v4647
      %4662 = vst.msk [vmem:[#allocation4 + $0x1b8] sm:$0x33] %vm3757, %v4654
      %v4663 = vld [vmem:[#allocation3 + $0x2] sm:$0xff]
      %v4664 = vld [vmem:[#allocation3 + $0xa] sm:$0xff]
      %v4667 = vcombine.high %v4663, %v4663
      %v4669 = vunpack.c.l.s4 1983009808
      %v4670 = vunpack.c.0.s8 %v4669
      %v4671 = vlaneseq
      %v4672 = vshrl.u32 %v4671, 7
      %v4673 = vsub.s32 %v4670, %v4672
      %v4674 = vrot.slane %v4663, %v4673
      %v4676 = vunpack.c.l.s4 1983009808
      %v4677 = vunpack.c.0.s8 %v4676
      %v4678 = vlaneseq
      %v4679 = vshrl.u32 %v4678, 7
      %v4680 = vsub.s32 %v4677, %v4679
      %v4681 = vrot.slane %v4667, %v4680
      %v4682 = vcombine.high %v4664, %v4664
      %v4684 = vunpack.c.l.s4 1983009808
      %v4685 = vunpack.c.0.s8 %v4684
      %v4686 = vlaneseq
      %v4687 = vshrl.u32 %v4686, 7
      %v4688 = vsub.s32 %v4685, %v4687
      %v4689 = vrot.slane %v4664, %v4688
      %v4691 = vunpack.c.l.s4 1983009808
      %v4692 = vunpack.c.0.s8 %v4691
      %v4693 = vlaneseq
      %v4694 = vshrl.u32 %v4693, 7
      %v4695 = vsub.s32 %v4692, %v4694
      %v4696 = vrot.slane %v4682, %v4695
      %4697 = vrot.lane.b32.xlu0 %v4674, 127
      %v4698 = vpop.permute.xlu0 %4697
      %4699 = vrot.lane.b32.xlu0 %v4681, 127
      %v4700 = vpop.permute.xlu0 %4699
      %4701 = vrot.lane.b32.xlu0 %v4689, 127
      %v4702 = vpop.permute.xlu0 %4701
      %4703 = vrot.lane.b32.xlu0 %v4696, 127
      %v4704 = vpop.permute.xlu0 %4703
      %v4705 = vrot.slane %v4698, 4
      %v4706 = vrot.slane %v4700, 4
      %v4707 = vrot.slane %v4702, 4
      %v4708 = vrot.slane %v4704, 4
      %v4709 = vsel %vm3741, %v4705, %v4706
      %v4710 = vsel %vm1996, %v4698, %v4709
      %v4711 = vsel %vm3741, %v4706, %v4707
      %v4712 = vsel %vm1996, %v4700, %v4711
      %v4713 = vsel %vm3741, %v4707, %v4708
      %v4714 = vsel %vm1996, %v4702, %v4713
      %v4715 = vsel %vm1996, %v4704, %v4708
      %4720 = vst [vmem:[#allocation4 + $0x1c0] sm:$0x33] %v4710
      %4721 = vst [vmem:[#allocation4 + $0x1c8] sm:$0x33] %v4712
      %4722 = vst [vmem:[#allocation4 + $0x1d0] sm:$0x33] %v4714
      %4723 = vst.msk [vmem:[#allocation4 + $0x1d8] sm:$0x33] %vm3757, %v4715
      %v4724 = vld [vmem:[#allocation3 + $0x2] sm:$0xff]
      %v4725 = vld [vmem:[#allocation3 + $0xa] sm:$0xff]
      %v4728 = vcombine.high %v4724, %v4724
      %v4730 = vunpack.c.l.s4 1983009808
      %v4731 = vunpack.c.0.s8 %v4730
      %v4732 = vlaneseq
      %v4733 = vshrl.u32 %v4732, 7
      %v4734 = vsub.s32 %v4731, %v4733
      %v4735 = vrot.slane %v4724, %v4734
      %v4737 = vunpack.c.l.s4 1983009808
      %v4738 = vunpack.c.0.s8 %v4737
      %v4739 = vlaneseq
      %v4740 = vshrl.u32 %v4739, 7
      %v4741 = vsub.s32 %v4738, %v4740
      %v4742 = vrot.slane %v4728, %v4741
      %v4743 = vcombine.high %v4725, %v4725
      %v4745 = vunpack.c.l.s4 1983009808
      %v4746 = vunpack.c.0.s8 %v4745
      %v4747 = vlaneseq
      %v4748 = vshrl.u32 %v4747, 7
      %v4749 = vsub.s32 %v4746, %v4748
      %v4750 = vrot.slane %v4725, %v4749
      %v4752 = vunpack.c.l.s4 1983009808
      %v4753 = vunpack.c.0.s8 %v4752
      %v4754 = vlaneseq
      %v4755 = vshrl.u32 %v4754, 7
      %v4756 = vsub.s32 %v4753, %v4755
      %v4757 = vrot.slane %v4743, %v4756
      %4758 = vrot.lane.b32.xlu0 %v4735, 119
      %v4759 = vpop.permute.xlu0 %4758
      %4760 = vrot.lane.b32.xlu0 %v4742, 119
      %v4761 = vpop.permute.xlu0 %4760
      %4762 = vrot.lane.b32.xlu0 %v4750, 119
      %v4763 = vpop.permute.xlu0 %4762
      %4764 = vrot.lane.b32.xlu0 %v4757, 119
      %v4765 = vpop.permute.xlu0 %4764
      %v4766 = vrot.slane %v4759, 4
      %v4767 = vrot.slane %v4761, 4
      %v4768 = vrot.slane %v4763, 4
      %v4769 = vrot.slane %v4765, 4
      %v4770 = vsel %vm3741, %v4766, %v4767
      %v4771 = vsel %vm2087, %v4759, %v4770
      %v4772 = vsel %vm3741, %v4767, %v4768
      %v4773 = vsel %vm2087, %v4761, %v4772
      %v4774 = vsel %vm3741, %v4768, %v4769
      %v4775 = vsel %vm2087, %v4763, %v4774
      %v4776 = vsel %vm2087, %v4765, %v4769
      %4781 = vst [vmem:[#allocation4 + $0x1e0] sm:$0x33] %v4771
      %4782 = vst [vmem:[#allocation4 + $0x1e8] sm:$0x33] %v4773
      %4783 = vst [vmem:[#allocation4 + $0x1f0] sm:$0x33] %v4775
      %4784 = vst.msk [vmem:[#allocation4 + $0x1f8] sm:$0x33] %vm3757, %v4776
      %v4785 = vld [vmem:[#allocation3 + $0x2] sm:$0xff]
      %v4786 = vld [vmem:[#allocation3 + $0xa] sm:$0xff]
      %v4789 = vcombine.high %v4785, %v4785
      %v4791 = vunpack.c.l.s4 1983009808
      %v4792 = vunpack.c.0.s8 %v4791
      %v4793 = vlaneseq
      %v4794 = vshrl.u32 %v4793, 7
      %v4795 = vsub.s32 %v4792, %v4794
      %v4796 = vrot.slane %v4785, %v4795
      %v4798 = vunpack.c.l.s4 1983009808
      %v4799 = vunpack.c.0.s8 %v4798
      %v4800 = vlaneseq
      %v4801 = vshrl.u32 %v4800, 7
      %v4802 = vsub.s32 %v4799, %v4801
      %v4803 = vrot.slane %v4789, %v4802
      %v4804 = vcombine.high %v4786, %v4786
      %v4806 = vunpack.c.l.s4 1983009808
      %v4807 = vunpack.c.0.s8 %v4806
      %v4808 = vlaneseq
      %v4809 = vshrl.u32 %v4808, 7
      %v4810 = vsub.s32 %v4807, %v4809
      %v4811 = vrot.slane %v4786, %v4810
      %v4813 = vunpack.c.l.s4 1983009808
      %v4814 = vunpack.c.0.s8 %v4813
      %v4815 = vlaneseq
      %v4816 = vshrl.u32 %v4815, 7
      %v4817 = vsub.s32 %v4814, %v4816
      %v4818 = vrot.slane %v4804, %v4817
      %4819 = vrot.lane.b32.xlu0 %v4796, 118
      %v4820 = vpop.permute.xlu0 %4819
      %4821 = vrot.lane.b32.xlu0 %v4803, 118
      %v4822 = vpop.permute.xlu0 %4821
      %4823 = vrot.lane.b32.xlu0 %v4811, 118
      %v4824 = vpop.permute.xlu0 %4823
      %4825 = vrot.lane.b32.xlu0 %v4818, 118
      %v4826 = vpop.permute.xlu0 %4825
      %v4827 = vrot.slane %v4820, 4
      %v4828 = vrot.slane %v4822, 4
      %v4829 = vrot.slane %v4824, 4
      %v4830 = vrot.slane %v4826, 4
      %v4831 = vsel %vm3741, %v4827, %v4828
      %v4832 = vsel %vm2178, %v4820, %v4831
      %v4833 = vsel %vm3741, %v4828, %v4829
      %v4834 = vsel %vm2178, %v4822, %v4833
      %v4835 = vsel %vm3741, %v4829, %v4830
      %v4836 = vsel %vm2178, %v4824, %v4835
      %v4837 = vsel %vm2178, %v4826, %v4830
      %4842 = vst [vmem:[#allocation4 + $0x200] sm:$0x33] %v4832
      %4843 = vst [vmem:[#allocation4 + $0x208] sm:$0x33] %v4834
      %4844 = vst [vmem:[#allocation4 + $0x210] sm:$0x33] %v4836
      %4845 = vst.msk [vmem:[#allocation4 + $0x218] sm:$0x33] %vm3757, %v4837
      %v4846 = vld [vmem:[#allocation3 + $0x2] sm:$0xff]
      %v4847 = vld [vmem:[#allocation3 + $0xa] sm:$0xff]
      %v4850 = vcombine.high %v4846, %v4846
      %v4852 = vunpack.c.l.s4 1983009808
      %v4853 = vunpack.c.0.s8 %v4852
      %v4854 = vlaneseq
      %v4855 = vshrl.u32 %v4854, 7
      %v4856 = vsub.s32 %v4853, %v4855
      %v4857 = vrot.slane %v4846, %v4856
      %v4859 = vunpack.c.l.s4 1983009808
      %v4860 = vunpack.c.0.s8 %v4859
      %v4861 = vlaneseq
      %v4862 = vshrl.u32 %v4861, 7
      %v4863 = vsub.s32 %v4860, %v4862
      %v4864 = vrot.slane %v4850, %v4863
      %v4865 = vcombine.high %v4847, %v4847
      %v4867 = vunpack.c.l.s4 1983009808
      %v4868 = vunpack.c.0.s8 %v4867
      %v4869 = vlaneseq
      %v4870 = vshrl.u32 %v4869, 7
      %v4871 = vsub.s32 %v4868, %v4870
      %v4872 = vrot.slane %v4847, %v4871
      %v4874 = vunpack.c.l.s4 1983009808
      %v4875 = vunpack.c.0.s8 %v4874
      %v4876 = vlaneseq
      %v4877 = vshrl.u32 %v4876, 7
      %v4878 = vsub.s32 %v4875, %v4877
      %v4879 = vrot.slane %v4865, %v4878
      %4880 = vrot.lane.b32.xlu0 %v4857, 117
      %v4881 = vpop.permute.xlu0 %4880
      %4882 = vrot.lane.b32.xlu0 %v4864, 117
      %v4883 = vpop.permute.xlu0 %4882
      %4884 = vrot.lane.b32.xlu0 %v4872, 117
      %v4885 = vpop.permute.xlu0 %4884
      %4886 = vrot.lane.b32.xlu0 %v4879, 117
      %v4887 = vpop.permute.xlu0 %4886
      %v4888 = vrot.slane %v4881, 4
      %v4889 = vrot.slane %v4883, 4
      %v4890 = vrot.slane %v4885, 4
      %v4891 = vrot.slane %v4887, 4
      %v4892 = vsel %vm3741, %v4888, %v4889
      %v4893 = vsel %vm2269, %v4881, %v4892
      %v4894 = vsel %vm3741, %v4889, %v4890
      %v4895 = vsel %vm2269, %v4883, %v4894
      %v4896 = vsel %vm3741, %v4890, %v4891
      %v4897 = vsel %vm2269, %v4885, %v4896
      %v4898 = vsel %vm2269, %v4887, %v4891
      %4903 = vst [vmem:[#allocation4 + $0x220] sm:$0x33] %v4893
      %4904 = vst [vmem:[#allocation4 + $0x228] sm:$0x33] %v4895
      %4905 = vst [vmem:[#allocation4 + $0x230] sm:$0x33] %v4897
      %4906 = vst.msk [vmem:[#allocation4 + $0x238] sm:$0x33] %vm3757, %v4898
      %v4907 = vld [vmem:[#allocation3 + $0x2] sm:$0xff]
      %v4908 = vld [vmem:[#allocation3 + $0xa] sm:$0xff]
      %v4909 = vld [vmem:[#allocation3 + $0x12] sm:$0x3]
      %v4913 = vcombine.high %v4907, %v4907
      %v4915 = vunpack.c.l.s4 1983009808
      %v4916 = vunpack.c.0.s8 %v4915
      %v4917 = vlaneseq
      %v4918 = vshrl.u32 %v4917, 7
      %v4919 = vsub.s32 %v4916, %v4918
      %v4920 = vrot.slane %v4907, %v4919
      %v4922 = vunpack.c.l.s4 1983009808
      %v4923 = vunpack.c.0.s8 %v4922
      %v4924 = vlaneseq
      %v4925 = vshrl.u32 %v4924, 7
      %v4926 = vsub.s32 %v4923, %v4925
      %v4927 = vrot.slane %v4913, %v4926
      %v4928 = vcombine.high %v4908, %v4908
      %v4930 = vunpack.c.l.s4 1983009808
      %v4931 = vunpack.c.0.s8 %v4930
      %v4932 = vlaneseq
      %v4933 = vshrl.u32 %v4932, 7
      %v4934 = vsub.s32 %v4931, %v4933
      %v4935 = vrot.slane %v4908, %v4934
      %v4937 = vunpack.c.l.s4 1983009808
      %v4938 = vunpack.c.0.s8 %v4937
      %v4939 = vlaneseq
      %v4940 = vshrl.u32 %v4939, 7
      %v4941 = vsub.s32 %v4938, %v4940
      %v4942 = vrot.slane %v4928, %v4941
      %v4944 = vunpack.c.l.s4 1983009808
      %v4945 = vunpack.c.0.s8 %v4944
      %v4946 = vlaneseq
      %v4947 = vshrl.u32 %v4946, 7
      %v4948 = vsub.s32 %v4945, %v4947
      %v4949 = vrot.slane %v4909, %v4948
      %4950 = vrot.lane.b32.xlu0 %v4920, 39
      %v4951 = vpop.permute.xlu0 %4950
      %4952 = vrot.lane.b32.xlu0 %v4927, 39
      %v4953 = vpop.permute.xlu0 %4952
      %4954 = vrot.lane.b32.xlu0 %v4935, 39
      %v4955 = vpop.permute.xlu0 %4954
      %4956 = vrot.lane.b32.xlu0 %v4942, 39
      %v4957 = vpop.permute.xlu0 %4956
      %4958 = vrot.lane.b32.xlu0 %v4949, 39
      %v4959 = vpop.permute.xlu0 %4958
      %v4960 = vrot.slane %v4951, 4
      %v4961 = vrot.slane %v4953, 4
      %v4962 = vrot.slane %v4955, 4
      %v4963 = vrot.slane %v4957, 4
      %v4964 = vrot.slane %v4959, 4
      %v4965 = vsel %vm3741, %v4960, %v4961
      %v4966 = vsel %vm2378, %v4951, %v4965
      %v4967 = vsel %vm3741, %v4961, %v4962
      %v4968 = vsel %vm2378, %v4953, %v4967
      %v4969 = vsel %vm3741, %v4962, %v4963
      %v4970 = vsel %vm2378, %v4955, %v4969
      %v4971 = vsel %vm3741, %v4963, %v4964
      %v4972 = vsel %vm2378, %v4957, %v4971
      %4977 = vst [vmem:[#allocation4 + $0x240] sm:$0x33] %v4966
      %4978 = vst [vmem:[#allocation4 + $0x248] sm:$0x33] %v4968
      %4979 = vst [vmem:[#allocation4 + $0x250] sm:$0x33] %v4970
      %4980 = vst.msk [vmem:[#allocation4 + $0x258] sm:$0x33] %vm3757, %v4972
      %v4981 = vld [vmem:[#allocation3 + $0x2] sm:$0xff]
      %v4982 = vld [vmem:[#allocation3 + $0xa] sm:$0xff]
      %v4983 = vld [vmem:[#allocation3 + $0x12] sm:$0x3]
      %v4987 = vcombine.high %v4981, %v4981
      %v4989 = vunpack.c.l.s4 1983009808
      %v4990 = vunpack.c.0.s8 %v4989
      %v4991 = vlaneseq
      %v4992 = vshrl.u32 %v4991, 7
      %v4993 = vsub.s32 %v4990, %v4992
      %v4994 = vrot.slane %v4981, %v4993
      %v4996 = vunpack.c.l.s4 1983009808
      %v4997 = vunpack.c.0.s8 %v4996
      %v4998 = vlaneseq
      %v4999 = vshrl.u32 %v4998, 7
      %v5000 = vsub.s32 %v4997, %v4999
      %v5001 = vrot.slane %v4987, %v5000
      %v5002 = vcombine.high %v4982, %v4982
      %v5004 = vunpack.c.l.s4 1983009808
      %v5005 = vunpack.c.0.s8 %v5004
      %v5006 = vlaneseq
      %v5007 = vshrl.u32 %v5006, 7
      %v5008 = vsub.s32 %v5005, %v5007
      %v5009 = vrot.slane %v4982, %v5008
      %v5011 = vunpack.c.l.s4 1983009808
      %v5012 = vunpack.c.0.s8 %v5011
      %v5013 = vlaneseq
      %v5014 = vshrl.u32 %v5013, 7
      %v5015 = vsub.s32 %v5012, %v5014
      %v5016 = vrot.slane %v5002, %v5015
      %v5018 = vunpack.c.l.s4 1983009808
      %v5019 = vunpack.c.0.s8 %v5018
      %v5020 = vlaneseq
      %v5021 = vshrl.u32 %v5020, 7
      %v5022 = vsub.s32 %v5019, %v5021
      %v5023 = vrot.slane %v4983, %v5022
      %5024 = vrot.lane.b32.xlu0 %v4994, 38
      %v5025 = vpop.permute.xlu0 %5024
      %5026 = vrot.lane.b32.xlu0 %v5001, 38
      %v5027 = vpop.permute.xlu0 %5026
      %5028 = vrot.lane.b32.xlu0 %v5009, 38
      %v5029 = vpop.permute.xlu0 %5028
      %5030 = vrot.lane.b32.xlu0 %v5016, 38
      %v5031 = vpop.permute.xlu0 %5030
      %5032 = vrot.lane.b32.xlu0 %v5023, 38
      %v5033 = vpop.permute.xlu0 %5032
      %v5034 = vrot.slane %v5025, 4
      %v5035 = vrot.slane %v5027, 4
      %v5036 = vrot.slane %v5029, 4
      %v5037 = vrot.slane %v5031, 4
      %v5038 = vrot.slane %v5033, 4
      %v5039 = vsel %vm3741, %v5034, %v5035
      %v5040 = vsel %vm2489, %v5025, %v5039
      %v5041 = vsel %vm3741, %v5035, %v5036
      %v5042 = vsel %vm2489, %v5027, %v5041
      %v5043 = vsel %vm3741, %v5036, %v5037
      %v5044 = vsel %vm2489, %v5029, %v5043
      %v5045 = vsel %vm3741, %v5037, %v5038
      %v5046 = vsel %vm2489, %v5031, %v5045
      %5051 = vst [vmem:[#allocation4 + $0x260] sm:$0x33] %v5040
      %5052 = vst [vmem:[#allocation4 + $0x268] sm:$0x33] %v5042
      %5053 = vst [vmem:[#allocation4 + $0x270] sm:$0x33] %v5044
      %5054 = vst.msk [vmem:[#allocation4 + $0x278] sm:$0x33] %vm3757, %v5046
      %v5055 = vld [vmem:[#allocation3 + $0x2] sm:$0xff]
      %v5056 = vld [vmem:[#allocation3 + $0xa] sm:$0xff]
      %v5057 = vld [vmem:[#allocation3 + $0x12] sm:$0x3]
      %v5061 = vcombine.high %v5055, %v5055
      %v5063 = vunpack.c.l.s4 1983009808
      %v5064 = vunpack.c.0.s8 %v5063
      %v5065 = vlaneseq
      %v5066 = vshrl.u32 %v5065, 7
      %v5067 = vsub.s32 %v5064, %v5066
      %v5068 = vrot.slane %v5055, %v5067
      %v5070 = vunpack.c.l.s4 1983009808
      %v5071 = vunpack.c.0.s8 %v5070
      %v5072 = vlaneseq
      %v5073 = vshrl.u32 %v5072, 7
      %v5074 = vsub.s32 %v5071, %v5073
      %v5075 = vrot.slane %v5061, %v5074
      %v5076 = vcombine.high %v5056, %v5056
      %v5078 = vunpack.c.l.s4 1983009808
      %v5079 = vunpack.c.0.s8 %v5078
      %v5080 = vlaneseq
      %v5081 = vshrl.u32 %v5080, 7
      %v5082 = vsub.s32 %v5079, %v5081
      %v5083 = vrot.slane %v5056, %v5082
      %v5085 = vunpack.c.l.s4 1983009808
      %v5086 = vunpack.c.0.s8 %v5085
      %v5087 = vlaneseq
      %v5088 = vshrl.u32 %v5087, 7
      %v5089 = vsub.s32 %v5086, %v5088
      %v5090 = vrot.slane %v5076, %v5089
      %v5092 = vunpack.c.l.s4 1983009808
      %v5093 = vunpack.c.0.s8 %v5092
      %v5094 = vlaneseq
      %v5095 = vshrl.u32 %v5094, 7
      %v5096 = vsub.s32 %v5093, %v5095
      %v5097 = vrot.slane %v5057, %v5096
      %5098 = vrot.lane.b32.xlu0 %v5068, 37
      %v5099 = vpop.permute.xlu0 %5098
      %5100 = vrot.lane.b32.xlu0 %v5075, 37
      %v5101 = vpop.permute.xlu0 %5100
      %5102 = vrot.lane.b32.xlu0 %v5083, 37
      %v5103 = vpop.permute.xlu0 %5102
      %5104 = vrot.lane.b32.xlu0 %v5090, 37
      %v5105 = vpop.permute.xlu0 %5104
      %5106 = vrot.lane.b32.xlu0 %v5097, 37
      %v5107 = vpop.permute.xlu0 %5106
      %v5108 = vrot.slane %v5099, 4
      %v5109 = vrot.slane %v5101, 4
      %v5110 = vrot.slane %v5103, 4
      %v5111 = vrot.slane %v5105, 4
      %v5112 = vrot.slane %v5107, 4
      %v5113 = vsel %vm3741, %v5108, %v5109
      %v5114 = vsel %vm2599, %v5099, %v5113
      %v5115 = vsel %vm3741, %v5109, %v5110
      %v5116 = vsel %vm2599, %v5101, %v5115
      %v5117 = vsel %vm3741, %v5110, %v5111
      %v5118 = vsel %vm2599, %v5103, %v5117
      %v5119 = vsel %vm3741, %v5111, %v5112
      %v5120 = vsel %vm2599, %v5105, %v5119
      %5125 = vst [vmem:[#allocation4 + $0x280] sm:$0x33] %v5114
      %5126 = vst [vmem:[#allocation4 + $0x288] sm:$0x33] %v5116
      %5127 = vst [vmem:[#allocation4 + $0x290] sm:$0x33] %v5118
      %5128 = vst.msk [vmem:[#allocation4 + $0x298] sm:$0x33] %vm3757, %v5120
      %v5129 = vld [vmem:[#allocation3 + $0x2] sm:$0xff]
      %v5130 = vld [vmem:[#allocation3 + $0xa] sm:$0xff]
      %v5131 = vld [vmem:[#allocation3 + $0x12] sm:$0x3]
      %v5135 = vcombine.high %v5129, %v5129
      %v5137 = vunpack.c.l.s4 1983009808
      %v5138 = vunpack.c.0.s8 %v5137
      %v5139 = vlaneseq
      %v5140 = vshrl.u32 %v5139, 7
      %v5141 = vsub.s32 %v5138, %v5140
      %v5142 = vrot.slane %v5129, %v5141
      %v5144 = vunpack.c.l.s4 1983009808
      %v5145 = vunpack.c.0.s8 %v5144
      %v5146 = vlaneseq
      %v5147 = vshrl.u32 %v5146, 7
      %v5148 = vsub.s32 %v5145, %v5147
      %v5149 = vrot.slane %v5135, %v5148
      %v5150 = vcombine.high %v5130, %v5130
      %v5152 = vunpack.c.l.s4 1983009808
      %v5153 = vunpack.c.0.s8 %v5152
      %v5154 = vlaneseq
      %v5155 = vshrl.u32 %v5154, 7
      %v5156 = vsub.s32 %v5153, %v5155
      %v5157 = vrot.slane %v5130, %v5156
      %v5159 = vunpack.c.l.s4 1983009808
      %v5160 = vunpack.c.0.s8 %v5159
      %v5161 = vlaneseq
      %v5162 = vshrl.u32 %v5161, 7
      %v5163 = vsub.s32 %v5160, %v5162
      %v5164 = vrot.slane %v5150, %v5163
      %v5166 = vunpack.c.l.s4 1983009808
      %v5167 = vunpack.c.0.s8 %v5166
      %v5168 = vlaneseq
      %v5169 = vshrl.u32 %v5168, 7
      %v5170 = vsub.s32 %v5167, %v5169
      %v5171 = vrot.slane %v5131, %v5170
      %5172 = vrot.lane.b32.xlu0 %v5142, 29
      %v5173 = vpop.permute.xlu0 %5172
      %5174 = vrot.lane.b32.xlu0 %v5149, 29
      %v5175 = vpop.permute.xlu0 %5174
      %5176 = vrot.lane.b32.xlu0 %v5157, 29
      %v5177 = vpop.permute.xlu0 %5176
      %5178 = vrot.lane.b32.xlu0 %v5164, 29
      %v5179 = vpop.permute.xlu0 %5178
      %5180 = vrot.lane.b32.xlu0 %v5171, 29
      %v5181 = vpop.permute.xlu0 %5180
      %v5182 = vrot.slane %v5173, 4
      %v5183 = vrot.slane %v5175, 4
      %v5184 = vrot.slane %v5177, 4
      %v5185 = vrot.slane %v5179, 4
      %v5186 = vrot.slane %v5181, 4
      %v5187 = vsel %vm3741, %v5182, %v5183
      %v5188 = vsel %vm2710, %v5173, %v5187
      %v5189 = vsel %vm3741, %v5183, %v5184
      %v5190 = vsel %vm2710, %v5175, %v5189
      %v5191 = vsel %vm3741, %v5184, %v5185
      %v5192 = vsel %vm2710, %v5177, %v5191
      %v5193 = vsel %vm3741, %v5185, %v5186
      %v5194 = vsel %vm2710, %v5179, %v5193
      %5199 = vst [vmem:[#allocation4 + $0x2a0] sm:$0x33] %v5188
      %5200 = vst [vmem:[#allocation4 + $0x2a8] sm:$0x33] %v5190
      %5201 = vst [vmem:[#allocation4 + $0x2b0] sm:$0x33] %v5192
      %5202 = vst.msk [vmem:[#allocation4 + $0x2b8] sm:$0x33] %vm3757, %v5194
      %v5203 = vld [vmem:[#allocation3 + $0x2] sm:$0xff]
      %v5204 = vld [vmem:[#allocation3 + $0xa] sm:$0xff]
      %v5205 = vld [vmem:[#allocation3 + $0x12] sm:$0x3]
      %v5209 = vcombine.high %v5203, %v5203
      %v5211 = vunpack.c.l.s4 1983009808
      %v5212 = vunpack.c.0.s8 %v5211
      %v5213 = vlaneseq
      %v5214 = vshrl.u32 %v5213, 7
      %v5215 = vsub.s32 %v5212, %v5214
      %v5216 = vrot.slane %v5203, %v5215
      %v5218 = vunpack.c.l.s4 1983009808
      %v5219 = vunpack.c.0.s8 %v5218
      %v5220 = vlaneseq
      %v5221 = vshrl.u32 %v5220, 7
      %v5222 = vsub.s32 %v5219, %v5221
      %v5223 = vrot.slane %v5209, %v5222
      %v5224 = vcombine.high %v5204, %v5204
      %v5226 = vunpack.c.l.s4 1983009808
      %v5227 = vunpack.c.0.s8 %v5226
      %v5228 = vlaneseq
      %v5229 = vshrl.u32 %v5228, 7
      %v5230 = vsub.s32 %v5227, %v5229
      %v5231 = vrot.slane %v5204, %v5230
      %v5233 = vunpack.c.l.s4 1983009808
      %v5234 = vunpack.c.0.s8 %v5233
      %v5235 = vlaneseq
      %v5236 = vshrl.u32 %v5235, 7
      %v5237 = vsub.s32 %v5234, %v5236
      %v5238 = vrot.slane %v5224, %v5237
      %v5240 = vunpack.c.l.s4 1983009808
      %v5241 = vunpack.c.0.s8 %v5240
      %v5242 = vlaneseq
      %v5243 = vshrl.u32 %v5242, 7
      %v5244 = vsub.s32 %v5241, %v5243
      %v5245 = vrot.slane %v5205, %v5244
      %5246 = vrot.lane.b32.xlu0 %v5216, 28
      %v5247 = vpop.permute.xlu0 %5246
      %5248 = vrot.lane.b32.xlu0 %v5223, 28
      %v5249 = vpop.permute.xlu0 %5248
      %5250 = vrot.lane.b32.xlu0 %v5231, 28
      %v5251 = vpop.permute.xlu0 %5250
      %5252 = vrot.lane.b32.xlu0 %v5238, 28
      %v5253 = vpop.permute.xlu0 %5252
      %5254 = vrot.lane.b32.xlu0 %v5245, 28
      %v5255 = vpop.permute.xlu0 %5254
      %v5256 = vrot.slane %v5247, 4
      %v5257 = vrot.slane %v5249, 4
      %v5258 = vrot.slane %v5251, 4
      %v5259 = vrot.slane %v5253, 4
      %v5260 = vrot.slane %v5255, 4
      %v5261 = vsel %vm3741, %v5256, %v5257
      %v5262 = vsel %vm2820, %v5247, %v5261
      %v5263 = vsel %vm3741, %v5257, %v5258
      %v5264 = vsel %vm2820, %v5249, %v5263
      %v5265 = vsel %vm3741, %v5258, %v5259
      %v5266 = vsel %vm2820, %v5251, %v5265
      %v5267 = vsel %vm3741, %v5259, %v5260
      %v5268 = vsel %vm2820, %v5253, %v5267
      %5273 = vst [vmem:[#allocation4 + $0x2c0] sm:$0x33] %v5262
      %5274 = vst [vmem:[#allocation4 + $0x2c8] sm:$0x33] %v5264
      %5275 = vst [vmem:[#allocation4 + $0x2d0] sm:$0x33] %v5266
      %5276 = vst.msk [vmem:[#allocation4 + $0x2d8] sm:$0x33] %vm3757, %v5268
      %v5277 = vld [vmem:[#allocation3 + $0x2] sm:$0xff]
      %v5278 = vld [vmem:[#allocation3 + $0xa] sm:$0xff]
      %v5279 = vld [vmem:[#allocation3 + $0x12] sm:$0x3]
      %v5283 = vcombine.high %v5277, %v5277
      %v5285 = vunpack.c.l.s4 1983009808
      %v5286 = vunpack.c.0.s8 %v5285
      %v5287 = vlaneseq
      %v5288 = vshrl.u32 %v5287, 7
      %v5289 = vsub.s32 %v5286, %v5288
      %v5290 = vrot.slane %v5277, %v5289
      %v5292 = vunpack.c.l.s4 1983009808
      %v5293 = vunpack.c.0.s8 %v5292
      %v5294 = vlaneseq
      %v5295 = vshrl.u32 %v5294, 7
      %v5296 = vsub.s32 %v5293, %v5295
      %v5297 = vrot.slane %v5283, %v5296
      %v5298 = vcombine.high %v5278, %v5278
      %v5300 = vunpack.c.l.s4 1983009808
      %v5301 = vunpack.c.0.s8 %v5300
      %v5302 = vlaneseq
      %v5303 = vshrl.u32 %v5302, 7
      %v5304 = vsub.s32 %v5301, %v5303
      %v5305 = vrot.slane %v5278, %v5304
      %v5307 = vunpack.c.l.s4 1983009808
      %v5308 = vunpack.c.0.s8 %v5307
      %v5309 = vlaneseq
      %v5310 = vshrl.u32 %v5309, 7
      %v5311 = vsub.s32 %v5308, %v5310
      %v5312 = vrot.slane %v5298, %v5311
      %v5314 = vunpack.c.l.s4 1983009808
      %v5315 = vunpack.c.0.s8 %v5314
      %v5316 = vlaneseq
      %v5317 = vshrl.u32 %v5316, 7
      %v5318 = vsub.s32 %v5315, %v5317
      %v5319 = vrot.slane %v5279, %v5318
      %5320 = vrot.lane.b32.xlu0 %v5290, 27
      %v5321 = vpop.permute.xlu0 %5320
      %5322 = vrot.lane.b32.xlu0 %v5297, 27
      %v5323 = vpop.permute.xlu0 %5322
      %5324 = vrot.lane.b32.xlu0 %v5305, 27
      %v5325 = vpop.permute.xlu0 %5324
      %5326 = vrot.lane.b32.xlu0 %v5312, 27
      %v5327 = vpop.permute.xlu0 %5326
      %5328 = vrot.lane.b32.xlu0 %v5319, 27
      %v5329 = vpop.permute.xlu0 %5328
      %v5330 = vrot.slane %v5321, 4
      %v5331 = vrot.slane %v5323, 4
      %v5332 = vrot.slane %v5325, 4
      %v5333 = vrot.slane %v5327, 4
      %v5334 = vrot.slane %v5329, 4
      %v5335 = vsel %vm3741, %v5330, %v5331
      %v5336 = vsel %vm2931, %v5321, %v5335
      %v5337 = vsel %vm3741, %v5331, %v5332
      %v5338 = vsel %vm2931, %v5323, %v5337
      %v5339 = vsel %vm3741, %v5332, %v5333
      %v5340 = vsel %vm2931, %v5325, %v5339
      %v5341 = vsel %vm3741, %v5333, %v5334
      %v5342 = vsel %vm2931, %v5327, %v5341
      %5347 = vst [vmem:[#allocation4 + $0x2e0] sm:$0x33] %v5336
      %5348 = vst [vmem:[#allocation4 + $0x2e8] sm:$0x33] %v5338
      %5349 = vst [vmem:[#allocation4 + $0x2f0] sm:$0x33] %v5340
      %5350 = vst.msk [vmem:[#allocation4 + $0x2f8] sm:$0x33] %vm3757, %v5342
      %v5351 = vld [vmem:[#allocation3 + $0x2] sm:$0xff]
      %v5352 = vld [vmem:[#allocation3 + $0xa] sm:$0xff]
      %v5353 = vld [vmem:[#allocation3 + $0x12] sm:$0x3]
      %v5357 = vcombine.high %v5351, %v5351
      %v5359 = vunpack.c.l.s4 1983009808
      %v5360 = vunpack.c.0.s8 %v5359
      %v5361 = vlaneseq
      %v5362 = vshrl.u32 %v5361, 7
      %v5363 = vsub.s32 %v5360, %v5362
      %v5364 = vrot.slane %v5351, %v5363
      %v5366 = vunpack.c.l.s4 1983009808
      %v5367 = vunpack.c.0.s8 %v5366
      %v5368 = vlaneseq
      %v5369 = vshrl.u32 %v5368, 7
      %v5370 = vsub.s32 %v5367, %v5369
      %v5371 = vrot.slane %v5357, %v5370
      %v5372 = vcombine.high %v5352, %v5352
      %v5374 = vunpack.c.l.s4 1983009808
      %v5375 = vunpack.c.0.s8 %v5374
      %v5376 = vlaneseq
      %v5377 = vshrl.u32 %v5376, 7
      %v5378 = vsub.s32 %v5375, %v5377
      %v5379 = vrot.slane %v5352, %v5378
      %v5381 = vunpack.c.l.s4 1983009808
      %v5382 = vunpack.c.0.s8 %v5381
      %v5383 = vlaneseq
      %v5384 = vshrl.u32 %v5383, 7
      %v5385 = vsub.s32 %v5382, %v5384
      %v5386 = vrot.slane %v5372, %v5385
      %v5388 = vunpack.c.l.s4 1983009808
      %v5389 = vunpack.c.0.s8 %v5388
      %v5390 = vlaneseq
      %v5391 = vshrl.u32 %v5390, 7
      %v5392 = vsub.s32 %v5389, %v5391
      %v5393 = vrot.slane %v5353, %v5392
      %5394 = vrot.lane.b32.xlu0 %v5364, 19
      %v5395 = vpop.permute.xlu0 %5394
      %5396 = vrot.lane.b32.xlu0 %v5371, 19
      %v5397 = vpop.permute.xlu0 %5396
      %5398 = vrot.lane.b32.xlu0 %v5379, 19
      %v5399 = vpop.permute.xlu0 %5398
      %5400 = vrot.lane.b32.xlu0 %v5386, 19
      %v5401 = vpop.permute.xlu0 %5400
      %5402 = vrot.lane.b32.xlu0 %v5393, 19
      %v5403 = vpop.permute.xlu0 %5402
      %v5404 = vrot.slane %v5395, 4
      %v5405 = vrot.slane %v5397, 4
      %v5406 = vrot.slane %v5399, 4
      %v5407 = vrot.slane %v5401, 4
      %v5408 = vrot.slane %v5403, 4
      %v5409 = vsel %vm3741, %v5404, %v5405
      %v5410 = vsel %vm3041, %v5395, %v5409
      %v5411 = vsel %vm3741, %v5405, %v5406
      %v5412 = vsel %vm3041, %v5397, %v5411
      %v5413 = vsel %vm3741, %v5406, %v5407
      %v5414 = vsel %vm3041, %v5399, %v5413
      %v5415 = vsel %vm3741, %v5407, %v5408
      %v5416 = vsel %vm3041, %v5401, %v5415
      %5421 = vst [vmem:[#allocation4 + $0x300] sm:$0x33] %v5410
      %5422 = vst [vmem:[#allocation4 + $0x308] sm:$0x33] %v5412
      %5423 = vst [vmem:[#allocation4 + $0x310] sm:$0x33] %v5414
      %5424 = vst.msk [vmem:[#allocation4 + $0x318] sm:$0x33] %vm3757, %v5416
      %v5425 = vld [vmem:[#allocation3 + $0x2] sm:$0xff]
      %v5426 = vld [vmem:[#allocation3 + $0xa] sm:$0xff]
      %v5427 = vld [vmem:[#allocation3 + $0x12] sm:$0x3]
      %v5431 = vcombine.high %v5425, %v5425
      %v5433 = vunpack.c.l.s4 1983009808
      %v5434 = vunpack.c.0.s8 %v5433
      %v5435 = vlaneseq
      %v5436 = vshrl.u32 %v5435, 7
      %v5437 = vsub.s32 %v5434, %v5436
      %v5438 = vrot.slane %v5425, %v5437
      %v5440 = vunpack.c.l.s4 1983009808
      %v5441 = vunpack.c.0.s8 %v5440
      %v5442 = vlaneseq
      %v5443 = vshrl.u32 %v5442, 7
      %v5444 = vsub.s32 %v5441, %v5443
      %v5445 = vrot.slane %v5431, %v5444
      %v5446 = vcombine.high %v5426, %v5426
      %v5448 = vunpack.c.l.s4 1983009808
      %v5449 = vunpack.c.0.s8 %v5448
      %v5450 = vlaneseq
      %v5451 = vshrl.u32 %v5450, 7
      %v5452 = vsub.s32 %v5449, %v5451
      %v5453 = vrot.slane %v5426, %v5452
      %v5455 = vunpack.c.l.s4 1983009808
      %v5456 = vunpack.c.0.s8 %v5455
      %v5457 = vlaneseq
      %v5458 = vshrl.u32 %v5457, 7
      %v5459 = vsub.s32 %v5456, %v5458
      %v5460 = vrot.slane %v5446, %v5459
      %v5462 = vunpack.c.l.s4 1983009808
      %v5463 = vunpack.c.0.s8 %v5462
      %v5464 = vlaneseq
      %v5465 = vshrl.u32 %v5464, 7
      %v5466 = vsub.s32 %v5463, %v5465
      %v5467 = vrot.slane %v5427, %v5466
      %5468 = vrot.lane.b32.xlu0 %v5438, 18
      %v5469 = vpop.permute.xlu0 %5468
      %5470 = vrot.lane.b32.xlu0 %v5445, 18
      %v5471 = vpop.permute.xlu0 %5470
      %5472 = vrot.lane.b32.xlu0 %v5453, 18
      %v5473 = vpop.permute.xlu0 %5472
      %5474 = vrot.lane.b32.xlu0 %v5460, 18
      %v5475 = vpop.permute.xlu0 %5474
      %5476 = vrot.lane.b32.xlu0 %v5467, 18
      %v5477 = vpop.permute.xlu0 %5476
      %v5478 = vrot.slane %v5469, 4
      %v5479 = vrot.slane %v5471, 4
      %v5480 = vrot.slane %v5473, 4
      %v5481 = vrot.slane %v5475, 4
      %v5482 = vrot.slane %v5477, 4
      %v5483 = vsel %vm3741, %v5478, %v5479
      %v5484 = vsel %vm3152, %v5469, %v5483
      %v5485 = vsel %vm3741, %v5479, %v5480
      %v5486 = vsel %vm3152, %v5471, %v5485
      %v5487 = vsel %vm3741, %v5480, %v5481
      %v5488 = vsel %vm3152, %v5473, %v5487
      %v5489 = vsel %vm3741, %v5481, %v5482
      %v5490 = vsel %vm3152, %v5475, %v5489
      %5495 = vst [vmem:[#allocation4 + $0x320] sm:$0x33] %v5484
      %5496 = vst [vmem:[#allocation4 + $0x328] sm:$0x33] %v5486
      %5497 = vst [vmem:[#allocation4 + $0x330] sm:$0x33] %v5488
      %5498 = vst.msk [vmem:[#allocation4 + $0x338] sm:$0x33] %vm3757, %v5490
      %v5499 = vld [vmem:[#allocation3 + $0x2] sm:$0xff]
      %v5500 = vld [vmem:[#allocation3 + $0xa] sm:$0xff]
      %v5501 = vld [vmem:[#allocation3 + $0x12] sm:$0x3]
      %v5505 = vcombine.high %v5499, %v5499
      %v5507 = vunpack.c.l.s4 1983009808
      %v5508 = vunpack.c.0.s8 %v5507
      %v5509 = vlaneseq
      %v5510 = vshrl.u32 %v5509, 7
      %v5511 = vsub.s32 %v5508, %v5510
      %v5512 = vrot.slane %v5499, %v5511
      %v5514 = vunpack.c.l.s4 1983009808
      %v5515 = vunpack.c.0.s8 %v5514
      %v5516 = vlaneseq
      %v5517 = vshrl.u32 %v5516, 7
      %v5518 = vsub.s32 %v5515, %v5517
      %v5519 = vrot.slane %v5505, %v5518
      %v5520 = vcombine.high %v5500, %v5500
      %v5522 = vunpack.c.l.s4 1983009808
      %v5523 = vunpack.c.0.s8 %v5522
      %v5524 = vlaneseq
      %v5525 = vshrl.u32 %v5524, 7
      %v5526 = vsub.s32 %v5523, %v5525
      %v5527 = vrot.slane %v5500, %v5526
      %v5529 = vunpack.c.l.s4 1983009808
      %v5530 = vunpack.c.0.s8 %v5529
      %v5531 = vlaneseq
      %v5532 = vshrl.u32 %v5531, 7
      %v5533 = vsub.s32 %v5530, %v5532
      %v5534 = vrot.slane %v5520, %v5533
      %v5536 = vunpack.c.l.s4 1983009808
      %v5537 = vunpack.c.0.s8 %v5536
      %v5538 = vlaneseq
      %v5539 = vshrl.u32 %v5538, 7
      %v5540 = vsub.s32 %v5537, %v5539
      %v5541 = vrot.slane %v5501, %v5540
      %5542 = vrot.lane.b32.xlu0 %v5512, 17
      %v5543 = vpop.permute.xlu0 %5542
      %5544 = vrot.lane.b32.xlu0 %v5519, 17
      %v5545 = vpop.permute.xlu0 %5544
      %5546 = vrot.lane.b32.xlu0 %v5527, 17
      %v5547 = vpop.permute.xlu0 %5546
      %5548 = vrot.lane.b32.xlu0 %v5534, 17
      %v5549 = vpop.permute.xlu0 %5548
      %5550 = vrot.lane.b32.xlu0 %v5541, 17
      %v5551 = vpop.permute.xlu0 %5550
      %v5552 = vrot.slane %v5543, 4
      %v5553 = vrot.slane %v5545, 4
      %v5554 = vrot.slane %v5547, 4
      %v5555 = vrot.slane %v5549, 4
      %v5556 = vrot.slane %v5551, 4
      %v5557 = vsel %vm3741, %v5552, %v5553
      %v5558 = vsel %vm3262, %v5543, %v5557
      %v5559 = vsel %vm3741, %v5553, %v5554
      %v5560 = vsel %vm3262, %v5545, %v5559
      %v5561 = vsel %vm3741, %v5554, %v5555
      %v5562 = vsel %vm3262, %v5547, %v5561
      %v5563 = vsel %vm3741, %v5555, %v5556
      %v5564 = vsel %vm3262, %v5549, %v5563
      %5569 = vst [vmem:[#allocation4 + $0x340] sm:$0x33] %v5558
      %5570 = vst [vmem:[#allocation4 + $0x348] sm:$0x33] %v5560
      %5571 = vst [vmem:[#allocation4 + $0x350] sm:$0x33] %v5562
      %5572 = vst.msk [vmem:[#allocation4 + $0x358] sm:$0x33] %vm3757, %v5564
      %v5573 = vld [vmem:[%s189 + $0x1] sm:$0xff]
      %v5575 = vcombine.high %v5573, %v5573
      %v5577 = vunpack.c.l.s4 1935823168
      %v5578 = vunpack.c.0.s8 %v5577
      %v5579 = vlaneseq
      %v5580 = vshrl.u32 %v5579, 7
      %v5581 = vsub.s32 %v5578, %v5580
      %v5582 = vrot.slane %v5573, %v5581
      %v5584 = vunpack.c.l.s4 1935823168
      %v5585 = vunpack.c.0.s8 %v5584
      %v5586 = vlaneseq
      %v5587 = vshrl.u32 %v5586, 7
      %v5588 = vsub.s32 %v5585, %v5587
      %v5589 = vrot.slane %v5575, %v5588
      %v5590 = vcombine.high %v5582, %v5582
      %v5591 = vcombine.high %v5589, %v5589
      %v5593 = vunpack.c.l.s4 1935823168
      %v5594 = vunpack.c.0.s8 %v5593
      %v5595 = vlaneseq
      %v5596 = vshrl.u32 %v5595, 7
      %v5597 = vsub.s32 %v5594, %v5596
      %v5598 = vrot.slane %v5582, %v5597
      %v5600 = vunpack.c.l.s4 1935823168
      %v5601 = vunpack.c.0.s8 %v5600
      %v5602 = vlaneseq
      %v5603 = vshrl.u32 %v5602, 7
      %v5604 = vsub.s32 %v5601, %v5603
      %v5605 = vrot.slane %v5590, %v5604
      %v5607 = vunpack.c.l.s4 1935823168
      %v5608 = vunpack.c.0.s8 %v5607
      %v5609 = vlaneseq
      %v5610 = vshrl.u32 %v5609, 7
      %v5611 = vsub.s32 %v5608, %v5610
      %v5612 = vrot.slane %v5589, %v5611
      %v5614 = vunpack.c.l.s4 1935823168
      %v5615 = vunpack.c.0.s8 %v5614
      %v5616 = vlaneseq
      %v5617 = vshrl.u32 %v5616, 7
      %v5618 = vsub.s32 %v5615, %v5617
      %v5619 = vrot.slane %v5591, %v5618
      %5624 = vst [vmem:[#allocation4 + $0x380] sm:$0x11] %v5598
      %5625 = vst [vmem:[#allocation4 + $0x388] sm:$0x11] %v5605
      %5626 = vst [vmem:[#allocation4 + $0x390] sm:$0x11] %v5612
      %vm5627 = vcmask 1040384
      %vm5628 = vmor %vm664, %vm5627
      %5629 = vst.msk [vmem:[#allocation4 + $0x398] sm:$0x11] %vm5628, %v5619
      %v5630 = vld [vmem:[%s2] sm:$0xf]
      %v5631 = vld [vmem:[#allocation4] sm:$0xff]
      %v5632 = vld [vmem:[#allocation4 + $0x8] sm:$0xff]
      %v5633 = vld [vmem:[#allocation4 + $0x10] sm:$0xff]
      %v5634 = vld [vmem:[#allocation4 + $0x18] sm:$0xff]
      %v5635 = vld [vmem:[#allocation4 + $0x20] sm:$0xff]
      %v5636 = vld [vmem:[#allocation4 + $0x28] sm:$0xff]
      %v5637 = vld [vmem:[#allocation4 + $0x30] sm:$0xff]
      %v5638 = vld [vmem:[#allocation4 + $0x38] sm:$0xff]
      %v5639 = vld [vmem:[#allocation4 + $0x40] sm:$0xff]
      %v5640 = vld [vmem:[#allocation4 + $0x48] sm:$0xff]
      %v5641 = vld [vmem:[#allocation4 + $0x50] sm:$0xff]
      %v5642 = vld [vmem:[#allocation4 + $0x58] sm:$0xff]
      %v5643 = vld [vmem:[#allocation4 + $0x60] sm:$0xff]
      %v5644 = vld [vmem:[#allocation4 + $0x68] sm:$0xff]
      %v5645 = vld [vmem:[#allocation4 + $0x70] sm:$0xff]
      %v5646 = vld [vmem:[#allocation4 + $0x78] sm:$0xff]
      %v5647 = vld [vmem:[#allocation4 + $0x80] sm:$0xff]
      %v5648 = vld [vmem:[#allocation4 + $0x88] sm:$0xff]
      %v5649 = vld [vmem:[#allocation4 + $0x90] sm:$0xff]
      %v5650 = vld [vmem:[#allocation4 + $0x98] sm:$0xff]
      %v5651 = vld [vmem:[#allocation4 + $0xa0] sm:$0xff]
      %v5652 = vld [vmem:[#allocation4 + $0xa8] sm:$0xff]
      %v5653 = vld [vmem:[#allocation4 + $0xb0] sm:$0xff]
      %v5654 = vld [vmem:[#allocation4 + $0xb8] sm:$0xff]
      %v5655 = vld [vmem:[#allocation4 + $0xc0] sm:$0xff]
      %v5656 = vld [vmem:[#allocation4 + $0xc8] sm:$0xff]
      %v5657 = vld [vmem:[#allocation4 + $0xd0] sm:$0xff]
      %v5658 = vld [vmem:[#allocation4 + $0xd8] sm:$0xff]
      %v5659 = vld [vmem:[#allocation4 + $0xe0] sm:$0xff]
      %v5660 = vld [vmem:[#allocation4 + $0xe8] sm:$0xff]
      %v5661 = vld [vmem:[#allocation4 + $0xf0] sm:$0xff]
      %v5662 = vld [vmem:[#allocation4 + $0xf8] sm:$0xff]
      %v5663 = vld [vmem:[#allocation4 + $0x100] sm:$0xff]
      %v5664 = vld [vmem:[#allocation4 + $0x108] sm:$0xff]
      %v5665 = vld [vmem:[#allocation4 + $0x110] sm:$0xff]
      %v5666 = vld [vmem:[#allocation4 + $0x118] sm:$0xff]
      %v5667 = vld [vmem:[#allocation4 + $0x120] sm:$0xff]
      %v5668 = vld [vmem:[#allocation4 + $0x128] sm:$0xff]
      %v5669 = vld [vmem:[#allocation4 + $0x130] sm:$0xff]
      %v5670 = vld [vmem:[#allocation4 + $0x138] sm:$0xff]
      %v5671 = vld [vmem:[#allocation4 + $0x140] sm:$0xff]
      %v5672 = vld [vmem:[#allocation4 + $0x148] sm:$0xff]
      %v5673 = vld [vmem:[#allocation4 + $0x150] sm:$0xff]
      %v5674 = vld [vmem:[#allocation4 + $0x158] sm:$0xff]
      %v5675 = vld [vmem:[#allocation4 + $0x160] sm:$0xff]
      %v5676 = vld [vmem:[#allocation4 + $0x168] sm:$0xff]
      %v5677 = vld [vmem:[#allocation4 + $0x170] sm:$0xff]
      %v5678 = vld [vmem:[#allocation4 + $0x178] sm:$0xff]
      %v5679 = vld [vmem:[#allocation4 + $0x180] sm:$0xff]
      %v5680 = vld [vmem:[#allocation4 + $0x188] sm:$0xff]
      %v5681 = vld [vmem:[#allocation4 + $0x190] sm:$0xff]
      %v5682 = vld [vmem:[#allocation4 + $0x198] sm:$0xff]
      %v5683 = vld [vmem:[#allocation4 + $0x1a0] sm:$0xff]
      %v5684 = vld [vmem:[#allocation4 + $0x1a8] sm:$0xff]
      %v5685 = vld [vmem:[#allocation4 + $0x1b0] sm:$0xff]
      %v5686 = vld [vmem:[#allocation4 + $0x1b8] sm:$0xff]
      %v5687 = vld [vmem:[#allocation4 + $0x1c0] sm:$0xff]
      %v5688 = vld [vmem:[#allocation4 + $0x1c8] sm:$0xff]
      %v5689 = vld [vmem:[#allocation4 + $0x1d0] sm:$0xff]
      %v5690 = vld [vmem:[#allocation4 + $0x1d8] sm:$0xff]
      %v5691 = vld [vmem:[#allocation4 + $0x1e0] sm:$0xff]
      %v5692 = vld [vmem:[#allocation4 + $0x1e8] sm:$0xff]
      %v5693 = vld [vmem:[#allocation4 + $0x1f0] sm:$0xff]
      %v5694 = vld [vmem:[#allocation4 + $0x1f8] sm:$0xff]
      %v5695 = vld [vmem:[#allocation4 + $0x200] sm:$0xff]
      %v5696 = vld [vmem:[#allocation4 + $0x208] sm:$0xff]
      %v5697 = vld [vmem:[#allocation4 + $0x210] sm:$0xff]
      %v5698 = vld [vmem:[#allocation4 + $0x218] sm:$0xff]
      %v5699 = vld [vmem:[#allocation4 + $0x220] sm:$0xff]
      %v5700 = vld [vmem:[#allocation4 + $0x228] sm:$0xff]
      %v5701 = vld [vmem:[#allocation4 + $0x230] sm:$0xff]
      %v5702 = vld [vmem:[#allocation4 + $0x238] sm:$0xff]
      %v5703 = vld [vmem:[#allocation4 + $0x240] sm:$0xff]
      %v5704 = vld [vmem:[#allocation4 + $0x248] sm:$0xff]
      %v5705 = vld [vmem:[#allocation4 + $0x250] sm:$0xff]
      %v5706 = vld [vmem:[#allocation4 + $0x258] sm:$0xff]
      %v5707 = vld [vmem:[#allocation4 + $0x260] sm:$0xff]
      %v5708 = vld [vmem:[#allocation4 + $0x268] sm:$0xff]
      %v5709 = vld [vmem:[#allocation4 + $0x270] sm:$0xff]
      %v5710 = vld [vmem:[#allocation4 + $0x278] sm:$0xff]
      %v5711 = vld [vmem:[#allocation4 + $0x280] sm:$0xff]
      %v5712 = vld [vmem:[#allocation4 + $0x288] sm:$0xff]
      %v5713 = vld [vmem:[#allocation4 + $0x290] sm:$0xff]
      %v5714 = vld [vmem:[#allocation4 + $0x298] sm:$0xff]
      %v5715 = vld [vmem:[#allocation4 + $0x2a0] sm:$0xff]
      %v5716 = vld [vmem:[#allocation4 + $0x2a8] sm:$0xff]
      %v5717 = vld [vmem:[#allocation4 + $0x2b0] sm:$0xff]
      %v5718 = vld [vmem:[#allocation4 + $0x2b8] sm:$0xff]
      %v5719 = vld [vmem:[#allocation4 + $0x2c0] sm:$0xff]
      %v5720 = vld [vmem:[#allocation4 + $0x2c8] sm:$0xff]
      %v5721 = vld [vmem:[#allocation4 + $0x2d0] sm:$0xff]
      %v5722 = vld [vmem:[#allocation4 + $0x2d8] sm:$0xff]
      %v5723 = vld [vmem:[#allocation4 + $0x2e0] sm:$0xff]
      %v5724 = vld [vmem:[#allocation4 + $0x2e8] sm:$0xff]
      %v5725 = vld [vmem:[#allocation4 + $0x2f0] sm:$0xff]
      %v5726 = vld [vmem:[#allocation4 + $0x2f8] sm:$0xff]
      %v5727 = vld [vmem:[#allocation4 + $0x300] sm:$0xff]
      %v5728 = vld [vmem:[#allocation4 + $0x308] sm:$0xff]
      %v5729 = vld [vmem:[#allocation4 + $0x310] sm:$0xff]
      %v5730 = vld [vmem:[#allocation4 + $0x318] sm:$0xff]
      %v5731 = vld [vmem:[#allocation4 + $0x320] sm:$0xff]
      %v5732 = vld [vmem:[#allocation4 + $0x328] sm:$0xff]
      %v5733 = vld [vmem:[#allocation4 + $0x330] sm:$0xff]
      %v5734 = vld [vmem:[#allocation4 + $0x338] sm:$0xff]
      %v5735 = vld [vmem:[#allocation4 + $0x340] sm:$0xff]
      %v5736 = vld [vmem:[#allocation4 + $0x348] sm:$0xff]
      %v5737 = vld [vmem:[#allocation4 + $0x350] sm:$0xff]
      %v5738 = vld [vmem:[#allocation4 + $0x358] sm:$0xff]
      %v5739 = vld [vmem:[#allocation4 + $0x360] sm:$0xff]
      %v5740 = vld [vmem:[#allocation4 + $0x368] sm:$0xff]
      %v5741 = vld [vmem:[#allocation4 + $0x370] sm:$0xff]
      %v5742 = vld [vmem:[#allocation4 + $0x378] sm:$0xff]
      %v5743 = vld [vmem:[#allocation4 + $0x380] sm:$0xff]
      %v5744 = vld [vmem:[#allocation4 + $0x388] sm:$0xff]
      %v5745 = vld [vmem:[#allocation4 + $0x390] sm:$0xff]
      %v5746 = vld [vmem:[#allocation4 + $0x398] sm:$0xff]
      %v5749 = vunpack.c.l.s4 1983009808
      %v5750 = vunpack.c.0.s8 %v5749
      %v5751 = vlaneseq
      %v5752 = vshrl.u32 %v5751, 7
      %v5753 = vsub.s32 %v5750, %v5752
      %v5754 = vrot.slane %v5630, %v5753
      %v5755 = vcombine.high %v5754, %v5754
      %v5873 = vunpack.c.l.b16 %v5631
      %v5874 = vunpack.c.h.b16 %v5631
      %v5875 = vunpack.c.l.b16 %v5632
      %v5876 = vunpack.c.h.b16 %v5632
      %v5877 = vunpack.c.l.b16 %v5633
      %v5878 = vunpack.c.h.b16 %v5633
      %v5879 = vunpack.c.l.b16 %v5634
      %v5880 = vunpack.c.h.b16 %v5634
      %v5881 = vunpack.c.l.b16 %v5635
      %v5882 = vunpack.c.h.b16 %v5635
      %v5883 = vunpack.c.l.b16 %v5636
      %v5884 = vunpack.c.h.b16 %v5636
      %v5885 = vunpack.c.l.b16 %v5637
      %v5886 = vunpack.c.h.b16 %v5637
      %v5887 = vunpack.c.l.b16 %v5638
      %v5888 = vunpack.c.h.b16 %v5638
      %v5889 = vunpack.c.l.b16 %v5639
      %v5890 = vunpack.c.h.b16 %v5639
      %v5891 = vunpack.c.l.b16 %v5640
      %v5892 = vunpack.c.h.b16 %v5640
      %v5893 = vunpack.c.l.b16 %v5641
      %v5894 = vunpack.c.h.b16 %v5641
      %v5895 = vunpack.c.l.b16 %v5642
      %v5896 = vunpack.c.h.b16 %v5642
      %v5897 = vunpack.c.l.b16 %v5643
      %v5898 = vunpack.c.h.b16 %v5643
      %v5899 = vunpack.c.l.b16 %v5644
      %v5900 = vunpack.c.h.b16 %v5644
      %v5901 = vunpack.c.l.b16 %v5645
      %v5902 = vunpack.c.h.b16 %v5645
      %v5903 = vunpack.c.l.b16 %v5646
      %v5904 = vunpack.c.h.b16 %v5646
      %v5905 = vunpack.c.l.b16 %v5647
      %v5906 = vunpack.c.h.b16 %v5647
      %v5907 = vunpack.c.l.b16 %v5648
      %v5908 = vunpack.c.h.b16 %v5648
      %v5909 = vunpack.c.l.b16 %v5649
      %v5910 = vunpack.c.h.b16 %v5649
      %v5911 = vunpack.c.l.b16 %v5650
      %v5912 = vunpack.c.h.b16 %v5650
      %v5913 = vunpack.c.l.b16 %v5651
      %v5914 = vunpack.c.h.b16 %v5651
      %v5915 = vunpack.c.l.b16 %v5652
      %v5916 = vunpack.c.h.b16 %v5652
      %v5917 = vunpack.c.l.b16 %v5653
      %v5918 = vunpack.c.h.b16 %v5653
      %v5919 = vunpack.c.l.b16 %v5654
      %v5920 = vunpack.c.h.b16 %v5654
      %v5921 = vunpack.c.l.b16 %v5655
      %v5922 = vunpack.c.h.b16 %v5655
      %v5923 = vunpack.c.l.b16 %v5656
      %v5924 = vunpack.c.h.b16 %v5656
      %v5925 = vunpack.c.l.b16 %v5657
      %v5926 = vunpack.c.h.b16 %v5657
      %v5927 = vunpack.c.l.b16 %v5658
      %v5928 = vunpack.c.h.b16 %v5658
      %v5929 = vunpack.c.l.b16 %v5659
      %v5930 = vunpack.c.h.b16 %v5659
      %v5931 = vunpack.c.l.b16 %v5660
      %v5932 = vunpack.c.h.b16 %v5660
      %v5933 = vunpack.c.l.b16 %v5661
      %v5934 = vunpack.c.h.b16 %v5661
      %v5935 = vunpack.c.l.b16 %v5662
      %v5936 = vunpack.c.h.b16 %v5662
      %v5937 = vunpack.c.l.b16 %v5663
      %v5938 = vunpack.c.h.b16 %v5663
      %v5939 = vunpack.c.l.b16 %v5664
      %v5940 = vunpack.c.h.b16 %v5664
      %v5941 = vunpack.c.l.b16 %v5665
      %v5942 = vunpack.c.h.b16 %v5665
      %v5943 = vunpack.c.l.b16 %v5666
      %v5944 = vunpack.c.h.b16 %v5666
      %v5945 = vunpack.c.l.b16 %v5667
      %v5946 = vunpack.c.h.b16 %v5667
      %v5947 = vunpack.c.l.b16 %v5668
      %v5948 = vunpack.c.h.b16 %v5668
      %v5949 = vunpack.c.l.b16 %v5669
      %v5950 = vunpack.c.h.b16 %v5669
      %v5951 = vunpack.c.l.b16 %v5670
      %v5952 = vunpack.c.h.b16 %v5670
      %v5953 = vunpack.c.l.b16 %v5671
      %v5954 = vunpack.c.h.b16 %v5671
      %v5955 = vunpack.c.l.b16 %v5672
      %v5956 = vunpack.c.h.b16 %v5672
      %v5957 = vunpack.c.l.b16 %v5673
      %v5958 = vunpack.c.h.b16 %v5673
      %v5959 = vunpack.c.l.b16 %v5674
      %v5960 = vunpack.c.h.b16 %v5674
      %v5961 = vunpack.c.l.b16 %v5675
      %v5962 = vunpack.c.h.b16 %v5675
      %v5963 = vunpack.c.l.b16 %v5676
      %v5964 = vunpack.c.h.b16 %v5676
      %v5965 = vunpack.c.l.b16 %v5677
      %v5966 = vunpack.c.h.b16 %v5677
      %v5967 = vunpack.c.l.b16 %v5678
      %v5968 = vunpack.c.h.b16 %v5678
      %v5969 = vunpack.c.l.b16 %v5679
      %v5970 = vunpack.c.h.b16 %v5679
      %v5971 = vunpack.c.l.b16 %v5680
      %v5972 = vunpack.c.h.b16 %v5680
      %v5973 = vunpack.c.l.b16 %v5681
      %v5974 = vunpack.c.h.b16 %v5681
      %v5975 = vunpack.c.l.b16 %v5682
      %v5976 = vunpack.c.h.b16 %v5682
      %v5977 = vunpack.c.l.b16 %v5683
      %v5978 = vunpack.c.h.b16 %v5683
      %v5979 = vunpack.c.l.b16 %v5684
      %v5980 = vunpack.c.h.b16 %v5684
      %v5981 = vunpack.c.l.b16 %v5685
      %v5982 = vunpack.c.h.b16 %v5685
      %v5983 = vunpack.c.l.b16 %v5686
      %v5984 = vunpack.c.h.b16 %v5686
      %v5985 = vunpack.c.l.b16 %v5687
      %v5986 = vunpack.c.h.b16 %v5687
      %v5987 = vunpack.c.l.b16 %v5688
      %v5988 = vunpack.c.h.b16 %v5688
      %v5989 = vunpack.c.l.b16 %v5689
      %v5990 = vunpack.c.h.b16 %v5689
      %v5991 = vunpack.c.l.b16 %v5690
      %v5992 = vunpack.c.h.b16 %v5690
      %v5993 = vunpack.c.l.b16 %v5691
      %v5994 = vunpack.c.h.b16 %v5691
      %v5995 = vunpack.c.l.b16 %v5692
      %v5996 = vunpack.c.h.b16 %v5692
      %v5997 = vunpack.c.l.b16 %v5693
      %v5998 = vunpack.c.h.b16 %v5693
      %v5999 = vunpack.c.l.b16 %v5694
      %v6000 = vunpack.c.h.b16 %v5694
      %v6001 = vunpack.c.l.b16 %v5695
      %v6002 = vunpack.c.h.b16 %v5695
      %v6003 = vunpack.c.l.b16 %v5696
      %v6004 = vunpack.c.h.b16 %v5696
      %v6005 = vunpack.c.l.b16 %v5697
      %v6006 = vunpack.c.h.b16 %v5697
      %v6007 = vunpack.c.l.b16 %v5698
      %v6008 = vunpack.c.h.b16 %v5698
      %v6009 = vunpack.c.l.b16 %v5699
      %v6010 = vunpack.c.h.b16 %v5699
      %v6011 = vunpack.c.l.b16 %v5700
      %v6012 = vunpack.c.h.b16 %v5700
      %v6013 = vunpack.c.l.b16 %v5701
      %v6014 = vunpack.c.h.b16 %v5701
      %v6015 = vunpack.c.l.b16 %v5702
      %v6016 = vunpack.c.h.b16 %v5702
      %v6017 = vunpack.c.l.b16 %v5703
      %v6018 = vunpack.c.h.b16 %v5703
      %v6019 = vunpack.c.l.b16 %v5704
      %v6020 = vunpack.c.h.b16 %v5704
      %v6021 = vunpack.c.l.b16 %v5705
      %v6022 = vunpack.c.h.b16 %v5705
      %v6023 = vunpack.c.l.b16 %v5706
      %v6024 = vunpack.c.h.b16 %v5706
      %v6025 = vunpack.c.l.b16 %v5707
      %v6026 = vunpack.c.h.b16 %v5707
      %v6027 = vunpack.c.l.b16 %v5708
      %v6028 = vunpack.c.h.b16 %v5708
      %v6029 = vunpack.c.l.b16 %v5709
      %v6030 = vunpack.c.h.b16 %v5709
      %v6031 = vunpack.c.l.b16 %v5710
      %v6032 = vunpack.c.h.b16 %v5710
      %v6033 = vunpack.c.l.b16 %v5711
      %v6034 = vunpack.c.h.b16 %v5711
      %v6035 = vunpack.c.l.b16 %v5712
      %v6036 = vunpack.c.h.b16 %v5712
      %v6037 = vunpack.c.l.b16 %v5713
      %v6038 = vunpack.c.h.b16 %v5713
      %v6039 = vunpack.c.l.b16 %v5714
      %v6040 = vunpack.c.h.b16 %v5714
      %v6041 = vunpack.c.l.b16 %v5715
      %v6042 = vunpack.c.h.b16 %v5715
      %v6043 = vunpack.c.l.b16 %v5716
      %v6044 = vunpack.c.h.b16 %v5716
      %v6045 = vunpack.c.l.b16 %v5717
      %v6046 = vunpack.c.h.b16 %v5717
      %v6047 = vunpack.c.l.b16 %v5718
      %v6048 = vunpack.c.h.b16 %v5718
      %v6049 = vunpack.c.l.b16 %v5719
      %v6050 = vunpack.c.h.b16 %v5719
      %v6051 = vunpack.c.l.b16 %v5720
      %v6052 = vunpack.c.h.b16 %v5720
      %v6053 = vunpack.c.l.b16 %v5721
      %v6054 = vunpack.c.h.b16 %v5721
      %v6055 = vunpack.c.l.b16 %v5722
      %v6056 = vunpack.c.h.b16 %v5722
      %v6057 = vunpack.c.l.b16 %v5723
      %v6058 = vunpack.c.h.b16 %v5723
      %v6059 = vunpack.c.l.b16 %v5724
      %v6060 = vunpack.c.h.b16 %v5724
      %v6061 = vunpack.c.l.b16 %v5725
      %v6062 = vunpack.c.h.b16 %v5725
      %v6063 = vunpack.c.l.b16 %v5726
      %v6064 = vunpack.c.h.b16 %v5726
      %v6065 = vunpack.c.l.b16 %v5727
      %v6066 = vunpack.c.h.b16 %v5727
      %v6067 = vunpack.c.l.b16 %v5728
      %v6068 = vunpack.c.h.b16 %v5728
      %v6069 = vunpack.c.l.b16 %v5729
      %v6070 = vunpack.c.h.b16 %v5729
      %v6071 = vunpack.c.l.b16 %v5730
      %v6072 = vunpack.c.h.b16 %v5730
      %v6073 = vunpack.c.l.b16 %v5731
      %v6074 = vunpack.c.h.b16 %v5731
      %v6075 = vunpack.c.l.b16 %v5732
      %v6076 = vunpack.c.h.b16 %v5732
      %v6077 = vunpack.c.l.b16 %v5733
      %v6078 = vunpack.c.h.b16 %v5733
      %v6079 = vunpack.c.l.b16 %v5734
      %v6080 = vunpack.c.h.b16 %v5734
      %v6081 = vunpack.c.l.b16 %v5735
      %v6082 = vunpack.c.h.b16 %v5735
      %v6083 = vunpack.c.l.b16 %v5736
      %v6084 = vunpack.c.h.b16 %v5736
      %v6085 = vunpack.c.l.b16 %v5737
      %v6086 = vunpack.c.h.b16 %v5737
      %v6087 = vunpack.c.l.b16 %v5738
      %v6088 = vunpack.c.h.b16 %v5738
      %v6089 = vunpack.c.l.b16 %v5739
      %v6090 = vunpack.c.h.b16 %v5739
      %v6091 = vunpack.c.l.b16 %v5740
      %v6092 = vunpack.c.h.b16 %v5740
      %v6093 = vunpack.c.l.b16 %v5741
      %v6094 = vunpack.c.h.b16 %v5741
      %v6095 = vunpack.c.l.b16 %v5742
      %v6096 = vunpack.c.h.b16 %v5742
      %v6097 = vunpack.c.l.b16 %v5743
      %v6098 = vunpack.c.h.b16 %v5743
      %v6099 = vunpack.c.l.b16 %v5744
      %v6100 = vunpack.c.h.b16 %v5744
      %v6101 = vunpack.c.l.b16 %v5745
      %v6102 = vunpack.c.h.b16 %v5745
      %v6103 = vunpack.c.l.b16 %v5746
      %v6104 = vunpack.c.h.b16 %v5746
      %v6105 = vpack.c.b16 %v5881, %v5873
      %v6106 = vpack.c.b16 %v5882, %v5874
      %v6107 = vpack.c.b16 %v5883, %v5875
      %v6108 = vpack.c.b16 %v5884, %v5876
      %v6109 = vpack.c.b16 %v5885, %v5877
      %v6110 = vpack.c.b16 %v5886, %v5878
      %v6111 = vpack.c.b16 %v5887, %v5879
      %v6112 = vpack.c.b16 %v5888, %v5880
      %v6113 = vpack.c.b16 %v5897, %v5889
      %v6114 = vpack.c.b16 %v5898, %v5890
      %v6115 = vpack.c.b16 %v5899, %v5891
      %v6116 = vpack.c.b16 %v5900, %v5892
      %v6117 = vpack.c.b16 %v5901, %v5893
      %v6118 = vpack.c.b16 %v5902, %v5894
      %v6119 = vpack.c.b16 %v5903, %v5895
      %v6120 = vpack.c.b16 %v5904, %v5896
      %v6121 = vpack.c.b16 %v5913, %v5905
      %v6122 = vpack.c.b16 %v5914, %v5906
      %v6123 = vpack.c.b16 %v5915, %v5907
      %v6124 = vpack.c.b16 %v5916, %v5908
      %v6125 = vpack.c.b16 %v5917, %v5909
      %v6126 = vpack.c.b16 %v5918, %v5910
      %v6127 = vpack.c.b16 %v5919, %v5911
      %v6128 = vpack.c.b16 %v5920, %v5912
      %v6129 = vpack.c.b16 %v5929, %v5921
      %v6130 = vpack.c.b16 %v5930, %v5922
      %v6131 = vpack.c.b16 %v5931, %v5923
      %v6132 = vpack.c.b16 %v5932, %v5924
      %v6133 = vpack.c.b16 %v5933, %v5925
      %v6134 = vpack.c.b16 %v5934, %v5926
      %v6135 = vpack.c.b16 %v5935, %v5927
      %v6136 = vpack.c.b16 %v5936, %v5928
      %v6137 = vpack.c.b16 %v5945, %v5937
      %v6138 = vpack.c.b16 %v5946, %v5938
      %v6139 = vpack.c.b16 %v5947, %v5939
      %v6140 = vpack.c.b16 %v5948, %v5940
      %v6141 = vpack.c.b16 %v5949, %v5941
      %v6142 = vpack.c.b16 %v5950, %v5942
      %v6143 = vpack.c.b16 %v5951, %v5943
      %v6144 = vpack.c.b16 %v5952, %v5944
      %v6145 = vpack.c.b16 %v5961, %v5953
      %v6146 = vpack.c.b16 %v5962, %v5954
      %v6147 = vpack.c.b16 %v5963, %v5955
      %v6148 = vpack.c.b16 %v5964, %v5956
      %v6149 = vpack.c.b16 %v5965, %v5957
      %v6150 = vpack.c.b16 %v5966, %v5958
      %v6151 = vpack.c.b16 %v5967, %v5959
      %v6152 = vpack.c.b16 %v5968, %v5960
      %v6153 = vpack.c.b16 %v5977, %v5969
      %v6154 = vpack.c.b16 %v5978, %v5970
      %v6155 = vpack.c.b16 %v5979, %v5971
      %v6156 = vpack.c.b16 %v5980, %v5972
      %v6157 = vpack.c.b16 %v5981, %v5973
      %v6158 = vpack.c.b16 %v5982, %v5974
      %v6159 = vpack.c.b16 %v5983, %v5975
      %v6160 = vpack.c.b16 %v5984, %v5976
      %v6161 = vpack.c.b16 %v5993, %v5985
      %v6162 = vpack.c.b16 %v5994, %v5986
      %v6163 = vpack.c.b16 %v5995, %v5987
      %v6164 = vpack.c.b16 %v5996, %v5988
      %v6165 = vpack.c.b16 %v5997, %v5989
      %v6166 = vpack.c.b16 %v5998, %v5990
      %v6167 = vpack.c.b16 %v5999, %v5991
      %v6168 = vpack.c.b16 %v6000, %v5992
      %v6169 = vpack.c.b16 %v6009, %v6001
      %v6170 = vpack.c.b16 %v6010, %v6002
      %v6171 = vpack.c.b16 %v6011, %v6003
      %v6172 = vpack.c.b16 %v6012, %v6004
      %v6173 = vpack.c.b16 %v6013, %v6005
      %v6174 = vpack.c.b16 %v6014, %v6006
      %v6175 = vpack.c.b16 %v6015, %v6007
      %v6176 = vpack.c.b16 %v6016, %v6008
      %v6177 = vpack.c.b16 %v6025, %v6017
      %v6178 = vpack.c.b16 %v6026, %v6018
      %v6179 = vpack.c.b16 %v6027, %v6019
      %v6180 = vpack.c.b16 %v6028, %v6020
      %v6181 = vpack.c.b16 %v6029, %v6021
      %v6182 = vpack.c.b16 %v6030, %v6022
      %v6183 = vpack.c.b16 %v6031, %v6023
      %v6184 = vpack.c.b16 %v6032, %v6024
      %v6185 = vpack.c.b16 %v6041, %v6033
      %v6186 = vpack.c.b16 %v6042, %v6034
      %v6187 = vpack.c.b16 %v6043, %v6035
      %v6188 = vpack.c.b16 %v6044, %v6036
      %v6189 = vpack.c.b16 %v6045, %v6037
      %v6190 = vpack.c.b16 %v6046, %v6038
      %v6191 = vpack.c.b16 %v6047, %v6039
      %v6192 = vpack.c.b16 %v6048, %v6040
      %v6193 = vpack.c.b16 %v6057, %v6049
      %v6194 = vpack.c.b16 %v6058, %v6050
      %v6195 = vpack.c.b16 %v6059, %v6051
      %v6196 = vpack.c.b16 %v6060, %v6052
      %v6197 = vpack.c.b16 %v6061, %v6053
      %v6198 = vpack.c.b16 %v6062, %v6054
      %v6199 = vpack.c.b16 %v6063, %v6055
      %v6200 = vpack.c.b16 %v6064, %v6056
      %v6201 = vpack.c.b16 %v6073, %v6065
      %v6202 = vpack.c.b16 %v6074, %v6066
      %v6203 = vpack.c.b16 %v6075, %v6067
      %v6204 = vpack.c.b16 %v6076, %v6068
      %v6205 = vpack.c.b16 %v6077, %v6069
      %v6206 = vpack.c.b16 %v6078, %v6070
      %v6207 = vpack.c.b16 %v6079, %v6071
      %v6208 = vpack.c.b16 %v6080, %v6072
      %v6209 = vpack.c.b16 %v6089, %v6081
      %v6210 = vpack.c.b16 %v6090, %v6082
      %v6211 = vpack.c.b16 %v6091, %v6083
      %v6212 = vpack.c.b16 %v6092, %v6084
      %v6213 = vpack.c.b16 %v6093, %v6085
      %v6214 = vpack.c.b16 %v6094, %v6086
      %v6215 = vpack.c.b16 %v6095, %v6087
      %v6216 = vpack.c.b16 %v6096, %v6088
      %v6217 = vpack.c.b16 %v6097, %v6097
      %v6218 = vpack.c.b16 %v6098, %v6098
      %v6219 = vpack.c.b16 %v6099, %v6099
      %v6220 = vpack.c.b16 %v6100, %v6100
      %v6221 = vpack.c.b16 %v6101, %v6101
      %v6222 = vpack.c.b16 %v6102, %v6102
      %v6223 = vpack.c.b16 %v6103, %v6103
      %v6224 = vpack.c.b16 %v6104, %v6104
      %v6338 = vsel %vm204, %v5755, 0
      %v6341 = vsel %vm313, %v6217, 0
      %v6344 = vsel %vm313, %v6218, 0
      %v6347 = vsel %vm313, %v6219, 0
      %v6350 = vsel %vm313, %v6220, 0
      %v6353 = vsel %vm313, %v6221, 0
      %v6356 = vsel %vm313, %v6222, 0
      %v6359 = vsel %vm313, %v6223, 0
      %v6362 = vsel %vm313, %v6224, 0
      %6364 = vmatprep.subr.bf16.mxu0 %v6106
      %6365 = vmatpush1.bf16.msra.mxu0 %v6105
      %6366 = vmatprep.subr.bf16.mxu0 %v6114
      %6367 = vmatpush1.bf16.msra.mxu0 %v6113
      %6368 = vmatprep.subr.bf16.mxu0 %v6122
      %6369 = vmatpush1.bf16.msra.mxu0 %v6121
      %6370 = vmatprep.subr.bf16.mxu0 %v6130
      %6371 = vmatpush1.bf16.msra.mxu0 %v6129
      %6372 = vmatprep.subr.bf16.mxu0 %v6138
      %6373 = vmatpush1.bf16.msra.mxu0 %v6137
      %6374 = vmatprep.subr.bf16.mxu0 %v6146
      %6375 = vmatpush1.bf16.msra.mxu0 %v6145
      %6376 = vmatprep.subr.bf16.mxu0 %v6154
      %6377 = vmatpush1.bf16.msra.mxu0 %v6153
      %6378 = vmatprep.subr.bf16.mxu0 %v6162
      %6379 = vmatpush1.bf16.msra.mxu0 %v6161
      %6380 = vmatprep.subr.bf16.mxu0 %v6170
      %6381 = vmatpush1.bf16.msra.mxu0 %v6169
      %6382 = vmatprep.subr.bf16.mxu0 %v6178
      %6383 = vmatpush1.bf16.msra.mxu0 %v6177
      %6384 = vmatprep.subr.bf16.mxu0 %v6186
      %6385 = vmatpush1.bf16.msra.mxu0 %v6185
      %6386 = vmatprep.subr.bf16.mxu0 %v6194
      %6387 = vmatpush1.bf16.msra.mxu0 %v6193
      %6388 = vmatprep.subr.bf16.mxu0 %v6202
      %6389 = vmatpush1.bf16.msra.mxu0 %v6201
      %6390 = vmatprep.subr.bf16.mxu0 %v6210
      %6391 = vmatpush1.bf16.msra.mxu0 %v6209
      %6392 = vmatprep.subr.bf16.mxu0 %v6344
      %6393 = vmatpush1.bf16.msra.mxu0 %v6341
      %6394 = vmatprep.subr.bf16.mxu0 0
      %6395 = vmatpush1.bf16.msra.mxu0 0
      %6396 = vmatprep.mubr.bf16.mxu0 %v6338
      %6397 = vmatmul.mubr.bf16.gmra.mrb[0].mxu0 %v5754
      %v6398 = vpop.f32.mrb[0].mxu0
      %v6399 = vadd.f32 0.0, %v6398
      %v6400 = vpop.f32.mrb[0].mxu0
      %v6401 = vadd.f32 0.0, %v6400
      %v6402 = vpop.f32.mrb[0].mxu0
      %v6403 = vpop.f32.mrb[0].mxu0
      %6404 = vdwg.mxu0
      %6405 = vmatprep.subr.bf16.mxu0 %v6108
      %6406 = vmatpush1.bf16.msra.mxu0 %v6107
      %6407 = vmatprep.subr.bf16.mxu0 %v6116
      %6408 = vmatpush1.bf16.msra.mxu0 %v6115
      %6409 = vmatprep.subr.bf16.mxu0 %v6124
      %6410 = vmatpush1.bf16.msra.mxu0 %v6123
      %6411 = vmatprep.subr.bf16.mxu0 %v6132
      %6412 = vmatpush1.bf16.msra.mxu0 %v6131
      %6413 = vmatprep.subr.bf16.mxu0 %v6140
      %6414 = vmatpush1.bf16.msra.mxu0 %v6139
      %6415 = vmatprep.subr.bf16.mxu0 %v6148
      %6416 = vmatpush1.bf16.msra.mxu0 %v6147
      %6417 = vmatprep.subr.bf16.mxu0 %v6156
      %6418 = vmatpush1.bf16.msra.mxu0 %v6155
      %6419 = vmatprep.subr.bf16.mxu0 %v6164
      %6420 = vmatpush1.bf16.msra.mxu0 %v6163
      %6421 = vmatprep.subr.bf16.mxu0 %v6172
      %6422 = vmatpush1.bf16.msra.mxu0 %v6171
      %6423 = vmatprep.subr.bf16.mxu0 %v6180
      %6424 = vmatpush1.bf16.msra.mxu0 %v6179
      %6425 = vmatprep.subr.bf16.mxu0 %v6188
      %6426 = vmatpush1.bf16.msra.mxu0 %v6187
      %6427 = vmatprep.subr.bf16.mxu0 %v6196
      %6428 = vmatpush1.bf16.msra.mxu0 %v6195
      %6429 = vmatprep.subr.bf16.mxu0 %v6204
      %6430 = vmatpush1.bf16.msra.mxu0 %v6203
      %6431 = vmatprep.subr.bf16.mxu0 %v6212
      %6432 = vmatpush1.bf16.msra.mxu0 %v6211
      %6433 = vmatprep.subr.bf16.mxu0 %v6350
      %6434 = vmatpush1.bf16.msra.mxu0 %v6347
      %6435 = vmatprep.subr.bf16.mxu0 0
      %6436 = vmatpush1.bf16.msra.mxu0 0
      %6437 = vmatprep.mubr.bf16.mxu0 %v6338
      %6438 = vmatmul.mubr.bf16.gmra.mrb[0].mxu0 %v5754
      %v6439 = vpop.f32.mrb[0].mxu0
      %v6440 = vadd.f32 0.0, %v6439
      %v6441 = vpop.f32.mrb[0].mxu0
      %v6442 = vadd.f32 0.0, %v6441
      %v6443 = vpop.f32.mrb[0].mxu0
      %v6444 = vpop.f32.mrb[0].mxu0
      %6445 = vdwg.mxu0
      %6446 = vmatprep.subr.bf16.mxu0 %v6110
      %6447 = vmatpush1.bf16.msra.mxu0 %v6109
      %6448 = vmatprep.subr.bf16.mxu0 %v6118
      %6449 = vmatpush1.bf16.msra.mxu0 %v6117
      %6450 = vmatprep.subr.bf16.mxu0 %v6126
      %6451 = vmatpush1.bf16.msra.mxu0 %v6125
      %6452 = vmatprep.subr.bf16.mxu0 %v6134
      %6453 = vmatpush1.bf16.msra.mxu0 %v6133
      %6454 = vmatprep.subr.bf16.mxu0 %v6142
      %6455 = vmatpush1.bf16.msra.mxu0 %v6141
      %6456 = vmatprep.subr.bf16.mxu0 %v6150
      %6457 = vmatpush1.bf16.msra.mxu0 %v6149
      %6458 = vmatprep.subr.bf16.mxu0 %v6158
      %6459 = vmatpush1.bf16.msra.mxu0 %v6157
      %6460 = vmatprep.subr.bf16.mxu0 %v6166
      %6461 = vmatpush1.bf16.msra.mxu0 %v6165
      %6462 = vmatprep.subr.bf16.mxu0 %v6174
      %6463 = vmatpush1.bf16.msra.mxu0 %v6173
      %6464 = vmatprep.subr.bf16.mxu0 %v6182
      %6465 = vmatpush1.bf16.msra.mxu0 %v6181
      %6466 = vmatprep.subr.bf16.mxu0 %v6190
      %6467 = vmatpush1.bf16.msra.mxu0 %v6189
      %6468 = vmatprep.subr.bf16.mxu0 %v6198
      %6469 = vmatpush1.bf16.msra.mxu0 %v6197
      %6470 = vmatprep.subr.bf16.mxu0 %v6206
      %6471 = vmatpush1.bf16.msra.mxu0 %v6205
      %6472 = vmatprep.subr.bf16.mxu0 %v6214
      %6473 = vmatpush1.bf16.msra.mxu0 %v6213
      %6474 = vmatprep.subr.bf16.mxu0 %v6356
      %6475 = vmatpush1.bf16.msra.mxu0 %v6353
      %6476 = vmatprep.subr.bf16.mxu0 0
      %6477 = vmatpush1.bf16.msra.mxu0 0
      %6478 = vmatprep.mubr.bf16.mxu0 %v6338
      %6479 = vmatmul.mubr.bf16.gmra.mrb[0].mxu0 %v5754
      %v6480 = vpop.f32.mrb[0].mxu0
      %v6481 = vadd.f32 0.0, %v6480
      %v6482 = vpop.f32.mrb[0].mxu0
      %v6483 = vadd.f32 0.0, %v6482
      %v6484 = vpop.f32.mrb[0].mxu0
      %v6485 = vpop.f32.mrb[0].mxu0
      %6486 = vdwg.mxu0
      %6487 = vmatprep.subr.bf16.mxu0 %v6112
      %6488 = vmatpush1.bf16.msra.mxu0 %v6111
      %6489 = vmatprep.subr.bf16.mxu0 %v6120
      %6490 = vmatpush1.bf16.msra.mxu0 %v6119
      %6491 = vmatprep.subr.bf16.mxu0 %v6128
      %6492 = vmatpush1.bf16.msra.mxu0 %v6127
      %6493 = vmatprep.subr.bf16.mxu0 %v6136
      %6494 = vmatpush1.bf16.msra.mxu0 %v6135
      %6495 = vmatprep.subr.bf16.mxu0 %v6144
      %6496 = vmatpush1.bf16.msra.mxu0 %v6143
      %6497 = vmatprep.subr.bf16.mxu0 %v6152
      %6498 = vmatpush1.bf16.msra.mxu0 %v6151
      %6499 = vmatprep.subr.bf16.mxu0 %v6160
      %6500 = vmatpush1.bf16.msra.mxu0 %v6159
      %6501 = vmatprep.subr.bf16.mxu0 %v6168
      %6502 = vmatpush1.bf16.msra.mxu0 %v6167
      %6503 = vmatprep.subr.bf16.mxu0 %v6176
      %6504 = vmatpush1.bf16.msra.mxu0 %v6175
      %6505 = vmatprep.subr.bf16.mxu0 %v6184
      %6506 = vmatpush1.bf16.msra.mxu0 %v6183
      %6507 = vmatprep.subr.bf16.mxu0 %v6192
      %6508 = vmatpush1.bf16.msra.mxu0 %v6191
      %6509 = vmatprep.subr.bf16.mxu0 %v6200
      %6510 = vmatpush1.bf16.msra.mxu0 %v6199
      %6511 = vmatprep.subr.bf16.mxu0 %v6208
      %6512 = vmatpush1.bf16.msra.mxu0 %v6207
      %6513 = vmatprep.subr.bf16.mxu0 %v6216
      %6514 = vmatpush1.bf16.msra.mxu0 %v6215
      %6515 = vmatprep.subr.bf16.mxu0 %v6362
      %6516 = vmatpush1.bf16.msra.mxu0 %v6359
      %6517 = vmatprep.subr.bf16.mxu0 0
      %6518 = vmatpush1.bf16.msra.mxu0 0
      %6519 = vmatprep.mubr.bf16.mxu0 %v6338
      %6520 = vmatmul.mubr.bf16.gmra.mrb[0].mxu0 %v5754
      %v6521 = vpop.f32.mrb[0].mxu0
      %v6522 = vadd.f32 0.0, %v6521
      %v6523 = vpop.f32.mrb[0].mxu0
      %v6524 = vadd.f32 0.0, %v6523
      %v6525 = vpop.f32.mrb[0].mxu0
      %v6526 = vpop.f32.mrb[0].mxu0
      %6527 = vdwg.mxu0
      %v6528 = vmax.f32 %v6399, 0.0
      %v6529 = vmax.f32 %v6401, 0.0
      %v6530 = vmax.f32 %v6440, 0.0
      %v6531 = vmax.f32 %v6442, 0.0
      %v6532 = vmax.f32 %v6481, 0.0
      %v6533 = vmax.f32 %v6483, 0.0
      %v6534 = vmax.f32 %v6522, 0.0
      %v6535 = vmax.f32 %v6524, 0.0
      %v6536 = vmul.f32 %v6528, %v3590
      %v6537 = vmul.f32 %v6529, %v3594
      %v6538 = vmul.f32 %v6530, %v3598
      %v6539 = vmul.f32 %v6531, %v3602
      %v6540 = vmul.f32 %v6532, %v3606
      %v6541 = vmul.f32 %v6533, %v3610
      %v6542 = vmul.f32 %v6534, %v3614
      %v6543 = vmul.f32 %v6535, %v3618
      %v6544 = vpack.c.bf16 %v6536, %v6536
      %v6545 = vpack.c.bf16 %v6537, %v6537
      %v6546 = vpack.c.bf16 %v6538, %v6538
      %v6547 = vpack.c.bf16 %v6539, %v6539
      %v6548 = vpack.c.bf16 %v6540, %v6540
      %v6549 = vpack.c.bf16 %v6541, %v6541
      %v6550 = vpack.c.bf16 %v6542, %v6542
      %v6551 = vpack.c.bf16 %v6543, %v6543
      %v6560 = vcombine.low %v6544, %v6545
      %v6561 = vcombine.low %v6546, %v6547
      %v6563 = vunpack.c.l.s4 1983009808
      %v6564 = vunpack.c.0.s8 %v6563
      %v6565 = vlaneseq
      %v6566 = vshrl.u32 %v6565, 7
      %v6567 = vsub.s32 %v6564, %v6566
      %v6568 = vrot.slane %v6560, %v6567
      %v6570 = vunpack.c.l.s4 1983009808
      %v6571 = vunpack.c.0.s8 %v6570
      %v6572 = vlaneseq
      %v6573 = vshrl.u32 %v6572, 7
      %v6574 = vsub.s32 %v6571, %v6573
      %v6575 = vrot.slane %v6561, %v6574
      %v6576 = vcombine.low %v6568, %v6575
      %v6577 = vcombine.low %v6548, %v6549
      %v6578 = vcombine.low %v6550, %v6551
      %v6580 = vunpack.c.l.s4 1983009808
      %v6581 = vunpack.c.0.s8 %v6580
      %v6582 = vlaneseq
      %v6583 = vshrl.u32 %v6582, 7
      %v6584 = vsub.s32 %v6581, %v6583
      %v6585 = vrot.slane %v6577, %v6584
      %v6587 = vunpack.c.l.s4 1983009808
      %v6588 = vunpack.c.0.s8 %v6587
      %v6589 = vlaneseq
      %v6590 = vshrl.u32 %v6589, 7
      %v6591 = vsub.s32 %v6588, %v6590
      %v6592 = vrot.slane %v6578, %v6591
      %v6593 = vcombine.low %v6585, %v6592
      %6596 = vst [vmem:[%s194] sm:$0xff] %v6576
      %6597 = vst.msk [vmem:[%s194 + $0x8] sm:$0xff] %vm3693, %v6593
      %p6598 = scmp.lt.s32.totalorder %s15, 1
      %s6599 = scalar_select %p6598, %s15, 1
      %s6600 = smul.addr %s6599, 8
      %s6601 = smul.addr %s6600, 2
      %s6602 = scalar_lea.vmem %s4, %s6601
      // Predicated region
      $region37: #{encoder_forward.2} parent=35 // pred_check
        %p6603 = pneg %p122
      $region38: #{encoder_forward.2} parent=35 // pred_check_branch
        %6605 = sbr.rel (%p6603) target = $region40
      $region39: #{encoder_forward.2} parent=35 // pred_region
        _
      $region40: #{encoder_forward.2} parent=35 // pred_fallthru
        _
    $region36: #{encoder_forward.2} parent=5 // pred_fallthru
      _
    %p6606 = scmp.le.s32.totalorder 2, %s10
    // Predicated region
    $region41: #{encoder_forward.2} parent=5 // pred_check
      %p6607 = pneg %p6606
    $region42: #{encoder_forward.2} parent=5 // pred_check_branch
      %6609 = sbr.rel (%p6607) target = $region44
    $region43: #{encoder_forward.2} parent=5 // pred_region
      %s6610 = ssub.s32 %s10, 2
      // Predicated region
      $region45: #{encoder_forward.2} parent=43 // pred_check
        %p6611 = pneg %p128
      $region46: #{encoder_forward.2} parent=43 // pred_check_branch
        %6613 = sbr.rel (%p6611) target = $region48
      $region47: #{encoder_forward.2} parent=43 // pred_region
        %p6614 = scmp.lt.s32.totalorder %s16, 1
        %s6615 = scalar_select %p6614, %s16, 1
        %s6616 = smul.addr %s6615, 8
        %s6617 = smul.addr %s6616, 2
        %s6618 = scalar_lea.vmem %s4, %s6617
      $region48: #{encoder_forward.2} parent=43 // pred_fallthru
        _
    $region44: #{encoder_forward.2} parent=5 // pred_fallthru
      _
  $region6: #{encoder_forward.2} parent=0 // loop_footer
    %s14 = sadd.s32 1, %s10
  $region7: #{encoder_forward.2} parent=0 // loop_footer_branch
    %9 = sbr.rel target = $region3
  $region8: #{encoder_forward.2} parent=0 // loop_exit
    _

// kernel: reverse
$region0: #{reverse}
  #allocation0 [shape = 's32[1]{0}', space=sflag, size = 0x4, scoped, tag = 'scoped memory for reverse']
  %s0 = inlined_call_operand.vmem [shape: f32[8,8,3,3,3], index: 0, kind: input, shape index: {}]
  %s1 = inlined_call_operand.vmem [shape: bf16[8,8,3,3,3], index: 1, kind: output, shape index: {}]
  %s2 = scalar_lea.vmem %s0, 208
  %v3 = vld [vmem:[%s2] sm:$0xff]
  %v4 = vpack.c.bf16 0.0, %v3
  %5 = vst [vmem:[%s1] sm:$0xf] %v4
  %s6 = scalar_lea.vmem %s0, 136
  %v7 = vld [vmem:[%s6] sm:$0xff]
  %s8 = scalar_lea.vmem %s1, 36
  %v9 = vpack.c.bf16 0.0, %v7
  %10 = vst [vmem:[%s8] sm:$0xf] %v9
  %s11 = scalar_lea.vmem %s0, 64
  %v12 = vld [vmem:[%s11] sm:$0xff]
  %s13 = scalar_lea.vmem %s1, 72
  %v14 = vpack.c.bf16 0.0, %v12
  %15 = vst [vmem:[%s13] sm:$0xf] %v14
  %s16 = scalar_lea.vmem %s0, 184
  %v17 = vld [vmem:[%s16] sm:$0xff]
  %s18 = scalar_lea.vmem %s1, 12
  %v19 = vpack.c.bf16 0.0, %v17
  %20 = vst [vmem:[%s18] sm:$0xf] %v19
  %s21 = scalar_lea.vmem %s0, 112
  %v22 = vld [vmem:[%s21] sm:$0xff]
  %s23 = scalar_lea.vmem %s1, 48
  %v24 = vpack.c.bf16 0.0, %v22
  %25 = vst [vmem:[%s23] sm:$0xf] %v24
  %s26 = scalar_lea.vmem %s0, 40
  %v27 = vld [vmem:[%s26] sm:$0xff]
  %s28 = scalar_lea.vmem %s1, 84
  %v29 = vpack.c.bf16 0.0, %v27
  %30 = vst [vmem:[%s28] sm:$0xf] %v29
  %s31 = scalar_lea.vmem %s0, 160
  %v32 = vld [vmem:[%s31] sm:$0xff]
  %s33 = scalar_lea.vmem %s1, 24
  %v34 = vpack.c.bf16 0.0, %v32
  %35 = vst [vmem:[%s33] sm:$0xf] %v34
  %s36 = scalar_lea.vmem %s0, 88
  %v37 = vld [vmem:[%s36] sm:$0xff]
  %s38 = scalar_lea.vmem %s1, 60
  %v39 = vpack.c.bf16 0.0, %v37
  %40 = vst [vmem:[%s38] sm:$0xf] %v39
  %s41 = scalar_lea.vmem %s0, 16
  %v42 = vld [vmem:[%s41] sm:$0xff]
  %s43 = scalar_lea.vmem %s1, 96
  %v44 = vpack.c.bf16 0.0, %v42
  %45 = vst [vmem:[%s43] sm:$0xf] %v44
  %s46 = scalar_lea.vmem %s0, 200
  %v47 = vld [vmem:[%s46] sm:$0xff]
  %s48 = scalar_lea.vmem %s1, 4
  %v49 = vpack.c.bf16 0.0, %v47
  %50 = vst [vmem:[%s48] sm:$0xf] %v49
  %s51 = scalar_lea.vmem %s0, 128
  %v52 = vld [vmem:[%s51] sm:$0xff]
  %s53 = scalar_lea.vmem %s1, 40
  %v54 = vpack.c.bf16 0.0, %v52
  %55 = vst [vmem:[%s53] sm:$0xf] %v54
  %s56 = scalar_lea.vmem %s0, 56
  %v57 = vld [vmem:[%s56] sm:$0xff]
  %s58 = scalar_lea.vmem %s1, 76
  %v59 = vpack.c.bf16 0.0, %v57
  %60 = vst [vmem:[%s58] sm:$0xf] %v59
  %s61 = scalar_lea.vmem %s0, 176
  %v62 = vld [vmem:[%s61] sm:$0xff]
  %s63 = scalar_lea.vmem %s1, 16
  %v64 = vpack.c.bf16 0.0, %v62
  %65 = vst [vmem:[%s63] sm:$0xf] %v64
  %s66 = scalar_lea.vmem %s0, 104
  %v67 = vld [vmem:[%s66] sm:$0xff]
  %s68 = scalar_lea.vmem %s1, 52
  %v69 = vpack.c.bf16 0.0, %v67
  %70 = vst [vmem:[%s68] sm:$0xf] %v69
  %s71 = scalar_lea.vmem %s0, 32
  %v72 = vld [vmem:[%s71] sm:$0xff]
  %s73 = scalar_lea.vmem %s1, 88
  %v74 = vpack.c.bf16 0.0, %v72
  %75 = vst [vmem:[%s73] sm:$0xf] %v74
  %s76 = scalar_lea.vmem %s0, 152
  %v77 = vld [vmem:[%s76] sm:$0xff]
  %s78 = scalar_lea.vmem %s1, 28
  %v79 = vpack.c.bf16 0.0, %v77
  %80 = vst [vmem:[%s78] sm:$0xf] %v79
  %s81 = scalar_lea.vmem %s0, 80
  %v82 = vld [vmem:[%s81] sm:$0xff]
  %s83 = scalar_lea.vmem %s1, 64
  %v84 = vpack.c.bf16 0.0, %v82
  %85 = vst [vmem:[%s83] sm:$0xf] %v84
  %s86 = scalar_lea.vmem %s0, 8
  %v87 = vld [vmem:[%s86] sm:$0xff]
  %s88 = scalar_lea.vmem %s1, 100
  %v89 = vpack.c.bf16 0.0, %v87
  %90 = vst [vmem:[%s88] sm:$0xf] %v89
  %s91 = scalar_lea.vmem %s0, 192
  %v92 = vld [vmem:[%s91] sm:$0xff]
  %s93 = scalar_lea.vmem %s1, 8
  %v94 = vpack.c.bf16 0.0, %v92
  %95 = vst [vmem:[%s93] sm:$0xf] %v94
  %s96 = scalar_lea.vmem %s0, 120
  %v97 = vld [vmem:[%s96] sm:$0xff]
  %s98 = scalar_lea.vmem %s1, 44
  %v99 = vpack.c.bf16 0.0, %v97
  %100 = vst [vmem:[%s98] sm:$0xf] %v99
  %s101 = scalar_lea.vmem %s0, 48
  %v102 = vld [vmem:[%s101] sm:$0xff]
  %s103 = scalar_lea.vmem %s1, 80
  %v104 = vpack.c.bf16 0.0, %v102
  %105 = vst [vmem:[%s103] sm:$0xf] %v104
  %s106 = scalar_lea.vmem %s0, 168
  %v107 = vld [vmem:[%s106] sm:$0xff]
  %s108 = scalar_lea.vmem %s1, 20
  %v109 = vpack.c.bf16 0.0, %v107
  %110 = vst [vmem:[%s108] sm:$0xf] %v109
  %s111 = scalar_lea.vmem %s0, 96
  %v112 = vld [vmem:[%s111] sm:$0xff]
  %s113 = scalar_lea.vmem %s1, 56
  %v114 = vpack.c.bf16 0.0, %v112
  %115 = vst [vmem:[%s113] sm:$0xf] %v114
  %s116 = scalar_lea.vmem %s0, 24
  %v117 = vld [vmem:[%s116] sm:$0xff]
  %s118 = scalar_lea.vmem %s1, 92
  %v119 = vpack.c.bf16 0.0, %v117
  %120 = vst [vmem:[%s118] sm:$0xf] %v119
  %s121 = scalar_lea.vmem %s0, 144
  %v122 = vld [vmem:[%s121] sm:$0xff]
  %s123 = scalar_lea.vmem %s1, 32
  %v124 = vpack.c.bf16 0.0, %v122
  %125 = vst [vmem:[%s123] sm:$0xf] %v124
  %s126 = scalar_lea.vmem %s0, 72
  %v127 = vld [vmem:[%s126] sm:$0xff]
  %s128 = scalar_lea.vmem %s1, 68
  %v129 = vpack.c.bf16 0.0, %v127
  %130 = vst [vmem:[%s128] sm:$0xf] %v129
  %v131 = vld [vmem:[%s0] sm:$0xff]
  %s132 = scalar_lea.vmem %s1, 104
  %v133 = vpack.c.bf16 0.0, %v131
  %134 = vst [vmem:[%s132] sm:$0xf] %v133

// kernel: encoder_forward.3
$region0: #{encoder_forward.3}
  #allocation0 [shape = 'u32[]', space=smem, size = 0x4, offset = 0x4, fixed_abs, tag = 'smem constant byte address 0x4 - core index']
  #allocation1 [shape = 'u32[144,128]{1,0:T(1,128)}', space=vmem, size = 0x12000, scoped, tag = 'internal scratch']
  #allocation2 [shape = 'bf16[224,216]{1,0:T(16,128)(2,1)}', space=vmem, size = 0x1c000, scoped, tag = 'scratch operand']
  #allocation3 [shape = 'bf16[8,472]{1,0:T(8,128)(2,1)}', space=vmem, size = 0x2000, scoped, tag = 'scratch operand']
  #allocation4 [shape = 'bf16[232,216]{1,0:T(8,128)(2,1)}', space=vmem, size = 0x1d000, scoped, tag = 'scratch operand']
  %s0 = inlined_call_operand.vmem [shape: bf16[2,4,472], index: 0, kind: input, shape index: {}]
  %s1 = inlined_call_operand.vmem [shape: bf16[8,224], index: 1, kind: input, shape index: {}]
  %s2 = inlined_call_operand.vmem [shape: bf16[8,232], index: 2, kind: input, shape index: {}]
  %s3 = inlined_call_operand.vmem [shape: f32[1,216], index: 3, kind: input, shape index: {}]
  %s4 = inlined_call_operand.vmem [shape: bf16[2,8,216], index: 4, kind: output, shape index: {}]
  %s5 = sld [smem:[#allocation0]]
  $region49: #{encoder_forward.3} parent=0
    _
  %s7 = ssub.s32 1, %s5
  %s8 = scalar_select 0, %s7, %s5
  loop: start=0, step=1, limit=4
  $region2: #{encoder_forward.3} parent=0 // loop_pre_header
    _
  $region3: #{encoder_forward.3} parent=0 // loop_header
    %s10 = sphi 0, %s14
    %p11 = scmp.ge.s32.totalorder %s10, 4
    %s20 = sphi 0, %s22
    %s23 = sphi 0, %s20
    %s24 = sphi 0, %s23
    %s40 = sphi 0, %s24
    %s44 = sphi 0, %s44
    %s46 = sphi 0, %s44
    %s47 = sphi 0, %s46
    %s61 = sphi 0, %s47
    %s65 = sphi 0, %s65
    %s67 = sphi 0, %s65
    %s68 = sphi 0, %s67
    %s82 = sphi 0, %s68
    %s86 = sphi 0, %s86
    %s88 = sphi 0, %s86
    %s89 = sphi 0, %s88
    %s103 = sphi 0, %s89
    %s109 = sphi 0, %s111
    %s112 = sphi 0, %s109
    %s113 = sphi 0, %s112
    %s129 = sphi 0, %s113
  $region4: #{encoder_forward.3} parent=0 // loop_header_branch
    %13 = sbr.rel (%p11) target = $region8
  $region5: #{encoder_forward.3} parent=0 // loop_body
    %s15 = ssub.s32 %s10, 1
    %s16 = ssub.s32 %s10, 2
    %s17 = sadd.s32 %s10, 1
    %s18 = ssub.s32 %s10, %s17
    %p19 = scmp.eq.s32.totalorder %s18, 0
    %s21 = sadd.s32 %s20, 1
    %s22 = scalar_select %p19, %s20, %s21
    %p25 = pneg %p19
    %p26 = scmp.eq.s32.totalorder %s10, 1
    %p27 = por %p25, %p26
    %p28 = scmp.ne.s32.totalorder %s20, %s23
    %p29 = scmp.eq.s32.totalorder %s10, 0
    %p30 = por %p28, %p29
    %p31 = scmp.ne.s32.totalorder %s20, %s23
    %p32 = scmp.eq.s32.totalorder %s15, 1
    %p33 = por %p31, %p32
    %p34 = scmp.ne.s32.totalorder %s23, %s24
    %p35 = scmp.eq.s32.totalorder %s15, 0
    %p36 = por %p34, %p35
    %p37 = scmp.ne.s32.totalorder %s23, %s24
    %p38 = scmp.eq.s32.totalorder %s16, 1
    %p39 = por %p37, %p38
    %p41 = scmp.ne.s32.totalorder %s24, %s40
    %p42 = scmp.eq.s32.totalorder %s16, 0
    %p43 = por %p41, %p42
    %s45 = sadd.s32 %s44, 1
    %p48 = scmp.eq.s32.totalorder %s10, 1
    %p49 = scmp.ne.s32.totalorder %s44, %s46
    %p50 = scmp.eq.s32.totalorder %s10, 0
    %p51 = por %p49, %p50
    %p52 = scmp.ne.s32.totalorder %s44, %s46
    %p53 = scmp.eq.s32.totalorder %s15, 1
    %p54 = por %p52, %p53
    %p55 = scmp.ne.s32.totalorder %s46, %s47
    %p56 = scmp.eq.s32.totalorder %s15, 0
    %p57 = por %p55, %p56
    %p58 = scmp.ne.s32.totalorder %s46, %s47
    %p59 = scmp.eq.s32.totalorder %s16, 1
    %p60 = por %p58, %p59
    %p62 = scmp.ne.s32.totalorder %s47, %s61
    %p63 = scmp.eq.s32.totalorder %s16, 0
    %p64 = por %p62, %p63
    %s66 = sadd.s32 %s65, 1
    %p69 = scmp.eq.s32.totalorder %s10, 1
    %p70 = scmp.ne.s32.totalorder %s65, %s67
    %p71 = scmp.eq.s32.totalorder %s10, 0
    %p72 = por %p70, %p71
    %p73 = scmp.ne.s32.totalorder %s65, %s67
    %p74 = scmp.eq.s32.totalorder %s15, 1
    %p75 = por %p73, %p74
    %p76 = scmp.ne.s32.totalorder %s67, %s68
    %p77 = scmp.eq.s32.totalorder %s15, 0
    %p78 = por %p76, %p77
    %p79 = scmp.ne.s32.totalorder %s67, %s68
    %p80 = scmp.eq.s32.totalorder %s16, 1
    %p81 = por %p79, %p80
    %p83 = scmp.ne.s32.totalorder %s68, %s82
    %p84 = scmp.eq.s32.totalorder %s16, 0
    %p85 = por %p83, %p84
    %s87 = sadd.s32 %s86, 1
    %p90 = scmp.eq.s32.totalorder %s10, 1
    %p91 = scmp.ne.s32.totalorder %s86, %s88
    %p92 = scmp.eq.s32.totalorder %s10, 0
    %p93 = por %p91, %p92
    %p94 = scmp.ne.s32.totalorder %s86, %s88
    %p95 = scmp.eq.s32.totalorder %s15, 1
    %p96 = por %p94, %p95
    %p97 = scmp.ne.s32.totalorder %s88, %s89
    %p98 = scmp.eq.s32.totalorder %s15, 0
    %p99 = por %p97, %p98
    %p100 = scmp.ne.s32.totalorder %s88, %s89
    %p101 = scmp.eq.s32.totalorder %s16, 1
    %p102 = por %p100, %p101
    %p104 = scmp.ne.s32.totalorder %s89, %s103
    %p105 = scmp.eq.s32.totalorder %s16, 0
    %p106 = por %p104, %p105
    %s107 = ssub.s32 %s10, %s17
    %p108 = scmp.eq.s32.totalorder %s107, 0
    %s110 = sadd.s32 %s109, 1
    %s111 = scalar_select %p108, %s109, %s110
    %p114 = pneg %p108
    %p115 = scmp.eq.s32.totalorder %s10, 1
    %p116 = por %p114, %p115
    %p117 = scmp.ne.s32.totalorder %s109, %s112
    %p118 = scmp.eq.s32.totalorder %s10, 0
    %p119 = por %p117, %p118
    %p120 = scmp.ne.s32.totalorder %s109, %s112
    %p121 = scmp.eq.s32.totalorder %s15, 1
    %p122 = por %p120, %p121
    %p123 = scmp.ne.s32.totalorder %s112, %s113
    %p124 = scmp.eq.s32.totalorder %s15, 0
    %p125 = por %p123, %p124
    %p126 = scmp.ne.s32.totalorder %s112, %s113
    %p127 = scmp.eq.s32.totalorder %s16, 1
    %p128 = por %p126, %p127
    %p130 = scmp.ne.s32.totalorder %s113, %s129
    %p131 = scmp.eq.s32.totalorder %s16, 0
    %p132 = por %p130, %p131
    %p133 = scmp.le.s32.totalorder 1, %s10
    %p134 = scmp.lt.s32.totalorder %s10, 3
    %p135 = pnand %p133, %p134
    %p136 = pneg %p135
    // Predicated region
    $region9: #{encoder_forward.3} parent=5 // pred_check
      _
    $region10: #{encoder_forward.3} parent=5 // pred_check_branch
      %138 = sbr.rel (%p135) target = $region12
    $region11: #{encoder_forward.3} parent=5 // pred_region
      %s139 = ssub.s32 %s10, 1
      // Predicated region
      $region13: #{encoder_forward.3} parent=11 // pred_check
        %p140 = pneg %p57
      $region14: #{encoder_forward.3} parent=11 // pred_check_branch
        %142 = sbr.rel (%p140) target = $region16
      $region15: #{encoder_forward.3} parent=11 // pred_region
        _
      $region16: #{encoder_forward.3} parent=11 // pred_fallthru
        _
      // Predicated region
      $region17: #{encoder_forward.3} parent=11 // pred_check
        %p143 = pneg %p78
      $region18: #{encoder_forward.3} parent=11 // pred_check_branch
        %145 = sbr.rel (%p143) target = $region20
      $region19: #{encoder_forward.3} parent=11 // pred_region
        _
      $region20: #{encoder_forward.3} parent=11 // pred_fallthru
        _
      // Predicated region
      $region21: #{encoder_forward.3} parent=11 // pred_check
        %p146 = pneg %p99
      $region22: #{encoder_forward.3} parent=11 // pred_check_branch
        %148 = sbr.rel (%p146) target = $region24
      $region23: #{encoder_forward.3} parent=11 // pred_region
        _
      $region24: #{encoder_forward.3} parent=11 // pred_fallthru
        _
    $region12: #{encoder_forward.3} parent=5 // pred_fallthru
      _
    %p149 = scmp.lt.s32.totalorder %s10, 2
    // Predicated region
    $region25: #{encoder_forward.3} parent=5 // pred_check
      %p150 = pneg %p149
    $region26: #{encoder_forward.3} parent=5 // pred_check_branch
      %152 = sbr.rel (%p150) target = $region28
    $region27: #{encoder_forward.3} parent=5 // pred_region
      // Predicated region
      $region29: #{encoder_forward.3} parent=27 // pred_check
        %p153 = pneg %p30
      $region30: #{encoder_forward.3} parent=27 // pred_check_branch
        %155 = sbr.rel (%p153) target = $region32
      $region31: #{encoder_forward.3} parent=27 // pred_region
        %p156 = scmp.lt.s32.totalorder %s10, 1
        %s157 = scalar_select %p156, %s10, 1
        %s158 = smul.addr %s157, 4
        %s159 = smul.addr %s158, 2
        %s160 = scalar_lea.vmem %s0, %s159
      $region32: #{encoder_forward.3} parent=27 // pred_fallthru
        _
    $region28: #{encoder_forward.3} parent=5 // pred_fallthru
      _
    %p161 = scmp.le.s32.totalorder 1, %s10
    %p162 = scmp.lt.s32.totalorder %s10, 3
    %p163 = pnand %p161, %p162
    %p164 = pneg %p163
    // Predicated region
    $region33: #{encoder_forward.3} parent=5 // pred_check
      _
    $region34: #{encoder_forward.3} parent=5 // pred_check_branch
      %166 = sbr.rel (%p163) target = $region36
    $region35: #{encoder_forward.3} parent=5 // pred_region
      %s167 = ssub.s32 %s10, 1
      %p168 = scmp.lt.s32.totalorder %s15, 1
      %s169 = scalar_select %p168, %s15, 1
      %s170 = smul.addr %s169, 4
      %s171 = smul.addr %s170, 2
      %s172 = scalar_lea.vmem %s0, %s171
      %p173 = pneg %p36
      %p174 = pneg %p33
      %p175 = pneg %p57
      %p176 = pneg %p54
      %p177 = pneg %p78
      %p178 = pneg %p75
      %p179 = pneg %p99
      %p180 = pneg %p96
      %p181 = pneg %p125
      %p182 = pneg %p122
      %p183 = scmp.lt.s32.totalorder %s15, 1
      %s184 = scalar_select %p183, %s15, 1
      %s185 = smul.addr %s184, 2
      %s186 = smul.addr %s185, 4
      %s187 = scalar_lea.vmem %s4, %s186
      %p188 = scmp.lt.s32.totalorder %s15, 1
      %s189 = scalar_select %p188, %s15, 1
      %s190 = smul.addr %s189, 4
      %s191 = smul.addr %s190, 2
      %s192 = scalar_lea.vmem %s0, %s191
      %p193 = scmp.lt.s32.totalorder %s15, 1
      %s194 = scalar_select %p193, %s15, 1
      %s195 = smul.addr %s194, 2
      %s196 = smul.addr %s195, 4
      %s197 = scalar_lea.vmem %s4, %s196
      %200 = vst [vmem:[#allocation2] sm:$0xff] 0
      %vm201 = vcmask 719872
      %202 = vst.msk [vmem:[#allocation2 + $0x8] sm:$0xff] %vm201, 0
      %203 = vst [vmem:[#allocation2 + $0x10] sm:$0xff] 0
      %204 = vst.msk [vmem:[#allocation2 + $0x18] sm:$0xff] %vm201, 0
      %205 = vst [vmem:[#allocation2 + $0x20] sm:$0xff] 0
      %206 = vst.msk [vmem:[#allocation2 + $0x28] sm:$0xff] %vm201, 0
      %207 = vst [vmem:[#allocation2 + $0x30] sm:$0xff] 0
      %208 = vst.msk [vmem:[#allocation2 + $0x38] sm:$0xff] %vm201, 0
      %209 = vst [vmem:[#allocation2 + $0x40] sm:$0xff] 0
      %210 = vst.msk [vmem:[#allocation2 + $0x48] sm:$0xff] %vm201, 0
      %211 = vst [vmem:[#allocation2 + $0x50] sm:$0xff] 0
      %212 = vst.msk [vmem:[#allocation2 + $0x58] sm:$0xff] %vm201, 0
      %213 = vst [vmem:[#allocation2 + $0x60] sm:$0xff] 0
      %214 = vst.msk [vmem:[#allocation2 + $0x68] sm:$0xff] %vm201, 0
      %215 = vst [vmem:[#allocation2 + $0x70] sm:$0xff] 0
      %216 = vst.msk [vmem:[#allocation2 + $0x78] sm:$0xff] %vm201, 0
      %217 = vst [vmem:[#allocation2 + $0x80] sm:$0xff] 0
      %218 = vst.msk [vmem:[#allocation2 + $0x88] sm:$0xff] %vm201, 0
      %219 = vst [vmem:[#allocation2 + $0x90] sm:$0xff] 0
      %220 = vst.msk [vmem:[#allocation2 + $0x98] sm:$0xff] %vm201, 0
      %221 = vst [vmem:[#allocation2 + $0xa0] sm:$0xff] 0
      %222 = vst.msk [vmem:[#allocation2 + $0xa8] sm:$0xff] %vm201, 0
      %223 = vst [vmem:[#allocation2 + $0xb0] sm:$0xff] 0
      %224 = vst.msk [vmem:[#allocation2 + $0xb8] sm:$0xff] %vm201, 0
      %225 = vst [vmem:[#allocation2 + $0xc0] sm:$0xff] 0
      %226 = vst.msk [vmem:[#allocation2 + $0xc8] sm:$0xff] %vm201, 0
      %227 = vst [vmem:[#allocation2 + $0xd0] sm:$0xff] 0
      %228 = vst.msk [vmem:[#allocation2 + $0xd8] sm:$0xff] %vm201, 0
      %vm229 = vcmask 1043456
      %vm230 = vcmask 719876
      %vm231 = vmor %vm230, %vm229
      %232 = vst.msk [vmem:[#allocation4] sm:$0xff] %vm231, 0
      %233 = vst.msk [vmem:[#allocation4 + $0x8] sm:$0xff] %vm231, 0
      %234 = vst.msk [vmem:[#allocation4 + $0x10] sm:$0xff] %vm231, 0
      %235 = vst.msk [vmem:[#allocation4 + $0x18] sm:$0xff] %vm231, 0
      %236 = vst.msk [vmem:[#allocation4 + $0x20] sm:$0xff] %vm231, 0
      %237 = vst.msk [vmem:[#allocation4 + $0x28] sm:$0xff] %vm231, 0
      %238 = vst.msk [vmem:[#allocation4 + $0x30] sm:$0xff] %vm231, 0
      %239 = vst.msk [vmem:[#allocation4 + $0x38] sm:$0xff] %vm231, 0
      %240 = vst.msk [vmem:[#allocation4 + $0x40] sm:$0xff] %vm231, 0
      %241 = vst.msk [vmem:[#allocation4 + $0x48] sm:$0xff] %vm231, 0
      %242 = vst.msk [vmem:[#allocation4 + $0x50] sm:$0xff] %vm231, 0
      %243 = vst.msk [vmem:[#allocation4 + $0x58] sm:$0xff] %vm231, 0
      %244 = vst.msk [vmem:[#allocation4 + $0x60] sm:$0xff] %vm231, 0
      %245 = vst.msk [vmem:[#allocation4 + $0x68] sm:$0xff] %vm231, 0
      %246 = vst.msk [vmem:[#allocation4 + $0x70] sm:$0xff] %vm231, 0
      %247 = vst.msk [vmem:[#allocation4 + $0x78] sm:$0xff] %vm231, 0
      %248 = vst.msk [vmem:[#allocation4 + $0x80] sm:$0xff] %vm231, 0
      %249 = vst.msk [vmem:[#allocation4 + $0x88] sm:$0xff] %vm231, 0
      %250 = vst.msk [vmem:[#allocation4 + $0x90] sm:$0xff] %vm231, 0
      %251 = vst.msk [vmem:[#allocation4 + $0x98] sm:$0xff] %vm231, 0
      %252 = vst.msk [vmem:[#allocation4 + $0xa0] sm:$0xff] %vm231, 0
      %253 = vst.msk [vmem:[#allocation4 + $0xa8] sm:$0xff] %vm231, 0
      %254 = vst.msk [vmem:[#allocation4 + $0xb0] sm:$0xff] %vm231, 0
      %255 = vst.msk [vmem:[#allocation4 + $0xb8] sm:$0xff] %vm231, 0
      %256 = vst.msk [vmem:[#allocation4 + $0xc0] sm:$0xff] %vm231, 0
      %257 = vst.msk [vmem:[#allocation4 + $0xc8] sm:$0xff] %vm231, 0
      %258 = vst.msk [vmem:[#allocation4 + $0xd0] sm:$0xff] %vm231, 0
      %259 = vst.msk [vmem:[#allocation4 + $0xd8] sm:$0xff] %vm231, 0
      %260 = vst.msk [vmem:[#allocation4 + $0xe0] sm:$0xff] %vm231, 0
      %261 = vst [vmem:[#allocation3] sm:$0xff] 0
      %262 = vst.msk [vmem:[#allocation3 + $0x8] sm:$0xff] %vm231, 0
      %vm263 = vcmask 1044484
      %vm264 = vsmask.f32 4352
      %vm265 = vmand %vm263, %vm264
      %v266 = vld [vmem:[#allocation2 + $0xd0] sm:$0x10]
      %v267 = vsel %vm265, 1065369472, %v266
      %268 = vst [vmem:[#allocation2 + $0xd0] sm:$0x10] %v267
      %vm269 = vcmask 716804
      %vm270 = vmand %vm269, %vm264
      %v271 = vld [vmem:[#allocation2 + $0xd8] sm:$0x10]
      %v272 = vsel %vm270, 1065369472, %v271
      %273 = vst [vmem:[#allocation2 + $0xd8] sm:$0x10] %v272
      %vm274 = vcmask 1040384
      %vm275 = vsmask.f32 256
      %vm276 = vmand %vm274, %vm275
      %vm277 = vmor %vm270, %vm276
      %v278 = vld [vmem:[#allocation4 + $0xd8] sm:$0x11]
      %v279 = vsel %vm277, 1065369472, %v278
      %280 = vst [vmem:[#allocation4 + $0xd8] sm:$0x11] %v279
      %v281 = vld [vmem:[%s3] sm:$0x3]
      %v282 = vld [vmem:[%s192] sm:$0x3f]
      %v284 = vcombine.high %v282, %v282
      %v286 = vunpack.c.l.s4 1983009808
      %v287 = vunpack.c.0.s8 %v286
      %v288 = vlaneseq
      %v289 = vshrl.u32 %v288, 7
      %v290 = vsub.s32 %v287, %v289
      %v291 = vrot.slane %v282, %v290
      %v293 = vunpack.c.l.s4 1983009808
      %v294 = vunpack.c.0.s8 %v293
      %v295 = vlaneseq
      %v296 = vshrl.u32 %v295, 7
      %v297 = vsub.s32 %v294, %v296
      %v298 = vrot.slane %v284, %v297
      %v299 = vcombine.high %v291, %v291
      %300 = vrot.lane.b32.xlu0 %v291, 43
      %v301 = vpop.permute.xlu0 %300
      %302 = vrot.lane.b32.xlu0 %v299, 43
      %v303 = vpop.permute.xlu0 %302
      %304 = vrot.lane.b32.xlu0 %v298, 43
      %v305 = vpop.permute.xlu0 %304
      %vm306 = vcmask 351232
      %v307 = vsel %vm306, %v301, %v303
      %v308 = vsel %vm306, %v303, %v305
      %311 = vst [vmem:[#allocation2] sm:$0x3] %v307
      %vm312 = vcmask 713728
      %313 = vst.msk [vmem:[#allocation2 + $0x8] sm:$0x3] %vm312, %v308
      %v314 = vld [vmem:[%s192] sm:$0x3f]
      %v316 = vcombine.high %v314, %v314
      %v318 = vunpack.c.l.s4 1983009808
      %v319 = vunpack.c.0.s8 %v318
      %v320 = vlaneseq
      %v321 = vshrl.u32 %v320, 7
      %v322 = vsub.s32 %v319, %v321
      %v323 = vrot.slane %v314, %v322
      %v325 = vunpack.c.l.s4 1983009808
      %v326 = vunpack.c.0.s8 %v325
      %v327 = vlaneseq
      %v328 = vshrl.u32 %v327, 7
      %v329 = vsub.s32 %v326, %v328
      %v330 = vrot.slane %v316, %v329
      %v331 = vcombine.low %v323, %v323
      %v332 = vcombine.low %v330, %v330
      %333 = vrot.lane.b32.xlu0 %v331, 42
      %v334 = vpop.permute.xlu0 %333
      %335 = vrot.lane.b32.xlu0 %v323, 42
      %v336 = vpop.permute.xlu0 %335
      %337 = vrot.lane.b32.xlu0 %v332, 42
      %v338 = vpop.permute.xlu0 %337
      %vm339 = vcmask 343040
      %v340 = vsel %vm339, %v334, %v336
      %v341 = vsel %vm339, %v336, %v338
      %344 = vst [vmem:[#allocation2] sm:$0x30] %v340
      %vm345 = vcmask 717828
      %346 = vst.msk [vmem:[#allocation2 + $0x8] sm:$0x30] %vm345, %v341
      %v347 = vld [vmem:[%s192] sm:$0x3f]
      %v349 = vcombine.high %v347, %v347
      %v351 = vunpack.c.l.s4 1983009808
      %v352 = vunpack.c.0.s8 %v351
      %v353 = vlaneseq
      %v354 = vshrl.u32 %v353, 7
      %v355 = vsub.s32 %v352, %v354
      %v356 = vrot.slane %v347, %v355
      %v358 = vunpack.c.l.s4 1983009808
      %v359 = vunpack.c.0.s8 %v358
      %v360 = vlaneseq
      %v361 = vshrl.u32 %v360, 7
      %v362 = vsub.s32 %v359, %v361
      %v363 = vrot.slane %v349, %v362
      %v364 = vcombine.high %v356, %v356
      %365 = vrot.lane.b32.xlu0 %v356, 41
      %v366 = vpop.permute.xlu0 %365
      %367 = vrot.lane.b32.xlu0 %v364, 41
      %v368 = vpop.permute.xlu0 %367
      %369 = vrot.lane.b32.xlu0 %v363, 41
      %v370 = vpop.permute.xlu0 %369
      %vm371 = vcmask 334848
      %v372 = vsel %vm371, %v366, %v368
      %v373 = vsel %vm371, %v368, %v370
      %376 = vst [vmem:[#allocation2 + $0x10] sm:$0x3] %v372
      %377 = vst.msk [vmem:[#allocation2 + $0x18] sm:$0x3] %vm312, %v373
      %v378 = vld [vmem:[%s192] sm:$0x3f]
      %v380 = vcombine.high %v378, %v378
      %v382 = vunpack.c.l.s4 1983009808
      %v383 = vunpack.c.0.s8 %v382
      %v384 = vlaneseq
      %v385 = vshrl.u32 %v384, 7
      %v386 = vsub.s32 %v383, %v385
      %v387 = vrot.slane %v378, %v386
      %v389 = vunpack.c.l.s4 1983009808
      %v390 = vunpack.c.0.s8 %v389
      %v391 = vlaneseq
      %v392 = vshrl.u32 %v391, 7
      %v393 = vsub.s32 %v390, %v392
      %v394 = vrot.slane %v380, %v393
      %v395 = vcombine.low %v387, %v387
      %v396 = vcombine.low %v394, %v394
      %397 = vrot.lane.b32.xlu0 %v395, 37
      %v398 = vpop.permute.xlu0 %397
      %399 = vrot.lane.b32.xlu0 %v387, 37
      %v400 = vpop.permute.xlu0 %399
      %401 = vrot.lane.b32.xlu0 %v396, 37
      %v402 = vpop.permute.xlu0 %401
      %vm403 = vcmask 302080
      %v404 = vsel %vm403, %v398, %v400
      %v405 = vsel %vm403, %v400, %v402
      %408 = vst [vmem:[#allocation2 + $0x10] sm:$0x30] %v404
      %409 = vst.msk [vmem:[#allocation2 + $0x18] sm:$0x30] %vm345, %v405
      %v410 = vld [vmem:[%s192] sm:$0x3f]
      %v412 = vcombine.high %v410, %v410
      %v414 = vunpack.c.l.s4 1983009808
      %v415 = vunpack.c.0.s8 %v414
      %v416 = vlaneseq
      %v417 = vshrl.u32 %v416, 7
      %v418 = vsub.s32 %v415, %v417
      %v419 = vrot.slane %v410, %v418
      %v421 = vunpack.c.l.s4 1983009808
      %v422 = vunpack.c.0.s8 %v421
      %v423 = vlaneseq
      %v424 = vshrl.u32 %v423, 7
      %v425 = vsub.s32 %v422, %v424
      %v426 = vrot.slane %v412, %v425
      %v427 = vcombine.high %v419, %v419
      %428 = vrot.lane.b32.xlu0 %v419, 36
      %v429 = vpop.permute.xlu0 %428
      %430 = vrot.lane.b32.xlu0 %v427, 36
      %v431 = vpop.permute.xlu0 %430
      %432 = vrot.lane.b32.xlu0 %v426, 36
      %v433 = vpop.permute.xlu0 %432
      %vm434 = vcmask 293888
      %v435 = vsel %vm434, %v429, %v431
      %v436 = vsel %vm434, %v431, %v433
      %439 = vst [vmem:[#allocation2 + $0x20] sm:$0x3] %v435
      %440 = vst.msk [vmem:[#allocation2 + $0x28] sm:$0x3] %vm312, %v436
      %v441 = vld [vmem:[%s192] sm:$0x3f]
      %v443 = vcombine.high %v441, %v441
      %v445 = vunpack.c.l.s4 1983009808
      %v446 = vunpack.c.0.s8 %v445
      %v447 = vlaneseq
      %v448 = vshrl.u32 %v447, 7
      %v449 = vsub.s32 %v446, %v448
      %v450 = vrot.slane %v441, %v449
      %v452 = vunpack.c.l.s4 1983009808
      %v453 = vunpack.c.0.s8 %v452
      %v454 = vlaneseq
      %v455 = vshrl.u32 %v454, 7
      %v456 = vsub.s32 %v453, %v455
      %v457 = vrot.slane %v443, %v456
      %v458 = vcombine.low %v450, %v450
      %v459 = vcombine.low %v457, %v457
      %460 = vrot.lane.b32.xlu0 %v458, 35
      %v461 = vpop.permute.xlu0 %460
      %462 = vrot.lane.b32.xlu0 %v450, 35
      %v463 = vpop.permute.xlu0 %462
      %464 = vrot.lane.b32.xlu0 %v459, 35
      %v465 = vpop.permute.xlu0 %464
      %vm466 = vcmask 285696
      %v467 = vsel %vm466, %v461, %v463
      %v468 = vsel %vm466, %v463, %v465
      %471 = vst [vmem:[#allocation2 + $0x20] sm:$0x30] %v467
      %472 = vst.msk [vmem:[#allocation2 + $0x28] sm:$0x30] %vm345, %v468
      %v473 = vld [vmem:[%s192] sm:$0x3f]
      %v475 = vcombine.high %v473, %v473
      %v477 = vunpack.c.l.s4 1983009808
      %v478 = vunpack.c.0.s8 %v477
      %v479 = vlaneseq
      %v480 = vshrl.u32 %v479, 7
      %v481 = vsub.s32 %v478, %v480
      %v482 = vrot.slane %v473, %v481
      %v484 = vunpack.c.l.s4 1983009808
      %v485 = vunpack.c.0.s8 %v484
      %v486 = vlaneseq
      %v487 = vshrl.u32 %v486, 7
      %v488 = vsub.s32 %v485, %v487
      %v489 = vrot.slane %v475, %v488
      %v490 = vcombine.high %v482, %v482
      %491 = vrot.lane.b32.xlu0 %v482, 31
      %v492 = vpop.permute.xlu0 %491
      %493 = vrot.lane.b32.xlu0 %v490, 31
      %v494 = vpop.permute.xlu0 %493
      %495 = vrot.lane.b32.xlu0 %v489, 31
      %v496 = vpop.permute.xlu0 %495
      %vm497 = vcmask 252928
      %v498 = vsel %vm497, %v492, %v494
      %v499 = vsel %vm497, %v494, %v496
      %502 = vst [vmem:[#allocation2 + $0x30] sm:$0x3] %v498
      %503 = vst.msk [vmem:[#allocation2 + $0x38] sm:$0x3] %vm312, %v499
      %v504 = vld [vmem:[%s192] sm:$0x3f]
      %v506 = vcombine.high %v504, %v504
      %v508 = vunpack.c.l.s4 1983009808
      %v509 = vunpack.c.0.s8 %v508
      %v510 = vlaneseq
      %v511 = vshrl.u32 %v510, 7
      %v512 = vsub.s32 %v509, %v511
      %v513 = vrot.slane %v504, %v512
      %v515 = vunpack.c.l.s4 1983009808
      %v516 = vunpack.c.0.s8 %v515
      %v517 = vlaneseq
      %v518 = vshrl.u32 %v517, 7
      %v519 = vsub.s32 %v516, %v518
      %v520 = vrot.slane %v506, %v519
      %v521 = vcombine.low %v513, %v513
      %v522 = vcombine.low %v520, %v520
      %523 = vrot.lane.b32.xlu0 %v521, 30
      %v524 = vpop.permute.xlu0 %523
      %525 = vrot.lane.b32.xlu0 %v513, 30
      %v526 = vpop.permute.xlu0 %525
      %527 = vrot.lane.b32.xlu0 %v522, 30
      %v528 = vpop.permute.xlu0 %527
      %vm529 = vcmask 244736
      %v530 = vsel %vm529, %v524, %v526
      %v531 = vsel %vm529, %v526, %v528
      %534 = vst [vmem:[#allocation2 + $0x30] sm:$0x30] %v530
      %535 = vst.msk [vmem:[#allocation2 + $0x38] sm:$0x30] %vm345, %v531
      %v536 = vld [vmem:[%s192] sm:$0x3f]
      %v538 = vcombine.high %v536, %v536
      %v540 = vunpack.c.l.s4 1983009808
      %v541 = vunpack.c.0.s8 %v540
      %v542 = vlaneseq
      %v543 = vshrl.u32 %v542, 7
      %v544 = vsub.s32 %v541, %v543
      %v545 = vrot.slane %v536, %v544
      %v547 = vunpack.c.l.s4 1983009808
      %v548 = vunpack.c.0.s8 %v547
      %v549 = vlaneseq
      %v550 = vshrl.u32 %v549, 7
      %v551 = vsub.s32 %v548, %v550
      %v552 = vrot.slane %v538, %v551
      %v553 = vcombine.high %v545, %v545
      %554 = vrot.lane.b32.xlu0 %v545, 29
      %v555 = vpop.permute.xlu0 %554
      %556 = vrot.lane.b32.xlu0 %v553, 29
      %v557 = vpop.permute.xlu0 %556
      %558 = vrot.lane.b32.xlu0 %v552, 29
      %v559 = vpop.permute.xlu0 %558
      %vm560 = vcmask 236544
      %v561 = vsel %vm560, %v555, %v557
      %v562 = vsel %vm560, %v557, %v559
      %565 = vst [vmem:[#allocation2 + $0x40] sm:$0x3] %v561
      %566 = vst.msk [vmem:[#allocation2 + $0x48] sm:$0x3] %vm312, %v562
      %v567 = vld [vmem:[%s192] sm:$0x3f]
      %v569 = vcombine.high %v567, %v567
      %v571 = vunpack.c.l.s4 1983009808
      %v572 = vunpack.c.0.s8 %v571
      %v573 = vlaneseq
      %v574 = vshrl.u32 %v573, 7
      %v575 = vsub.s32 %v572, %v574
      %v576 = vrot.slane %v567, %v575
      %v578 = vunpack.c.l.s4 1983009808
      %v579 = vunpack.c.0.s8 %v578
      %v580 = vlaneseq
      %v581 = vshrl.u32 %v580, 7
      %v582 = vsub.s32 %v579, %v581
      %v583 = vrot.slane %v569, %v582
      %v584 = vcombine.low %v576, %v576
      %v585 = vcombine.low %v583, %v583
      %586 = vrot.lane.b32.xlu0 %v584, 7
      %v587 = vpop.permute.xlu0 %586
      %588 = vrot.lane.b32.xlu0 %v576, 7
      %v589 = vpop.permute.xlu0 %588
      %590 = vrot.lane.b32.xlu0 %v585, 7
      %v591 = vpop.permute.xlu0 %590
      %vm592 = vcmask 56320
      %v593 = vsel %vm592, %v587, %v589
      %v594 = vsel %vm592, %v589, %v591
      %597 = vst [vmem:[#allocation2 + $0x40] sm:$0x30] %v593
      %598 = vst.msk [vmem:[#allocation2 + $0x48] sm:$0x30] %vm345, %v594
      %v599 = vld [vmem:[%s192] sm:$0x3f]
      %v601 = vcombine.high %v599, %v599
      %v603 = vunpack.c.l.s4 1983009808
      %v604 = vunpack.c.0.s8 %v603
      %v605 = vlaneseq
      %v606 = vshrl.u32 %v605, 7
      %v607 = vsub.s32 %v604, %v606
      %v608 = vrot.slane %v599, %v607
      %v610 = vunpack.c.l.s4 1983009808
      %v611 = vunpack.c.0.s8 %v610
      %v612 = vlaneseq
      %v613 = vshrl.u32 %v612, 7
      %v614 = vsub.s32 %v611, %v613
      %v615 = vrot.slane %v601, %v614
      %v616 = vcombine.high %v608, %v608
      %617 = vrot.lane.b32.xlu0 %v608, 6
      %v618 = vpop.permute.xlu0 %617
      %619 = vrot.lane.b32.xlu0 %v616, 6
      %v620 = vpop.permute.xlu0 %619
      %621 = vrot.lane.b32.xlu0 %v615, 6
      %v622 = vpop.permute.xlu0 %621
      %vm623 = vcmask 48128
      %v624 = vsel %vm623, %v618, %v620
      %v625 = vsel %vm623, %v620, %v622
      %628 = vst [vmem:[#allocation2 + $0x50] sm:$0x3] %v624
      %629 = vst.msk [vmem:[#allocation2 + $0x58] sm:$0x3] %vm312, %v625
      %v630 = vld [vmem:[%s192] sm:$0x3f]
      %v632 = vcombine.high %v630, %v630
      %v634 = vunpack.c.l.s4 1983009808
      %v635 = vunpack.c.0.s8 %v634
      %v636 = vlaneseq
      %v637 = vshrl.u32 %v636, 7
      %v638 = vsub.s32 %v635, %v637
      %v639 = vrot.slane %v630, %v638
      %v641 = vunpack.c.l.s4 1983009808
      %v642 = vunpack.c.0.s8 %v641
      %v643 = vlaneseq
      %v644 = vshrl.u32 %v643, 7
      %v645 = vsub.s32 %v642, %v644
      %v646 = vrot.slane %v632, %v645
      %v647 = vcombine.low %v639, %v639
      %v648 = vcombine.low %v646, %v646
      %649 = vrot.lane.b32.xlu0 %v647, 5
      %v650 = vpop.permute.xlu0 %649
      %651 = vrot.lane.b32.xlu0 %v639, 5
      %v652 = vpop.permute.xlu0 %651
      %653 = vrot.lane.b32.xlu0 %v648, 5
      %v654 = vpop.permute.xlu0 %653
      %vm655 = vcmask 39936
      %v656 = vsel %vm655, %v650, %v652
      %v657 = vsel %vm655, %v652, %v654
      %660 = vst [vmem:[#allocation2 + $0x50] sm:$0x30] %v656
      %661 = vst.msk [vmem:[#allocation2 + $0x58] sm:$0x30] %vm345, %v657
      %v662 = vld [vmem:[%s192] sm:$0x3f]
      %v664 = vcombine.high %v662, %v662
      %v666 = vunpack.c.l.s4 1983009808
      %v667 = vunpack.c.0.s8 %v666
      %v668 = vlaneseq
      %v669 = vshrl.u32 %v668, 7
      %v670 = vsub.s32 %v667, %v669
      %v671 = vrot.slane %v662, %v670
      %v673 = vunpack.c.l.s4 1983009808
      %v674 = vunpack.c.0.s8 %v673
      %v675 = vlaneseq
      %v676 = vshrl.u32 %v675, 7
      %v677 = vsub.s32 %v674, %v676
      %v678 = vrot.slane %v664, %v677
      %v679 = vcombine.high %v671, %v671
      %680 = vrot.lane.b32.xlu0 %v671, 1
      %v681 = vpop.permute.xlu0 %680
      %682 = vrot.lane.b32.xlu0 %v679, 1
      %v683 = vpop.permute.xlu0 %682
      %684 = vrot.lane.b32.xlu0 %v678, 1
      %v685 = vpop.permute.xlu0 %684
      %vm686 = vcmask 7168
      %v687 = vsel %vm686, %v681, %v683
      %v688 = vsel %vm686, %v683, %v685
      %691 = vst [vmem:[#allocation2 + $0x60] sm:$0x3] %v687
      %692 = vst.msk [vmem:[#allocation2 + $0x68] sm:$0x3] %vm312, %v688
      %v693 = vld [vmem:[%s192 + $0x2] sm:$0xf]
      %v696 = vunpack.c.l.s4 1983009808
      %v697 = vunpack.c.0.s8 %v696
      %v698 = vlaneseq
      %v699 = vshrl.u32 %v698, 7
      %v700 = vsub.s32 %v697, %v699
      %v701 = vrot.slane %v693, %v700
      %v702 = vcombine.low %v701, %v701
      %705 = vst [vmem:[#allocation2 + $0x60] sm:$0x30] %v702
      %706 = vst.msk [vmem:[#allocation2 + $0x68] sm:$0x30] %vm345, %v701
      %v707 = vld [vmem:[%s192 + $0x2] sm:$0xf]
      %v710 = vunpack.c.l.s4 1983009808
      %v711 = vunpack.c.0.s8 %v710
      %v712 = vlaneseq
      %v713 = vshrl.u32 %v712, 7
      %v714 = vsub.s32 %v711, %v713
      %v715 = vrot.slane %v707, %v714
      %v716 = vcombine.high %v715, %v715
      %717 = vrot.lane.b32.xlu0 %v715, 127
      %v718 = vpop.permute.xlu0 %717
      %719 = vrot.lane.b32.xlu0 %v716, 127
      %v720 = vpop.permute.xlu0 %719
      %vm721 = vcmask 1039360
      %v722 = vsel %vm721, %v718, %v720
      %725 = vst [vmem:[#allocation2 + $0x70] sm:$0x3] %v722
      %726 = vst.msk [vmem:[#allocation2 + $0x78] sm:$0x3] %vm312, %v720
      %v727 = vld [vmem:[%s192 + $0x2] sm:$0xf]
      %v730 = vunpack.c.l.s4 1983009808
      %v731 = vunpack.c.0.s8 %v730
      %v732 = vlaneseq
      %v733 = vshrl.u32 %v732, 7
      %v734 = vsub.s32 %v731, %v733
      %v735 = vrot.slane %v727, %v734
      %v736 = vcombine.low %v735, %v735
      %737 = vrot.lane.b32.xlu0 %v736, 123
      %v738 = vpop.permute.xlu0 %737
      %739 = vrot.lane.b32.xlu0 %v735, 123
      %v740 = vpop.permute.xlu0 %739
      %vm741 = vcmask 1006592
      %v742 = vsel %vm741, %v738, %v740
      %745 = vst [vmem:[#allocation2 + $0x70] sm:$0x30] %v742
      %746 = vst.msk [vmem:[#allocation2 + $0x78] sm:$0x30] %vm345, %v740
      %v747 = vld [vmem:[%s192 + $0x2] sm:$0xf]
      %v750 = vunpack.c.l.s4 1983009808
      %v751 = vunpack.c.0.s8 %v750
      %v752 = vlaneseq
      %v753 = vshrl.u32 %v752, 7
      %v754 = vsub.s32 %v751, %v753
      %v755 = vrot.slane %v747, %v754
      %v756 = vcombine.high %v755, %v755
      %757 = vrot.lane.b32.xlu0 %v755, 122
      %v758 = vpop.permute.xlu0 %757
      %759 = vrot.lane.b32.xlu0 %v756, 122
      %v760 = vpop.permute.xlu0 %759
      %vm761 = vcmask 998400
      %v762 = vsel %vm761, %v758, %v760
      %765 = vst [vmem:[#allocation2 + $0x80] sm:$0x3] %v762
      %766 = vst.msk [vmem:[#allocation2 + $0x88] sm:$0x3] %vm312, %v760
      %v767 = vld [vmem:[%s192 + $0x2] sm:$0xf]
      %v770 = vunpack.c.l.s4 1983009808
      %v771 = vunpack.c.0.s8 %v770
      %v772 = vlaneseq
      %v773 = vshrl.u32 %v772, 7
      %v774 = vsub.s32 %v771, %v773
      %v775 = vrot.slane %v767, %v774
      %v776 = vcombine.low %v775, %v775
      %777 = vrot.lane.b32.xlu0 %v776, 121
      %v778 = vpop.permute.xlu0 %777
      %779 = vrot.lane.b32.xlu0 %v775, 121
      %v780 = vpop.permute.xlu0 %779
      %vm781 = vcmask 990208
      %v782 = vsel %vm781, %v778, %v780
      %785 = vst [vmem:[#allocation2 + $0x80] sm:$0x30] %v782
      %786 = vst.msk [vmem:[#allocation2 + $0x88] sm:$0x30] %vm345, %v780
      %v787 = vld [vmem:[%s192 + $0x2] sm:$0xf]
      %v790 = vunpack.c.l.s4 1983009808
      %v791 = vunpack.c.0.s8 %v790
      %v792 = vlaneseq
      %v793 = vshrl.u32 %v792, 7
      %v794 = vsub.s32 %v791, %v793
      %v795 = vrot.slane %v787, %v794
      %v796 = vcombine.high %v795, %v795
      %797 = vrot.lane.b32.xlu0 %v795, 99
      %v798 = vpop.permute.xlu0 %797
      %799 = vrot.lane.b32.xlu0 %v796, 99
      %v800 = vpop.permute.xlu0 %799
      %vm801 = vcmask 809984
      %v802 = vsel %vm801, %v798, %v800
      %805 = vst [vmem:[#allocation2 + $0x90] sm:$0x3] %v802
      %806 = vst.msk [vmem:[#allocation2 + $0x98] sm:$0x3] %vm312, %v800
      %v807 = vld [vmem:[%s192 + $0x2] sm:$0xf]
      %v810 = vunpack.c.l.s4 1983009808
      %v811 = vunpack.c.0.s8 %v810
      %v812 = vlaneseq
      %v813 = vshrl.u32 %v812, 7
      %v814 = vsub.s32 %v811, %v813
      %v815 = vrot.slane %v807, %v814
      %v816 = vcombine.low %v815, %v815
      %817 = vrot.lane.b32.xlu0 %v816, 98
      %v818 = vpop.permute.xlu0 %817
      %819 = vrot.lane.b32.xlu0 %v815, 98
      %v820 = vpop.permute.xlu0 %819
      %vm821 = vcmask 801792
      %v822 = vsel %vm821, %v818, %v820
      %825 = vst [vmem:[#allocation2 + $0x90] sm:$0x30] %v822
      %826 = vst.msk [vmem:[#allocation2 + $0x98] sm:$0x30] %vm345, %v820
      %v827 = vld [vmem:[%s192 + $0x2] sm:$0xf]
      %v830 = vunpack.c.l.s4 1983009808
      %v831 = vunpack.c.0.s8 %v830
      %v832 = vlaneseq
      %v833 = vshrl.u32 %v832, 7
      %v834 = vsub.s32 %v831, %v833
      %v835 = vrot.slane %v827, %v834
      %v836 = vcombine.high %v835, %v835
      %837 = vrot.lane.b32.xlu0 %v835, 97
      %v838 = vpop.permute.xlu0 %837
      %839 = vrot.lane.b32.xlu0 %v836, 97
      %v840 = vpop.permute.xlu0 %839
      %vm841 = vcmask 793600
      %v842 = vsel %vm841, %v838, %v840
      %845 = vst [vmem:[#allocation2 + $0xa0] sm:$0x3] %v842
      %846 = vst.msk [vmem:[#allocation2 + $0xa8] sm:$0x3] %vm312, %v840
      %v847 = vld [vmem:[%s192 + $0x2] sm:$0xf]
      %v850 = vunpack.c.l.s4 1983009808
      %v851 = vunpack.c.0.s8 %v850
      %v852 = vlaneseq
      %v853 = vshrl.u32 %v852, 7
      %v854 = vsub.s32 %v851, %v853
      %v855 = vrot.slane %v847, %v854
      %v856 = vcombine.low %v855, %v855
      %857 = vrot.lane.b32.xlu0 %v856, 93
      %v858 = vpop.permute.xlu0 %857
      %859 = vrot.lane.b32.xlu0 %v855, 93
      %v860 = vpop.permute.xlu0 %859
      %vm861 = vcmask 760832
      %v862 = vsel %vm861, %v858, %v860
      %865 = vst [vmem:[#allocation2 + $0xa0] sm:$0x30] %v862
      %866 = vst.msk [vmem:[#allocation2 + $0xa8] sm:$0x30] %vm345, %v860
      %v867 = vld [vmem:[%s192 + $0x2] sm:$0xf]
      %v870 = vunpack.c.l.s4 1983009808
      %v871 = vunpack.c.0.s8 %v870
      %v872 = vlaneseq
      %v873 = vshrl.u32 %v872, 7
      %v874 = vsub.s32 %v871, %v873
      %v875 = vrot.slane %v867, %v874
      %v876 = vcombine.high %v875, %v875
      %877 = vrot.lane.b32.xlu0 %v875, 92
      %v878 = vpop.permute.xlu0 %877
      %879 = vrot.lane.b32.xlu0 %v876, 92
      %v880 = vpop.permute.xlu0 %879
      %vm881 = vcmask 752640
      %v882 = vsel %vm881, %v878, %v880
      %885 = vst [vmem:[#allocation2 + $0xb0] sm:$0x3] %v882
      %886 = vst.msk [vmem:[#allocation2 + $0xb8] sm:$0x3] %vm312, %v880
      %v887 = vld [vmem:[%s192 + $0x2] sm:$0xf]
      %v890 = vunpack.c.l.s4 1983009808
      %v891 = vunpack.c.0.s8 %v890
      %v892 = vlaneseq
      %v893 = vshrl.u32 %v892, 7
      %v894 = vsub.s32 %v891, %v893
      %v895 = vrot.slane %v887, %v894
      %v896 = vcombine.low %v895, %v895
      %897 = vrot.lane.b32.xlu0 %v896, 91
      %v898 = vpop.permute.xlu0 %897
      %899 = vrot.lane.b32.xlu0 %v895, 91
      %v900 = vpop.permute.xlu0 %899
      %vm901 = vcmask 744448
      %v902 = vsel %vm901, %v898, %v900
      %905 = vst [vmem:[#allocation2 + $0xb0] sm:$0x30] %v902
      %906 = vst.msk [vmem:[#allocation2 + $0xb8] sm:$0x30] %vm345, %v900
      %v907 = vld [vmem:[%s192 + $0x2] sm:$0x3f]
      %v909 = vcombine.high %v907, %v907
      %v911 = vunpack.c.l.s4 1983009808
      %v912 = vunpack.c.0.s8 %v911
      %v913 = vlaneseq
      %v914 = vshrl.u32 %v913, 7
      %v915 = vsub.s32 %v912, %v914
      %v916 = vrot.slane %v907, %v915
      %v918 = vunpack.c.l.s4 1983009808
      %v919 = vunpack.c.0.s8 %v918
      %v920 = vlaneseq
      %v921 = vshrl.u32 %v920, 7
      %v922 = vsub.s32 %v919, %v921
      %v923 = vrot.slane %v909, %v922
      %v924 = vcombine.high %v916, %v916
      %925 = vrot.lane.b32.xlu0 %v916, 87
      %v926 = vpop.permute.xlu0 %925
      %927 = vrot.lane.b32.xlu0 %v924, 87
      %v928 = vpop.permute.xlu0 %927
      %929 = vrot.lane.b32.xlu0 %v923, 87
      %v930 = vpop.permute.xlu0 %929
      %vm931 = vcmask 711680
      %v932 = vsel %vm931, %v926, %v928
      %v933 = vsel %vm931, %v928, %v930
      %936 = vst [vmem:[#allocation2 + $0xc0] sm:$0x3] %v932
      %937 = vst.msk [vmem:[#allocation2 + $0xc8] sm:$0x3] %vm312, %v933
      %v938 = vld [vmem:[%s192 + $0x2] sm:$0x3f]
      %v940 = vcombine.high %v938, %v938
      %v942 = vunpack.c.l.s4 1983009808
      %v943 = vunpack.c.0.s8 %v942
      %v944 = vlaneseq
      %v945 = vshrl.u32 %v944, 7
      %v946 = vsub.s32 %v943, %v945
      %v947 = vrot.slane %v938, %v946
      %v949 = vunpack.c.l.s4 1983009808
      %v950 = vunpack.c.0.s8 %v949
      %v951 = vlaneseq
      %v952 = vshrl.u32 %v951, 7
      %v953 = vsub.s32 %v950, %v952
      %v954 = vrot.slane %v940, %v953
      %v955 = vcombine.low %v947, %v947
      %v956 = vcombine.low %v954, %v954
      %957 = vrot.lane.b32.xlu0 %v955, 86
      %v958 = vpop.permute.xlu0 %957
      %959 = vrot.lane.b32.xlu0 %v947, 86
      %v960 = vpop.permute.xlu0 %959
      %961 = vrot.lane.b32.xlu0 %v956, 86
      %v962 = vpop.permute.xlu0 %961
      %vm963 = vcmask 703488
      %v964 = vsel %vm963, %v958, %v960
      %v965 = vsel %vm963, %v960, %v962
      %968 = vst [vmem:[#allocation2 + $0xc0] sm:$0x30] %v964
      %969 = vst.msk [vmem:[#allocation2 + $0xc8] sm:$0x30] %vm345, %v965
      %v970 = vld [vmem:[%s192 + $0x2] sm:$0x3f]
      %v972 = vcombine.high %v970, %v970
      %v974 = vunpack.c.l.s4 1983009808
      %v975 = vunpack.c.0.s8 %v974
      %v976 = vlaneseq
      %v977 = vshrl.u32 %v976, 7
      %v978 = vsub.s32 %v975, %v977
      %v979 = vrot.slane %v970, %v978
      %v981 = vunpack.c.l.s4 1983009808
      %v982 = vunpack.c.0.s8 %v981
      %v983 = vlaneseq
      %v984 = vshrl.u32 %v983, 7
      %v985 = vsub.s32 %v982, %v984
      %v986 = vrot.slane %v972, %v985
      %v987 = vcombine.high %v979, %v979
      %988 = vrot.lane.b32.xlu0 %v979, 85
      %v989 = vpop.permute.xlu0 %988
      %990 = vrot.lane.b32.xlu0 %v987, 85
      %v991 = vpop.permute.xlu0 %990
      %992 = vrot.lane.b32.xlu0 %v986, 85
      %v993 = vpop.permute.xlu0 %992
      %vm994 = vcmask 695296
      %v995 = vsel %vm994, %v989, %v991
      %v996 = vsel %vm994, %v991, %v993
      %999 = vst [vmem:[#allocation2 + $0xd0] sm:$0x3] %v995
      %1000 = vst.msk [vmem:[#allocation2 + $0xd8] sm:$0x3] %vm312, %v996
      %v1001 = vld [vmem:[%s1] sm:$0xff]
      %v1002 = vld [vmem:[#allocation2] sm:$0xff]
      %v1003 = vld [vmem:[#allocation2 + $0x8] sm:$0xff]
      %v1004 = vld [vmem:[#allocation2 + $0x10] sm:$0xff]
      %v1005 = vld [vmem:[#allocation2 + $0x18] sm:$0xff]
      %v1006 = vld [vmem:[#allocation2 + $0x20] sm:$0xff]
      %v1007 = vld [vmem:[#allocation2 + $0x28] sm:$0xff]
      %v1008 = vld [vmem:[#allocation2 + $0x30] sm:$0xff]
      %v1009 = vld [vmem:[#allocation2 + $0x38] sm:$0xff]
      %v1010 = vld [vmem:[#allocation2 + $0x40] sm:$0xff]
      %v1011 = vld [vmem:[#allocation2 + $0x48] sm:$0xff]
      %v1012 = vld [vmem:[#allocation2 + $0x50] sm:$0xff]
      %v1013 = vld [vmem:[#allocation2 + $0x58] sm:$0xff]
      %v1014 = vld [vmem:[#allocation2 + $0x60] sm:$0xff]
      %v1015 = vld [vmem:[#allocation2 + $0x68] sm:$0xff]
      %v1016 = vld [vmem:[#allocation2 + $0x70] sm:$0xff]
      %v1017 = vld [vmem:[#allocation2 + $0x78] sm:$0xff]
      %v1018 = vld [vmem:[#allocation2 + $0x80] sm:$0xff]
      %v1019 = vld [vmem:[#allocation2 + $0x88] sm:$0xff]
      %v1020 = vld [vmem:[#allocation2 + $0x90] sm:$0xff]
      %v1021 = vld [vmem:[#allocation2 + $0x98] sm:$0xff]
      %v1022 = vld [vmem:[#allocation2 + $0xa0] sm:$0xff]
      %v1023 = vld [vmem:[#allocation2 + $0xa8] sm:$0xff]
      %v1024 = vld [vmem:[#allocation2 + $0xb0] sm:$0xff]
      %v1025 = vld [vmem:[#allocation2 + $0xb8] sm:$0xff]
      %v1026 = vld [vmem:[#allocation2 + $0xc0] sm:$0xff]
      %v1027 = vld [vmem:[#allocation2 + $0xc8] sm:$0xff]
      %v1028 = vld [vmem:[#allocation2 + $0xd0] sm:$0xff]
      %v1029 = vld [vmem:[#allocation2 + $0xd8] sm:$0xff]
      %v1031 = vunpack.c.l.b16 %v1001
      %v1032 = vunpack.c.h.b16 %v1001
      %v1033 = vpack.c.b16 %v1031, %v1031
      %v1034 = vpack.c.b16 %v1032, %v1032
      %vm1036 = vcmask 785408
      %v1038 = vsel %vm1036, %v1034, 0
      %1040 = vmatprep.subr.bf16.mxu0 %v1003
      %1041 = vmatpush1.bf16.msra.mxu0 %v1002
      %1042 = vmatprep.subr.bf16.mxu0 %v1005
      %1043 = vmatpush1.bf16.msra.mxu0 %v1004
      %1044 = vmatprep.subr.bf16.mxu0 %v1007
      %1045 = vmatpush1.bf16.msra.mxu0 %v1006
      %1046 = vmatprep.subr.bf16.mxu0 %v1009
      %1047 = vmatpush1.bf16.msra.mxu0 %v1008
      %1048 = vmatprep.subr.bf16.mxu0 %v1011
      %1049 = vmatpush1.bf16.msra.mxu0 %v1010
      %1050 = vmatprep.subr.bf16.mxu0 %v1013
      %1051 = vmatpush1.bf16.msra.mxu0 %v1012
      %1052 = vmatprep.subr.bf16.mxu0 %v1015
      %1053 = vmatpush1.bf16.msra.mxu0 %v1014
      %1054 = vmatprep.subr.bf16.mxu0 %v1017
      %1055 = vmatpush1.bf16.msra.mxu0 %v1016
      %1056 = vmatprep.subr.bf16.mxu0 %v1019
      %1057 = vmatpush1.bf16.msra.mxu0 %v1018
      %1058 = vmatprep.subr.bf16.mxu0 %v1021
      %1059 = vmatpush1.bf16.msra.mxu0 %v1020
      %1060 = vmatprep.subr.bf16.mxu0 %v1023
      %1061 = vmatpush1.bf16.msra.mxu0 %v1022
      %1062 = vmatprep.subr.bf16.mxu0 %v1025
      %1063 = vmatpush1.bf16.msra.mxu0 %v1024
      %1064 = vmatprep.subr.bf16.mxu0 %v1027
      %1065 = vmatpush1.bf16.msra.mxu0 %v1026
      %1066 = vmatprep.subr.bf16.mxu0 %v1029
      %1067 = vmatpush1.bf16.msra.mxu0 %v1028
      %1068 = vmatprep.subr.bf16.mxu0 0
      %1069 = vmatpush1.bf16.msra.mxu0 0
      %1070 = vmatprep.subr.bf16.mxu0 0
      %1071 = vmatpush1.bf16.msra.mxu0 0
      %1072 = vmatprep.mubr.bf16.mxu0 %v1038
      %1073 = vmatmul.mubr.bf16.gmra.mrb[0].mxu0 %v1033
      %v1074 = vpop.f32.mrb[0].mxu0
      %v1075 = vadd.f32 0.0, %v1074
      %v1076 = vpop.f32.mrb[0].mxu0
      %v1077 = vadd.f32 0.0, %v1076
      %v1078 = vpop.f32.mrb[0].mxu0
      %v1079 = vpop.f32.mrb[0].mxu0
      %1080 = vdwg.mxu0
      %v1081 = vmax.f32 %v1075, 0.0
      %v1082 = vmax.f32 %v1077, 0.0
      %v1084 = vlaneseq
      %v1085 = vshrl.u32 %v1084, 7
      %v1086 = vsub.s32 0, %v1085
      %v1087 = vrot.slane %v281, %v1086
      %v1088 = vlaneseq
      %v1089 = vshrl.u32 %v1088, 7
      %v1090 = vsub.s32 1, %v1089
      %v1091 = vrot.slane %v281, %v1090
      %v1094 = vmul.f32 %v1081, %v1087
      %v1095 = vmul.f32 %v1082, %v1091
      %v1096 = vpack.c.bf16 %v1094, %v1094
      %v1097 = vpack.c.bf16 %v1095, %v1095
      %v1100 = vunpack.c.l.b16 %v1096
      %v1101 = vunpack.c.l.b16 %v1097
      %v1102 = vpack.c.b16 %v1101, %v1100
      %1104 = vst.msk [vmem:[#allocation3 + $0x4] sm:$0xff] %vm231, %v1102
      %v1105 = vld [vmem:[#allocation3] sm:$0xff]
      %v1106 = vld [vmem:[#allocation3 + $0x8] sm:$0xf]
      %1109 = vrot.lane.b32.xlu0 %v1105, 43
      %v1110 = vpop.permute.xlu0 %1109
      %1111 = vrot.lane.b32.xlu0 %v1106, 43
      %v1112 = vpop.permute.xlu0 %1111
      %v1113 = vrot.slane %v1110, 4
      %v1114 = vrot.slane %v1112, 4
      %vm1115 = vcmask 1043456
      %v1116 = vsel %vm1115, %v1113, %v1114
      %v1117 = vsel %vm306, %v1110, %v1116
      %1119 = vst.msk [vmem:[#allocation4] sm:$0xff] %vm231, %v1117
      %v1120 = vld [vmem:[#allocation3] sm:$0xff]
      %v1121 = vld [vmem:[#allocation3 + $0x8] sm:$0xf]
      %1124 = vrot.lane.b32.xlu0 %v1120, 42
      %v1125 = vpop.permute.xlu0 %1124
      %1126 = vrot.lane.b32.xlu0 %v1121, 42
      %v1127 = vpop.permute.xlu0 %1126
      %v1128 = vrot.slane %v1125, 4
      %v1129 = vrot.slane %v1127, 4
      %v1130 = vsel %vm1115, %v1128, %v1129
      %v1131 = vsel %vm339, %v1125, %v1130
      %1133 = vst.msk [vmem:[#allocation4 + $0x8] sm:$0xff] %vm231, %v1131
      %v1134 = vld [vmem:[#allocation3] sm:$0xff]
      %v1135 = vld [vmem:[#allocation3 + $0x8] sm:$0xf]
      %1138 = vrot.lane.b32.xlu0 %v1134, 41
      %v1139 = vpop.permute.xlu0 %1138
      %1140 = vrot.lane.b32.xlu0 %v1135, 41
      %v1141 = vpop.permute.xlu0 %1140
      %v1142 = vrot.slane %v1139, 4
      %v1143 = vrot.slane %v1141, 4
      %v1144 = vsel %vm1115, %v1142, %v1143
      %v1145 = vsel %vm371, %v1139, %v1144
      %1147 = vst.msk [vmem:[#allocation4 + $0x10] sm:$0xff] %vm231, %v1145
      %v1148 = vld [vmem:[#allocation3] sm:$0xff]
      %v1149 = vld [vmem:[#allocation3 + $0x8] sm:$0xf]
      %1152 = vrot.lane.b32.xlu0 %v1148, 37
      %v1153 = vpop.permute.xlu0 %1152
      %1154 = vrot.lane.b32.xlu0 %v1149, 37
      %v1155 = vpop.permute.xlu0 %1154
      %v1156 = vrot.slane %v1153, 4
      %v1157 = vrot.slane %v1155, 4
      %v1158 = vsel %vm1115, %v1156, %v1157
      %v1159 = vsel %vm403, %v1153, %v1158
      %1161 = vst.msk [vmem:[#allocation4 + $0x18] sm:$0xff] %vm231, %v1159
      %v1162 = vld [vmem:[#allocation3] sm:$0xff]
      %v1163 = vld [vmem:[#allocation3 + $0x8] sm:$0xf]
      %1166 = vrot.lane.b32.xlu0 %v1162, 36
      %v1167 = vpop.permute.xlu0 %1166
      %1168 = vrot.lane.b32.xlu0 %v1163, 36
      %v1169 = vpop.permute.xlu0 %1168
      %v1170 = vrot.slane %v1167, 4
      %v1171 = vrot.slane %v1169, 4
      %v1172 = vsel %vm1115, %v1170, %v1171
      %v1173 = vsel %vm434, %v1167, %v1172
      %1175 = vst.msk [vmem:[#allocation4 + $0x20] sm:$0xff] %vm231, %v1173
      %v1176 = vld [vmem:[#allocation3] sm:$0xff]
      %v1177 = vld [vmem:[#allocation3 + $0x8] sm:$0xf]
      %1180 = vrot.lane.b32.xlu0 %v1176, 35
      %v1181 = vpop.permute.xlu0 %1180
      %1182 = vrot.lane.b32.xlu0 %v1177, 35
      %v1183 = vpop.permute.xlu0 %1182
      %v1184 = vrot.slane %v1181, 4
      %v1185 = vrot.slane %v1183, 4
      %v1186 = vsel %vm1115, %v1184, %v1185
      %v1187 = vsel %vm466, %v1181, %v1186
      %1189 = vst.msk [vmem:[#allocation4 + $0x28] sm:$0xff] %vm231, %v1187
      %v1190 = vld [vmem:[#allocation3] sm:$0xff]
      %v1191 = vld [vmem:[#allocation3 + $0x8] sm:$0xf]
      %1194 = vrot.lane.b32.xlu0 %v1190, 31
      %v1195 = vpop.permute.xlu0 %1194
      %1196 = vrot.lane.b32.xlu0 %v1191, 31
      %v1197 = vpop.permute.xlu0 %1196
      %v1198 = vrot.slane %v1195, 4
      %v1199 = vrot.slane %v1197, 4
      %v1200 = vsel %vm1115, %v1198, %v1199
      %v1201 = vsel %vm497, %v1195, %v1200
      %1203 = vst.msk [vmem:[#allocation4 + $0x30] sm:$0xff] %vm231, %v1201
      %v1204 = vld [vmem:[#allocation3] sm:$0xff]
      %v1205 = vld [vmem:[#allocation3 + $0x8] sm:$0xf]
      %1208 = vrot.lane.b32.xlu0 %v1204, 30
      %v1209 = vpop.permute.xlu0 %1208
      %1210 = vrot.lane.b32.xlu0 %v1205, 30
      %v1211 = vpop.permute.xlu0 %1210
      %v1212 = vrot.slane %v1209, 4
      %v1213 = vrot.slane %v1211, 4
      %v1214 = vsel %vm1115, %v1212, %v1213
      %v1215 = vsel %vm529, %v1209, %v1214
      %1217 = vst.msk [vmem:[#allocation4 + $0x38] sm:$0xff] %vm231, %v1215
      %v1218 = vld [vmem:[#allocation3] sm:$0xff]
      %v1219 = vld [vmem:[#allocation3 + $0x8] sm:$0xf]
      %1222 = vrot.lane.b32.xlu0 %v1218, 29
      %v1223 = vpop.permute.xlu0 %1222
      %1224 = vrot.lane.b32.xlu0 %v1219, 29
      %v1225 = vpop.permute.xlu0 %1224
      %v1226 = vrot.slane %v1223, 4
      %v1227 = vrot.slane %v1225, 4
      %v1228 = vsel %vm1115, %v1226, %v1227
      %v1229 = vsel %vm560, %v1223, %v1228
      %1231 = vst.msk [vmem:[#allocation4 + $0x40] sm:$0xff] %vm231, %v1229
      %v1232 = vld [vmem:[#allocation3] sm:$0xff]
      %v1233 = vld [vmem:[#allocation3 + $0x8] sm:$0xf]
      %1236 = vrot.lane.b32.xlu0 %v1232, 7
      %v1237 = vpop.permute.xlu0 %1236
      %1238 = vrot.lane.b32.xlu0 %v1233, 7
      %v1239 = vpop.permute.xlu0 %1238
      %v1240 = vrot.slane %v1237, 4
      %v1241 = vrot.slane %v1239, 4
      %v1242 = vsel %vm1115, %v1240, %v1241
      %v1243 = vsel %vm592, %v1237, %v1242
      %1245 = vst.msk [vmem:[#allocation4 + $0x48] sm:$0xff] %vm231, %v1243
      %v1246 = vld [vmem:[#allocation3] sm:$0xff]
      %v1247 = vld [vmem:[#allocation3 + $0x8] sm:$0xf]
      %1250 = vrot.lane.b32.xlu0 %v1246, 6
      %v1251 = vpop.permute.xlu0 %1250
      %1252 = vrot.lane.b32.xlu0 %v1247, 6
      %v1253 = vpop.permute.xlu0 %1252
      %v1254 = vrot.slane %v1251, 4
      %v1255 = vrot.slane %v1253, 4
      %v1256 = vsel %vm1115, %v1254, %v1255
      %v1257 = vsel %vm623, %v1251, %v1256
      %1259 = vst.msk [vmem:[#allocation4 + $0x50] sm:$0xff] %vm231, %v1257
      %v1260 = vld [vmem:[#allocation3] sm:$0xff]
      %v1261 = vld [vmem:[#allocation3 + $0x8] sm:$0xf]
      %1264 = vrot.lane.b32.xlu0 %v1260, 5
      %v1265 = vpop.permute.xlu0 %1264
      %1266 = vrot.lane.b32.xlu0 %v1261, 5
      %v1267 = vpop.permute.xlu0 %1266
      %v1268 = vrot.slane %v1265, 4
      %v1269 = vrot.slane %v1267, 4
      %v1270 = vsel %vm1115, %v1268, %v1269
      %v1271 = vsel %vm655, %v1265, %v1270
      %1273 = vst.msk [vmem:[#allocation4 + $0x58] sm:$0xff] %vm231, %v1271
      %v1274 = vld [vmem:[#allocation3] sm:$0xff]
      %v1275 = vld [vmem:[#allocation3 + $0x8] sm:$0xf]
      %1278 = vrot.lane.b32.xlu0 %v1274, 1
      %v1279 = vpop.permute.xlu0 %1278
      %1280 = vrot.lane.b32.xlu0 %v1275, 1
      %v1281 = vpop.permute.xlu0 %1280
      %v1282 = vrot.slane %v1279, 4
      %v1283 = vrot.slane %v1281, 4
      %v1284 = vsel %vm1115, %v1282, %v1283
      %v1285 = vsel %vm686, %v1279, %v1284
      %1287 = vst.msk [vmem:[#allocation4 + $0x60] sm:$0xff] %vm231, %v1285
      %v1288 = vld [vmem:[#allocation3 + $0x4] sm:$0xff]
      %1289 = vst.msk [vmem:[#allocation4 + $0x68] sm:$0xff] %vm231, %v1288
      %v1290 = vld [vmem:[#allocation3 + $0x4] sm:$0xff]
      %1292 = vrot.lane.b32.xlu0 %v1290, 127
      %v1293 = vpop.permute.xlu0 %1292
      %v1294 = vrot.slane %v1293, 4
      %v1295 = vsel %vm721, %v1293, %v1294
      %1297 = vst.msk [vmem:[#allocation4 + $0x70] sm:$0xff] %vm231, %v1295
      %v1298 = vld [vmem:[#allocation3 + $0x4] sm:$0xff]
      %1300 = vrot.lane.b32.xlu0 %v1298, 123
      %v1301 = vpop.permute.xlu0 %1300
      %v1302 = vrot.slane %v1301, 4
      %v1303 = vsel %vm741, %v1301, %v1302
      %1305 = vst.msk [vmem:[#allocation4 + $0x78] sm:$0xff] %vm231, %v1303
      %v1306 = vld [vmem:[#allocation3 + $0x4] sm:$0xff]
      %1308 = vrot.lane.b32.xlu0 %v1306, 122
      %v1309 = vpop.permute.xlu0 %1308
      %v1310 = vrot.slane %v1309, 4
      %v1311 = vsel %vm761, %v1309, %v1310
      %1313 = vst.msk [vmem:[#allocation4 + $0x80] sm:$0xff] %vm231, %v1311
      %v1314 = vld [vmem:[#allocation3 + $0x4] sm:$0xff]
      %1316 = vrot.lane.b32.xlu0 %v1314, 121
      %v1317 = vpop.permute.xlu0 %1316
      %v1318 = vrot.slane %v1317, 4
      %v1319 = vsel %vm781, %v1317, %v1318
      %1321 = vst.msk [vmem:[#allocation4 + $0x88] sm:$0xff] %vm231, %v1319
      %v1322 = vld [vmem:[#allocation3 + $0x4] sm:$0xff]
      %1324 = vrot.lane.b32.xlu0 %v1322, 99
      %v1325 = vpop.permute.xlu0 %1324
      %v1326 = vrot.slane %v1325, 4
      %v1327 = vsel %vm801, %v1325, %v1326
      %1329 = vst.msk [vmem:[#allocation4 + $0x90] sm:$0xff] %vm231, %v1327
      %v1330 = vld [vmem:[#allocation3 + $0x4] sm:$0xff]
      %1332 = vrot.lane.b32.xlu0 %v1330, 98
      %v1333 = vpop.permute.xlu0 %1332
      %v1334 = vrot.slane %v1333, 4
      %v1335 = vsel %vm821, %v1333, %v1334
      %1337 = vst.msk [vmem:[#allocation4 + $0x98] sm:$0xff] %vm231, %v1335
      %v1338 = vld [vmem:[#allocation3 + $0x4] sm:$0xff]
      %1340 = vrot.lane.b32.xlu0 %v1338, 97
      %v1341 = vpop.permute.xlu0 %1340
      %v1342 = vrot.slane %v1341, 4
      %v1343 = vsel %vm841, %v1341, %v1342
      %1345 = vst.msk [vmem:[#allocation4 + $0xa0] sm:$0xff] %vm231, %v1343
      %v1346 = vld [vmem:[#allocation3 + $0x4] sm:$0xff]
      %1348 = vrot.lane.b32.xlu0 %v1346, 93
      %v1349 = vpop.permute.xlu0 %1348
      %v1350 = vrot.slane %v1349, 4
      %v1351 = vsel %vm861, %v1349, %v1350
      %1353 = vst.msk [vmem:[#allocation4 + $0xa8] sm:$0xff] %vm231, %v1351
      %v1354 = vld [vmem:[#allocation3 + $0x4] sm:$0xff]
      %1356 = vrot.lane.b32.xlu0 %v1354, 92
      %v1357 = vpop.permute.xlu0 %1356
      %v1358 = vrot.slane %v1357, 4
      %v1359 = vsel %vm881, %v1357, %v1358
      %1361 = vst.msk [vmem:[#allocation4 + $0xb0] sm:$0xff] %vm231, %v1359
      %v1362 = vld [vmem:[#allocation3 + $0x4] sm:$0xff]
      %1364 = vrot.lane.b32.xlu0 %v1362, 91
      %v1365 = vpop.permute.xlu0 %1364
      %v1366 = vrot.slane %v1365, 4
      %v1367 = vsel %vm901, %v1365, %v1366
      %1369 = vst.msk [vmem:[#allocation4 + $0xb8] sm:$0xff] %vm231, %v1367
      %v1370 = vld [vmem:[#allocation3 + $0x4] sm:$0xff]
      %v1371 = vld [vmem:[#allocation3 + $0xc] sm:$0xf]
      %1374 = vrot.lane.b32.xlu0 %v1370, 87
      %v1375 = vpop.permute.xlu0 %1374
      %1376 = vrot.lane.b32.xlu0 %v1371, 87
      %v1377 = vpop.permute.xlu0 %1376
      %v1378 = vrot.slane %v1375, 4
      %v1379 = vrot.slane %v1377, 4
      %v1380 = vsel %vm1115, %v1378, %v1379
      %v1381 = vsel %vm931, %v1375, %v1380
      %1383 = vst.msk [vmem:[#allocation4 + $0xc0] sm:$0xff] %vm231, %v1381
      %v1384 = vld [vmem:[#allocation3 + $0x4] sm:$0xff]
      %v1385 = vld [vmem:[#allocation3 + $0xc] sm:$0xf]
      %1388 = vrot.lane.b32.xlu0 %v1384, 86
      %v1389 = vpop.permute.xlu0 %1388
      %1390 = vrot.lane.b32.xlu0 %v1385, 86
      %v1391 = vpop.permute.xlu0 %1390
      %v1392 = vrot.slane %v1389, 4
      %v1393 = vrot.slane %v1391, 4
      %v1394 = vsel %vm1115, %v1392, %v1393
      %v1395 = vsel %vm963, %v1389, %v1394
      %1397 = vst.msk [vmem:[#allocation4 + $0xc8] sm:$0xff] %vm231, %v1395
      %v1398 = vld [vmem:[#allocation3 + $0x4] sm:$0xff]
      %v1399 = vld [vmem:[#allocation3 + $0xc] sm:$0xf]
      %1402 = vrot.lane.b32.xlu0 %v1398, 85
      %v1403 = vpop.permute.xlu0 %1402
      %1404 = vrot.lane.b32.xlu0 %v1399, 85
      %v1405 = vpop.permute.xlu0 %1404
      %v1406 = vrot.slane %v1403, 4
      %v1407 = vrot.slane %v1405, 4
      %v1408 = vsel %vm1115, %v1406, %v1407
      %v1409 = vsel %vm994, %v1403, %v1408
      %1411 = vst.msk [vmem:[#allocation4 + $0xd0] sm:$0xff] %vm231, %v1409
      %v1412 = vld [vmem:[%s192 + $0x2] sm:$0xf]
      %v1415 = vunpack.c.l.s4 1983009808
      %v1416 = vunpack.c.0.s8 %v1415
      %v1417 = vlaneseq
      %v1418 = vshrl.u32 %v1417, 7
      %v1419 = vsub.s32 %v1416, %v1418
      %v1420 = vrot.slane %v1412, %v1419
      %vm1422 = vcmask 1041408
      %vm1423 = vmor %vm345, %vm1422
      %1424 = vst.msk [vmem:[#allocation4 + $0xe0] sm:$0x33] %vm1423, %v1420
      %v1425 = vld [vmem:[%s2] sm:$0xff]
      %v1426 = vld [vmem:[#allocation4] sm:$0xff]
      %v1427 = vld [vmem:[#allocation4 + $0x8] sm:$0xff]
      %v1428 = vld [vmem:[#allocation4 + $0x10] sm:$0xff]
      %v1429 = vld [vmem:[#allocation4 + $0x18] sm:$0xff]
      %v1430 = vld [vmem:[#allocation4 + $0x20] sm:$0xff]
      %v1431 = vld [vmem:[#allocation4 + $0x28] sm:$0xff]
      %v1432 = vld [vmem:[#allocation4 + $0x30] sm:$0xff]
      %v1433 = vld [vmem:[#allocation4 + $0x38] sm:$0xff]
      %v1434 = vld [vmem:[#allocation4 + $0x40] sm:$0xff]
      %v1435 = vld [vmem:[#allocation4 + $0x48] sm:$0xff]
      %v1436 = vld [vmem:[#allocation4 + $0x50] sm:$0xff]
      %v1437 = vld [vmem:[#allocation4 + $0x58] sm:$0xff]
      %v1438 = vld [vmem:[#allocation4 + $0x60] sm:$0xff]
      %v1439 = vld [vmem:[#allocation4 + $0x68] sm:$0xff]
      %v1440 = vld [vmem:[#allocation4 + $0x70] sm:$0xff]
      %v1441 = vld [vmem:[#allocation4 + $0x78] sm:$0xff]
      %v1442 = vld [vmem:[#allocation4 + $0x80] sm:$0xff]
      %v1443 = vld [vmem:[#allocation4 + $0x88] sm:$0xff]
      %v1444 = vld [vmem:[#allocation4 + $0x90] sm:$0xff]
      %v1445 = vld [vmem:[#allocation4 + $0x98] sm:$0xff]
      %v1446 = vld [vmem:[#allocation4 + $0xa0] sm:$0xff]
      %v1447 = vld [vmem:[#allocation4 + $0xa8] sm:$0xff]
      %v1448 = vld [vmem:[#allocation4 + $0xb0] sm:$0xff]
      %v1449 = vld [vmem:[#allocation4 + $0xb8] sm:$0xff]
      %v1450 = vld [vmem:[#allocation4 + $0xc0] sm:$0xff]
      %v1451 = vld [vmem:[#allocation4 + $0xc8] sm:$0xff]
      %v1452 = vld [vmem:[#allocation4 + $0xd0] sm:$0xff]
      %v1453 = vld [vmem:[#allocation4 + $0xd8] sm:$0xff]
      %v1454 = vld [vmem:[#allocation4 + $0xe0] sm:$0xff]
      %v1456 = vunpack.c.l.b16 %v1425
      %v1457 = vunpack.c.h.b16 %v1425
      %v1458 = vpack.c.b16 %v1456, %v1456
      %v1459 = vpack.c.b16 %v1457, %v1457
      %v1490 = vunpack.c.l.b16 %v1426
      %v1491 = vunpack.c.h.b16 %v1426
      %v1492 = vunpack.c.l.b16 %v1427
      %v1493 = vunpack.c.h.b16 %v1427
      %v1494 = vunpack.c.l.b16 %v1428
      %v1495 = vunpack.c.h.b16 %v1428
      %v1496 = vunpack.c.l.b16 %v1429
      %v1497 = vunpack.c.h.b16 %v1429
      %v1498 = vunpack.c.l.b16 %v1430
      %v1499 = vunpack.c.h.b16 %v1430
      %v1500 = vunpack.c.l.b16 %v1431
      %v1501 = vunpack.c.h.b16 %v1431
      %v1502 = vunpack.c.l.b16 %v1432
      %v1503 = vunpack.c.h.b16 %v1432
      %v1504 = vunpack.c.l.b16 %v1433
      %v1505 = vunpack.c.h.b16 %v1433
      %v1506 = vunpack.c.l.b16 %v1434
      %v1507 = vunpack.c.h.b16 %v1434
      %v1508 = vunpack.c.l.b16 %v1435
      %v1509 = vunpack.c.h.b16 %v1435
      %v1510 = vunpack.c.l.b16 %v1436
      %v1511 = vunpack.c.h.b16 %v1436
      %v1512 = vunpack.c.l.b16 %v1437
      %v1513 = vunpack.c.h.b16 %v1437
      %v1514 = vunpack.c.l.b16 %v1438
      %v1515 = vunpack.c.h.b16 %v1438
      %v1516 = vunpack.c.l.b16 %v1439
      %v1517 = vunpack.c.h.b16 %v1439
      %v1518 = vunpack.c.l.b16 %v1440
      %v1519 = vunpack.c.h.b16 %v1440
      %v1520 = vunpack.c.l.b16 %v1441
      %v1521 = vunpack.c.h.b16 %v1441
      %v1522 = vunpack.c.l.b16 %v1442
      %v1523 = vunpack.c.h.b16 %v1442
      %v1524 = vunpack.c.l.b16 %v1443
      %v1525 = vunpack.c.h.b16 %v1443
      %v1526 = vunpack.c.l.b16 %v1444
      %v1527 = vunpack.c.h.b16 %v1444
      %v1528 = vunpack.c.l.b16 %v1445
      %v1529 = vunpack.c.h.b16 %v1445
      %v1530 = vunpack.c.l.b16 %v1446
      %v1531 = vunpack.c.h.b16 %v1446
      %v1532 = vunpack.c.l.b16 %v1447
      %v1533 = vunpack.c.h.b16 %v1447
      %v1534 = vunpack.c.l.b16 %v1448
      %v1535 = vunpack.c.h.b16 %v1448
      %v1536 = vunpack.c.l.b16 %v1449
      %v1537 = vunpack.c.h.b16 %v1449
      %v1538 = vunpack.c.l.b16 %v1450
      %v1539 = vunpack.c.h.b16 %v1450
      %v1540 = vunpack.c.l.b16 %v1451
      %v1541 = vunpack.c.h.b16 %v1451
      %v1542 = vunpack.c.l.b16 %v1452
      %v1543 = vunpack.c.h.b16 %v1452
      %v1544 = vunpack.c.l.b16 %v1453
      %v1545 = vunpack.c.h.b16 %v1453
      %v1546 = vunpack.c.l.b16 %v1454
      %v1547 = vunpack.c.h.b16 %v1454
      %v1548 = vpack.c.b16 %v1492, %v1490
      %v1549 = vpack.c.b16 %v1493, %v1491
      %v1550 = vpack.c.b16 %v1496, %v1494
      %v1551 = vpack.c.b16 %v1497, %v1495
      %v1552 = vpack.c.b16 %v1500, %v1498
      %v1553 = vpack.c.b16 %v1501, %v1499
      %v1554 = vpack.c.b16 %v1504, %v1502
      %v1555 = vpack.c.b16 %v1505, %v1503
      %v1556 = vpack.c.b16 %v1508, %v1506
      %v1557 = vpack.c.b16 %v1509, %v1507
      %v1558 = vpack.c.b16 %v1512, %v1510
      %v1559 = vpack.c.b16 %v1513, %v1511
      %v1560 = vpack.c.b16 %v1516, %v1514
      %v1561 = vpack.c.b16 %v1517, %v1515
      %v1562 = vpack.c.b16 %v1520, %v1518
      %v1563 = vpack.c.b16 %v1521, %v1519
      %v1564 = vpack.c.b16 %v1524, %v1522
      %v1565 = vpack.c.b16 %v1525, %v1523
      %v1566 = vpack.c.b16 %v1528, %v1526
      %v1567 = vpack.c.b16 %v1529, %v1527
      %v1568 = vpack.c.b16 %v1532, %v1530
      %v1569 = vpack.c.b16 %v1533, %v1531
      %v1570 = vpack.c.b16 %v1536, %v1534
      %v1571 = vpack.c.b16 %v1537, %v1535
      %v1572 = vpack.c.b16 %v1540, %v1538
      %v1573 = vpack.c.b16 %v1541, %v1539
      %v1574 = vpack.c.b16 %v1544, %v1542
      %v1575 = vpack.c.b16 %v1545, %v1543
      %v1576 = vpack.c.b16 %v1546, %v1546
      %v1577 = vpack.c.b16 %v1547, %v1547
      %vm1606 = vcmask 850944
      %v1608 = vsel %vm1606, %v1459, 0
      %v1611 = vsel %vm229, %v1576, 0
      %v1614 = vsel %vm229, %v1577, 0
      %1616 = vmatprep.subr.bf16.mxu0 %v1549
      %1617 = vmatpush1.bf16.msra.mxu0 %v1548
      %1618 = vmatprep.subr.bf16.mxu0 %v1551
      %1619 = vmatpush1.bf16.msra.mxu0 %v1550
      %1620 = vmatprep.subr.bf16.mxu0 %v1553
      %1621 = vmatpush1.bf16.msra.mxu0 %v1552
      %1622 = vmatprep.subr.bf16.mxu0 %v1555
      %1623 = vmatpush1.bf16.msra.mxu0 %v1554
      %1624 = vmatprep.subr.bf16.mxu0 %v1557
      %1625 = vmatpush1.bf16.msra.mxu0 %v1556
      %1626 = vmatprep.subr.bf16.mxu0 %v1559
      %1627 = vmatpush1.bf16.msra.mxu0 %v1558
      %1628 = vmatprep.subr.bf16.mxu0 %v1561
      %1629 = vmatpush1.bf16.msra.mxu0 %v1560
      %1630 = vmatprep.subr.bf16.mxu0 %v1563
      %1631 = vmatpush1.bf16.msra.mxu0 %v1562
      %1632 = vmatprep.subr.bf16.mxu0 %v1565
      %1633 = vmatpush1.bf16.msra.mxu0 %v1564
      %1634 = vmatprep.subr.bf16.mxu0 %v1567
      %1635 = vmatpush1.bf16.msra.mxu0 %v1566
      %1636 = vmatprep.subr.bf16.mxu0 %v1569
      %1637 = vmatpush1.bf16.msra.mxu0 %v1568
      %1638 = vmatprep.subr.bf16.mxu0 %v1571
      %1639 = vmatpush1.bf16.msra.mxu0 %v1570
      %1640 = vmatprep.subr.bf16.mxu0 %v1573
      %1641 = vmatpush1.bf16.msra.mxu0 %v1572
      %1642 = vmatprep.subr.bf16.mxu0 %v1575
      %1643 = vmatpush1.bf16.msra.mxu0 %v1574
      %1644 = vmatprep.subr.bf16.mxu0 %v1614
      %1645 = vmatpush1.bf16.msra.mxu0 %v1611
      %1646 = vmatprep.subr.bf16.mxu0 0
      %1647 = vmatpush1.bf16.msra.mxu0 0
      %1648 = vmatprep.mubr.bf16.mxu0 %v1608
      %1649 = vmatmul.mubr.bf16.gmra.mrb[0].mxu0 %v1458
      %v1650 = vpop.f32.mrb[0].mxu0
      %v1651 = vadd.f32 0.0, %v1650
      %v1652 = vpop.f32.mrb[0].mxu0
      %v1653 = vadd.f32 0.0, %v1652
      %v1654 = vpop.f32.mrb[0].mxu0
      %v1655 = vpop.f32.mrb[0].mxu0
      %1656 = vdwg.mxu0
      %v1657 = vmax.f32 %v1651, 0.0
      %v1658 = vmax.f32 %v1653, 0.0
      %v1659 = vmul.f32 %v1657, %v1087
      %v1660 = vmul.f32 %v1658, %v1091
      %v1661 = vpack.c.bf16 %v1659, %v1659
      %v1662 = vpack.c.bf16 %v1660, %v1660
      %v1665 = vunpack.c.l.b16 %v1661
      %v1666 = vunpack.c.l.b16 %v1662
      %v1667 = vpack.c.b16 %v1666, %v1665
      %1669 = vst.msk [vmem:[%s197] sm:$0xff] %vm231, %v1667
      %p1670 = scmp.lt.s32.totalorder %s15, 1
      %s1671 = scalar_select %p1670, %s15, 1
      %s1672 = smul.addr %s1671, 2
      %s1673 = smul.addr %s1672, 4
      %s1674 = scalar_lea.vmem %s4, %s1673
      // Predicated region
      $region37: #{encoder_forward.3} parent=35 // pred_check
        %p1675 = pneg %p122
      $region38: #{encoder_forward.3} parent=35 // pred_check_branch
        %1677 = sbr.rel (%p1675) target = $region40
      $region39: #{encoder_forward.3} parent=35 // pred_region
        _
      $region40: #{encoder_forward.3} parent=35 // pred_fallthru
        _
    $region36: #{encoder_forward.3} parent=5 // pred_fallthru
      _
    %p1678 = scmp.le.s32.totalorder 2, %s10
    // Predicated region
    $region41: #{encoder_forward.3} parent=5 // pred_check
      %p1679 = pneg %p1678
    $region42: #{encoder_forward.3} parent=5 // pred_check_branch
      %1681 = sbr.rel (%p1679) target = $region44
    $region43: #{encoder_forward.3} parent=5 // pred_region
      %s1682 = ssub.s32 %s10, 2
      // Predicated region
      $region45: #{encoder_forward.3} parent=43 // pred_check
        %p1683 = pneg %p128
      $region46: #{encoder_forward.3} parent=43 // pred_check_branch
        %1685 = sbr.rel (%p1683) target = $region48
      $region47: #{encoder_forward.3} parent=43 // pred_region
        %p1686 = scmp.lt.s32.totalorder %s16, 1
        %s1687 = scalar_select %p1686, %s16, 1
        %s1688 = smul.addr %s1687, 2
        %s1689 = smul.addr %s1688, 4
        %s1690 = scalar_lea.vmem %s4, %s1689
      $region48: #{encoder_forward.3} parent=43 // pred_fallthru
        _
    $region44: #{encoder_forward.3} parent=5 // pred_fallthru
      _
  $region6: #{encoder_forward.3} parent=0 // loop_footer
    %s14 = sadd.s32 1, %s10
  $region7: #{encoder_forward.3} parent=0 // loop_footer_branch
    %9 = sbr.rel target = $region3
  $region8: #{encoder_forward.3} parent=0 // loop_exit
    _

// kernel: reverse.3
$region0: #{reverse.3}
  #allocation0 [shape = 's32[1]{0}', space=sflag, size = 0x4, scoped, tag = 'scoped memory for reverse.3']
  %s0 = inlined_call_operand.vmem [shape: f32[16,16,3,3,3], index: 0, kind: input, shape index: {}]
  %s1 = inlined_call_operand.vmem [shape: bf16[16,16,3,3,3], index: 1, kind: output, shape index: {}]
  %s2 = scalar_lea.vmem %s0, 416
  %v3 = vld [vmem:[%s2] sm:$0xff]
  %v4 = vpack.c.bf16 0.0, %v3
  %5 = vst [vmem:[%s1] sm:$0xf] %v4
  %s6 = scalar_lea.vmem %s0, 272
  %v7 = vld [vmem:[%s6] sm:$0xff]
  %s8 = scalar_lea.vmem %s1, 72
  %v9 = vpack.c.bf16 0.0, %v7
  %10 = vst [vmem:[%s8] sm:$0xf] %v9
  %s11 = scalar_lea.vmem %s0, 128
  %v12 = vld [vmem:[%s11] sm:$0xff]
  %s13 = scalar_lea.vmem %s1, 144
  %v14 = vpack.c.bf16 0.0, %v12
  %15 = vst [vmem:[%s13] sm:$0xf] %v14
  %s16 = scalar_lea.vmem %s0, 368
  %v17 = vld [vmem:[%s16] sm:$0xff]
  %s18 = scalar_lea.vmem %s1, 24
  %v19 = vpack.c.bf16 0.0, %v17
  %20 = vst [vmem:[%s18] sm:$0xf] %v19
  %s21 = scalar_lea.vmem %s0, 224
  %v22 = vld [vmem:[%s21] sm:$0xff]
  %s23 = scalar_lea.vmem %s1, 96
  %v24 = vpack.c.bf16 0.0, %v22
  %25 = vst [vmem:[%s23] sm:$0xf] %v24
  %s26 = scalar_lea.vmem %s0, 80
  %v27 = vld [vmem:[%s26] sm:$0xff]
  %s28 = scalar_lea.vmem %s1, 168
  %v29 = vpack.c.bf16 0.0, %v27
  %30 = vst [vmem:[%s28] sm:$0xf] %v29
  %s31 = scalar_lea.vmem %s0, 320
  %v32 = vld [vmem:[%s31] sm:$0xff]
  %s33 = scalar_lea.vmem %s1, 48
  %v34 = vpack.c.bf16 0.0, %v32
  %35 = vst [vmem:[%s33] sm:$0xf] %v34
  %s36 = scalar_lea.vmem %s0, 176
  %v37 = vld [vmem:[%s36] sm:$0xff]
  %s38 = scalar_lea.vmem %s1, 120
  %v39 = vpack.c.bf16 0.0, %v37
  %40 = vst [vmem:[%s38] sm:$0xf] %v39
  %s41 = scalar_lea.vmem %s0, 32
  %v42 = vld [vmem:[%s41] sm:$0xff]
  %s43 = scalar_lea.vmem %s1, 192
  %v44 = vpack.c.bf16 0.0, %v42
  %45 = vst [vmem:[%s43] sm:$0xf] %v44
  %s46 = scalar_lea.vmem %s0, 400
  %v47 = vld [vmem:[%s46] sm:$0xff]
  %s48 = scalar_lea.vmem %s1, 8
  %v49 = vpack.c.bf16 0.0, %v47
  %50 = vst [vmem:[%s48] sm:$0xf] %v49
  %s51 = scalar_lea.vmem %s0, 256
  %v52 = vld [vmem:[%s51] sm:$0xff]
  %s53 = scalar_lea.vmem %s1, 80
  %v54 = vpack.c.bf16 0.0, %v52
  %55 = vst [vmem:[%s53] sm:$0xf] %v54
  %s56 = scalar_lea.vmem %s0, 112
  %v57 = vld [vmem:[%s56] sm:$0xff]
  %s58 = scalar_lea.vmem %s1, 152
  %v59 = vpack.c.bf16 0.0, %v57
  %60 = vst [vmem:[%s58] sm:$0xf] %v59
  %s61 = scalar_lea.vmem %s0, 352
  %v62 = vld [vmem:[%s61] sm:$0xff]
  %s63 = scalar_lea.vmem %s1, 32
  %v64 = vpack.c.bf16 0.0, %v62
  %65 = vst [vmem:[%s63] sm:$0xf] %v64
  %s66 = scalar_lea.vmem %s0, 208
  %v67 = vld [vmem:[%s66] sm:$0xff]
  %s68 = scalar_lea.vmem %s1, 104
  %v69 = vpack.c.bf16 0.0, %v67
  %70 = vst [vmem:[%s68] sm:$0xf] %v69
  %s71 = scalar_lea.vmem %s0, 64
  %v72 = vld [vmem:[%s71] sm:$0xff]
  %s73 = scalar_lea.vmem %s1, 176
  %v74 = vpack.c.bf16 0.0, %v72
  %75 = vst [vmem:[%s73] sm:$0xf] %v74
  %s76 = scalar_lea.vmem %s0, 304
  %v77 = vld [vmem:[%s76] sm:$0xff]
  %s78 = scalar_lea.vmem %s1, 56
  %v79 = vpack.c.bf16 0.0, %v77
  %80 = vst [vmem:[%s78] sm:$0xf] %v79
  %s81 = scalar_lea.vmem %s0, 160
  %v82 = vld [vmem:[%s81] sm:$0xff]
  %s83 = scalar_lea.vmem %s1, 128
  %v84 = vpack.c.bf16 0.0, %v82
  %85 = vst [vmem:[%s83] sm:$0xf] %v84
  %s86 = scalar_lea.vmem %s0, 16
  %v87 = vld [vmem:[%s86] sm:$0xff]
  %s88 = scalar_lea.vmem %s1, 200
  %v89 = vpack.c.bf16 0.0, %v87
  %90 = vst [vmem:[%s88] sm:$0xf] %v89
  %s91 = scalar_lea.vmem %s0, 384
  %v92 = vld [vmem:[%s91] sm:$0xff]
  %s93 = scalar_lea.vmem %s1, 16
  %v94 = vpack.c.bf16 0.0, %v92
  %95 = vst [vmem:[%s93] sm:$0xf] %v94
  %s96 = scalar_lea.vmem %s0, 240
  %v97 = vld [vmem:[%s96] sm:$0xff]
  %s98 = scalar_lea.vmem %s1, 88
  %v99 = vpack.c.bf16 0.0, %v97
  %100 = vst [vmem:[%s98] sm:$0xf] %v99
  %s101 = scalar_lea.vmem %s0, 96
  %v102 = vld [vmem:[%s101] sm:$0xff]
  %s103 = scalar_lea.vmem %s1, 160
  %v104 = vpack.c.bf16 0.0, %v102
  %105 = vst [vmem:[%s103] sm:$0xf] %v104
  %s106 = scalar_lea.vmem %s0, 336
  %v107 = vld [vmem:[%s106] sm:$0xff]
  %s108 = scalar_lea.vmem %s1, 40
  %v109 = vpack.c.bf16 0.0, %v107
  %110 = vst [vmem:[%s108] sm:$0xf] %v109
  %s111 = scalar_lea.vmem %s0, 192
  %v112 = vld [vmem:[%s111] sm:$0xff]
  %s113 = scalar_lea.vmem %s1, 112
  %v114 = vpack.c.bf16 0.0, %v112
  %115 = vst [vmem:[%s113] sm:$0xf] %v114
  %s116 = scalar_lea.vmem %s0, 48
  %v117 = vld [vmem:[%s116] sm:$0xff]
  %s118 = scalar_lea.vmem %s1, 184
  %v119 = vpack.c.bf16 0.0, %v117
  %120 = vst [vmem:[%s118] sm:$0xf] %v119
  %s121 = scalar_lea.vmem %s0, 288
  %v122 = vld [vmem:[%s121] sm:$0xff]
  %s123 = scalar_lea.vmem %s1, 64
  %v124 = vpack.c.bf16 0.0, %v122
  %125 = vst [vmem:[%s123] sm:$0xf] %v124
  %s126 = scalar_lea.vmem %s0, 144
  %v127 = vld [vmem:[%s126] sm:$0xff]
  %s128 = scalar_lea.vmem %s1, 136
  %v129 = vpack.c.bf16 0.0, %v127
  %130 = vst [vmem:[%s128] sm:$0xf] %v129
  %v131 = vld [vmem:[%s0] sm:$0xff]
  %s132 = scalar_lea.vmem %s1, 208
  %v133 = vpack.c.bf16 0.0, %v131
  %134 = vst [vmem:[%s132] sm:$0xf] %v133
  %s135 = scalar_lea.vmem %s0, 424
  %v136 = vld [vmem:[%s135] sm:$0xff]
  %s137 = scalar_lea.vmem %s1, 4
  %v138 = vpack.c.bf16 0.0, %v136
  %139 = vst [vmem:[%s137] sm:$0xf] %v138
  %s140 = scalar_lea.vmem %s0, 280
  %v141 = vld [vmem:[%s140] sm:$0xff]
  %s142 = scalar_lea.vmem %s1, 76
  %v143 = vpack.c.bf16 0.0, %v141
  %144 = vst [vmem:[%s142] sm:$0xf] %v143
  %s145 = scalar_lea.vmem %s0, 136
  %v146 = vld [vmem:[%s145] sm:$0xff]
  %s147 = scalar_lea.vmem %s1, 148
  %v148 = vpack.c.bf16 0.0, %v146
  %149 = vst [vmem:[%s147] sm:$0xf] %v148
  %s150 = scalar_lea.vmem %s0, 376
  %v151 = vld [vmem:[%s150] sm:$0xff]
  %s152 = scalar_lea.vmem %s1, 28
  %v153 = vpack.c.bf16 0.0, %v151
  %154 = vst [vmem:[%s152] sm:$0xf] %v153
  %s155 = scalar_lea.vmem %s0, 232
  %v156 = vld [vmem:[%s155] sm:$0xff]
  %s157 = scalar_lea.vmem %s1, 100
  %v158 = vpack.c.bf16 0.0, %v156
  %159 = vst [vmem:[%s157] sm:$0xf] %v158
  %s160 = scalar_lea.vmem %s0, 88
  %v161 = vld [vmem:[%s160] sm:$0xff]
  %s162 = scalar_lea.vmem %s1, 172
  %v163 = vpack.c.bf16 0.0, %v161
  %164 = vst [vmem:[%s162] sm:$0xf] %v163
  %s165 = scalar_lea.vmem %s0, 328
  %v166 = vld [vmem:[%s165] sm:$0xff]
  %s167 = scalar_lea.vmem %s1, 52
  %v168 = vpack.c.bf16 0.0, %v166
  %169 = vst [vmem:[%s167] sm:$0xf] %v168
  %s170 = scalar_lea.vmem %s0, 184
  %v171 = vld [vmem:[%s170] sm:$0xff]
  %s172 = scalar_lea.vmem %s1, 124
  %v173 = vpack.c.bf16 0.0, %v171
  %174 = vst [vmem:[%s172] sm:$0xf] %v173
  %s175 = scalar_lea.vmem %s0, 40
  %v176 = vld [vmem:[%s175] sm:$0xff]
  %s177 = scalar_lea.vmem %s1, 196
  %v178 = vpack.c.bf16 0.0, %v176
  %179 = vst [vmem:[%s177] sm:$0xf] %v178
  %s180 = scalar_lea.vmem %s0, 408
  %v181 = vld [vmem:[%s180] sm:$0xff]
  %s182 = scalar_lea.vmem %s1, 12
  %v183 = vpack.c.bf16 0.0, %v181
  %184 = vst [vmem:[%s182] sm:$0xf] %v183
  %s185 = scalar_lea.vmem %s0, 264
  %v186 = vld [vmem:[%s185] sm:$0xff]
  %s187 = scalar_lea.vmem %s1, 84
  %v188 = vpack.c.bf16 0.0, %v186
  %189 = vst [vmem:[%s187] sm:$0xf] %v188
  %s190 = scalar_lea.vmem %s0, 120
  %v191 = vld [vmem:[%s190] sm:$0xff]
  %s192 = scalar_lea.vmem %s1, 156
  %v193 = vpack.c.bf16 0.0, %v191
  %194 = vst [vmem:[%s192] sm:$0xf] %v193
  %s195 = scalar_lea.vmem %s0, 360
  %v196 = vld [vmem:[%s195] sm:$0xff]
  %s197 = scalar_lea.vmem %s1, 36
  %v198 = vpack.c.bf16 0.0, %v196
  %199 = vst [vmem:[%s197] sm:$0xf] %v198
  %s200 = scalar_lea.vmem %s0, 216
  %v201 = vld [vmem:[%s200] sm:$0xff]
  %s202 = scalar_lea.vmem %s1, 108
  %v203 = vpack.c.bf16 0.0, %v201
  %204 = vst [vmem:[%s202] sm:$0xf] %v203
  %s205 = scalar_lea.vmem %s0, 72
  %v206 = vld [vmem:[%s205] sm:$0xff]
  %s207 = scalar_lea.vmem %s1, 180
  %v208 = vpack.c.bf16 0.0, %v206
  %209 = vst [vmem:[%s207] sm:$0xf] %v208
  %s210 = scalar_lea.vmem %s0, 312
  %v211 = vld [vmem:[%s210] sm:$0xff]
  %s212 = scalar_lea.vmem %s1, 60
  %v213 = vpack.c.bf16 0.0, %v211
  %214 = vst [vmem:[%s212] sm:$0xf] %v213
  %s215 = scalar_lea.vmem %s0, 168
  %v216 = vld [vmem:[%s215] sm:$0xff]
  %s217 = scalar_lea.vmem %s1, 132
  %v218 = vpack.c.bf16 0.0, %v216
  %219 = vst [vmem:[%s217] sm:$0xf] %v218
  %s220 = scalar_lea.vmem %s0, 24
  %v221 = vld [vmem:[%s220] sm:$0xff]
  %s222 = scalar_lea.vmem %s1, 204
  %v223 = vpack.c.bf16 0.0, %v221
  %224 = vst [vmem:[%s222] sm:$0xf] %v223
  %s225 = scalar_lea.vmem %s0, 392
  %v226 = vld [vmem:[%s225] sm:$0xff]
  %s227 = scalar_lea.vmem %s1, 20
  %v228 = vpack.c.bf16 0.0, %v226
  %229 = vst [vmem:[%s227] sm:$0xf] %v228
  %s230 = scalar_lea.vmem %s0, 248
  %v231 = vld [vmem:[%s230] sm:$0xff]
  %s232 = scalar_lea.vmem %s1, 92
  %v233 = vpack.c.bf16 0.0, %v231
  %234 = vst [vmem:[%s232] sm:$0xf] %v233
  %s235 = scalar_lea.vmem %s0, 104
  %v236 = vld [vmem:[%s235] sm:$0xff]
  %s237 = scalar_lea.vmem %s1, 164
  %v238 = vpack.c.bf16 0.0, %v236
  %239 = vst [vmem:[%s237] sm:$0xf] %v238
  %s240 = scalar_lea.vmem %s0, 344
  %v241 = vld [vmem:[%s240] sm:$0xff]
  %s242 = scalar_lea.vmem %s1, 44
  %v243 = vpack.c.bf16 0.0, %v241
  %244 = vst [vmem:[%s242] sm:$0xf] %v243
  %s245 = scalar_lea.vmem %s0, 200
  %v246 = vld [vmem:[%s245] sm:$0xff]
  %s247 = scalar_lea.vmem %s1, 116
  %v248 = vpack.c.bf16 0.0, %v246
  %249 = vst [vmem:[%s247] sm:$0xf] %v248
  %s250 = scalar_lea.vmem %s0, 56
  %v251 = vld [vmem:[%s250] sm:$0xff]
  %s252 = scalar_lea.vmem %s1, 188
  %v253 = vpack.c.bf16 0.0, %v251
  %254 = vst [vmem:[%s252] sm:$0xf] %v253
  %s255 = scalar_lea.vmem %s0, 296
  %v256 = vld [vmem:[%s255] sm:$0xff]
  %s257 = scalar_lea.vmem %s1, 68
  %v258 = vpack.c.bf16 0.0, %v256
  %259 = vst [vmem:[%s257] sm:$0xf] %v258
  %s260 = scalar_lea.vmem %s0, 152
  %v261 = vld [vmem:[%s260] sm:$0xff]
  %s262 = scalar_lea.vmem %s1, 140
  %v263 = vpack.c.bf16 0.0, %v261
  %264 = vst [vmem:[%s262] sm:$0xf] %v263
  %s265 = scalar_lea.vmem %s0, 8
  %v266 = vld [vmem:[%s265] sm:$0xff]
  %s267 = scalar_lea.vmem %s1, 212
  %v268 = vpack.c.bf16 0.0, %v266
  %269 = vst [vmem:[%s267] sm:$0xf] %v268

// kernel: reverse.2
$region0: #{reverse.2}
  #allocation0 [shape = 's32[1]{0}', space=sflag, size = 0x4, scoped, tag = 'scoped memory for reverse.2']
  %s0 = inlined_call_operand.vmem [shape: f32[16,8,3,3,3], index: 0, kind: input, shape index: {}]
  %s1 = inlined_call_operand.vmem [shape: bf16[16,8,3,3,3], index: 1, kind: output, shape index: {}]
  %s2 = scalar_lea.vmem %s0, 208
  %v3 = vld [vmem:[%s2] sm:$0xff]
  %v4 = vpack.c.bf16 0.0, %v3
  %5 = vst [vmem:[%s1] sm:$0xf] %v4
  %s6 = scalar_lea.vmem %s0, 136
  %v7 = vld [vmem:[%s6] sm:$0xff]
  %s8 = scalar_lea.vmem %s1, 36
  %v9 = vpack.c.bf16 0.0, %v7
  %10 = vst [vmem:[%s8] sm:$0xf] %v9
  %s11 = scalar_lea.vmem %s0, 64
  %v12 = vld [vmem:[%s11] sm:$0xff]
  %s13 = scalar_lea.vmem %s1, 72
  %v14 = vpack.c.bf16 0.0, %v12
  %15 = vst [vmem:[%s13] sm:$0xf] %v14
  %s16 = scalar_lea.vmem %s0, 184
  %v17 = vld [vmem:[%s16] sm:$0xff]
  %s18 = scalar_lea.vmem %s1, 12
  %v19 = vpack.c.bf16 0.0, %v17
  %20 = vst [vmem:[%s18] sm:$0xf] %v19
  %s21 = scalar_lea.vmem %s0, 112
  %v22 = vld [vmem:[%s21] sm:$0xff]
  %s23 = scalar_lea.vmem %s1, 48
  %v24 = vpack.c.bf16 0.0, %v22
  %25 = vst [vmem:[%s23] sm:$0xf] %v24
  %s26 = scalar_lea.vmem %s0, 40
  %v27 = vld [vmem:[%s26] sm:$0xff]
  %s28 = scalar_lea.vmem %s1, 84
  %v29 = vpack.c.bf16 0.0, %v27
  %30 = vst [vmem:[%s28] sm:$0xf] %v29
  %s31 = scalar_lea.vmem %s0, 160
  %v32 = vld [vmem:[%s31] sm:$0xff]
  %s33 = scalar_lea.vmem %s1, 24
  %v34 = vpack.c.bf16 0.0, %v32
  %35 = vst [vmem:[%s33] sm:$0xf] %v34
  %s36 = scalar_lea.vmem %s0, 88
  %v37 = vld [vmem:[%s36] sm:$0xff]
  %s38 = scalar_lea.vmem %s1, 60
  %v39 = vpack.c.bf16 0.0, %v37
  %40 = vst [vmem:[%s38] sm:$0xf] %v39
  %s41 = scalar_lea.vmem %s0, 16
  %v42 = vld [vmem:[%s41] sm:$0xff]
  %s43 = scalar_lea.vmem %s1, 96
  %v44 = vpack.c.bf16 0.0, %v42
  %45 = vst [vmem:[%s43] sm:$0xf] %v44
  %s46 = scalar_lea.vmem %s0, 200
  %v47 = vld [vmem:[%s46] sm:$0xff]
  %s48 = scalar_lea.vmem %s1, 4
  %v49 = vpack.c.bf16 0.0, %v47
  %50 = vst [vmem:[%s48] sm:$0xf] %v49
  %s51 = scalar_lea.vmem %s0, 128
  %v52 = vld [vmem:[%s51] sm:$0xff]
  %s53 = scalar_lea.vmem %s1, 40
  %v54 = vpack.c.bf16 0.0, %v52
  %55 = vst [vmem:[%s53] sm:$0xf] %v54
  %s56 = scalar_lea.vmem %s0, 56
  %v57 = vld [vmem:[%s56] sm:$0xff]
  %s58 = scalar_lea.vmem %s1, 76
  %v59 = vpack.c.bf16 0.0, %v57
  %60 = vst [vmem:[%s58] sm:$0xf] %v59
  %s61 = scalar_lea.vmem %s0, 176
  %v62 = vld [vmem:[%s61] sm:$0xff]
  %s63 = scalar_lea.vmem %s1, 16
  %v64 = vpack.c.bf16 0.0, %v62
  %65 = vst [vmem:[%s63] sm:$0xf] %v64
  %s66 = scalar_lea.vmem %s0, 104
  %v67 = vld [vmem:[%s66] sm:$0xff]
  %s68 = scalar_lea.vmem %s1, 52
  %v69 = vpack.c.bf16 0.0, %v67
  %70 = vst [vmem:[%s68] sm:$0xf] %v69
  %s71 = scalar_lea.vmem %s0, 32
  %v72 = vld [vmem:[%s71] sm:$0xff]
  %s73 = scalar_lea.vmem %s1, 88
  %v74 = vpack.c.bf16 0.0, %v72
  %75 = vst [vmem:[%s73] sm:$0xf] %v74
  %s76 = scalar_lea.vmem %s0, 152
  %v77 = vld [vmem:[%s76] sm:$0xff]
  %s78 = scalar_lea.vmem %s1, 28
  %v79 = vpack.c.bf16 0.0, %v77
  %80 = vst [vmem:[%s78] sm:$0xf] %v79
  %s81 = scalar_lea.vmem %s0, 80
  %v82 = vld [vmem:[%s81] sm:$0xff]
  %s83 = scalar_lea.vmem %s1, 64
  %v84 = vpack.c.bf16 0.0, %v82
  %85 = vst [vmem:[%s83] sm:$0xf] %v84
  %s86 = scalar_lea.vmem %s0, 8
  %v87 = vld [vmem:[%s86] sm:$0xff]
  %s88 = scalar_lea.vmem %s1, 100
  %v89 = vpack.c.bf16 0.0, %v87
  %90 = vst [vmem:[%s88] sm:$0xf] %v89
  %s91 = scalar_lea.vmem %s0, 192
  %v92 = vld [vmem:[%s91] sm:$0xff]
  %s93 = scalar_lea.vmem %s1, 8
  %v94 = vpack.c.bf16 0.0, %v92
  %95 = vst [vmem:[%s93] sm:$0xf] %v94
  %s96 = scalar_lea.vmem %s0, 120
  %v97 = vld [vmem:[%s96] sm:$0xff]
  %s98 = scalar_lea.vmem %s1, 44
  %v99 = vpack.c.bf16 0.0, %v97
  %100 = vst [vmem:[%s98] sm:$0xf] %v99
  %s101 = scalar_lea.vmem %s0, 48
  %v102 = vld [vmem:[%s101] sm:$0xff]
  %s103 = scalar_lea.vmem %s1, 80
  %v104 = vpack.c.bf16 0.0, %v102
  %105 = vst [vmem:[%s103] sm:$0xf] %v104
  %s106 = scalar_lea.vmem %s0, 168
  %v107 = vld [vmem:[%s106] sm:$0xff]
  %s108 = scalar_lea.vmem %s1, 20
  %v109 = vpack.c.bf16 0.0, %v107
  %110 = vst [vmem:[%s108] sm:$0xf] %v109
  %s111 = scalar_lea.vmem %s0, 96
  %v112 = vld [vmem:[%s111] sm:$0xff]
  %s113 = scalar_lea.vmem %s1, 56
  %v114 = vpack.c.bf16 0.0, %v112
  %115 = vst [vmem:[%s113] sm:$0xf] %v114
  %s116 = scalar_lea.vmem %s0, 24
  %v117 = vld [vmem:[%s116] sm:$0xff]
  %s118 = scalar_lea.vmem %s1, 92
  %v119 = vpack.c.bf16 0.0, %v117
  %120 = vst [vmem:[%s118] sm:$0xf] %v119
  %s121 = scalar_lea.vmem %s0, 144
  %v122 = vld [vmem:[%s121] sm:$0xff]
  %s123 = scalar_lea.vmem %s1, 32
  %v124 = vpack.c.bf16 0.0, %v122
  %125 = vst [vmem:[%s123] sm:$0xf] %v124
  %s126 = scalar_lea.vmem %s0, 72
  %v127 = vld [vmem:[%s126] sm:$0xff]
  %s128 = scalar_lea.vmem %s1, 68
  %v129 = vpack.c.bf16 0.0, %v127
  %130 = vst [vmem:[%s128] sm:$0xf] %v129
  %v131 = vld [vmem:[%s0] sm:$0xff]
  %s132 = scalar_lea.vmem %s1, 104
  %v133 = vpack.c.bf16 0.0, %v131
  %134 = vst [vmem:[%s132] sm:$0xf] %v133

</llo_original>
